<compile_context>
chip_gen: v6e
topology: v6e:2x2x1
jax: 0.10.0
libtpu: 0.0.40
codegen_flags: <defaults>
</compile_context>

<pallas_src>
import numpy as np
import jax
import jax.numpy as jnp
from jax.experimental import pallas as pl
from jax.experimental.pallas import tpu as pltpu

EPS = 1e-5
LANE = 128   # channel dims padded to a multiple of the 128-lane width
SUB = 8      # the intermediate W canvas is kept 8-sublane aligned


def _round_up(x, m):
    return (x + m - 1) // m * m


def _conv3x3(src, w_ref, out_h, out_w):
    """3x3 'same' conv as a single im2col MXU matmul.

    src   : (B, >= out_h+2, >= out_w+2, Cin_p), zero spatial halo baked in.
    w_ref : (9*Cin_p, Cout_p) bf16 ref, rows ordered (dy, dx, cin).
    returns (B*out_h*out_w, Cout_p) f32.
    """
    src = src.astype(jnp.bfloat16)                         # cast once, up front
    b = src.shape[0]
    cin = src.shape[-1]
    taps = [src[:, dy:dy + out_h, dx:dx + out_w, :]
            for dy in range(3) for dx in range(3)]
    patch = jnp.concatenate(taps, axis=-1)                 # (B, oh, ow, 9*cin) bf16
    patch = patch.reshape(b * out_h * out_w, 9 * cin)
    # bf16 operands, f32 accumulation on the MXU.
    return jnp.dot(patch, w_ref[...], preferred_element_type=jnp.float32)


def _bn_relu(a, g_ref, b_ref, count):
    """Training-mode BatchNorm2d (biased batch stats) + ReLU in one pass.

    a: (M, C) f32 where any rows beyond the real `count` samples are exactly 0,
    so sum / sum-of-squares over all rows equal the true batch statistics.
    """
    inv = 1.0 / count
    s = jnp.sum(a, axis=0, keepdims=True)
    ss = jnp.sum(a * a, axis=0, keepdims=True)
    mean = s * inv
    var = ss * inv - mean * mean
    scale = g_ref[...] * jax.lax.rsqrt(var + EPS)
    shift = b_ref[...] - mean * scale
    return jnp.maximum(a * scale + shift, 0.0)


def double_conv_kernel(x_ref, w1_ref, g1_ref, b1_ref, w2_ref, g2_ref, b2_ref,
                       o_ref, hraw_ref):
    step = pl.program_id(0)
    n_steps = pl.num_programs(0)
    n_img, out_h, out_w, cout_p = o_ref.shape
    _, can_h, can_w, _ = hraw_ref.shape

    # ---- pass 1 (every grid step): raw conv1 of this image -> VMEM scratch.
    # Evaluated on the (can_h, can_w) halo canvas so the normalized
    # intermediate already carries the 1-pixel zero border conv2 needs.
    acc1 = _conv3x3(x_ref[...], w1_ref, can_h, can_w)      # (can_h*can_w, Cp)
    hraw_ref[step] = acc1.reshape(can_h, can_w, cout_p)

    # ---- pass 2 (last grid step): BN1+ReLU -> conv2 -> BN2+ReLU -> output.
    @pl.when(step == n_steps - 1)
    def _():
        m_true = n_img * out_h * out_w                     # real sample count
        h4 = hraw_ref[...]                                 # (N, can_h, can_w, Cp)
        row = jax.lax.broadcasted_iota(jnp.int32, h4.shape, 1)
        col = jax.lax.broadcasted_iota(jnp.int32, h4.shape, 2)
        interior = (row >= 1) & (row <= out_h) & (col >= 1) & (col <= out_w)
        h4 = jnp.where(interior, h4, 0.0)                  # zero halo / canvas slack
        y1 = _bn_relu(h4.reshape(n_img * can_h * can_w, cout_p),
                      g1_ref, b1_ref, m_true)
        # re-zero the halo (ReLU(shift) leaks there) so conv2 sees zero padding
        z1 = jnp.where(interior, y1.reshape(n_img, can_h, can_w, cout_p), 0.0)
        acc2 = _conv3x3(z1, w2_ref, out_h, out_w)          # (N*H*W, Cp) f32
        y2 = _bn_relu(acc2, g2_ref, b2_ref, m_true)
        o_ref[...] = y2.reshape(n_img, out_h, out_w, cout_p)


def double_conv(x_nchw, w1, gamma1, beta1, w2, gamma2, beta2):
    """x: (N, Cin, H, W) f32; w*: (Cout, Cin, 3, 3) PyTorch OIHW, bias=False."""
    n, cin, h, w = x_nchw.shape
    cout = w1.shape[0]
    cin_p = _round_up(cin, LANE)
    cout_p = _round_up(cout, LANE)

    can_h = h + 2                      # conv1-output / conv2-input halo canvas
    can_w = _round_up(w + 2, SUB)      # keep the sublane dim 8-aligned
    in_h = can_h + 2                   # input canvas: 2-px halo, since conv1 is
    in_w = can_w + 2                   # evaluated on the (can_h, can_w) grid

    # NCHW -> NHWC (channels on the lane axis) + spatial/channel zero padding,
    # then cast to bf16 (MXU operand dtype) so the HBM->VMEM DMA is half-size.
    # NOTE: padding Cin=4 up to 128 inflates the input read for this toy size;
    # for realistic U-Net channel counts it is minor.
    x = jnp.transpose(x_nchw, (0, 2, 3, 1)).astype(jnp.float32)
    x = jnp.pad(x, ((0, 0), (2, in_h - h - 2), (2, in_w - w - 2),
                    (0, cin_p - cin))).astype(jnp.bfloat16)

    def prep_w(wt):
        co, ci = wt.shape[0], wt.shape[1]
        ci_p, co_p = _round_up(ci, LANE), _round_up(co, LANE)
        wk = jnp.transpose(wt, (2, 3, 1, 0)).astype(jnp.float32)   # (3,3,ci,co)
        wk = jnp.pad(wk, ((0, 0), (0, 0), (0, ci_p - ci), (0, co_p - co)))
        return wk.reshape(9 * ci_p, co_p).astype(jnp.bfloat16)

    def prep_gb(g, bt):
        g = jnp.pad(g.astype(jnp.float32).reshape(-1), (0, cout_p - cout),
                    constant_values=1.0)
        bt = jnp.pad(bt.astype(jnp.float32).reshape(-1), (0, cout_p - cout))
        return g.reshape(1, cout_p), bt.reshape(1, cout_p)

    w1k, w2k = prep_w(w1), prep_w(w2)
    g1, b1 = prep_gb(gamma1, beta1)
    g2, b2 = prep_gb(gamma2, beta2)

    out = pl.pallas_call(
        double_conv_kernel,
        out_shape=jax.ShapeDtypeStruct((n, h, w, cout_p), jnp.float32),
        grid=(n,),
        in_specs=[
            # input image streamed per grid step: DMA of image i+1 overlaps
            # the conv1 compute of image i
            pl.BlockSpec((1, in_h, in_w, cin_p), lambda i: (i, 0, 0, 0)),
            pl.BlockSpec((9 * cin_p, cout_p), lambda i: (0, 0)),    # w1 (bf16)
            pl.BlockSpec((1, cout_p), lambda i: (0, 0)),            # gamma1
            pl.BlockSpec((1, cout_p), lambda i: (0, 0)),            # beta1
            pl.BlockSpec((9 * cout_p, cout_p), lambda i: (0, 0)),   # w2 (bf16)
            pl.BlockSpec((1, cout_p), lambda i: (0, 0)),            # gamma2
            pl.BlockSpec((1, cout_p), lambda i: (0, 0)),            # beta2
        ],
        # lane-dense output stays resident in VMEM, written once on the last step
        out_specs=pl.BlockSpec((n, h, w, cout_p), lambda i: (0, 0, 0, 0)),
        scratch_shapes=[pltpu.VMEM((n, can_h, can_w, cout_p), jnp.float32)],
        compiler_params=pltpu.CompilerParams(
            # cross-step scratch + global BN statistics => sequential grid
            dimension_semantics=("arbitrary",),
            vmem_limit_bytes=32 * 1024 * 1024),
    )(x, w1k, g1, b1, w2k, g2, b2)

    # drop the channel padding and go back to NCHW
    return jnp.transpose(out[..., :cout], (0, 3, 1, 2))


def double_conv_reference(x, w1, g1, b1, w2, g2, b2):
    """Pure-JAX reference matching PyTorch training-mode DoubleConv."""
    def conv(x, w):
        return jax.lax.conv_general_dilated(
            x, w, window_strides=(1, 1), padding=((1, 1), (1, 1)),
            dimension_numbers=("NCHW", "OIHW", "NCHW"),
            precision=jax.lax.Precision.HIGHEST)

    def bn_relu(y, g, b):
        mean = jnp.mean(y, axis=(0, 2, 3), keepdims=True)
        var = jnp.mean((y - mean) ** 2, axis=(0, 2, 3), keepdims=True)
        yn = (y - mean) / jnp.sqrt(var + EPS)
        yn = yn * g.reshape(1, -1, 1, 1) + b.reshape(1, -1, 1, 1)
        return jnp.maximum(yn, 0.0)

    y = bn_relu(conv(x, w1), g1, b1)
    return bn_relu(conv(y, w2), g2, b2)


if __name__ == "__main__":
    N, Cin, Cout, H, W = 2, 4, 8, 16, 16

    key = jax.random.PRNGKey(0)
    kx, kw1, kw2 = jax.random.split(key, 3)

    x = jax.random.normal(kx, (N, Cin, H, W), jnp.float32)
    # deterministic synthetic parameters (Conv2d layers have no bias)
    w1 = jax.random.normal(kw1, (Cout, Cin, 3, 3), jnp.float32) * 0.2
    w2 = jax.random.normal(kw2, (Cout, Cout, 3, 3), jnp.float32) * 0.2
    gamma1 = 1.0 + 0.1 * jnp.arange(Cout, dtype=jnp.float32)
    beta1 = 0.05 * jnp.arange(Cout, dtype=jnp.float32)
    gamma2 = 1.0 - 0.05 * jnp.arange(Cout, dtype=jnp.float32)
    beta2 = -0.03 * jnp.arange(Cout, dtype=jnp.float32)

    out = jax.block_until_ready(
        double_conv(x, w1, gamma1, beta1, w2, gamma2, beta2))
    ref = jax.block_until_ready(
        double_conv_reference(x, w1, gamma1, beta1, w2, gamma2, beta2))

    # bf16 MXU operands with f32 accumulation -> slightly looser than pure f32
    np.testing.assert_allclose(np.asarray(out), np.asarray(ref),
                               rtol=3e-2, atol=3e-2)
    print("KERNEL_OK")
</pallas_src>

<mosaic_0001>
module attributes {stable_mosaic.version = 11 : i64} {
  func.func @double_conv_kernel(%arg0: i32, %arg1: memref<1x20x26x128xbf16, #tpu.memory_space<vmem>>, %arg2: memref<1152x128xbf16, #tpu.memory_space<vmem>>, %arg3: memref<1x128xf32, #tpu.memory_space<vmem>>, %arg4: memref<1x128xf32, #tpu.memory_space<vmem>>, %arg5: memref<1152x128xbf16, #tpu.memory_space<vmem>>, %arg6: memref<1x128xf32, #tpu.memory_space<vmem>>, %arg7: memref<1x128xf32, #tpu.memory_space<vmem>>, %arg8: memref<2x16x16x128xf32, #tpu.memory_space<vmem>>, %arg9: memref<2x18x24x128xf32, #tpu.memory_space<vmem>>) attributes {dimension_semantics = [#tpu.dimension_semantics<arbitrary>], iteration_bounds = array<i64: 2>, scalar_prefetch = 0 : i64, scratch_operands = 1 : i64, tpu.core_type = #tpu.core_type<tc>, window_params = [{transform_indices = @transform_0, window_bounds = array<i64: 1, 20, 26, 128>}, {pipeline_mode = #tpu.pipeline_mode<synchronous>, transform_indices = @transform_1, window_bounds = array<i64: 1152, 128>}, {pipeline_mode = #tpu.pipeline_mode<synchronous>, transform_indices = @transform_2, window_bounds = array<i64: 1, 128>}, {pipeline_mode = #tpu.pipeline_mode<synchronous>, transform_indices = @transform_3, window_bounds = array<i64: 1, 128>}, {pipeline_mode = #tpu.pipeline_mode<synchronous>, transform_indices = @transform_4, window_bounds = array<i64: 1152, 128>}, {pipeline_mode = #tpu.pipeline_mode<synchronous>, transform_indices = @transform_5, window_bounds = array<i64: 1, 128>}, {pipeline_mode = #tpu.pipeline_mode<synchronous>, transform_indices = @transform_6, window_bounds = array<i64: 1, 128>}, {pipeline_mode = #tpu.pipeline_mode<synchronous>, transform_indices = @transform_7, window_bounds = array<i64: 2, 16, 16, 128>}]} {
    %c0 = arith.constant 0 : index
    %c0_0 = arith.constant 0 : index
    %c0_1 = arith.constant 0 : index
    %c0_2 = arith.constant 0 : index
    %0 = vector.load %arg1[%c0, %c0_0, %c0_1, %c0_2] : memref<1x20x26x128xbf16, #tpu.memory_space<vmem>>, vector<1x20x26x128xbf16>
    %1 = vector.extract_strided_slice %0 {offsets = [0, 0, 0, 0], sizes = [1, 18, 24, 128], strides = [1, 1, 1, 1]} : vector<1x20x26x128xbf16> to vector<1x18x24x128xbf16>
    %2 = vector.extract_strided_slice %0 {offsets = [0, 0, 1, 0], sizes = [1, 18, 24, 128], strides = [1, 1, 1, 1]} : vector<1x20x26x128xbf16> to vector<1x18x24x128xbf16>
    %3 = vector.extract_strided_slice %0 {offsets = [0, 0, 2, 0], sizes = [1, 18, 24, 128], strides = [1, 1, 1, 1]} : vector<1x20x26x128xbf16> to vector<1x18x24x128xbf16>
    %4 = vector.extract_strided_slice %0 {offsets = [0, 1, 0, 0], sizes = [1, 18, 24, 128], strides = [1, 1, 1, 1]} : vector<1x20x26x128xbf16> to vector<1x18x24x128xbf16>
    %5 = vector.extract_strided_slice %0 {offsets = [0, 1, 1, 0], sizes = [1, 18, 24, 128], strides = [1, 1, 1, 1]} : vector<1x20x26x128xbf16> to vector<1x18x24x128xbf16>
    %6 = vector.extract_strided_slice %0 {offsets = [0, 1, 2, 0], sizes = [1, 18, 24, 128], strides = [1, 1, 1, 1]} : vector<1x20x26x128xbf16> to vector<1x18x24x128xbf16>
    %7 = vector.extract_strided_slice %0 {offsets = [0, 2, 0, 0], sizes = [1, 18, 24, 128], strides = [1, 1, 1, 1]} : vector<1x20x26x128xbf16> to vector<1x18x24x128xbf16>
    %8 = vector.extract_strided_slice %0 {offsets = [0, 2, 1, 0], sizes = [1, 18, 24, 128], strides = [1, 1, 1, 1]} : vector<1x20x26x128xbf16> to vector<1x18x24x128xbf16>
    %9 = vector.extract_strided_slice %0 {offsets = [0, 2, 2, 0], sizes = [1, 18, 24, 128], strides = [1, 1, 1, 1]} : vector<1x20x26x128xbf16> to vector<1x18x24x128xbf16>
    %10 = tpu.concatenate %1, %2, %3, %4, %5, %6, %7, %8, %9 in 3 : vector<1x18x24x128xbf16>, vector<1x18x24x128xbf16>, vector<1x18x24x128xbf16>, vector<1x18x24x128xbf16>, vector<1x18x24x128xbf16>, vector<1x18x24x128xbf16>, vector<1x18x24x128xbf16>, vector<1x18x24x128xbf16>, vector<1x18x24x128xbf16> -> vector<1x18x24x1152xbf16>
    %11 = vector.shape_cast %10 : vector<1x18x24x1152xbf16> to vector<432x1152xbf16>
    %c0_3 = arith.constant 0 : index
    %c0_4 = arith.constant 0 : index
    %12 = vector.load %arg2[%c0_3, %c0_4] : memref<1152x128xbf16, #tpu.memory_space<vmem>>, vector<1152x128xbf16>
    %cst = arith.constant dense<0.000000e+00> : vector<432x128xf32>
    %13 = tpu.matmul %11, %12, %cst {dimension_numbers = #tpu.dot_dimension_numbers<[1], [0], [0], [1], [0, 0, 1, 1], [], []>} : vector<432x1152xbf16>, vector<1152x128xbf16>, vector<432x128xf32> -> vector<432x128xf32>
    %14 = vector.shape_cast %13 : vector<432x128xf32> to vector<18x24x128xf32>
    %15 = arith.index_cast %arg0 : i32 to index
    %c0_5 = arith.constant 0 : index
    %c0_6 = arith.constant 0 : index
    %c0_7 = arith.constant 0 : index
    %16 = vector.load %arg9[%15, %c0_5, %c0_6, %c0_7] : memref<2x18x24x128xf32, #tpu.memory_space<vmem>>, vector<1x18x24x128xf32>
    %17 = vector.shape_cast %16 : vector<1x18x24x128xf32> to vector<18x24x128xf32>
    %18 = vector.shape_cast %14 : vector<18x24x128xf32> to vector<1x18x24x128xf32>
    tpu.vector_store %arg9[%15, %c0_5, %c0_6, %c0_7], %18 {strides = array<i32>} : memref<2x18x24x128xf32, #tpu.memory_space<vmem>>, vector<1x18x24x128xf32>,
    %c1_i32 = arith.constant 1 : i32
    %19 = arith.cmpi eq, %arg0, %c1_i32 : i32
    %20 = arith.extui %19 : i1 to i32
    %c0_i32 = arith.constant 0 : i32
    %21 = arith.cmpi ne, %20, %c0_i32 : i32
    scf.if %21 {
      %c0_8 = arith.constant 0 : index
      %c0_9 = arith.constant 0 : index
      %c0_10 = arith.constant 0 : index
      %c0_11 = arith.constant 0 : index
      %22 = vector.load %arg9[%c0_8, %c0_9, %c0_10, %c0_11] : memref<2x18x24x128xf32, #tpu.memory_space<vmem>>, vector<2x18x24x128xf32>
      %23 = tpu.iota {dimensions = array<i32: 1>} : vector<2x18x24x128xi32>
      %24 = tpu.iota {dimensions = array<i32: 2>} : vector<2x18x24x128xi32>
      %c1_i32_12 = arith.constant 1 : i32
      %25 = vector.broadcast %c1_i32_12 : i32 to vector<2x18x24x128xi32>
      %26 = arith.cmpi sge, %23, %25 : vector<2x18x24x128xi32>
      %c16_i32 = arith.constant 16 : i32
      %27 = vector.broadcast %c16_i32 : i32 to vector<2x18x24x128xi32>
      %28 = arith.cmpi sle, %23, %27 : vector<2x18x24x128xi32>
      %29 = arith.andi %26, %28 : vector<2x18x24x128xi1>
      %c1_i32_13 = arith.constant 1 : i32
      %30 = vector.broadcast %c1_i32_13 : i32 to vector<2x18x24x128xi32>
      %31 = arith.cmpi sge, %24, %30 : vector<2x18x24x128xi32>
      %32 = arith.andi %29, %31 : vector<2x18x24x128xi1>
      %c16_i32_14 = arith.constant 16 : i32
      %33 = vector.broadcast %c16_i32_14 : i32 to vector<2x18x24x128xi32>
      %34 = arith.cmpi sle, %24, %33 : vector<2x18x24x128xi32>
      %35 = arith.andi %32, %34 : vector<2x18x24x128xi1>
      %cst_15 = arith.constant 0.000000e+00 : f32
      %36 = vector.broadcast %cst_15 : f32 to vector<2x18x24x128xf32>
      %37 = arith.select %35, %22, %36 : vector<2x18x24x128xi1>, vector<2x18x24x128xf32>
      %38 = vector.shape_cast %37 : vector<2x18x24x128xf32> to vector<864x128xf32>
      %cst_16 = arith.constant dense<0.000000e+00> : vector<128xf32>
      %39 = vector.multi_reduction <add>, %38, %cst_16 [0] : vector<864x128xf32> to vector<128xf32>
      %40 = vector.shape_cast %39 : vector<128xf32> to vector<1x128xf32>
      %41 = arith.mulf %38, %38 : vector<864x128xf32>
      %cst_17 = arith.constant dense<0.000000e+00> : vector<128xf32>
      %42 = vector.multi_reduction <add>, %41, %cst_17 [0] : vector<864x128xf32> to vector<128xf32>
      %43 = vector.shape_cast %42 : vector<128xf32> to vector<1x128xf32>
      %cst_18 = arith.constant 0.001953125 : f32
      %44 = vector.broadcast %cst_18 : f32 to vector<1x128xf32>
      %45 = arith.mulf %40, %44 : vector<1x128xf32>
      %cst_19 = arith.constant 0.001953125 : f32
      %46 = vector.broadcast %cst_19 : f32 to vector<1x128xf32>
      %47 = arith.mulf %43, %46 : vector<1x128xf32>
      %48 = arith.mulf %45, %45 : vector<1x128xf32>
      %49 = arith.subf %47, %48 : vector<1x128xf32>
      %c0_20 = arith.constant 0 : index
      %c0_21 = arith.constant 0 : index
      %50 = vector.load %arg3[%c0_20, %c0_21] : memref<1x128xf32, #tpu.memory_space<vmem>>, vector<1x128xf32>
      %cst_22 = arith.constant 9.99999974E-6 : f32
      %51 = vector.broadcast %cst_22 : f32 to vector<1x128xf32>
      %52 = arith.addf %49, %51 : vector<1x128xf32>
      %53 = math.rsqrt %52 : vector<1x128xf32>
      %54 = arith.mulf %50, %53 : vector<1x128xf32>
      %c0_23 = arith.constant 0 : index
      %c0_24 = arith.constant 0 : index
      %55 = vector.load %arg4[%c0_23, %c0_24] : memref<1x128xf32, #tpu.memory_space<vmem>>, vector<1x128xf32>
      %56 = arith.mulf %45, %54 : vector<1x128xf32>
      %57 = arith.subf %55, %56 : vector<1x128xf32>
      %58 = vector.broadcast %54 : vector<1x128xf32> to vector<864x128xf32>
      %59 = arith.mulf %38, %58 : vector<864x128xf32>
      %60 = vector.broadcast %57 : vector<1x128xf32> to vector<864x128xf32>
      %61 = arith.addf %59, %60 : vector<864x128xf32>
      %cst_25 = arith.constant 0.000000e+00 : f32
      %62 = vector.broadcast %cst_25 : f32 to vector<864x128xf32>
      %63 = arith.maximumf %61, %62 : vector<864x128xf32>
      %64 = vector.shape_cast %63 : vector<864x128xf32> to vector<2x18x24x128xf32>
      %cst_26 = arith.constant 0.000000e+00 : f32
      %65 = vector.broadcast %cst_26 : f32 to vector<2x18x24x128xf32>
      %66 = arith.select %35, %64, %65 : vector<2x18x24x128xi1>, vector<2x18x24x128xf32>
      %67 = arith.truncf %66 : vector<2x18x24x128xf32> to vector<2x18x24x128xbf16>
      %68 = vector.extract_strided_slice %67 {offsets = [0, 0, 0, 0], sizes = [2, 16, 16, 128], strides = [1, 1, 1, 1]} : vector<2x18x24x128xbf16> to vector<2x16x16x128xbf16>
      %69 = vector.extract_strided_slice %67 {offsets = [0, 0, 1, 0], sizes = [2, 16, 16, 128], strides = [1, 1, 1, 1]} : vector<2x18x24x128xbf16> to vector<2x16x16x128xbf16>
      %70 = vector.extract_strided_slice %67 {offsets = [0, 0, 2, 0], sizes = [2, 16, 16, 128], strides = [1, 1, 1, 1]} : vector<2x18x24x128xbf16> to vector<2x16x16x128xbf16>
      %71 = vector.extract_strided_slice %67 {offsets = [0, 1, 0, 0], sizes = [2, 16, 16, 128], strides = [1, 1, 1, 1]} : vector<2x18x24x128xbf16> to vector<2x16x16x128xbf16>
      %72 = vector.extract_strided_slice %67 {offsets = [0, 1, 1, 0], sizes = [2, 16, 16, 128], strides = [1, 1, 1, 1]} : vector<2x18x24x128xbf16> to vector<2x16x16x128xbf16>
      %73 = vector.extract_strided_slice %67 {offsets = [0, 1, 2, 0], sizes = [2, 16, 16, 128], strides = [1, 1, 1, 1]} : vector<2x18x24x128xbf16> to vector<2x16x16x128xbf16>
      %74 = vector.extract_strided_slice %67 {offsets = [0, 2, 0, 0], sizes = [2, 16, 16, 128], strides = [1, 1, 1, 1]} : vector<2x18x24x128xbf16> to vector<2x16x16x128xbf16>
      %75 = vector.extract_strided_slice %67 {offsets = [0, 2, 1, 0], sizes = [2, 16, 16, 128], strides = [1, 1, 1, 1]} : vector<2x18x24x128xbf16> to vector<2x16x16x128xbf16>
      %76 = vector.extract_strided_slice %67 {offsets = [0, 2, 2, 0], sizes = [2, 16, 16, 128], strides = [1, 1, 1, 1]} : vector<2x18x24x128xbf16> to vector<2x16x16x128xbf16>
      %77 = tpu.concatenate %68, %69, %70, %71, %72, %73, %74, %75, %76 in 3 : vector<2x16x16x128xbf16>, vector<2x16x16x128xbf16>, vector<2x16x16x128xbf16>, vector<2x16x16x128xbf16>, vector<2x16x16x128xbf16>, vector<2x16x16x128xbf16>, vector<2x16x16x128xbf16>, vector<2x16x16x128xbf16>, vector<2x16x16x128xbf16> -> vector<2x16x16x1152xbf16>
      %78 = vector.shape_cast %77 : vector<2x16x16x1152xbf16> to vector<512x1152xbf16>
      %c0_27 = arith.constant 0 : index
      %c0_28 = arith.constant 0 : index
      %79 = vector.load %arg5[%c0_27, %c0_28] : memref<1152x128xbf16, #tpu.memory_space<vmem>>, vector<1152x128xbf16>
      %cst_29 = arith.constant dense<0.000000e+00> : vector<512x128xf32>
      %80 = tpu.matmul %78, %79, %cst_29 {dimension_numbers = #tpu.dot_dimension_numbers<[1], [0], [0], [1], [0, 0, 1, 1], [], []>} : vector<512x1152xbf16>, vector<1152x128xbf16>, vector<512x128xf32> -> vector<512x128xf32>
      %cst_30 = arith.constant dense<0.000000e+00> : vector<128xf32>
      %81 = vector.multi_reduction <add>, %80, %cst_30 [0] : vector<512x128xf32> to vector<128xf32>
      %82 = vector.shape_cast %81 : vector<128xf32> to vector<1x128xf32>
      %83 = arith.mulf %80, %80 : vector<512x128xf32>
      %cst_31 = arith.constant dense<0.000000e+00> : vector<128xf32>
      %84 = vector.multi_reduction <add>, %83, %cst_31 [0] : vector<512x128xf32> to vector<128xf32>
      %85 = vector.shape_cast %84 : vector<128xf32> to vector<1x128xf32>
      %cst_32 = arith.constant 0.001953125 : f32
      %86 = vector.broadcast %cst_32 : f32 to vector<1x128xf32>
      %87 = arith.mulf %82, %86 : vector<1x128xf32>
      %cst_33 = arith.constant 0.001953125 : f32
      %88 = vector.broadcast %cst_33 : f32 to vector<1x128xf32>
      %89 = arith.mulf %85, %88 : vector<1x128xf32>
      %90 = arith.mulf %87, %87 : vector<1x128xf32>
      %91 = arith.subf %89, %90 : vector<1x128xf32>
      %c0_34 = arith.constant 0 : index
      %c0_35 = arith.constant 0 : index
      %92 = vector.load %arg6[%c0_34, %c0_35] : memref<1x128xf32, #tpu.memory_space<vmem>>, vector<1x128xf32>
      %cst_36 = arith.constant 9.99999974E-6 : f32
      %93 = vector.broadcast %cst_36 : f32 to vector<1x128xf32>
      %94 = arith.addf %91, %93 : vector<1x128xf32>
      %95 = math.rsqrt %94 : vector<1x128xf32>
      %96 = arith.mulf %92, %95 : vector<1x128xf32>
      %c0_37 = arith.constant 0 : index
      %c0_38 = arith.constant 0 : index
      %97 = vector.load %arg7[%c0_37, %c0_38] : memref<1x128xf32, #tpu.memory_space<vmem>>, vector<1x128xf32>
      %98 = arith.mulf %87, %96 : vector<1x128xf32>
      %99 = arith.subf %97, %98 : vector<1x128xf32>
      %100 = vector.broadcast %96 : vector<1x128xf32> to vector<512x128xf32>
      %101 = arith.mulf %80, %100 : vector<512x128xf32>
      %102 = vector.broadcast %99 : vector<1x128xf32> to vector<512x128xf32>
      %103 = arith.addf %101, %102 : vector<512x128xf32>
      %cst_39 = arith.constant 0.000000e+00 : f32
      %104 = vector.broadcast %cst_39 : f32 to vector<512x128xf32>
      %105 = arith.maximumf %103, %104 : vector<512x128xf32>
      %106 = vector.shape_cast %105 : vector<512x128xf32> to vector<2x16x16x128xf32>
      %c0_40 = arith.constant 0 : index
      %c0_41 = arith.constant 0 : index
      %c0_42 = arith.constant 0 : index
      %c0_43 = arith.constant 0 : index
      %107 = vector.load %arg8[%c0_40, %c0_41, %c0_42, %c0_43] : memref<2x16x16x128xf32, #tpu.memory_space<vmem>>, vector<2x16x16x128xf32>
      tpu.vector_store %arg8[%c0_40, %c0_41, %c0_42, %c0_43], %106 {strides = array<i32>} : memref<2x16x16x128xf32, #tpu.memory_space<vmem>>, vector<2x16x16x128xf32>,
    } else {
    }
    return
  }
  func.func @transform_0(%arg0: i32) -> (i32, i32, i32, i32) {
    %c0_i32 = arith.constant 0 : i32
    %c0_i32_0 = arith.constant 0 : i32
    %c0_i32_1 = arith.constant 0 : i32
    %c0_i32_2 = arith.constant 0 : i32
    return %arg0, %c0_i32, %c0_i32_0, %c0_i32_1 : i32, i32, i32, i32
  }
  func.func @transform_1(%arg0: i32) -> (i32, i32) {
    %c0_i32 = arith.constant 0 : i32
    %c0_i32_0 = arith.constant 0 : i32
    %c0_i32_1 = arith.constant 0 : i32
    return %c0_i32, %c0_i32_0 : i32, i32
  }
  func.func @transform_2(%arg0: i32) -> (i32, i32) {
    %c0_i32 = arith.constant 0 : i32
    %c0_i32_0 = arith.constant 0 : i32
    %c0_i32_1 = arith.constant 0 : i32
    return %c0_i32, %c0_i32_0 : i32, i32
  }
  func.func @transform_3(%arg0: i32) -> (i32, i32) {
    %c0_i32 = arith.constant 0 : i32
    %c0_i32_0 = arith.constant 0 : i32
    %c0_i32_1 = arith.constant 0 : i32
    return %c0_i32, %c0_i32_0 : i32, i32
  }
  func.func @transform_4(%arg0: i32) -> (i32, i32) {
    %c0_i32 = arith.constant 0 : i32
    %c0_i32_0 = arith.constant 0 : i32
    %c0_i32_1 = arith.constant 0 : i32
    return %c0_i32, %c0_i32_0 : i32, i32
  }
  func.func @transform_5(%arg0: i32) -> (i32, i32) {
    %c0_i32 = arith.constant 0 : i32
    %c0_i32_0 = arith.constant 0 : i32
    %c0_i32_1 = arith.constant 0 : i32
    return %c0_i32, %c0_i32_0 : i32, i32
  }
  func.func @transform_6(%arg0: i32) -> (i32, i32) {
    %c0_i32 = arith.constant 0 : i32
    %c0_i32_0 = arith.constant 0 : i32
    %c0_i32_1 = arith.constant 0 : i32
    return %c0_i32, %c0_i32_0 : i32, i32
  }
  func.func @transform_7(%arg0: i32) -> (i32, i32, i32, i32) {
    %c0_i32 = arith.constant 0 : i32
    %c0_i32_0 = arith.constant 0 : i32
    %c0_i32_1 = arith.constant 0 : i32
    %c0_i32_2 = arith.constant 0 : i32
    %c0_i32_3 = arith.constant 0 : i32
    return %c0_i32, %c0_i32_0, %c0_i32_1, %c0_i32_2 : i32, i32, i32, i32
  }
}

</mosaic_0001>

<llo_original>
// kernel: tpu_custom_call.1
$region0: #{tpu_custom_call.1}
  #allocation0 [shape = 'u32[]', space=smem, size = 0x4, offset = 0x4, fixed_abs, tag = 'smem constant byte address 0x4 - core index']
  #allocation1 [shape = 'u32[144,128]{1,0:T(1,128)}', space=vmem, size = 0x12000, scoped, tag = 'internal scratch']
  #allocation2 [shape = 'f32[2,18,24,128]{3,2,1,0:T(8,128)}', space=vmem, size = 0x6c000, scoped, tag = 'scratch operand']
  %s0 = inlined_call_operand.vmem [shape: bf16[2,20,26,128], index: 0, kind: input, shape index: {}]
  %s1 = inlined_call_operand.vmem [shape: bf16[1152,128], index: 1, kind: input, shape index: {}]
  %s2 = inlined_call_operand.vmem [shape: f32[1,128], index: 2, kind: input, shape index: {}]
  %s3 = inlined_call_operand.vmem [shape: f32[1,128], index: 3, kind: input, shape index: {}]
  %s4 = inlined_call_operand.vmem [shape: bf16[1152,128], index: 4, kind: input, shape index: {}]
  %s5 = inlined_call_operand.vmem [shape: f32[1,128], index: 5, kind: input, shape index: {}]
  %s6 = inlined_call_operand.vmem [shape: f32[1,128], index: 6, kind: input, shape index: {}]
  %s7 = inlined_call_operand.hbm [shape: f32[2,16,16,128], index: 7, kind: output, shape index: {}]
  %s8 = sld [smem:[#allocation0]]
  $region65: #{tpu_custom_call.1} parent=0
    _
  %s10 = ssub.s32 1, %s8
  %s11 = scalar_select 0, %s10, %s8
  $region1: #{tpu_custom_call.1} parent=0
    #allocation3 [shape = 'u8[262144]{0}', space=vmem, size = 0x40000, scoped, tag = 'output window, operand 0, single buffered']
    #allocation4 [shape = 's32[2]{0}', space=sflag, size = 0x8, scoped, tag = 'scoped memory for tpu_custom_call.1']
    %12 = vsyncpa [#allocation4], 0
    loop: start=0, step=1, limit=4
    $region2: #{tpu_custom_call.1} parent=1 // loop_pre_header
      _
    $region3: #{tpu_custom_call.1} parent=1 // loop_header
      %s14 = sphi 0, %s18
      %p15 = scmp.ge.s32.totalorder %s14, 4
      %s24 = sphi 0, %s26
      %s27 = sphi 0, %s24
      %s28 = sphi 0, %s27
      %s44 = sphi 0, %s28
      %s48 = sphi 0, %s48
      %s50 = sphi 0, %s48
      %s51 = sphi 0, %s50
      %s65 = sphi 0, %s51
      %s69 = sphi 0, %s69
      %s71 = sphi 0, %s69
      %s72 = sphi 0, %s71
      %s86 = sphi 0, %s72
      %s90 = sphi 0, %s90
      %s92 = sphi 0, %s90
      %s93 = sphi 0, %s92
      %s107 = sphi 0, %s93
      %s111 = sphi 0, %s111
      %s113 = sphi 0, %s111
      %s114 = sphi 0, %s113
      %s128 = sphi 0, %s114
      %s132 = sphi 0, %s132
      %s134 = sphi 0, %s132
      %s135 = sphi 0, %s134
      %s149 = sphi 0, %s135
      %s153 = sphi 0, %s153
      %s155 = sphi 0, %s153
      %s156 = sphi 0, %s155
      %s170 = sphi 0, %s156
      %s174 = sphi 0, %s174
      %s176 = sphi 0, %s174
      %s177 = sphi 0, %s176
      %s191 = sphi 0, %s177
    $region4: #{tpu_custom_call.1} parent=1 // loop_header_branch
      %17 = sbr.rel (%p15) target = $region8
    $region5: #{tpu_custom_call.1} parent=1 // loop_body
      %s19 = ssub.s32 %s14, 1
      %s20 = ssub.s32 %s14, 2
      %s21 = sadd.s32 %s14, 1
      %s22 = ssub.s32 %s14, %s21
      %p23 = scmp.eq.s32.totalorder %s22, 0
      %s25 = sadd.s32 %s24, 1
      %s26 = scalar_select %p23, %s24, %s25
      %p29 = pneg %p23
      %p30 = scmp.eq.s32.totalorder %s14, 1
      %p31 = por %p29, %p30
      %p32 = scmp.ne.s32.totalorder %s24, %s27
      %p33 = scmp.eq.s32.totalorder %s14, 0
      %p34 = por %p32, %p33
      %p35 = scmp.ne.s32.totalorder %s24, %s27
      %p36 = scmp.eq.s32.totalorder %s19, 1
      %p37 = por %p35, %p36
      %p38 = scmp.ne.s32.totalorder %s27, %s28
      %p39 = scmp.eq.s32.totalorder %s19, 0
      %p40 = por %p38, %p39
      %p41 = scmp.ne.s32.totalorder %s27, %s28
      %p42 = scmp.eq.s32.totalorder %s20, 1
      %p43 = por %p41, %p42
      %p45 = scmp.ne.s32.totalorder %s28, %s44
      %p46 = scmp.eq.s32.totalorder %s20, 0
      %p47 = por %p45, %p46
      %s49 = sadd.s32 %s48, 1
      %p52 = scmp.eq.s32.totalorder %s14, 1
      %p53 = scmp.ne.s32.totalorder %s48, %s50
      %p54 = scmp.eq.s32.totalorder %s14, 0
      %p55 = por %p53, %p54
      %p56 = scmp.ne.s32.totalorder %s48, %s50
      %p57 = scmp.eq.s32.totalorder %s19, 1
      %p58 = por %p56, %p57
      %p59 = scmp.ne.s32.totalorder %s50, %s51
      %p60 = scmp.eq.s32.totalorder %s19, 0
      %p61 = por %p59, %p60
      %p62 = scmp.ne.s32.totalorder %s50, %s51
      %p63 = scmp.eq.s32.totalorder %s20, 1
      %p64 = por %p62, %p63
      %p66 = scmp.ne.s32.totalorder %s51, %s65
      %p67 = scmp.eq.s32.totalorder %s20, 0
      %p68 = por %p66, %p67
      %s70 = sadd.s32 %s69, 1
      %p73 = scmp.eq.s32.totalorder %s14, 1
      %p74 = scmp.ne.s32.totalorder %s69, %s71
      %p75 = scmp.eq.s32.totalorder %s14, 0
      %p76 = por %p74, %p75
      %p77 = scmp.ne.s32.totalorder %s69, %s71
      %p78 = scmp.eq.s32.totalorder %s19, 1
      %p79 = por %p77, %p78
      %p80 = scmp.ne.s32.totalorder %s71, %s72
      %p81 = scmp.eq.s32.totalorder %s19, 0
      %p82 = por %p80, %p81
      %p83 = scmp.ne.s32.totalorder %s71, %s72
      %p84 = scmp.eq.s32.totalorder %s20, 1
      %p85 = por %p83, %p84
      %p87 = scmp.ne.s32.totalorder %s72, %s86
      %p88 = scmp.eq.s32.totalorder %s20, 0
      %p89 = por %p87, %p88
      %s91 = sadd.s32 %s90, 1
      %p94 = scmp.eq.s32.totalorder %s14, 1
      %p95 = scmp.ne.s32.totalorder %s90, %s92
      %p96 = scmp.eq.s32.totalorder %s14, 0
      %p97 = por %p95, %p96
      %p98 = scmp.ne.s32.totalorder %s90, %s92
      %p99 = scmp.eq.s32.totalorder %s19, 1
      %p100 = por %p98, %p99
      %p101 = scmp.ne.s32.totalorder %s92, %s93
      %p102 = scmp.eq.s32.totalorder %s19, 0
      %p103 = por %p101, %p102
      %p104 = scmp.ne.s32.totalorder %s92, %s93
      %p105 = scmp.eq.s32.totalorder %s20, 1
      %p106 = por %p104, %p105
      %p108 = scmp.ne.s32.totalorder %s93, %s107
      %p109 = scmp.eq.s32.totalorder %s20, 0
      %p110 = por %p108, %p109
      %s112 = sadd.s32 %s111, 1
      %p115 = scmp.eq.s32.totalorder %s14, 1
      %p116 = scmp.ne.s32.totalorder %s111, %s113
      %p117 = scmp.eq.s32.totalorder %s14, 0
      %p118 = por %p116, %p117
      %p119 = scmp.ne.s32.totalorder %s111, %s113
      %p120 = scmp.eq.s32.totalorder %s19, 1
      %p121 = por %p119, %p120
      %p122 = scmp.ne.s32.totalorder %s113, %s114
      %p123 = scmp.eq.s32.totalorder %s19, 0
      %p124 = por %p122, %p123
      %p125 = scmp.ne.s32.totalorder %s113, %s114
      %p126 = scmp.eq.s32.totalorder %s20, 1
      %p127 = por %p125, %p126
      %p129 = scmp.ne.s32.totalorder %s114, %s128
      %p130 = scmp.eq.s32.totalorder %s20, 0
      %p131 = por %p129, %p130
      %s133 = sadd.s32 %s132, 1
      %p136 = scmp.eq.s32.totalorder %s14, 1
      %p137 = scmp.ne.s32.totalorder %s132, %s134
      %p138 = scmp.eq.s32.totalorder %s14, 0
      %p139 = por %p137, %p138
      %p140 = scmp.ne.s32.totalorder %s132, %s134
      %p141 = scmp.eq.s32.totalorder %s19, 1
      %p142 = por %p140, %p141
      %p143 = scmp.ne.s32.totalorder %s134, %s135
      %p144 = scmp.eq.s32.totalorder %s19, 0
      %p145 = por %p143, %p144
      %p146 = scmp.ne.s32.totalorder %s134, %s135
      %p147 = scmp.eq.s32.totalorder %s20, 1
      %p148 = por %p146, %p147
      %p150 = scmp.ne.s32.totalorder %s135, %s149
      %p151 = scmp.eq.s32.totalorder %s20, 0
      %p152 = por %p150, %p151
      %s154 = sadd.s32 %s153, 1
      %p157 = scmp.eq.s32.totalorder %s14, 1
      %p158 = scmp.ne.s32.totalorder %s153, %s155
      %p159 = scmp.eq.s32.totalorder %s14, 0
      %p160 = por %p158, %p159
      %p161 = scmp.ne.s32.totalorder %s153, %s155
      %p162 = scmp.eq.s32.totalorder %s19, 1
      %p163 = por %p161, %p162
      %p164 = scmp.ne.s32.totalorder %s155, %s156
      %p165 = scmp.eq.s32.totalorder %s19, 0
      %p166 = por %p164, %p165
      %p167 = scmp.ne.s32.totalorder %s155, %s156
      %p168 = scmp.eq.s32.totalorder %s20, 1
      %p169 = por %p167, %p168
      %p171 = scmp.ne.s32.totalorder %s156, %s170
      %p172 = scmp.eq.s32.totalorder %s20, 0
      %p173 = por %p171, %p172
      %s175 = sadd.s32 %s174, 1
      %p178 = scmp.eq.s32.totalorder %s14, 1
      %p179 = scmp.ne.s32.totalorder %s174, %s176
      %p180 = scmp.eq.s32.totalorder %s14, 0
      %p181 = por %p179, %p180
      %p182 = scmp.ne.s32.totalorder %s174, %s176
      %p183 = scmp.eq.s32.totalorder %s19, 1
      %p184 = por %p182, %p183
      %p185 = scmp.ne.s32.totalorder %s176, %s177
      %p186 = scmp.eq.s32.totalorder %s19, 0
      %p187 = por %p185, %p186
      %p188 = scmp.ne.s32.totalorder %s176, %s177
      %p189 = scmp.eq.s32.totalorder %s20, 1
      %p190 = por %p188, %p189
      %p192 = scmp.ne.s32.totalorder %s177, %s191
      %p193 = scmp.eq.s32.totalorder %s20, 0
      %p194 = por %p192, %p193
      %p195 = scmp.le.s32.totalorder 1, %s14
      %p196 = scmp.lt.s32.totalorder %s14, 3
      %p197 = pnand %p195, %p196
      %p198 = pneg %p197
      // Predicated region
      $region9: #{tpu_custom_call.1} parent=5 // pred_check
        _
      $region10: #{tpu_custom_call.1} parent=5 // pred_check_branch
        %200 = sbr.rel (%p197) target = $region12
      $region11: #{tpu_custom_call.1} parent=5 // pred_region
        %s201 = ssub.s32 %s14, 1
        // Predicated region
        $region13: #{tpu_custom_call.1} parent=11 // pred_check
          %p202 = pneg %p61
        $region14: #{tpu_custom_call.1} parent=11 // pred_check_branch
          %204 = sbr.rel (%p202) target = $region16
        $region15: #{tpu_custom_call.1} parent=11 // pred_region
          _
        $region16: #{tpu_custom_call.1} parent=11 // pred_fallthru
          _
        // Predicated region
        $region17: #{tpu_custom_call.1} parent=11 // pred_check
          %p205 = pneg %p82
        $region18: #{tpu_custom_call.1} parent=11 // pred_check_branch
          %207 = sbr.rel (%p205) target = $region20
        $region19: #{tpu_custom_call.1} parent=11 // pred_region
          _
        $region20: #{tpu_custom_call.1} parent=11 // pred_fallthru
          _
        // Predicated region
        $region21: #{tpu_custom_call.1} parent=11 // pred_check
          %p208 = pneg %p103
        $region22: #{tpu_custom_call.1} parent=11 // pred_check_branch
          %210 = sbr.rel (%p208) target = $region24
        $region23: #{tpu_custom_call.1} parent=11 // pred_region
          _
        $region24: #{tpu_custom_call.1} parent=11 // pred_fallthru
          _
        // Predicated region
        $region25: #{tpu_custom_call.1} parent=11 // pred_check
          %p211 = pneg %p124
        $region26: #{tpu_custom_call.1} parent=11 // pred_check_branch
          %213 = sbr.rel (%p211) target = $region28
        $region27: #{tpu_custom_call.1} parent=11 // pred_region
          _
        $region28: #{tpu_custom_call.1} parent=11 // pred_fallthru
          _
        // Predicated region
        $region29: #{tpu_custom_call.1} parent=11 // pred_check
          %p214 = pneg %p145
        $region30: #{tpu_custom_call.1} parent=11 // pred_check_branch
          %216 = sbr.rel (%p214) target = $region32
        $region31: #{tpu_custom_call.1} parent=11 // pred_region
          _
        $region32: #{tpu_custom_call.1} parent=11 // pred_fallthru
          _
        // Predicated region
        $region33: #{tpu_custom_call.1} parent=11 // pred_check
          %p217 = pneg %p166
        $region34: #{tpu_custom_call.1} parent=11 // pred_check_branch
          %219 = sbr.rel (%p217) target = $region36
        $region35: #{tpu_custom_call.1} parent=11 // pred_region
          _
        $region36: #{tpu_custom_call.1} parent=11 // pred_fallthru
          _
      $region12: #{tpu_custom_call.1} parent=5 // pred_fallthru
        _
      %p220 = scmp.lt.s32.totalorder %s14, 2
      // Predicated region
      $region37: #{tpu_custom_call.1} parent=5 // pred_check
        %p221 = pneg %p220
      $region38: #{tpu_custom_call.1} parent=5 // pred_check_branch
        %223 = sbr.rel (%p221) target = $region40
      $region39: #{tpu_custom_call.1} parent=5 // pred_region
        // Predicated region
        $region41: #{tpu_custom_call.1} parent=39 // pred_check
          %p224 = pneg %p34
        $region42: #{tpu_custom_call.1} parent=39 // pred_check_branch
          %226 = sbr.rel (%p224) target = $region44
        $region43: #{tpu_custom_call.1} parent=39 // pred_region
          %p227 = scmp.lt.s32.totalorder %s14, 1
          %s228 = scalar_select %p227, %s14, 1
          %s229 = smul.addr %s228, 80
          %s230 = smul.addr %s229, 4
          %s231 = scalar_lea.vmem %s0, %s230
        $region44: #{tpu_custom_call.1} parent=39 // pred_fallthru
          _
      $region40: #{tpu_custom_call.1} parent=5 // pred_fallthru
        _
      %p232 = scmp.le.s32.totalorder 1, %s14
      %p233 = scmp.lt.s32.totalorder %s14, 3
      %p234 = pnand %p232, %p233
      %p235 = pneg %p234
      // Predicated region
      $region45: #{tpu_custom_call.1} parent=5 // pred_check
        _
      $region46: #{tpu_custom_call.1} parent=5 // pred_check_branch
        %237 = sbr.rel (%p234) target = $region48
      $region47: #{tpu_custom_call.1} parent=5 // pred_region
        %s238 = ssub.s32 %s14, 1
        %p239 = scmp.lt.s32.totalorder %s19, 1
        %s240 = scalar_select %p239, %s19, 1
        %s241 = smul.addr %s240, 80
        %s242 = smul.addr %s241, 4
        %s243 = scalar_lea.vmem %s0, %s242
        %p244 = pneg %p40
        %p245 = pneg %p37
        %p246 = pneg %p61
        %p247 = pneg %p58
        %p248 = pneg %p82
        %p249 = pneg %p79
        %p250 = pneg %p103
        %p251 = pneg %p100
        %p252 = pneg %p124
        %p253 = pneg %p121
        %p254 = pneg %p145
        %p255 = pneg %p142
        %p256 = pneg %p166
        %p257 = pneg %p163
        %p258 = pneg %p187
        %p259 = pneg %p184
        %p260 = scmp.lt.s32.totalorder %s19, 1
        %s261 = scalar_select %p260, %s19, 1
        %s262 = smul.addr %s261, 80
        %s263 = smul.addr %s262, 4
        %s264 = scalar_lea.vmem %s0, %s263
        %v266 = vld [vmem:[%s264] sm:$0xf]
        %v267 = vld [vmem:[%s264 + $0x4] sm:$0xf]
        %v268 = vld [vmem:[%s264 + $0x8] sm:$0xf]
        %v269 = vld [vmem:[%s264 + $0xc] sm:$0x1]
        %v270 = vld [vmem:[%s264 + $0x10] sm:$0xf]
        %v271 = vld [vmem:[%s264 + $0x14] sm:$0xf]
        %v272 = vld [vmem:[%s264 + $0x18] sm:$0xf]
        %v273 = vld [vmem:[%s264 + $0x1c] sm:$0x1]
        %v274 = vld [vmem:[%s264 + $0x20] sm:$0xf]
        %v275 = vld [vmem:[%s264 + $0x24] sm:$0xf]
        %v276 = vld [vmem:[%s264 + $0x28] sm:$0xf]
        %v277 = vld [vmem:[%s264 + $0x2c] sm:$0x1]
        %v278 = vld [vmem:[%s264 + $0x30] sm:$0xf]
        %v279 = vld [vmem:[%s264 + $0x34] sm:$0xf]
        %v280 = vld [vmem:[%s264 + $0x38] sm:$0xf]
        %v281 = vld [vmem:[%s264 + $0x3c] sm:$0x1]
        %v282 = vld [vmem:[%s264 + $0x40] sm:$0xf]
        %v283 = vld [vmem:[%s264 + $0x44] sm:$0xf]
        %v284 = vld [vmem:[%s264 + $0x48] sm:$0xf]
        %v285 = vld [vmem:[%s264 + $0x4c] sm:$0x1]
        %v286 = vld [vmem:[%s264 + $0x50] sm:$0xf]
        %v287 = vld [vmem:[%s264 + $0x54] sm:$0xf]
        %v288 = vld [vmem:[%s264 + $0x58] sm:$0xf]
        %v289 = vld [vmem:[%s264 + $0x5c] sm:$0x1]
        %v290 = vld [vmem:[%s264 + $0x60] sm:$0xf]
        %v291 = vld [vmem:[%s264 + $0x64] sm:$0xf]
        %v292 = vld [vmem:[%s264 + $0x68] sm:$0xf]
        %v293 = vld [vmem:[%s264 + $0x6c] sm:$0x1]
        %v294 = vld [vmem:[%s264 + $0x70] sm:$0xf]
        %v295 = vld [vmem:[%s264 + $0x74] sm:$0xf]
        %v296 = vld [vmem:[%s264 + $0x78] sm:$0xf]
        %v297 = vld [vmem:[%s264 + $0x7c] sm:$0x1]
        %v298 = vld [vmem:[%s264 + $0x80] sm:$0xf]
        %v299 = vld [vmem:[%s264 + $0x84] sm:$0xf]
        %v300 = vld [vmem:[%s264 + $0x88] sm:$0xf]
        %v301 = vld [vmem:[%s264 + $0x8c] sm:$0x1]
        %v302 = vld [vmem:[%s264 + $0x90] sm:$0xf]
        %v303 = vld [vmem:[%s264 + $0x94] sm:$0xf]
        %v304 = vld [vmem:[%s264 + $0x98] sm:$0xf]
        %v305 = vld [vmem:[%s264 + $0x9c] sm:$0x1]
        %v306 = vld [vmem:[%s264 + $0xa0] sm:$0xf]
        %v307 = vld [vmem:[%s264 + $0xa4] sm:$0xf]
        %v308 = vld [vmem:[%s264 + $0xa8] sm:$0xf]
        %v309 = vld [vmem:[%s264 + $0xac] sm:$0x1]
        %v310 = vld [vmem:[%s264 + $0xb0] sm:$0xf]
        %v311 = vld [vmem:[%s264 + $0xb4] sm:$0xf]
        %v312 = vld [vmem:[%s264 + $0xb8] sm:$0xf]
        %v313 = vld [vmem:[%s264 + $0xbc] sm:$0x1]
        %v314 = vld [vmem:[%s264 + $0xc0] sm:$0xf]
        %v315 = vld [vmem:[%s264 + $0xc4] sm:$0xf]
        %v316 = vld [vmem:[%s264 + $0xc8] sm:$0xf]
        %v317 = vld [vmem:[%s264 + $0xcc] sm:$0x1]
        %v318 = vld [vmem:[%s264 + $0xd0] sm:$0xf]
        %v319 = vld [vmem:[%s264 + $0xd4] sm:$0xf]
        %v320 = vld [vmem:[%s264 + $0xd8] sm:$0xf]
        %v321 = vld [vmem:[%s264 + $0xdc] sm:$0x1]
        %v322 = vld [vmem:[%s264 + $0xe0] sm:$0xf]
        %v323 = vld [vmem:[%s264 + $0xe4] sm:$0xf]
        %v324 = vld [vmem:[%s264 + $0xe8] sm:$0xf]
        %v325 = vld [vmem:[%s264 + $0xec] sm:$0x1]
        %v326 = vld [vmem:[%s264 + $0xf0] sm:$0xf]
        %v327 = vld [vmem:[%s264 + $0xf4] sm:$0xf]
        %v328 = vld [vmem:[%s264 + $0xf8] sm:$0xf]
        %v329 = vld [vmem:[%s264 + $0xfc] sm:$0x1]
        %v330 = vld [vmem:[%s264 + $0x100] sm:$0xf]
        %v331 = vld [vmem:[%s264 + $0x104] sm:$0xf]
        %v332 = vld [vmem:[%s264 + $0x108] sm:$0xf]
        %v333 = vld [vmem:[%s264 + $0x10c] sm:$0x1]
        %v334 = vld [vmem:[%s264 + $0x110] sm:$0xf]
        %v335 = vld [vmem:[%s264 + $0x114] sm:$0xf]
        %v336 = vld [vmem:[%s264 + $0x118] sm:$0xf]
        %v337 = vld [vmem:[%s264 + $0x11c] sm:$0x1]
        %v338 = vld [vmem:[%s264 + $0x120] sm:$0xf]
        %v339 = vld [vmem:[%s264 + $0x124] sm:$0xf]
        %v340 = vld [vmem:[%s264 + $0x128] sm:$0xf]
        %v341 = vld [vmem:[%s264 + $0x12c] sm:$0x1]
        %v342 = vld [vmem:[%s264 + $0x130] sm:$0xf]
        %v343 = vld [vmem:[%s264 + $0x134] sm:$0xf]
        %v344 = vld [vmem:[%s264 + $0x138] sm:$0xf]
        %v345 = vld [vmem:[%s264 + $0x13c] sm:$0x1]
        %v400 = vunpack.c.l.b16 %v266
        %v401 = vunpack.c.l.b16 %v267
        %v402 = vunpack.c.l.b16 %v268
        %v403 = vunpack.c.l.b16 %v270
        %v404 = vunpack.c.l.b16 %v271
        %v405 = vunpack.c.l.b16 %v272
        %v406 = vunpack.c.l.b16 %v274
        %v407 = vunpack.c.l.b16 %v275
        %v408 = vunpack.c.l.b16 %v276
        %v409 = vunpack.c.l.b16 %v278
        %v410 = vunpack.c.l.b16 %v279
        %v411 = vunpack.c.l.b16 %v280
        %v412 = vunpack.c.l.b16 %v282
        %v413 = vunpack.c.l.b16 %v283
        %v414 = vunpack.c.l.b16 %v284
        %v415 = vunpack.c.l.b16 %v286
        %v416 = vunpack.c.l.b16 %v287
        %v417 = vunpack.c.l.b16 %v288
        %v418 = vunpack.c.l.b16 %v290
        %v419 = vunpack.c.l.b16 %v291
        %v420 = vunpack.c.l.b16 %v292
        %v421 = vunpack.c.l.b16 %v294
        %v422 = vunpack.c.l.b16 %v295
        %v423 = vunpack.c.l.b16 %v296
        %v424 = vunpack.c.l.b16 %v298
        %v425 = vunpack.c.l.b16 %v299
        %v426 = vunpack.c.l.b16 %v300
        %v427 = vunpack.c.l.b16 %v302
        %v428 = vunpack.c.l.b16 %v303
        %v429 = vunpack.c.l.b16 %v304
        %v430 = vunpack.c.l.b16 %v306
        %v431 = vunpack.c.l.b16 %v307
        %v432 = vunpack.c.l.b16 %v308
        %v433 = vunpack.c.l.b16 %v310
        %v434 = vunpack.c.l.b16 %v311
        %v435 = vunpack.c.l.b16 %v312
        %v436 = vunpack.c.l.b16 %v314
        %v437 = vunpack.c.l.b16 %v315
        %v438 = vunpack.c.l.b16 %v316
        %v439 = vunpack.c.l.b16 %v318
        %v440 = vunpack.c.l.b16 %v319
        %v441 = vunpack.c.l.b16 %v320
        %v442 = vunpack.c.l.b16 %v322
        %v443 = vunpack.c.l.b16 %v323
        %v444 = vunpack.c.l.b16 %v324
        %v445 = vunpack.c.l.b16 %v326
        %v446 = vunpack.c.l.b16 %v327
        %v447 = vunpack.c.l.b16 %v328
        %v448 = vunpack.c.l.b16 %v330
        %v449 = vunpack.c.l.b16 %v331
        %v450 = vunpack.c.l.b16 %v332
        %v451 = vunpack.c.l.b16 %v334
        %v452 = vunpack.c.l.b16 %v335
        %v453 = vunpack.c.l.b16 %v336
        %v472 = vunpack.c.l.b16 %v269
        %v473 = vunpack.c.l.b16 %v273
        %v474 = vunpack.c.l.b16 %v277
        %v475 = vunpack.c.l.b16 %v281
        %v476 = vunpack.c.l.b16 %v285
        %v477 = vunpack.c.l.b16 %v289
        %v478 = vunpack.c.l.b16 %v293
        %v479 = vunpack.c.l.b16 %v297
        %v480 = vunpack.c.l.b16 %v301
        %v481 = vunpack.c.l.b16 %v305
        %v482 = vunpack.c.l.b16 %v309
        %v483 = vunpack.c.l.b16 %v313
        %v484 = vunpack.c.l.b16 %v317
        %v485 = vunpack.c.l.b16 %v321
        %v486 = vunpack.c.l.b16 %v325
        %v487 = vunpack.c.l.b16 %v329
        %v488 = vunpack.c.l.b16 %v333
        %v489 = vunpack.c.l.b16 %v337
        %v490 = vpack.c.b16 %v401, %v400
        %v491 = vpack.c.b16 %v472, %v402
        %v492 = vpack.c.b16 %v404, %v403
        %v493 = vpack.c.b16 %v473, %v405
        %v494 = vpack.c.b16 %v407, %v406
        %v495 = vpack.c.b16 %v474, %v408
        %v496 = vpack.c.b16 %v410, %v409
        %v497 = vpack.c.b16 %v475, %v411
        %v498 = vpack.c.b16 %v413, %v412
        %v499 = vpack.c.b16 %v476, %v414
        %v500 = vpack.c.b16 %v416, %v415
        %v501 = vpack.c.b16 %v477, %v417
        %v502 = vpack.c.b16 %v419, %v418
        %v503 = vpack.c.b16 %v478, %v420
        %v504 = vpack.c.b16 %v422, %v421
        %v505 = vpack.c.b16 %v479, %v423
        %v506 = vpack.c.b16 %v425, %v424
        %v507 = vpack.c.b16 %v480, %v426
        %v508 = vpack.c.b16 %v428, %v427
        %v509 = vpack.c.b16 %v481, %v429
        %v510 = vpack.c.b16 %v431, %v430
        %v511 = vpack.c.b16 %v482, %v432
        %v512 = vpack.c.b16 %v434, %v433
        %v513 = vpack.c.b16 %v483, %v435
        %v514 = vpack.c.b16 %v437, %v436
        %v515 = vpack.c.b16 %v484, %v438
        %v516 = vpack.c.b16 %v440, %v439
        %v517 = vpack.c.b16 %v485, %v441
        %v518 = vpack.c.b16 %v443, %v442
        %v519 = vpack.c.b16 %v486, %v444
        %v520 = vpack.c.b16 %v446, %v445
        %v521 = vpack.c.b16 %v487, %v447
        %v522 = vpack.c.b16 %v449, %v448
        %v523 = vpack.c.b16 %v488, %v450
        %v524 = vpack.c.b16 %v452, %v451
        %v525 = vpack.c.b16 %v489, %v453
        %vm526 = vsmask.f32 7424
        %v528 = vshrl.u32 %v490, 16
        %v530 = vshll.u32 %v490, 16
        %v532 = vrot.slane %v530, 1
        %v533 = vor.u32 %v528, %v532
        %v535 = vshll.u32 %v491, 16
        %v537 = vrot.slane %v535, 1
        %v538 = vsel %vm526, %v533, %v537
        %v539 = vshrl.u32 %v491, 16
        %v541 = vor.u32 %v539, %v537
        %v543 = vshrl.u32 %v492, 16
        %v545 = vshll.u32 %v492, 16
        %v547 = vrot.slane %v545, 1
        %v548 = vor.u32 %v543, %v547
        %v550 = vshll.u32 %v493, 16
        %v552 = vrot.slane %v550, 1
        %v553 = vsel %vm526, %v548, %v552
        %v554 = vshrl.u32 %v493, 16
        %v556 = vor.u32 %v554, %v552
        %v558 = vshrl.u32 %v494, 16
        %v560 = vshll.u32 %v494, 16
        %v562 = vrot.slane %v560, 1
        %v563 = vor.u32 %v558, %v562
        %v565 = vshll.u32 %v495, 16
        %v567 = vrot.slane %v565, 1
        %v568 = vsel %vm526, %v563, %v567
        %v569 = vshrl.u32 %v495, 16
        %v571 = vor.u32 %v569, %v567
        %v573 = vshrl.u32 %v496, 16
        %v575 = vshll.u32 %v496, 16
        %v577 = vrot.slane %v575, 1
        %v578 = vor.u32 %v573, %v577
        %v580 = vshll.u32 %v497, 16
        %v582 = vrot.slane %v580, 1
        %v583 = vsel %vm526, %v578, %v582
        %v584 = vshrl.u32 %v497, 16
        %v586 = vor.u32 %v584, %v582
        %v588 = vshrl.u32 %v498, 16
        %v590 = vshll.u32 %v498, 16
        %v592 = vrot.slane %v590, 1
        %v593 = vor.u32 %v588, %v592
        %v595 = vshll.u32 %v499, 16
        %v597 = vrot.slane %v595, 1
        %v598 = vsel %vm526, %v593, %v597
        %v599 = vshrl.u32 %v499, 16
        %v601 = vor.u32 %v599, %v597
        %v603 = vshrl.u32 %v500, 16
        %v605 = vshll.u32 %v500, 16
        %v607 = vrot.slane %v605, 1
        %v608 = vor.u32 %v603, %v607
        %v610 = vshll.u32 %v501, 16
        %v612 = vrot.slane %v610, 1
        %v613 = vsel %vm526, %v608, %v612
        %v614 = vshrl.u32 %v501, 16
        %v616 = vor.u32 %v614, %v612
        %v618 = vshrl.u32 %v502, 16
        %v620 = vshll.u32 %v502, 16
        %v622 = vrot.slane %v620, 1
        %v623 = vor.u32 %v618, %v622
        %v625 = vshll.u32 %v503, 16
        %v627 = vrot.slane %v625, 1
        %v628 = vsel %vm526, %v623, %v627
        %v629 = vshrl.u32 %v503, 16
        %v631 = vor.u32 %v629, %v627
        %v633 = vshrl.u32 %v504, 16
        %v635 = vshll.u32 %v504, 16
        %v637 = vrot.slane %v635, 1
        %v638 = vor.u32 %v633, %v637
        %v640 = vshll.u32 %v505, 16
        %v642 = vrot.slane %v640, 1
        %v643 = vsel %vm526, %v638, %v642
        %v644 = vshrl.u32 %v505, 16
        %v646 = vor.u32 %v644, %v642
        %v648 = vshrl.u32 %v506, 16
        %v650 = vshll.u32 %v506, 16
        %v652 = vrot.slane %v650, 1
        %v653 = vor.u32 %v648, %v652
        %v655 = vshll.u32 %v507, 16
        %v657 = vrot.slane %v655, 1
        %v658 = vsel %vm526, %v653, %v657
        %v659 = vshrl.u32 %v507, 16
        %v661 = vor.u32 %v659, %v657
        %v663 = vshrl.u32 %v508, 16
        %v665 = vshll.u32 %v508, 16
        %v667 = vrot.slane %v665, 1
        %v668 = vor.u32 %v663, %v667
        %v670 = vshll.u32 %v509, 16
        %v672 = vrot.slane %v670, 1
        %v673 = vsel %vm526, %v668, %v672
        %v674 = vshrl.u32 %v509, 16
        %v676 = vor.u32 %v674, %v672
        %v678 = vshrl.u32 %v510, 16
        %v680 = vshll.u32 %v510, 16
        %v682 = vrot.slane %v680, 1
        %v683 = vor.u32 %v678, %v682
        %v685 = vshll.u32 %v511, 16
        %v687 = vrot.slane %v685, 1
        %v688 = vsel %vm526, %v683, %v687
        %v689 = vshrl.u32 %v511, 16
        %v691 = vor.u32 %v689, %v687
        %v693 = vshrl.u32 %v512, 16
        %v695 = vshll.u32 %v512, 16
        %v697 = vrot.slane %v695, 1
        %v698 = vor.u32 %v693, %v697
        %v700 = vshll.u32 %v513, 16
        %v702 = vrot.slane %v700, 1
        %v703 = vsel %vm526, %v698, %v702
        %v704 = vshrl.u32 %v513, 16
        %v706 = vor.u32 %v704, %v702
        %v708 = vshrl.u32 %v514, 16
        %v710 = vshll.u32 %v514, 16
        %v712 = vrot.slane %v710, 1
        %v713 = vor.u32 %v708, %v712
        %v715 = vshll.u32 %v515, 16
        %v717 = vrot.slane %v715, 1
        %v718 = vsel %vm526, %v713, %v717
        %v719 = vshrl.u32 %v515, 16
        %v721 = vor.u32 %v719, %v717
        %v723 = vshrl.u32 %v516, 16
        %v725 = vshll.u32 %v516, 16
        %v727 = vrot.slane %v725, 1
        %v728 = vor.u32 %v723, %v727
        %v730 = vshll.u32 %v517, 16
        %v732 = vrot.slane %v730, 1
        %v733 = vsel %vm526, %v728, %v732
        %v734 = vshrl.u32 %v517, 16
        %v736 = vor.u32 %v734, %v732
        %v738 = vshrl.u32 %v518, 16
        %v740 = vshll.u32 %v518, 16
        %v742 = vrot.slane %v740, 1
        %v743 = vor.u32 %v738, %v742
        %v745 = vshll.u32 %v519, 16
        %v747 = vrot.slane %v745, 1
        %v748 = vsel %vm526, %v743, %v747
        %v749 = vshrl.u32 %v519, 16
        %v751 = vor.u32 %v749, %v747
        %v753 = vshrl.u32 %v520, 16
        %v755 = vshll.u32 %v520, 16
        %v757 = vrot.slane %v755, 1
        %v758 = vor.u32 %v753, %v757
        %v760 = vshll.u32 %v521, 16
        %v762 = vrot.slane %v760, 1
        %v763 = vsel %vm526, %v758, %v762
        %v764 = vshrl.u32 %v521, 16
        %v766 = vor.u32 %v764, %v762
        %v768 = vshrl.u32 %v522, 16
        %v770 = vshll.u32 %v522, 16
        %v772 = vrot.slane %v770, 1
        %v773 = vor.u32 %v768, %v772
        %v775 = vshll.u32 %v523, 16
        %v777 = vrot.slane %v775, 1
        %v778 = vsel %vm526, %v773, %v777
        %v779 = vshrl.u32 %v523, 16
        %v781 = vor.u32 %v779, %v777
        %v783 = vshrl.u32 %v524, 16
        %v785 = vshll.u32 %v524, 16
        %v787 = vrot.slane %v785, 1
        %v788 = vor.u32 %v783, %v787
        %v790 = vshll.u32 %v525, 16
        %v792 = vrot.slane %v790, 1
        %v793 = vsel %vm526, %v788, %v792
        %v794 = vshrl.u32 %v525, 16
        %v796 = vor.u32 %v794, %v792
        %vm797 = vcmask 1046528
        %v798 = vrot.slane %v490, 1
        %v799 = vrot.slane %v491, 1
        %v800 = vsel %vm797, %v798, %v799
        %v801 = vrot.slane %v492, 1
        %v802 = vrot.slane %v493, 1
        %v803 = vsel %vm797, %v801, %v802
        %v804 = vrot.slane %v494, 1
        %v805 = vrot.slane %v495, 1
        %v806 = vsel %vm797, %v804, %v805
        %v807 = vrot.slane %v496, 1
        %v808 = vrot.slane %v497, 1
        %v809 = vsel %vm797, %v807, %v808
        %v810 = vrot.slane %v498, 1
        %v811 = vrot.slane %v499, 1
        %v812 = vsel %vm797, %v810, %v811
        %v813 = vrot.slane %v500, 1
        %v814 = vrot.slane %v501, 1
        %v815 = vsel %vm797, %v813, %v814
        %v816 = vrot.slane %v502, 1
        %v817 = vrot.slane %v503, 1
        %v818 = vsel %vm797, %v816, %v817
        %v819 = vrot.slane %v504, 1
        %v820 = vrot.slane %v505, 1
        %v821 = vsel %vm797, %v819, %v820
        %v822 = vrot.slane %v506, 1
        %v823 = vrot.slane %v507, 1
        %v824 = vsel %vm797, %v822, %v823
        %v825 = vrot.slane %v508, 1
        %v826 = vrot.slane %v509, 1
        %v827 = vsel %vm797, %v825, %v826
        %v828 = vrot.slane %v510, 1
        %v829 = vrot.slane %v511, 1
        %v830 = vsel %vm797, %v828, %v829
        %v831 = vrot.slane %v512, 1
        %v832 = vrot.slane %v513, 1
        %v833 = vsel %vm797, %v831, %v832
        %v834 = vrot.slane %v514, 1
        %v835 = vrot.slane %v515, 1
        %v836 = vsel %vm797, %v834, %v835
        %v837 = vrot.slane %v516, 1
        %v838 = vrot.slane %v517, 1
        %v839 = vsel %vm797, %v837, %v838
        %v840 = vrot.slane %v518, 1
        %v841 = vrot.slane %v519, 1
        %v842 = vsel %vm797, %v840, %v841
        %v843 = vrot.slane %v520, 1
        %v844 = vrot.slane %v521, 1
        %v845 = vsel %vm797, %v843, %v844
        %v846 = vrot.slane %v522, 1
        %v847 = vrot.slane %v523, 1
        %v848 = vsel %vm797, %v846, %v847
        %v849 = vrot.slane %v524, 1
        %v850 = vrot.slane %v525, 1
        %v851 = vsel %vm797, %v849, %v850
        %v855 = vunpack.c.l.b16 %v338
        %v856 = vunpack.c.l.b16 %v339
        %v857 = vunpack.c.l.b16 %v340
        %v859 = vunpack.c.l.b16 %v341
        %v860 = vpack.c.b16 %v856, %v855
        %v861 = vpack.c.b16 %v859, %v857
        %v863 = vshrl.u32 %v860, 16
        %v865 = vshll.u32 %v860, 16
        %v867 = vrot.slane %v865, 1
        %v868 = vor.u32 %v863, %v867
        %v870 = vshll.u32 %v861, 16
        %v872 = vrot.slane %v870, 1
        %v873 = vsel %vm526, %v868, %v872
        %v874 = vshrl.u32 %v861, 16
        %v876 = vor.u32 %v874, %v872
        %v877 = vrot.slane %v860, 1
        %v878 = vrot.slane %v861, 1
        %v879 = vsel %vm797, %v877, %v878
        %v883 = vunpack.c.l.b16 %v342
        %v884 = vunpack.c.l.b16 %v343
        %v885 = vunpack.c.l.b16 %v344
        %v887 = vunpack.c.l.b16 %v345
        %v888 = vpack.c.b16 %v884, %v883
        %v889 = vpack.c.b16 %v887, %v885
        %v891 = vshrl.u32 %v888, 16
        %v893 = vshll.u32 %v888, 16
        %v895 = vrot.slane %v893, 1
        %v896 = vor.u32 %v891, %v895
        %v898 = vshll.u32 %v889, 16
        %v900 = vrot.slane %v898, 1
        %v901 = vsel %vm526, %v896, %v900
        %v902 = vshrl.u32 %v889, 16
        %v904 = vor.u32 %v902, %v900
        %v905 = vrot.slane %v888, 1
        %v906 = vrot.slane %v889, 1
        %v907 = vsel %vm797, %v905, %v906
        %v908 = vunpack.c.l.b16 %v538
        %v909 = vunpack.c.l.b16 %v800
        %v910 = vunpack.c.l.b16 %v553
        %v911 = vunpack.c.l.b16 %v803
        %v912 = vunpack.c.l.b16 %v568
        %v913 = vunpack.c.l.b16 %v806
        %v914 = vunpack.c.h.b16 %v538
        %v915 = vunpack.c.h.b16 %v800
        %v916 = vunpack.c.h.b16 %v553
        %v917 = vunpack.c.h.b16 %v803
        %v918 = vunpack.c.h.b16 %v568
        %v919 = vunpack.c.h.b16 %v806
        %v920 = vunpack.c.l.b16 %v541
        %v921 = vunpack.c.l.b16 %v799
        %v922 = vunpack.c.l.b16 %v556
        %v923 = vunpack.c.l.b16 %v802
        %v924 = vunpack.c.l.b16 %v571
        %v925 = vunpack.c.l.b16 %v805
        %v926 = vunpack.c.l.b16 %v583
        %v927 = vunpack.c.l.b16 %v809
        %v928 = vunpack.c.h.b16 %v583
        %v929 = vunpack.c.h.b16 %v809
        %v930 = vunpack.c.l.b16 %v586
        %v931 = vunpack.c.l.b16 %v808
        %v932 = vunpack.c.l.b16 %v598
        %v933 = vunpack.c.l.b16 %v812
        %v934 = vunpack.c.h.b16 %v598
        %v935 = vunpack.c.h.b16 %v812
        %v936 = vunpack.c.l.b16 %v601
        %v937 = vunpack.c.l.b16 %v811
        %v938 = vunpack.c.l.b16 %v613
        %v939 = vunpack.c.l.b16 %v815
        %v940 = vunpack.c.h.b16 %v613
        %v941 = vunpack.c.h.b16 %v815
        %v942 = vunpack.c.l.b16 %v616
        %v943 = vunpack.c.l.b16 %v814
        %v944 = vunpack.c.l.b16 %v628
        %v945 = vunpack.c.l.b16 %v818
        %v946 = vunpack.c.h.b16 %v628
        %v947 = vunpack.c.h.b16 %v818
        %v948 = vunpack.c.l.b16 %v631
        %v949 = vunpack.c.l.b16 %v817
        %v950 = vunpack.c.l.b16 %v643
        %v951 = vunpack.c.l.b16 %v821
        %v952 = vunpack.c.h.b16 %v643
        %v953 = vunpack.c.h.b16 %v821
        %v954 = vunpack.c.l.b16 %v646
        %v955 = vunpack.c.l.b16 %v820
        %v956 = vunpack.c.l.b16 %v658
        %v957 = vunpack.c.l.b16 %v824
        %v958 = vunpack.c.h.b16 %v658
        %v959 = vunpack.c.h.b16 %v824
        %v960 = vunpack.c.l.b16 %v661
        %v961 = vunpack.c.l.b16 %v823
        %v962 = vunpack.c.l.b16 %v673
        %v963 = vunpack.c.l.b16 %v827
        %v964 = vunpack.c.h.b16 %v673
        %v965 = vunpack.c.h.b16 %v827
        %v966 = vunpack.c.l.b16 %v676
        %v967 = vunpack.c.l.b16 %v826
        %v968 = vunpack.c.l.b16 %v688
        %v969 = vunpack.c.l.b16 %v830
        %v970 = vunpack.c.h.b16 %v688
        %v971 = vunpack.c.h.b16 %v830
        %v972 = vunpack.c.l.b16 %v691
        %v973 = vunpack.c.l.b16 %v829
        %v974 = vunpack.c.l.b16 %v703
        %v975 = vunpack.c.l.b16 %v833
        %v976 = vunpack.c.h.b16 %v703
        %v977 = vunpack.c.h.b16 %v833
        %v978 = vunpack.c.l.b16 %v706
        %v979 = vunpack.c.l.b16 %v832
        %v980 = vunpack.c.l.b16 %v718
        %v981 = vunpack.c.l.b16 %v836
        %v982 = vunpack.c.h.b16 %v718
        %v983 = vunpack.c.h.b16 %v836
        %v984 = vunpack.c.l.b16 %v721
        %v985 = vunpack.c.l.b16 %v835
        %v986 = vunpack.c.l.b16 %v733
        %v987 = vunpack.c.l.b16 %v839
        %v988 = vunpack.c.h.b16 %v733
        %v989 = vunpack.c.h.b16 %v839
        %v990 = vunpack.c.l.b16 %v736
        %v991 = vunpack.c.l.b16 %v838
        %v992 = vunpack.c.l.b16 %v748
        %v993 = vunpack.c.l.b16 %v842
        %v994 = vunpack.c.h.b16 %v748
        %v995 = vunpack.c.h.b16 %v842
        %v996 = vunpack.c.l.b16 %v751
        %v997 = vunpack.c.l.b16 %v841
        %v998 = vunpack.c.l.b16 %v763
        %v999 = vunpack.c.l.b16 %v845
        %v1000 = vunpack.c.h.b16 %v763
        %v1001 = vunpack.c.h.b16 %v845
        %v1002 = vunpack.c.l.b16 %v766
        %v1003 = vunpack.c.l.b16 %v844
        %v1004 = vunpack.c.l.b16 %v778
        %v1005 = vunpack.c.l.b16 %v848
        %v1006 = vunpack.c.h.b16 %v778
        %v1007 = vunpack.c.h.b16 %v848
        %v1008 = vunpack.c.l.b16 %v781
        %v1009 = vunpack.c.l.b16 %v847
        %v1010 = vunpack.c.l.b16 %v793
        %v1011 = vunpack.c.l.b16 %v851
        %v1012 = vunpack.c.h.b16 %v793
        %v1013 = vunpack.c.h.b16 %v851
        %v1014 = vunpack.c.l.b16 %v796
        %v1015 = vunpack.c.l.b16 %v850
        %v1016 = vunpack.c.l.b16 %v873
        %v1017 = vunpack.c.l.b16 %v879
        %v1018 = vunpack.c.h.b16 %v873
        %v1019 = vunpack.c.h.b16 %v879
        %v1020 = vunpack.c.l.b16 %v876
        %v1021 = vunpack.c.l.b16 %v878
        %v1022 = vunpack.c.l.b16 %v901
        %v1023 = vunpack.c.l.b16 %v907
        %v1024 = vunpack.c.h.b16 %v901
        %v1025 = vunpack.c.h.b16 %v907
        %v1026 = vunpack.c.l.b16 %v904
        %v1027 = vunpack.c.l.b16 %v906
        %v1028 = vld [vmem:[%s1] sm:$0xf]
        %v1029 = vld [vmem:[%s1 + $0x4] sm:$0xf]
        %v1030 = vld [vmem:[%s1 + $0x8] sm:$0xf]
        %v1031 = vld [vmem:[%s1 + $0xc] sm:$0xf]
        %v1032 = vld [vmem:[%s1 + $0x10] sm:$0xf]
        %v1033 = vld [vmem:[%s1 + $0x14] sm:$0xf]
        %v1034 = vld [vmem:[%s1 + $0x18] sm:$0xf]
        %v1035 = vld [vmem:[%s1 + $0x1c] sm:$0xf]
        %v1036 = vld [vmem:[%s1 + $0x20] sm:$0xf]
        %v1037 = vld [vmem:[%s1 + $0x24] sm:$0xf]
        %v1038 = vld [vmem:[%s1 + $0x28] sm:$0xf]
        %v1039 = vld [vmem:[%s1 + $0x2c] sm:$0xf]
        %v1040 = vld [vmem:[%s1 + $0x30] sm:$0xf]
        %v1041 = vld [vmem:[%s1 + $0x34] sm:$0xf]
        %v1042 = vld [vmem:[%s1 + $0x38] sm:$0xf]
        %v1043 = vld [vmem:[%s1 + $0x3c] sm:$0xf]
        %v1044 = vld [vmem:[%s1 + $0x40] sm:$0xf]
        %v1045 = vld [vmem:[%s1 + $0x44] sm:$0xf]
        %v1046 = vld [vmem:[%s1 + $0x48] sm:$0xf]
        %v1047 = vld [vmem:[%s1 + $0x4c] sm:$0xf]
        %v1048 = vld [vmem:[%s1 + $0x50] sm:$0xf]
        %v1049 = vld [vmem:[%s1 + $0x54] sm:$0xf]
        %v1050 = vld [vmem:[%s1 + $0x58] sm:$0xf]
        %v1051 = vld [vmem:[%s1 + $0x5c] sm:$0xf]
        %v1052 = vld [vmem:[%s1 + $0x60] sm:$0xf]
        %v1053 = vld [vmem:[%s1 + $0x64] sm:$0xf]
        %v1054 = vld [vmem:[%s1 + $0x68] sm:$0xf]
        %v1055 = vld [vmem:[%s1 + $0x6c] sm:$0xf]
        %v1056 = vld [vmem:[%s1 + $0x70] sm:$0xf]
        %v1057 = vld [vmem:[%s1 + $0x74] sm:$0xf]
        %v1058 = vld [vmem:[%s1 + $0x78] sm:$0xf]
        %v1059 = vld [vmem:[%s1 + $0x7c] sm:$0xf]
        %v1060 = vld [vmem:[%s1 + $0x80] sm:$0xf]
        %v1061 = vld [vmem:[%s1 + $0x84] sm:$0xf]
        %v1062 = vld [vmem:[%s1 + $0x88] sm:$0xf]
        %v1063 = vld [vmem:[%s1 + $0x8c] sm:$0xf]
        %v1064 = vld [vmem:[%s1 + $0x90] sm:$0xf]
        %v1065 = vld [vmem:[%s1 + $0x94] sm:$0xf]
        %v1066 = vld [vmem:[%s1 + $0x98] sm:$0xf]
        %v1067 = vld [vmem:[%s1 + $0x9c] sm:$0xf]
        %v1068 = vld [vmem:[%s1 + $0xa0] sm:$0xf]
        %v1069 = vld [vmem:[%s1 + $0xa4] sm:$0xf]
        %v1070 = vld [vmem:[%s1 + $0xa8] sm:$0xf]
        %v1071 = vld [vmem:[%s1 + $0xac] sm:$0xf]
        %v1072 = vld [vmem:[%s1 + $0xb0] sm:$0xf]
        %v1073 = vld [vmem:[%s1 + $0xb4] sm:$0xf]
        %v1074 = vld [vmem:[%s1 + $0xb8] sm:$0xf]
        %v1075 = vld [vmem:[%s1 + $0xbc] sm:$0xf]
        %v1076 = vld [vmem:[%s1 + $0xc0] sm:$0xf]
        %v1077 = vld [vmem:[%s1 + $0xc4] sm:$0xf]
        %v1078 = vld [vmem:[%s1 + $0xc8] sm:$0xf]
        %v1079 = vld [vmem:[%s1 + $0xcc] sm:$0xf]
        %v1080 = vld [vmem:[%s1 + $0xd0] sm:$0xf]
        %v1081 = vld [vmem:[%s1 + $0xd4] sm:$0xf]
        %v1082 = vld [vmem:[%s1 + $0xd8] sm:$0xf]
        %v1083 = vld [vmem:[%s1 + $0xdc] sm:$0xf]
        %v1084 = vld [vmem:[%s1 + $0xe0] sm:$0xf]
        %v1085 = vld [vmem:[%s1 + $0xe4] sm:$0xf]
        %v1086 = vld [vmem:[%s1 + $0xe8] sm:$0xf]
        %v1087 = vld [vmem:[%s1 + $0xec] sm:$0xf]
        %v1088 = vld [vmem:[%s1 + $0xf0] sm:$0xf]
        %v1089 = vld [vmem:[%s1 + $0xf4] sm:$0xf]
        %v1090 = vld [vmem:[%s1 + $0xf8] sm:$0xf]
        %v1091 = vld [vmem:[%s1 + $0xfc] sm:$0xf]
        %v1092 = vld [vmem:[%s1 + $0x100] sm:$0xf]
        %v1093 = vld [vmem:[%s1 + $0x104] sm:$0xf]
        %v1094 = vld [vmem:[%s1 + $0x108] sm:$0xf]
        %v1095 = vld [vmem:[%s1 + $0x10c] sm:$0xf]
        %v1096 = vld [vmem:[%s1 + $0x110] sm:$0xf]
        %v1097 = vld [vmem:[%s1 + $0x114] sm:$0xf]
        %v1098 = vld [vmem:[%s1 + $0x118] sm:$0xf]
        %v1099 = vld [vmem:[%s1 + $0x11c] sm:$0xf]
        %v1100 = vld [vmem:[%s1 + $0x120] sm:$0xf]
        %v1101 = vld [vmem:[%s1 + $0x124] sm:$0xf]
        %v1102 = vld [vmem:[%s1 + $0x128] sm:$0xf]
        %v1103 = vld [vmem:[%s1 + $0x12c] sm:$0xf]
        %v1104 = vld [vmem:[%s1 + $0x130] sm:$0xf]
        %v1105 = vld [vmem:[%s1 + $0x134] sm:$0xf]
        %v1106 = vld [vmem:[%s1 + $0x138] sm:$0xf]
        %v1107 = vld [vmem:[%s1 + $0x13c] sm:$0xf]
        %v1108 = vld [vmem:[%s1 + $0x140] sm:$0xf]
        %v1109 = vld [vmem:[%s1 + $0x144] sm:$0xf]
        %v1110 = vld [vmem:[%s1 + $0x148] sm:$0xf]
        %v1111 = vld [vmem:[%s1 + $0x14c] sm:$0xf]
        %v1112 = vld [vmem:[%s1 + $0x150] sm:$0xf]
        %v1113 = vld [vmem:[%s1 + $0x154] sm:$0xf]
        %v1114 = vld [vmem:[%s1 + $0x158] sm:$0xf]
        %v1115 = vld [vmem:[%s1 + $0x15c] sm:$0xf]
        %v1116 = vld [vmem:[%s1 + $0x160] sm:$0xf]
        %v1117 = vld [vmem:[%s1 + $0x164] sm:$0xf]
        %v1118 = vld [vmem:[%s1 + $0x168] sm:$0xf]
        %v1119 = vld [vmem:[%s1 + $0x16c] sm:$0xf]
        %v1120 = vld [vmem:[%s1 + $0x170] sm:$0xf]
        %v1121 = vld [vmem:[%s1 + $0x174] sm:$0xf]
        %v1122 = vld [vmem:[%s1 + $0x178] sm:$0xf]
        %v1123 = vld [vmem:[%s1 + $0x17c] sm:$0xf]
        %v1124 = vld [vmem:[%s1 + $0x180] sm:$0xf]
        %v1125 = vld [vmem:[%s1 + $0x184] sm:$0xf]
        %v1126 = vld [vmem:[%s1 + $0x188] sm:$0xf]
        %v1127 = vld [vmem:[%s1 + $0x18c] sm:$0xf]
        %v1128 = vld [vmem:[%s1 + $0x190] sm:$0xf]
        %v1129 = vld [vmem:[%s1 + $0x194] sm:$0xf]
        %v1130 = vld [vmem:[%s1 + $0x198] sm:$0xf]
        %v1131 = vld [vmem:[%s1 + $0x19c] sm:$0xf]
        %v1132 = vld [vmem:[%s1 + $0x1a0] sm:$0xf]
        %v1133 = vld [vmem:[%s1 + $0x1a4] sm:$0xf]
        %v1134 = vld [vmem:[%s1 + $0x1a8] sm:$0xf]
        %v1135 = vld [vmem:[%s1 + $0x1ac] sm:$0xf]
        %v1136 = vld [vmem:[%s1 + $0x1b0] sm:$0xf]
        %v1137 = vld [vmem:[%s1 + $0x1b4] sm:$0xf]
        %v1138 = vld [vmem:[%s1 + $0x1b8] sm:$0xf]
        %v1139 = vld [vmem:[%s1 + $0x1bc] sm:$0xf]
        %v1140 = vld [vmem:[%s1 + $0x1c0] sm:$0xf]
        %v1141 = vld [vmem:[%s1 + $0x1c4] sm:$0xf]
        %v1142 = vld [vmem:[%s1 + $0x1c8] sm:$0xf]
        %v1143 = vld [vmem:[%s1 + $0x1cc] sm:$0xf]
        %v1144 = vld [vmem:[%s1 + $0x1d0] sm:$0xf]
        %v1145 = vld [vmem:[%s1 + $0x1d4] sm:$0xf]
        %v1146 = vld [vmem:[%s1 + $0x1d8] sm:$0xf]
        %v1147 = vld [vmem:[%s1 + $0x1dc] sm:$0xf]
        %v1148 = vld [vmem:[%s1 + $0x1e0] sm:$0xf]
        %v1149 = vld [vmem:[%s1 + $0x1e4] sm:$0xf]
        %v1150 = vld [vmem:[%s1 + $0x1e8] sm:$0xf]
        %v1151 = vld [vmem:[%s1 + $0x1ec] sm:$0xf]
        %v1152 = vld [vmem:[%s1 + $0x1f0] sm:$0xf]
        %v1153 = vld [vmem:[%s1 + $0x1f4] sm:$0xf]
        %v1154 = vld [vmem:[%s1 + $0x1f8] sm:$0xf]
        %v1155 = vld [vmem:[%s1 + $0x1fc] sm:$0xf]
        %v1156 = vld [vmem:[%s1 + $0x200] sm:$0xf]
        %v1157 = vld [vmem:[%s1 + $0x204] sm:$0xf]
        %v1158 = vld [vmem:[%s1 + $0x208] sm:$0xf]
        %v1159 = vld [vmem:[%s1 + $0x20c] sm:$0xf]
        %v1160 = vld [vmem:[%s1 + $0x210] sm:$0xf]
        %v1161 = vld [vmem:[%s1 + $0x214] sm:$0xf]
        %v1162 = vld [vmem:[%s1 + $0x218] sm:$0xf]
        %v1163 = vld [vmem:[%s1 + $0x21c] sm:$0xf]
        %v1164 = vld [vmem:[%s1 + $0x220] sm:$0xf]
        %v1165 = vld [vmem:[%s1 + $0x224] sm:$0xf]
        %v1166 = vld [vmem:[%s1 + $0x228] sm:$0xf]
        %v1167 = vld [vmem:[%s1 + $0x22c] sm:$0xf]
        %v1168 = vld [vmem:[%s1 + $0x230] sm:$0xf]
        %v1169 = vld [vmem:[%s1 + $0x234] sm:$0xf]
        %v1170 = vld [vmem:[%s1 + $0x238] sm:$0xf]
        %v1171 = vld [vmem:[%s1 + $0x23c] sm:$0xf]
        %v1172 = vpack.c.b16 %v914, %v908
        %v1173 = vpack.c.b16 %v915, %v909
        %v1174 = vpack.c.b16 %v916, %v910
        %v1175 = vpack.c.b16 %v917, %v911
        %v1176 = vpack.c.b16 %v918, %v912
        %v1177 = vpack.c.b16 %v919, %v913
        %v1178 = vpack.c.b16 %v403, %v402
        %v1179 = vpack.c.b16 %v910, %v920
        %v1180 = vpack.c.b16 %v911, %v921
        %v1181 = vpack.c.b16 %v406, %v405
        %v1182 = vpack.c.b16 %v912, %v922
        %v1183 = vpack.c.b16 %v913, %v923
        %v1184 = vpack.c.b16 %v409, %v408
        %v1185 = vpack.c.b16 %v926, %v924
        %v1186 = vpack.c.b16 %v927, %v925
        %v1187 = vpack.c.b16 %v405, %v404
        %v1188 = vpack.c.b16 %v922, %v916
        %v1189 = vpack.c.b16 %v923, %v917
        %v1190 = vpack.c.b16 %v408, %v407
        %v1191 = vpack.c.b16 %v924, %v918
        %v1192 = vpack.c.b16 %v925, %v919
        %v1193 = vpack.c.b16 %v411, %v410
        %v1194 = vpack.c.b16 %v930, %v928
        %v1195 = vpack.c.b16 %v931, %v929
        %v1196 = vpack.c.b16 %v928, %v926
        %v1197 = vpack.c.b16 %v929, %v927
        %v1198 = vpack.c.b16 %v934, %v932
        %v1199 = vpack.c.b16 %v935, %v933
        %v1200 = vpack.c.b16 %v412, %v411
        %v1201 = vpack.c.b16 %v932, %v930
        %v1202 = vpack.c.b16 %v933, %v931
        %v1203 = vpack.c.b16 %v415, %v414
        %v1204 = vpack.c.b16 %v938, %v936
        %v1205 = vpack.c.b16 %v939, %v937
        %v1206 = vpack.c.b16 %v414, %v413
        %v1207 = vpack.c.b16 %v936, %v934
        %v1208 = vpack.c.b16 %v937, %v935
        %v1209 = vpack.c.b16 %v417, %v416
        %v1210 = vpack.c.b16 %v942, %v940
        %v1211 = vpack.c.b16 %v943, %v941
        %v1212 = vpack.c.b16 %v940, %v938
        %v1213 = vpack.c.b16 %v941, %v939
        %v1214 = vpack.c.b16 %v946, %v944
        %v1215 = vpack.c.b16 %v947, %v945
        %v1216 = vpack.c.b16 %v418, %v417
        %v1217 = vpack.c.b16 %v944, %v942
        %v1218 = vpack.c.b16 %v945, %v943
        %v1219 = vpack.c.b16 %v421, %v420
        %v1220 = vpack.c.b16 %v950, %v948
        %v1221 = vpack.c.b16 %v951, %v949
        %v1222 = vpack.c.b16 %v420, %v419
        %v1223 = vpack.c.b16 %v948, %v946
        %v1224 = vpack.c.b16 %v949, %v947
        %v1225 = vpack.c.b16 %v423, %v422
        %v1226 = vpack.c.b16 %v954, %v952
        %v1227 = vpack.c.b16 %v955, %v953
        %v1228 = vpack.c.b16 %v952, %v950
        %v1229 = vpack.c.b16 %v953, %v951
        %v1230 = vpack.c.b16 %v958, %v956
        %v1231 = vpack.c.b16 %v959, %v957
        %v1232 = vpack.c.b16 %v424, %v423
        %v1233 = vpack.c.b16 %v956, %v954
        %v1234 = vpack.c.b16 %v957, %v955
        %v1235 = vpack.c.b16 %v427, %v426
        %v1236 = vpack.c.b16 %v962, %v960
        %v1237 = vpack.c.b16 %v963, %v961
        %v1238 = vpack.c.b16 %v426, %v425
        %v1239 = vpack.c.b16 %v960, %v958
        %v1240 = vpack.c.b16 %v961, %v959
        %v1241 = vpack.c.b16 %v429, %v428
        %v1242 = vpack.c.b16 %v966, %v964
        %v1243 = vpack.c.b16 %v967, %v965
        %v1244 = vpack.c.b16 %v964, %v962
        %v1245 = vpack.c.b16 %v965, %v963
        %v1246 = vpack.c.b16 %v970, %v968
        %v1247 = vpack.c.b16 %v971, %v969
        %v1248 = vpack.c.b16 %v430, %v429
        %v1249 = vpack.c.b16 %v968, %v966
        %v1250 = vpack.c.b16 %v969, %v967
        %v1251 = vpack.c.b16 %v433, %v432
        %v1252 = vpack.c.b16 %v974, %v972
        %v1253 = vpack.c.b16 %v975, %v973
        %v1254 = vpack.c.b16 %v432, %v431
        %v1255 = vpack.c.b16 %v972, %v970
        %v1256 = vpack.c.b16 %v973, %v971
        %v1257 = vpack.c.b16 %v435, %v434
        %v1258 = vpack.c.b16 %v978, %v976
        %v1259 = vpack.c.b16 %v979, %v977
        %v1260 = vpack.c.b16 %v976, %v974
        %v1261 = vpack.c.b16 %v977, %v975
        %v1262 = vpack.c.b16 %v982, %v980
        %v1263 = vpack.c.b16 %v983, %v981
        %v1264 = vpack.c.b16 %v436, %v435
        %v1265 = vpack.c.b16 %v980, %v978
        %v1266 = vpack.c.b16 %v981, %v979
        %v1267 = vpack.c.b16 %v439, %v438
        %v1268 = vpack.c.b16 %v986, %v984
        %v1269 = vpack.c.b16 %v987, %v985
        %v1270 = vpack.c.b16 %v438, %v437
        %v1271 = vpack.c.b16 %v984, %v982
        %v1272 = vpack.c.b16 %v985, %v983
        %v1273 = vpack.c.b16 %v441, %v440
        %v1274 = vpack.c.b16 %v990, %v988
        %v1275 = vpack.c.b16 %v991, %v989
        %v1276 = vpack.c.b16 %v988, %v986
        %v1277 = vpack.c.b16 %v989, %v987
        %v1278 = vpack.c.b16 %v994, %v992
        %v1279 = vpack.c.b16 %v995, %v993
        %v1280 = vpack.c.b16 %v442, %v441
        %v1281 = vpack.c.b16 %v992, %v990
        %v1282 = vpack.c.b16 %v993, %v991
        %v1283 = vpack.c.b16 %v445, %v444
        %v1284 = vpack.c.b16 %v998, %v996
        %v1285 = vpack.c.b16 %v999, %v997
        %v1286 = vpack.c.b16 %v444, %v443
        %v1287 = vpack.c.b16 %v996, %v994
        %v1288 = vpack.c.b16 %v997, %v995
        %v1289 = vpack.c.b16 %v447, %v446
        %v1290 = vpack.c.b16 %v1002, %v1000
        %v1291 = vpack.c.b16 %v1003, %v1001
        %v1292 = vpack.c.b16 %v1000, %v998
        %v1293 = vpack.c.b16 %v1001, %v999
        %v1294 = vpack.c.b16 %v1006, %v1004
        %v1295 = vpack.c.b16 %v1007, %v1005
        %v1296 = vpack.c.b16 %v448, %v447
        %v1297 = vpack.c.b16 %v1004, %v1002
        %v1298 = vpack.c.b16 %v1005, %v1003
        %v1299 = vpack.c.b16 %v451, %v450
        %v1300 = vpack.c.b16 %v1010, %v1008
        %v1301 = vpack.c.b16 %v1011, %v1009
        %v1302 = vpack.c.b16 %v450, %v449
        %v1303 = vpack.c.b16 %v1008, %v1006
        %v1304 = vpack.c.b16 %v1009, %v1007
        %v1305 = vpack.c.b16 %v453, %v452
        %v1306 = vpack.c.b16 %v1014, %v1012
        %v1307 = vpack.c.b16 %v1015, %v1013
        %v1308 = vpack.c.b16 %v1012, %v1010
        %v1309 = vpack.c.b16 %v1013, %v1011
        %v1310 = vpack.c.b16 %v1018, %v1016
        %v1311 = vpack.c.b16 %v1019, %v1017
        %v1312 = vpack.c.b16 %v855, %v453
        %v1313 = vpack.c.b16 %v1016, %v1014
        %v1314 = vpack.c.b16 %v1017, %v1015
        %v1315 = vpack.c.b16 %v883, %v857
        %v1316 = vpack.c.b16 %v1022, %v1020
        %v1317 = vpack.c.b16 %v1023, %v1021
        %v1318 = vpack.c.b16 %v857, %v856
        %v1319 = vpack.c.b16 %v1020, %v1018
        %v1320 = vpack.c.b16 %v1021, %v1019
        %v1321 = vpack.c.b16 %v885, %v884
        %v1322 = vpack.c.b16 %v1026, %v1024
        %v1323 = vpack.c.b16 %v1027, %v1025
        %v1639 = vunpack.c.l.b16 %v1028
        %v1640 = vunpack.c.l.b16 %v1029
        %v1641 = vunpack.c.l.b16 %v1030
        %v1642 = vunpack.c.l.b16 %v1031
        %v1643 = vunpack.c.l.b16 %v1032
        %v1644 = vunpack.c.l.b16 %v1033
        %v1645 = vunpack.c.l.b16 %v1034
        %v1646 = vunpack.c.l.b16 %v1035
        %v1647 = vunpack.c.l.b16 %v1036
        %v1648 = vunpack.c.l.b16 %v1037
        %v1649 = vunpack.c.l.b16 %v1038
        %v1650 = vunpack.c.l.b16 %v1039
        %v1651 = vunpack.c.l.b16 %v1040
        %v1652 = vunpack.c.l.b16 %v1041
        %v1653 = vunpack.c.l.b16 %v1042
        %v1654 = vunpack.c.l.b16 %v1043
        %v1655 = vunpack.c.l.b16 %v1044
        %v1656 = vunpack.c.l.b16 %v1045
        %v1657 = vunpack.c.l.b16 %v1046
        %v1658 = vunpack.c.l.b16 %v1047
        %v1659 = vunpack.c.l.b16 %v1048
        %v1660 = vunpack.c.l.b16 %v1049
        %v1661 = vunpack.c.l.b16 %v1050
        %v1662 = vunpack.c.l.b16 %v1051
        %v1663 = vunpack.c.l.b16 %v1052
        %v1664 = vunpack.c.l.b16 %v1053
        %v1665 = vunpack.c.l.b16 %v1054
        %v1666 = vunpack.c.l.b16 %v1055
        %v1667 = vunpack.c.l.b16 %v1056
        %v1668 = vunpack.c.l.b16 %v1057
        %v1669 = vunpack.c.l.b16 %v1058
        %v1670 = vunpack.c.l.b16 %v1059
        %v1671 = vunpack.c.l.b16 %v1060
        %v1672 = vunpack.c.l.b16 %v1061
        %v1673 = vunpack.c.l.b16 %v1062
        %v1674 = vunpack.c.l.b16 %v1063
        %v1675 = vunpack.c.l.b16 %v1064
        %v1676 = vunpack.c.l.b16 %v1065
        %v1677 = vunpack.c.l.b16 %v1066
        %v1678 = vunpack.c.l.b16 %v1067
        %v1679 = vunpack.c.l.b16 %v1068
        %v1680 = vunpack.c.l.b16 %v1069
        %v1681 = vunpack.c.l.b16 %v1070
        %v1682 = vunpack.c.l.b16 %v1071
        %v1683 = vunpack.c.l.b16 %v1072
        %v1684 = vunpack.c.l.b16 %v1073
        %v1685 = vunpack.c.l.b16 %v1074
        %v1686 = vunpack.c.l.b16 %v1075
        %v1687 = vunpack.c.l.b16 %v1076
        %v1688 = vunpack.c.l.b16 %v1077
        %v1689 = vunpack.c.l.b16 %v1078
        %v1690 = vunpack.c.l.b16 %v1079
        %v1691 = vunpack.c.l.b16 %v1080
        %v1692 = vunpack.c.l.b16 %v1081
        %v1693 = vunpack.c.l.b16 %v1082
        %v1694 = vunpack.c.l.b16 %v1083
        %v1695 = vunpack.c.l.b16 %v1084
        %v1696 = vunpack.c.l.b16 %v1085
        %v1697 = vunpack.c.l.b16 %v1086
        %v1698 = vunpack.c.l.b16 %v1087
        %v1699 = vunpack.c.l.b16 %v1088
        %v1700 = vunpack.c.l.b16 %v1089
        %v1701 = vunpack.c.l.b16 %v1090
        %v1702 = vunpack.c.l.b16 %v1091
        %v1703 = vunpack.c.l.b16 %v1092
        %v1704 = vunpack.c.l.b16 %v1093
        %v1705 = vunpack.c.l.b16 %v1094
        %v1706 = vunpack.c.l.b16 %v1095
        %v1707 = vunpack.c.l.b16 %v1096
        %v1708 = vunpack.c.l.b16 %v1097
        %v1709 = vunpack.c.l.b16 %v1098
        %v1710 = vunpack.c.l.b16 %v1099
        %v1711 = vunpack.c.l.b16 %v1100
        %v1712 = vunpack.c.l.b16 %v1101
        %v1713 = vunpack.c.l.b16 %v1102
        %v1714 = vunpack.c.l.b16 %v1103
        %v1715 = vunpack.c.l.b16 %v1104
        %v1716 = vunpack.c.l.b16 %v1105
        %v1717 = vunpack.c.l.b16 %v1106
        %v1718 = vunpack.c.l.b16 %v1107
        %v1719 = vunpack.c.l.b16 %v1108
        %v1720 = vunpack.c.l.b16 %v1109
        %v1721 = vunpack.c.l.b16 %v1110
        %v1722 = vunpack.c.l.b16 %v1111
        %v1723 = vunpack.c.l.b16 %v1112
        %v1724 = vunpack.c.l.b16 %v1113
        %v1725 = vunpack.c.l.b16 %v1114
        %v1726 = vunpack.c.l.b16 %v1115
        %v1727 = vunpack.c.l.b16 %v1116
        %v1728 = vunpack.c.l.b16 %v1117
        %v1729 = vunpack.c.l.b16 %v1118
        %v1730 = vunpack.c.l.b16 %v1119
        %v1731 = vunpack.c.l.b16 %v1120
        %v1732 = vunpack.c.l.b16 %v1121
        %v1733 = vunpack.c.l.b16 %v1122
        %v1734 = vunpack.c.l.b16 %v1123
        %v1735 = vunpack.c.l.b16 %v1124
        %v1736 = vunpack.c.l.b16 %v1125
        %v1737 = vunpack.c.l.b16 %v1126
        %v1738 = vunpack.c.l.b16 %v1127
        %v1739 = vunpack.c.l.b16 %v1128
        %v1740 = vunpack.c.l.b16 %v1129
        %v1741 = vunpack.c.l.b16 %v1130
        %v1742 = vunpack.c.l.b16 %v1131
        %v1743 = vunpack.c.l.b16 %v1132
        %v1744 = vunpack.c.l.b16 %v1133
        %v1745 = vunpack.c.l.b16 %v1134
        %v1746 = vunpack.c.l.b16 %v1135
        %v1747 = vunpack.c.l.b16 %v1136
        %v1748 = vunpack.c.l.b16 %v1137
        %v1749 = vunpack.c.l.b16 %v1138
        %v1750 = vunpack.c.l.b16 %v1139
        %v1751 = vunpack.c.l.b16 %v1140
        %v1752 = vunpack.c.l.b16 %v1141
        %v1753 = vunpack.c.l.b16 %v1142
        %v1754 = vunpack.c.l.b16 %v1143
        %v1755 = vunpack.c.l.b16 %v1144
        %v1756 = vunpack.c.l.b16 %v1145
        %v1757 = vunpack.c.l.b16 %v1146
        %v1758 = vunpack.c.l.b16 %v1147
        %v1759 = vunpack.c.l.b16 %v1148
        %v1760 = vunpack.c.l.b16 %v1149
        %v1761 = vunpack.c.l.b16 %v1150
        %v1762 = vunpack.c.l.b16 %v1151
        %v1763 = vunpack.c.l.b16 %v1152
        %v1764 = vunpack.c.l.b16 %v1153
        %v1765 = vunpack.c.l.b16 %v1154
        %v1766 = vunpack.c.l.b16 %v1155
        %v1767 = vunpack.c.l.b16 %v1156
        %v1768 = vunpack.c.l.b16 %v1157
        %v1769 = vunpack.c.l.b16 %v1158
        %v1770 = vunpack.c.l.b16 %v1159
        %v1771 = vunpack.c.l.b16 %v1160
        %v1772 = vunpack.c.l.b16 %v1161
        %v1773 = vunpack.c.l.b16 %v1162
        %v1774 = vunpack.c.l.b16 %v1163
        %v1775 = vunpack.c.l.b16 %v1164
        %v1776 = vunpack.c.l.b16 %v1165
        %v1777 = vunpack.c.l.b16 %v1166
        %v1778 = vunpack.c.l.b16 %v1167
        %v1779 = vunpack.c.l.b16 %v1168
        %v1780 = vunpack.c.l.b16 %v1169
        %v1781 = vunpack.c.l.b16 %v1170
        %v1782 = vunpack.c.l.b16 %v1171
        %v1783 = vpack.c.b16 %v1640, %v1639
        %v1784 = vpack.c.b16 %v1642, %v1641
        %v1785 = vpack.c.b16 %v1644, %v1643
        %v1786 = vpack.c.b16 %v1646, %v1645
        %v1787 = vpack.c.b16 %v1648, %v1647
        %v1788 = vpack.c.b16 %v1650, %v1649
        %v1789 = vpack.c.b16 %v1652, %v1651
        %v1790 = vpack.c.b16 %v1654, %v1653
        %v1791 = vpack.c.b16 %v1656, %v1655
        %v1792 = vpack.c.b16 %v1658, %v1657
        %v1793 = vpack.c.b16 %v1660, %v1659
        %v1794 = vpack.c.b16 %v1662, %v1661
        %v1795 = vpack.c.b16 %v1664, %v1663
        %v1796 = vpack.c.b16 %v1666, %v1665
        %v1797 = vpack.c.b16 %v1668, %v1667
        %v1798 = vpack.c.b16 %v1670, %v1669
        %v1799 = vpack.c.b16 %v1672, %v1671
        %v1800 = vpack.c.b16 %v1674, %v1673
        %v1801 = vpack.c.b16 %v1676, %v1675
        %v1802 = vpack.c.b16 %v1678, %v1677
        %v1803 = vpack.c.b16 %v1680, %v1679
        %v1804 = vpack.c.b16 %v1682, %v1681
        %v1805 = vpack.c.b16 %v1684, %v1683
        %v1806 = vpack.c.b16 %v1686, %v1685
        %v1807 = vpack.c.b16 %v1688, %v1687
        %v1808 = vpack.c.b16 %v1690, %v1689
        %v1809 = vpack.c.b16 %v1692, %v1691
        %v1810 = vpack.c.b16 %v1694, %v1693
        %v1811 = vpack.c.b16 %v1696, %v1695
        %v1812 = vpack.c.b16 %v1698, %v1697
        %v1813 = vpack.c.b16 %v1700, %v1699
        %v1814 = vpack.c.b16 %v1702, %v1701
        %v1815 = vpack.c.b16 %v1704, %v1703
        %v1816 = vpack.c.b16 %v1706, %v1705
        %v1817 = vpack.c.b16 %v1708, %v1707
        %v1818 = vpack.c.b16 %v1710, %v1709
        %v1819 = vpack.c.b16 %v1712, %v1711
        %v1820 = vpack.c.b16 %v1714, %v1713
        %v1821 = vpack.c.b16 %v1716, %v1715
        %v1822 = vpack.c.b16 %v1718, %v1717
        %v1823 = vpack.c.b16 %v1720, %v1719
        %v1824 = vpack.c.b16 %v1722, %v1721
        %v1825 = vpack.c.b16 %v1724, %v1723
        %v1826 = vpack.c.b16 %v1726, %v1725
        %v1827 = vpack.c.b16 %v1728, %v1727
        %v1828 = vpack.c.b16 %v1730, %v1729
        %v1829 = vpack.c.b16 %v1732, %v1731
        %v1830 = vpack.c.b16 %v1734, %v1733
        %v1831 = vpack.c.b16 %v1736, %v1735
        %v1832 = vpack.c.b16 %v1738, %v1737
        %v1833 = vpack.c.b16 %v1740, %v1739
        %v1834 = vpack.c.b16 %v1742, %v1741
        %v1835 = vpack.c.b16 %v1744, %v1743
        %v1836 = vpack.c.b16 %v1746, %v1745
        %v1837 = vpack.c.b16 %v1748, %v1747
        %v1838 = vpack.c.b16 %v1750, %v1749
        %v1839 = vpack.c.b16 %v1752, %v1751
        %v1840 = vpack.c.b16 %v1754, %v1753
        %v1841 = vpack.c.b16 %v1756, %v1755
        %v1842 = vpack.c.b16 %v1758, %v1757
        %v1843 = vpack.c.b16 %v1760, %v1759
        %v1844 = vpack.c.b16 %v1762, %v1761
        %v1845 = vpack.c.b16 %v1764, %v1763
        %v1846 = vpack.c.b16 %v1766, %v1765
        %v1847 = vpack.c.b16 %v1768, %v1767
        %v1848 = vpack.c.b16 %v1770, %v1769
        %v1849 = vpack.c.b16 %v1772, %v1771
        %v1850 = vpack.c.b16 %v1774, %v1773
        %v1851 = vpack.c.b16 %v1776, %v1775
        %v1852 = vpack.c.b16 %v1778, %v1777
        %v1853 = vpack.c.b16 %v1780, %v1779
        %v1854 = vpack.c.b16 %v1782, %v1781
        %1927 = vmatprep.subr.bf16.mxu0 0
        %1928 = vmatpush1.bf16.msra.mxu0 %v1790
        %1929 = vmatprep.subr.bf16.mxu0 0
        %1930 = vmatpush1.bf16.msra.mxu0 %v1789
        %1931 = vmatprep.subr.bf16.mxu0 0
        %1932 = vmatpush1.bf16.msra.mxu0 %v1788
        %1933 = vmatprep.subr.bf16.mxu0 0
        %1934 = vmatpush1.bf16.msra.mxu0 %v1787
        %1935 = vmatprep.subr.bf16.mxu0 0
        %1936 = vmatpush1.bf16.msra.mxu0 %v1786
        %1937 = vmatprep.subr.bf16.mxu0 0
        %1938 = vmatpush1.bf16.msra.mxu0 %v1785
        %1939 = vmatprep.subr.bf16.mxu0 0
        %1940 = vmatpush1.bf16.msra.mxu0 %v1784
        %1941 = vmatprep.subr.bf16.mxu0 0
        %1942 = vmatpush1.bf16.msra.mxu0 %v1783
        %1943 = vmatprep.subr.bf16.mxu0 0
        %1944 = vmatpush2.bf16.msra.mxu0 %v1798
        %1945 = vmatprep.subr.bf16.mxu0 0
        %1946 = vmatpush2.bf16.msra.mxu0 %v1797
        %1947 = vmatprep.subr.bf16.mxu0 0
        %1948 = vmatpush2.bf16.msra.mxu0 %v1796
        %1949 = vmatprep.subr.bf16.mxu0 0
        %1950 = vmatpush2.bf16.msra.mxu0 %v1795
        %1951 = vmatprep.subr.bf16.mxu0 0
        %1952 = vmatpush2.bf16.msra.mxu0 %v1794
        %1953 = vmatprep.subr.bf16.mxu0 0
        %1954 = vmatpush2.bf16.msra.mxu0 %v1793
        %1955 = vmatprep.subr.bf16.mxu0 0
        %1956 = vmatpush2.bf16.msra.mxu0 %v1792
        %1957 = vmatprep.subr.bf16.mxu0 0
        %1958 = vmatpush2.bf16.msra.mxu0 %v1791
        %1959 = vmatprep.mubr.bf16.mxu0 %v1172
        %1960 = vmatmul.mubr.bf16.gmra.mxu0 %v490
        %v1961 = vpop.f32.mrf.mxu0
        %v1962 = vadd.f32 0.0, %v1961
        %v1963 = vpop.f32.mrf.mxu0
        %v1964 = vpop.f32.mrf.mxu0
        %v1965 = vadd.f32 0.0, %v1964
        %v1966 = vpop.f32.mrf.mxu0
        %1967 = vmatprep.mubr.bf16.mxu0 %v1179
        %1968 = vmatmul.mubr.bf16.gmra.mxu0 %v1178
        %v1969 = vpop.f32.mrf.mxu0
        %v1970 = vadd.f32 0.0, %v1969
        %v1971 = vpop.f32.mrf.mxu0
        %v1972 = vpop.f32.mrf.mxu0
        %v1973 = vadd.f32 0.0, %v1972
        %v1974 = vpop.f32.mrf.mxu0
        %1975 = vmatprep.mubr.bf16.mxu0 %v1188
        %1976 = vmatmul.mubr.bf16.gmra.mxu0 %v1187
        %v1977 = vpop.f32.mrf.mxu0
        %v1978 = vadd.f32 0.0, %v1977
        %v1979 = vpop.f32.mrf.mxu0
        %v1980 = vpop.f32.mrf.mxu0
        %v1981 = vadd.f32 0.0, %v1980
        %v1982 = vpop.f32.mrf.mxu0
        %1983 = vmatprep.mubr.bf16.mxu0 %v1176
        %1984 = vmatmul.mubr.bf16.gmra.mxu0 %v494
        %v1985 = vpop.f32.mrf.mxu0
        %v1986 = vadd.f32 0.0, %v1985
        %v1987 = vpop.f32.mrf.mxu0
        %v1988 = vpop.f32.mrf.mxu0
        %v1989 = vadd.f32 0.0, %v1988
        %v1990 = vpop.f32.mrf.mxu0
        %1991 = vmatprep.mubr.bf16.mxu0 %v1185
        %1992 = vmatmul.mubr.bf16.gmra.mxu0 %v1184
        %v1993 = vpop.f32.mrf.mxu0
        %v1994 = vadd.f32 0.0, %v1993
        %v1995 = vpop.f32.mrf.mxu0
        %v1996 = vpop.f32.mrf.mxu0
        %v1997 = vadd.f32 0.0, %v1996
        %v1998 = vpop.f32.mrf.mxu0
        %1999 = vmatprep.mubr.bf16.mxu0 %v1194
        %2000 = vmatmul.mubr.bf16.gmra.mxu0 %v1193
        %v2001 = vpop.f32.mrf.mxu0
        %v2002 = vadd.f32 0.0, %v2001
        %v2003 = vpop.f32.mrf.mxu0
        %v2004 = vpop.f32.mrf.mxu0
        %v2005 = vadd.f32 0.0, %v2004
        %v2006 = vpop.f32.mrf.mxu0
        %2007 = vmatprep.mubr.bf16.mxu0 %v1198
        %2008 = vmatmul.mubr.bf16.gmra.mxu0 %v498
        %v2009 = vpop.f32.mrf.mxu0
        %v2010 = vadd.f32 0.0, %v2009
        %v2011 = vpop.f32.mrf.mxu0
        %v2012 = vpop.f32.mrf.mxu0
        %v2013 = vadd.f32 0.0, %v2012
        %v2014 = vpop.f32.mrf.mxu0
        %2015 = vmatprep.mubr.bf16.mxu0 %v1204
        %2016 = vmatmul.mubr.bf16.gmra.mxu0 %v1203
        %v2017 = vpop.f32.mrf.mxu0
        %v2018 = vadd.f32 0.0, %v2017
        %v2019 = vpop.f32.mrf.mxu0
        %v2020 = vpop.f32.mrf.mxu0
        %v2021 = vadd.f32 0.0, %v2020
        %v2022 = vpop.f32.mrf.mxu0
        %2023 = vmatprep.mubr.bf16.mxu0 %v1210
        %2024 = vmatmul.mubr.bf16.gmra.mxu0 %v1209
        %v2025 = vpop.f32.mrf.mxu0
        %v2026 = vadd.f32 0.0, %v2025
        %v2027 = vpop.f32.mrf.mxu0
        %v2028 = vpop.f32.mrf.mxu0
        %v2029 = vadd.f32 0.0, %v2028
        %v2030 = vpop.f32.mrf.mxu0
        %2031 = vmatprep.mubr.bf16.mxu0 %v1214
        %2032 = vmatmul.mubr.bf16.gmra.mxu0 %v502
        %v2033 = vpop.f32.mrf.mxu0
        %v2034 = vadd.f32 0.0, %v2033
        %v2035 = vpop.f32.mrf.mxu0
        %v2036 = vpop.f32.mrf.mxu0
        %v2037 = vadd.f32 0.0, %v2036
        %v2038 = vpop.f32.mrf.mxu0
        %2039 = vmatprep.mubr.bf16.mxu0 %v1220
        %2040 = vmatmul.mubr.bf16.gmra.mxu0 %v1219
        %v2041 = vpop.f32.mrf.mxu0
        %v2042 = vadd.f32 0.0, %v2041
        %v2043 = vpop.f32.mrf.mxu0
        %v2044 = vpop.f32.mrf.mxu0
        %v2045 = vadd.f32 0.0, %v2044
        %v2046 = vpop.f32.mrf.mxu0
        %2047 = vmatprep.mubr.bf16.mxu0 %v1226
        %2048 = vmatmul.mubr.bf16.gmra.mxu0 %v1225
        %v2049 = vpop.f32.mrf.mxu0
        %v2050 = vadd.f32 0.0, %v2049
        %v2051 = vpop.f32.mrf.mxu0
        %v2052 = vpop.f32.mrf.mxu0
        %v2053 = vadd.f32 0.0, %v2052
        %v2054 = vpop.f32.mrf.mxu0
        %2055 = vmatprep.mubr.bf16.mxu0 %v1230
        %2056 = vmatmul.mubr.bf16.gmra.mxu0 %v506
        %v2057 = vpop.f32.mrf.mxu0
        %v2058 = vadd.f32 0.0, %v2057
        %v2059 = vpop.f32.mrf.mxu0
        %v2060 = vpop.f32.mrf.mxu0
        %v2061 = vadd.f32 0.0, %v2060
        %v2062 = vpop.f32.mrf.mxu0
        %2063 = vmatprep.mubr.bf16.mxu0 %v1236
        %2064 = vmatmul.mubr.bf16.gmra.mxu0 %v1235
        %v2065 = vpop.f32.mrf.mxu0
        %v2066 = vadd.f32 0.0, %v2065
        %v2067 = vpop.f32.mrf.mxu0
        %v2068 = vpop.f32.mrf.mxu0
        %v2069 = vadd.f32 0.0, %v2068
        %v2070 = vpop.f32.mrf.mxu0
        %2071 = vmatprep.mubr.bf16.mxu0 %v1242
        %2072 = vmatmul.mubr.bf16.gmra.mxu0 %v1241
        %v2073 = vpop.f32.mrf.mxu0
        %v2074 = vadd.f32 0.0, %v2073
        %v2075 = vpop.f32.mrf.mxu0
        %v2076 = vpop.f32.mrf.mxu0
        %v2077 = vadd.f32 0.0, %v2076
        %v2078 = vpop.f32.mrf.mxu0
        %2079 = vmatprep.mubr.bf16.mxu0 %v1246
        %2080 = vmatmul.mubr.bf16.gmra.mxu0 %v510
        %v2081 = vpop.f32.mrf.mxu0
        %v2082 = vadd.f32 0.0, %v2081
        %v2083 = vpop.f32.mrf.mxu0
        %v2084 = vpop.f32.mrf.mxu0
        %v2085 = vadd.f32 0.0, %v2084
        %v2086 = vpop.f32.mrf.mxu0
        %2087 = vmatprep.mubr.bf16.mxu0 %v1252
        %2088 = vmatmul.mubr.bf16.gmra.mxu0 %v1251
        %v2089 = vpop.f32.mrf.mxu0
        %v2090 = vadd.f32 0.0, %v2089
        %v2091 = vpop.f32.mrf.mxu0
        %v2092 = vpop.f32.mrf.mxu0
        %v2093 = vadd.f32 0.0, %v2092
        %v2094 = vpop.f32.mrf.mxu0
        %2095 = vmatprep.mubr.bf16.mxu0 %v1258
        %2096 = vmatmul.mubr.bf16.gmra.mxu0 %v1257
        %v2097 = vpop.f32.mrf.mxu0
        %v2098 = vadd.f32 0.0, %v2097
        %v2099 = vpop.f32.mrf.mxu0
        %v2100 = vpop.f32.mrf.mxu0
        %v2101 = vadd.f32 0.0, %v2100
        %v2102 = vpop.f32.mrf.mxu0
        %2103 = vmatprep.mubr.bf16.mxu0 %v1262
        %2104 = vmatmul.mubr.bf16.gmra.mxu0 %v514
        %v2105 = vpop.f32.mrf.mxu0
        %v2106 = vadd.f32 0.0, %v2105
        %v2107 = vpop.f32.mrf.mxu0
        %v2108 = vpop.f32.mrf.mxu0
        %v2109 = vadd.f32 0.0, %v2108
        %v2110 = vpop.f32.mrf.mxu0
        %2111 = vmatprep.mubr.bf16.mxu0 %v1268
        %2112 = vmatmul.mubr.bf16.gmra.mxu0 %v1267
        %v2113 = vpop.f32.mrf.mxu0
        %v2114 = vadd.f32 0.0, %v2113
        %v2115 = vpop.f32.mrf.mxu0
        %v2116 = vpop.f32.mrf.mxu0
        %v2117 = vadd.f32 0.0, %v2116
        %v2118 = vpop.f32.mrf.mxu0
        %2119 = vmatprep.mubr.bf16.mxu0 %v1274
        %2120 = vmatmul.mubr.bf16.gmra.mxu0 %v1273
        %v2121 = vpop.f32.mrf.mxu0
        %v2122 = vadd.f32 0.0, %v2121
        %v2123 = vpop.f32.mrf.mxu0
        %v2124 = vpop.f32.mrf.mxu0
        %v2125 = vadd.f32 0.0, %v2124
        %v2126 = vpop.f32.mrf.mxu0
        %2127 = vmatprep.mubr.bf16.mxu0 %v1278
        %2128 = vmatmul.mubr.bf16.gmra.mxu0 %v518
        %v2129 = vpop.f32.mrf.mxu0
        %v2130 = vadd.f32 0.0, %v2129
        %v2131 = vpop.f32.mrf.mxu0
        %v2132 = vpop.f32.mrf.mxu0
        %v2133 = vadd.f32 0.0, %v2132
        %v2134 = vpop.f32.mrf.mxu0
        %2135 = vmatprep.mubr.bf16.mxu0 %v1284
        %2136 = vmatmul.mubr.bf16.gmra.mxu0 %v1283
        %v2137 = vpop.f32.mrf.mxu0
        %v2138 = vadd.f32 0.0, %v2137
        %v2139 = vpop.f32.mrf.mxu0
        %v2140 = vpop.f32.mrf.mxu0
        %v2141 = vadd.f32 0.0, %v2140
        %v2142 = vpop.f32.mrf.mxu0
        %2143 = vmatprep.mubr.bf16.mxu0 %v1290
        %2144 = vmatmul.mubr.bf16.gmra.mxu0 %v1289
        %v2145 = vpop.f32.mrf.mxu0
        %v2146 = vadd.f32 0.0, %v2145
        %v2147 = vpop.f32.mrf.mxu0
        %v2148 = vpop.f32.mrf.mxu0
        %v2149 = vadd.f32 0.0, %v2148
        %v2150 = vpop.f32.mrf.mxu0
        %2151 = vmatprep.mubr.bf16.mxu0 %v1294
        %2152 = vmatmul.mubr.bf16.gmra.mxu0 %v522
        %v2153 = vpop.f32.mrf.mxu0
        %v2154 = vadd.f32 0.0, %v2153
        %v2155 = vpop.f32.mrf.mxu0
        %v2156 = vpop.f32.mrf.mxu0
        %v2157 = vadd.f32 0.0, %v2156
        %v2158 = vpop.f32.mrf.mxu0
        %2159 = vmatprep.mubr.bf16.mxu0 %v1300
        %2160 = vmatmul.mubr.bf16.gmra.mxu0 %v1299
        %v2161 = vpop.f32.mrf.mxu0
        %v2162 = vadd.f32 0.0, %v2161
        %v2163 = vpop.f32.mrf.mxu0
        %v2164 = vpop.f32.mrf.mxu0
        %v2165 = vadd.f32 0.0, %v2164
        %v2166 = vpop.f32.mrf.mxu0
        %2167 = vmatprep.mubr.bf16.mxu0 %v1306
        %2168 = vmatmul.mubr.bf16.gmra.mxu0 %v1305
        %v2169 = vpop.f32.mrf.mxu0
        %v2170 = vadd.f32 0.0, %v2169
        %v2171 = vpop.f32.mrf.mxu0
        %v2172 = vpop.f32.mrf.mxu0
        %v2173 = vadd.f32 0.0, %v2172
        %v2174 = vpop.f32.mrf.mxu0
        %2175 = vdwg.mxu0
        %2176 = vmatprep.subr.bf16.mxu0 0
        %2177 = vmatpush1.bf16.msra.mxu0 %v1806
        %2178 = vmatprep.subr.bf16.mxu0 0
        %2179 = vmatpush1.bf16.msra.mxu0 %v1805
        %2180 = vmatprep.subr.bf16.mxu0 0
        %2181 = vmatpush1.bf16.msra.mxu0 %v1804
        %2182 = vmatprep.subr.bf16.mxu0 0
        %2183 = vmatpush1.bf16.msra.mxu0 %v1803
        %2184 = vmatprep.subr.bf16.mxu0 0
        %2185 = vmatpush1.bf16.msra.mxu0 %v1802
        %2186 = vmatprep.subr.bf16.mxu0 0
        %2187 = vmatpush1.bf16.msra.mxu0 %v1801
        %2188 = vmatprep.subr.bf16.mxu0 0
        %2189 = vmatpush1.bf16.msra.mxu0 %v1800
        %2190 = vmatprep.subr.bf16.mxu0 0
        %2191 = vmatpush1.bf16.msra.mxu0 %v1799
        %2192 = vmatprep.subr.bf16.mxu0 0
        %2193 = vmatpush2.bf16.msra.mxu0 %v1814
        %2194 = vmatprep.subr.bf16.mxu0 0
        %2195 = vmatpush2.bf16.msra.mxu0 %v1813
        %2196 = vmatprep.subr.bf16.mxu0 0
        %2197 = vmatpush2.bf16.msra.mxu0 %v1812
        %2198 = vmatprep.subr.bf16.mxu0 0
        %2199 = vmatpush2.bf16.msra.mxu0 %v1811
        %2200 = vmatprep.subr.bf16.mxu0 0
        %2201 = vmatpush2.bf16.msra.mxu0 %v1810
        %2202 = vmatprep.subr.bf16.mxu0 0
        %2203 = vmatpush2.bf16.msra.mxu0 %v1809
        %2204 = vmatprep.subr.bf16.mxu0 0
        %2205 = vmatpush2.bf16.msra.mxu0 %v1808
        %2206 = vmatprep.subr.bf16.mxu0 0
        %2207 = vmatpush2.bf16.msra.mxu0 %v1807
        %2208 = vmatprep.mubr.bf16.mxu0 %v492
        %2209 = vmatmul.mubr.bf16.gmra.mxu0 %v1173
        %v2210 = vpop.f32.mrf.mxu0
        %v2211 = vadd.f32 %v1962, %v2210
        %v2212 = vpop.f32.mrf.mxu0
        %v2213 = vpop.f32.mrf.mxu0
        %v2214 = vadd.f32 %v1965, %v2213
        %v2215 = vpop.f32.mrf.mxu0
        %2216 = vmatprep.mubr.bf16.mxu0 %v1181
        %2217 = vmatmul.mubr.bf16.gmra.mxu0 %v1180
        %v2218 = vpop.f32.mrf.mxu0
        %v2219 = vadd.f32 %v1970, %v2218
        %v2220 = vpop.f32.mrf.mxu0
        %v2221 = vpop.f32.mrf.mxu0
        %v2222 = vadd.f32 %v1973, %v2221
        %v2223 = vpop.f32.mrf.mxu0
        %2224 = vmatprep.mubr.bf16.mxu0 %v1190
        %2225 = vmatmul.mubr.bf16.gmra.mxu0 %v1189
        %v2226 = vpop.f32.mrf.mxu0
        %v2227 = vadd.f32 %v1978, %v2226
        %v2228 = vpop.f32.mrf.mxu0
        %v2229 = vpop.f32.mrf.mxu0
        %v2230 = vadd.f32 %v1981, %v2229
        %v2231 = vpop.f32.mrf.mxu0
        %2232 = vmatprep.mubr.bf16.mxu0 %v496
        %2233 = vmatmul.mubr.bf16.gmra.mxu0 %v1177
        %v2234 = vpop.f32.mrf.mxu0
        %v2235 = vadd.f32 %v1986, %v2234
        %v2236 = vpop.f32.mrf.mxu0
        %v2237 = vpop.f32.mrf.mxu0
        %v2238 = vadd.f32 %v1989, %v2237
        %v2239 = vpop.f32.mrf.mxu0
        %2240 = vmatprep.mubr.bf16.mxu0 %v1200
        %2241 = vmatmul.mubr.bf16.gmra.mxu0 %v1186
        %v2242 = vpop.f32.mrf.mxu0
        %v2243 = vadd.f32 %v1994, %v2242
        %v2244 = vpop.f32.mrf.mxu0
        %v2245 = vpop.f32.mrf.mxu0
        %v2246 = vadd.f32 %v1997, %v2245
        %v2247 = vpop.f32.mrf.mxu0
        %2248 = vmatprep.mubr.bf16.mxu0 %v1206
        %2249 = vmatmul.mubr.bf16.gmra.mxu0 %v1195
        %v2250 = vpop.f32.mrf.mxu0
        %v2251 = vadd.f32 %v2002, %v2250
        %v2252 = vpop.f32.mrf.mxu0
        %v2253 = vpop.f32.mrf.mxu0
        %v2254 = vadd.f32 %v2005, %v2253
        %v2255 = vpop.f32.mrf.mxu0
        %2256 = vmatprep.mubr.bf16.mxu0 %v500
        %2257 = vmatmul.mubr.bf16.gmra.mxu0 %v1199
        %v2258 = vpop.f32.mrf.mxu0
        %v2259 = vadd.f32 %v2010, %v2258
        %v2260 = vpop.f32.mrf.mxu0
        %v2261 = vpop.f32.mrf.mxu0
        %v2262 = vadd.f32 %v2013, %v2261
        %v2263 = vpop.f32.mrf.mxu0
        %2264 = vmatprep.mubr.bf16.mxu0 %v1216
        %2265 = vmatmul.mubr.bf16.gmra.mxu0 %v1205
        %v2266 = vpop.f32.mrf.mxu0
        %v2267 = vadd.f32 %v2018, %v2266
        %v2268 = vpop.f32.mrf.mxu0
        %v2269 = vpop.f32.mrf.mxu0
        %v2270 = vadd.f32 %v2021, %v2269
        %v2271 = vpop.f32.mrf.mxu0
        %2272 = vmatprep.mubr.bf16.mxu0 %v1222
        %2273 = vmatmul.mubr.bf16.gmra.mxu0 %v1211
        %v2274 = vpop.f32.mrf.mxu0
        %v2275 = vadd.f32 %v2026, %v2274
        %v2276 = vpop.f32.mrf.mxu0
        %v2277 = vpop.f32.mrf.mxu0
        %v2278 = vadd.f32 %v2029, %v2277
        %v2279 = vpop.f32.mrf.mxu0
        %2280 = vmatprep.mubr.bf16.mxu0 %v504
        %2281 = vmatmul.mubr.bf16.gmra.mxu0 %v1215
        %v2282 = vpop.f32.mrf.mxu0
        %v2283 = vadd.f32 %v2034, %v2282
        %v2284 = vpop.f32.mrf.mxu0
        %v2285 = vpop.f32.mrf.mxu0
        %v2286 = vadd.f32 %v2037, %v2285
        %v2287 = vpop.f32.mrf.mxu0
        %2288 = vmatprep.mubr.bf16.mxu0 %v1232
        %2289 = vmatmul.mubr.bf16.gmra.mxu0 %v1221
        %v2290 = vpop.f32.mrf.mxu0
        %v2291 = vadd.f32 %v2042, %v2290
        %v2292 = vpop.f32.mrf.mxu0
        %v2293 = vpop.f32.mrf.mxu0
        %v2294 = vadd.f32 %v2045, %v2293
        %v2295 = vpop.f32.mrf.mxu0
        %2296 = vmatprep.mubr.bf16.mxu0 %v1238
        %2297 = vmatmul.mubr.bf16.gmra.mxu0 %v1227
        %v2298 = vpop.f32.mrf.mxu0
        %v2299 = vadd.f32 %v2050, %v2298
        %v2300 = vpop.f32.mrf.mxu0
        %v2301 = vpop.f32.mrf.mxu0
        %v2302 = vadd.f32 %v2053, %v2301
        %v2303 = vpop.f32.mrf.mxu0
        %2304 = vmatprep.mubr.bf16.mxu0 %v508
        %2305 = vmatmul.mubr.bf16.gmra.mxu0 %v1231
        %v2306 = vpop.f32.mrf.mxu0
        %v2307 = vadd.f32 %v2058, %v2306
        %v2308 = vpop.f32.mrf.mxu0
        %v2309 = vpop.f32.mrf.mxu0
        %v2310 = vadd.f32 %v2061, %v2309
        %v2311 = vpop.f32.mrf.mxu0
        %2312 = vmatprep.mubr.bf16.mxu0 %v1248
        %2313 = vmatmul.mubr.bf16.gmra.mxu0 %v1237
        %v2314 = vpop.f32.mrf.mxu0
        %v2315 = vadd.f32 %v2066, %v2314
        %v2316 = vpop.f32.mrf.mxu0
        %v2317 = vpop.f32.mrf.mxu0
        %v2318 = vadd.f32 %v2069, %v2317
        %v2319 = vpop.f32.mrf.mxu0
        %2320 = vmatprep.mubr.bf16.mxu0 %v1254
        %2321 = vmatmul.mubr.bf16.gmra.mxu0 %v1243
        %v2322 = vpop.f32.mrf.mxu0
        %v2323 = vadd.f32 %v2074, %v2322
        %v2324 = vpop.f32.mrf.mxu0
        %v2325 = vpop.f32.mrf.mxu0
        %v2326 = vadd.f32 %v2077, %v2325
        %v2327 = vpop.f32.mrf.mxu0
        %2328 = vmatprep.mubr.bf16.mxu0 %v512
        %2329 = vmatmul.mubr.bf16.gmra.mxu0 %v1247
        %v2330 = vpop.f32.mrf.mxu0
        %v2331 = vadd.f32 %v2082, %v2330
        %v2332 = vpop.f32.mrf.mxu0
        %v2333 = vpop.f32.mrf.mxu0
        %v2334 = vadd.f32 %v2085, %v2333
        %v2335 = vpop.f32.mrf.mxu0
        %2336 = vmatprep.mubr.bf16.mxu0 %v1264
        %2337 = vmatmul.mubr.bf16.gmra.mxu0 %v1253
        %v2338 = vpop.f32.mrf.mxu0
        %v2339 = vadd.f32 %v2090, %v2338
        %v2340 = vpop.f32.mrf.mxu0
        %v2341 = vpop.f32.mrf.mxu0
        %v2342 = vadd.f32 %v2093, %v2341
        %v2343 = vpop.f32.mrf.mxu0
        %2344 = vmatprep.mubr.bf16.mxu0 %v1270
        %2345 = vmatmul.mubr.bf16.gmra.mxu0 %v1259
        %v2346 = vpop.f32.mrf.mxu0
        %v2347 = vadd.f32 %v2098, %v2346
        %v2348 = vpop.f32.mrf.mxu0
        %v2349 = vpop.f32.mrf.mxu0
        %v2350 = vadd.f32 %v2101, %v2349
        %v2351 = vpop.f32.mrf.mxu0
        %2352 = vmatprep.mubr.bf16.mxu0 %v516
        %2353 = vmatmul.mubr.bf16.gmra.mxu0 %v1263
        %v2354 = vpop.f32.mrf.mxu0
        %v2355 = vadd.f32 %v2106, %v2354
        %v2356 = vpop.f32.mrf.mxu0
        %v2357 = vpop.f32.mrf.mxu0
        %v2358 = vadd.f32 %v2109, %v2357
        %v2359 = vpop.f32.mrf.mxu0
        %2360 = vmatprep.mubr.bf16.mxu0 %v1280
        %2361 = vmatmul.mubr.bf16.gmra.mxu0 %v1269
        %v2362 = vpop.f32.mrf.mxu0
        %v2363 = vadd.f32 %v2114, %v2362
        %v2364 = vpop.f32.mrf.mxu0
        %v2365 = vpop.f32.mrf.mxu0
        %v2366 = vadd.f32 %v2117, %v2365
        %v2367 = vpop.f32.mrf.mxu0
        %2368 = vmatprep.mubr.bf16.mxu0 %v1286
        %2369 = vmatmul.mubr.bf16.gmra.mxu0 %v1275
        %v2370 = vpop.f32.mrf.mxu0
        %v2371 = vadd.f32 %v2122, %v2370
        %v2372 = vpop.f32.mrf.mxu0
        %v2373 = vpop.f32.mrf.mxu0
        %v2374 = vadd.f32 %v2125, %v2373
        %v2375 = vpop.f32.mrf.mxu0
        %2376 = vmatprep.mubr.bf16.mxu0 %v520
        %2377 = vmatmul.mubr.bf16.gmra.mxu0 %v1279
        %v2378 = vpop.f32.mrf.mxu0
        %v2379 = vadd.f32 %v2130, %v2378
        %v2380 = vpop.f32.mrf.mxu0
        %v2381 = vpop.f32.mrf.mxu0
        %v2382 = vadd.f32 %v2133, %v2381
        %v2383 = vpop.f32.mrf.mxu0
        %2384 = vmatprep.mubr.bf16.mxu0 %v1296
        %2385 = vmatmul.mubr.bf16.gmra.mxu0 %v1285
        %v2386 = vpop.f32.mrf.mxu0
        %v2387 = vadd.f32 %v2138, %v2386
        %v2388 = vpop.f32.mrf.mxu0
        %v2389 = vpop.f32.mrf.mxu0
        %v2390 = vadd.f32 %v2141, %v2389
        %v2391 = vpop.f32.mrf.mxu0
        %2392 = vmatprep.mubr.bf16.mxu0 %v1302
        %2393 = vmatmul.mubr.bf16.gmra.mxu0 %v1291
        %v2394 = vpop.f32.mrf.mxu0
        %v2395 = vadd.f32 %v2146, %v2394
        %v2396 = vpop.f32.mrf.mxu0
        %v2397 = vpop.f32.mrf.mxu0
        %v2398 = vadd.f32 %v2149, %v2397
        %v2399 = vpop.f32.mrf.mxu0
        %2400 = vmatprep.mubr.bf16.mxu0 %v524
        %2401 = vmatmul.mubr.bf16.gmra.mxu0 %v1295
        %v2402 = vpop.f32.mrf.mxu0
        %v2403 = vadd.f32 %v2154, %v2402
        %v2404 = vpop.f32.mrf.mxu0
        %v2405 = vpop.f32.mrf.mxu0
        %v2406 = vadd.f32 %v2157, %v2405
        %v2407 = vpop.f32.mrf.mxu0
        %2408 = vmatprep.mubr.bf16.mxu0 %v1312
        %2409 = vmatmul.mubr.bf16.gmra.mxu0 %v1301
        %v2410 = vpop.f32.mrf.mxu0
        %v2411 = vadd.f32 %v2162, %v2410
        %v2412 = vpop.f32.mrf.mxu0
        %v2413 = vpop.f32.mrf.mxu0
        %v2414 = vadd.f32 %v2165, %v2413
        %v2415 = vpop.f32.mrf.mxu0
        %2416 = vmatprep.mubr.bf16.mxu0 %v1318
        %2417 = vmatmul.mubr.bf16.gmra.mxu0 %v1307
        %v2418 = vpop.f32.mrf.mxu0
        %v2419 = vadd.f32 %v2170, %v2418
        %v2420 = vpop.f32.mrf.mxu0
        %v2421 = vpop.f32.mrf.mxu0
        %v2422 = vadd.f32 %v2173, %v2421
        %v2423 = vpop.f32.mrf.mxu0
        %2424 = vdwg.mxu0
        %2425 = vmatprep.subr.bf16.mxu0 0
        %2426 = vmatpush1.bf16.msra.mxu0 %v1822
        %2427 = vmatprep.subr.bf16.mxu0 0
        %2428 = vmatpush1.bf16.msra.mxu0 %v1821
        %2429 = vmatprep.subr.bf16.mxu0 0
        %2430 = vmatpush1.bf16.msra.mxu0 %v1820
        %2431 = vmatprep.subr.bf16.mxu0 0
        %2432 = vmatpush1.bf16.msra.mxu0 %v1819
        %2433 = vmatprep.subr.bf16.mxu0 0
        %2434 = vmatpush1.bf16.msra.mxu0 %v1818
        %2435 = vmatprep.subr.bf16.mxu0 0
        %2436 = vmatpush1.bf16.msra.mxu0 %v1817
        %2437 = vmatprep.subr.bf16.mxu0 0
        %2438 = vmatpush1.bf16.msra.mxu0 %v1816
        %2439 = vmatprep.subr.bf16.mxu0 0
        %2440 = vmatpush1.bf16.msra.mxu0 %v1815
        %2441 = vmatprep.subr.bf16.mxu0 0
        %2442 = vmatpush2.bf16.msra.mxu0 %v1830
        %2443 = vmatprep.subr.bf16.mxu0 0
        %2444 = vmatpush2.bf16.msra.mxu0 %v1829
        %2445 = vmatprep.subr.bf16.mxu0 0
        %2446 = vmatpush2.bf16.msra.mxu0 %v1828
        %2447 = vmatprep.subr.bf16.mxu0 0
        %2448 = vmatpush2.bf16.msra.mxu0 %v1827
        %2449 = vmatprep.subr.bf16.mxu0 0
        %2450 = vmatpush2.bf16.msra.mxu0 %v1826
        %2451 = vmatprep.subr.bf16.mxu0 0
        %2452 = vmatpush2.bf16.msra.mxu0 %v1825
        %2453 = vmatprep.subr.bf16.mxu0 0
        %2454 = vmatpush2.bf16.msra.mxu0 %v1824
        %2455 = vmatprep.subr.bf16.mxu0 0
        %2456 = vmatpush2.bf16.msra.mxu0 %v1823
        %2457 = vmatprep.mubr.bf16.mxu0 %v1175
        %2458 = vmatmul.mubr.bf16.gmra.mxu0 %v1174
        %v2459 = vpop.f32.mrf.mxu0
        %v2460 = vadd.f32 %v2211, %v2459
        %v2461 = vpop.f32.mrf.mxu0
        %v2462 = vpop.f32.mrf.mxu0
        %v2463 = vadd.f32 %v2214, %v2462
        %v2464 = vpop.f32.mrf.mxu0
        %2465 = vmatprep.mubr.bf16.mxu0 %v1183
        %2466 = vmatmul.mubr.bf16.gmra.mxu0 %v1182
        %v2467 = vpop.f32.mrf.mxu0
        %v2468 = vadd.f32 %v2219, %v2467
        %v2469 = vpop.f32.mrf.mxu0
        %v2470 = vpop.f32.mrf.mxu0
        %v2471 = vadd.f32 %v2222, %v2470
        %v2472 = vpop.f32.mrf.mxu0
        %2473 = vmatprep.mubr.bf16.mxu0 %v1192
        %2474 = vmatmul.mubr.bf16.gmra.mxu0 %v1191
        %v2475 = vpop.f32.mrf.mxu0
        %v2476 = vadd.f32 %v2227, %v2475
        %v2477 = vpop.f32.mrf.mxu0
        %v2478 = vpop.f32.mrf.mxu0
        %v2479 = vadd.f32 %v2230, %v2478
        %v2480 = vpop.f32.mrf.mxu0
        %2481 = vmatprep.mubr.bf16.mxu0 %v1197
        %2482 = vmatmul.mubr.bf16.gmra.mxu0 %v1196
        %v2483 = vpop.f32.mrf.mxu0
        %v2484 = vadd.f32 %v2235, %v2483
        %v2485 = vpop.f32.mrf.mxu0
        %v2486 = vpop.f32.mrf.mxu0
        %v2487 = vadd.f32 %v2238, %v2486
        %v2488 = vpop.f32.mrf.mxu0
        %2489 = vmatprep.mubr.bf16.mxu0 %v1202
        %2490 = vmatmul.mubr.bf16.gmra.mxu0 %v1201
        %v2491 = vpop.f32.mrf.mxu0
        %v2492 = vadd.f32 %v2243, %v2491
        %v2493 = vpop.f32.mrf.mxu0
        %v2494 = vpop.f32.mrf.mxu0
        %v2495 = vadd.f32 %v2246, %v2494
        %v2496 = vpop.f32.mrf.mxu0
        %2497 = vmatprep.mubr.bf16.mxu0 %v1208
        %2498 = vmatmul.mubr.bf16.gmra.mxu0 %v1207
        %v2499 = vpop.f32.mrf.mxu0
        %v2500 = vadd.f32 %v2251, %v2499
        %v2501 = vpop.f32.mrf.mxu0
        %v2502 = vpop.f32.mrf.mxu0
        %v2503 = vadd.f32 %v2254, %v2502
        %v2504 = vpop.f32.mrf.mxu0
        %2505 = vmatprep.mubr.bf16.mxu0 %v1213
        %2506 = vmatmul.mubr.bf16.gmra.mxu0 %v1212
        %v2507 = vpop.f32.mrf.mxu0
        %v2508 = vadd.f32 %v2259, %v2507
        %v2509 = vpop.f32.mrf.mxu0
        %v2510 = vpop.f32.mrf.mxu0
        %v2511 = vadd.f32 %v2262, %v2510
        %v2512 = vpop.f32.mrf.mxu0
        %2513 = vmatprep.mubr.bf16.mxu0 %v1218
        %2514 = vmatmul.mubr.bf16.gmra.mxu0 %v1217
        %v2515 = vpop.f32.mrf.mxu0
        %v2516 = vadd.f32 %v2267, %v2515
        %v2517 = vpop.f32.mrf.mxu0
        %v2518 = vpop.f32.mrf.mxu0
        %v2519 = vadd.f32 %v2270, %v2518
        %v2520 = vpop.f32.mrf.mxu0
        %2521 = vmatprep.mubr.bf16.mxu0 %v1224
        %2522 = vmatmul.mubr.bf16.gmra.mxu0 %v1223
        %v2523 = vpop.f32.mrf.mxu0
        %v2524 = vadd.f32 %v2275, %v2523
        %v2525 = vpop.f32.mrf.mxu0
        %v2526 = vpop.f32.mrf.mxu0
        %v2527 = vadd.f32 %v2278, %v2526
        %v2528 = vpop.f32.mrf.mxu0
        %2529 = vmatprep.mubr.bf16.mxu0 %v1229
        %2530 = vmatmul.mubr.bf16.gmra.mxu0 %v1228
        %v2531 = vpop.f32.mrf.mxu0
        %v2532 = vadd.f32 %v2283, %v2531
        %v2533 = vpop.f32.mrf.mxu0
        %v2534 = vpop.f32.mrf.mxu0
        %v2535 = vadd.f32 %v2286, %v2534
        %v2536 = vpop.f32.mrf.mxu0
        %2537 = vmatprep.mubr.bf16.mxu0 %v1234
        %2538 = vmatmul.mubr.bf16.gmra.mxu0 %v1233
        %v2539 = vpop.f32.mrf.mxu0
        %v2540 = vadd.f32 %v2291, %v2539
        %v2541 = vpop.f32.mrf.mxu0
        %v2542 = vpop.f32.mrf.mxu0
        %v2543 = vadd.f32 %v2294, %v2542
        %v2544 = vpop.f32.mrf.mxu0
        %2545 = vmatprep.mubr.bf16.mxu0 %v1240
        %2546 = vmatmul.mubr.bf16.gmra.mxu0 %v1239
        %v2547 = vpop.f32.mrf.mxu0
        %v2548 = vadd.f32 %v2299, %v2547
        %v2549 = vpop.f32.mrf.mxu0
        %v2550 = vpop.f32.mrf.mxu0
        %v2551 = vadd.f32 %v2302, %v2550
        %v2552 = vpop.f32.mrf.mxu0
        %2553 = vmatprep.mubr.bf16.mxu0 %v1245
        %2554 = vmatmul.mubr.bf16.gmra.mxu0 %v1244
        %v2555 = vpop.f32.mrf.mxu0
        %v2556 = vadd.f32 %v2307, %v2555
        %v2557 = vpop.f32.mrf.mxu0
        %v2558 = vpop.f32.mrf.mxu0
        %v2559 = vadd.f32 %v2310, %v2558
        %v2560 = vpop.f32.mrf.mxu0
        %2561 = vmatprep.mubr.bf16.mxu0 %v1250
        %2562 = vmatmul.mubr.bf16.gmra.mxu0 %v1249
        %v2563 = vpop.f32.mrf.mxu0
        %v2564 = vadd.f32 %v2315, %v2563
        %v2565 = vpop.f32.mrf.mxu0
        %v2566 = vpop.f32.mrf.mxu0
        %v2567 = vadd.f32 %v2318, %v2566
        %v2568 = vpop.f32.mrf.mxu0
        %2569 = vmatprep.mubr.bf16.mxu0 %v1256
        %2570 = vmatmul.mubr.bf16.gmra.mxu0 %v1255
        %v2571 = vpop.f32.mrf.mxu0
        %v2572 = vadd.f32 %v2323, %v2571
        %v2573 = vpop.f32.mrf.mxu0
        %v2574 = vpop.f32.mrf.mxu0
        %v2575 = vadd.f32 %v2326, %v2574
        %v2576 = vpop.f32.mrf.mxu0
        %2577 = vmatprep.mubr.bf16.mxu0 %v1261
        %2578 = vmatmul.mubr.bf16.gmra.mxu0 %v1260
        %v2579 = vpop.f32.mrf.mxu0
        %v2580 = vadd.f32 %v2331, %v2579
        %v2581 = vpop.f32.mrf.mxu0
        %v2582 = vpop.f32.mrf.mxu0
        %v2583 = vadd.f32 %v2334, %v2582
        %v2584 = vpop.f32.mrf.mxu0
        %2585 = vmatprep.mubr.bf16.mxu0 %v1266
        %2586 = vmatmul.mubr.bf16.gmra.mxu0 %v1265
        %v2587 = vpop.f32.mrf.mxu0
        %v2588 = vadd.f32 %v2339, %v2587
        %v2589 = vpop.f32.mrf.mxu0
        %v2590 = vpop.f32.mrf.mxu0
        %v2591 = vadd.f32 %v2342, %v2590
        %v2592 = vpop.f32.mrf.mxu0
        %2593 = vmatprep.mubr.bf16.mxu0 %v1272
        %2594 = vmatmul.mubr.bf16.gmra.mxu0 %v1271
        %v2595 = vpop.f32.mrf.mxu0
        %v2596 = vadd.f32 %v2347, %v2595
        %v2597 = vpop.f32.mrf.mxu0
        %v2598 = vpop.f32.mrf.mxu0
        %v2599 = vadd.f32 %v2350, %v2598
        %v2600 = vpop.f32.mrf.mxu0
        %2601 = vmatprep.mubr.bf16.mxu0 %v1277
        %2602 = vmatmul.mubr.bf16.gmra.mxu0 %v1276
        %v2603 = vpop.f32.mrf.mxu0
        %v2604 = vadd.f32 %v2355, %v2603
        %v2605 = vpop.f32.mrf.mxu0
        %v2606 = vpop.f32.mrf.mxu0
        %v2607 = vadd.f32 %v2358, %v2606
        %v2608 = vpop.f32.mrf.mxu0
        %2609 = vmatprep.mubr.bf16.mxu0 %v1282
        %2610 = vmatmul.mubr.bf16.gmra.mxu0 %v1281
        %v2611 = vpop.f32.mrf.mxu0
        %v2612 = vadd.f32 %v2363, %v2611
        %v2613 = vpop.f32.mrf.mxu0
        %v2614 = vpop.f32.mrf.mxu0
        %v2615 = vadd.f32 %v2366, %v2614
        %v2616 = vpop.f32.mrf.mxu0
        %2617 = vmatprep.mubr.bf16.mxu0 %v1288
        %2618 = vmatmul.mubr.bf16.gmra.mxu0 %v1287
        %v2619 = vpop.f32.mrf.mxu0
        %v2620 = vadd.f32 %v2371, %v2619
        %v2621 = vpop.f32.mrf.mxu0
        %v2622 = vpop.f32.mrf.mxu0
        %v2623 = vadd.f32 %v2374, %v2622
        %v2624 = vpop.f32.mrf.mxu0
        %2625 = vmatprep.mubr.bf16.mxu0 %v1293
        %2626 = vmatmul.mubr.bf16.gmra.mxu0 %v1292
        %v2627 = vpop.f32.mrf.mxu0
        %v2628 = vadd.f32 %v2379, %v2627
        %v2629 = vpop.f32.mrf.mxu0
        %v2630 = vpop.f32.mrf.mxu0
        %v2631 = vadd.f32 %v2382, %v2630
        %v2632 = vpop.f32.mrf.mxu0
        %2633 = vmatprep.mubr.bf16.mxu0 %v1298
        %2634 = vmatmul.mubr.bf16.gmra.mxu0 %v1297
        %v2635 = vpop.f32.mrf.mxu0
        %v2636 = vadd.f32 %v2387, %v2635
        %v2637 = vpop.f32.mrf.mxu0
        %v2638 = vpop.f32.mrf.mxu0
        %v2639 = vadd.f32 %v2390, %v2638
        %v2640 = vpop.f32.mrf.mxu0
        %2641 = vmatprep.mubr.bf16.mxu0 %v1304
        %2642 = vmatmul.mubr.bf16.gmra.mxu0 %v1303
        %v2643 = vpop.f32.mrf.mxu0
        %v2644 = vadd.f32 %v2395, %v2643
        %v2645 = vpop.f32.mrf.mxu0
        %v2646 = vpop.f32.mrf.mxu0
        %v2647 = vadd.f32 %v2398, %v2646
        %v2648 = vpop.f32.mrf.mxu0
        %2649 = vmatprep.mubr.bf16.mxu0 %v1309
        %2650 = vmatmul.mubr.bf16.gmra.mxu0 %v1308
        %v2651 = vpop.f32.mrf.mxu0
        %v2652 = vadd.f32 %v2403, %v2651
        %v2653 = vpop.f32.mrf.mxu0
        %v2654 = vpop.f32.mrf.mxu0
        %v2655 = vadd.f32 %v2406, %v2654
        %v2656 = vpop.f32.mrf.mxu0
        %2657 = vmatprep.mubr.bf16.mxu0 %v1314
        %2658 = vmatmul.mubr.bf16.gmra.mxu0 %v1313
        %v2659 = vpop.f32.mrf.mxu0
        %v2660 = vadd.f32 %v2411, %v2659
        %v2661 = vpop.f32.mrf.mxu0
        %v2662 = vpop.f32.mrf.mxu0
        %v2663 = vadd.f32 %v2414, %v2662
        %v2664 = vpop.f32.mrf.mxu0
        %2665 = vmatprep.mubr.bf16.mxu0 %v1320
        %2666 = vmatmul.mubr.bf16.gmra.mxu0 %v1319
        %v2667 = vpop.f32.mrf.mxu0
        %v2668 = vadd.f32 %v2419, %v2667
        %v2669 = vpop.f32.mrf.mxu0
        %v2670 = vpop.f32.mrf.mxu0
        %v2671 = vadd.f32 %v2422, %v2670
        %v2672 = vpop.f32.mrf.mxu0
        %2673 = vdwg.mxu0
        %2674 = vmatprep.subr.bf16.mxu0 0
        %2675 = vmatpush1.bf16.msra.mxu0 %v1838
        %2676 = vmatprep.subr.bf16.mxu0 0
        %2677 = vmatpush1.bf16.msra.mxu0 %v1837
        %2678 = vmatprep.subr.bf16.mxu0 0
        %2679 = vmatpush1.bf16.msra.mxu0 %v1836
        %2680 = vmatprep.subr.bf16.mxu0 0
        %2681 = vmatpush1.bf16.msra.mxu0 %v1835
        %2682 = vmatprep.subr.bf16.mxu0 0
        %2683 = vmatpush1.bf16.msra.mxu0 %v1834
        %2684 = vmatprep.subr.bf16.mxu0 0
        %2685 = vmatpush1.bf16.msra.mxu0 %v1833
        %2686 = vmatprep.subr.bf16.mxu0 0
        %2687 = vmatpush1.bf16.msra.mxu0 %v1832
        %2688 = vmatprep.subr.bf16.mxu0 0
        %2689 = vmatpush1.bf16.msra.mxu0 %v1831
        %2690 = vmatprep.subr.bf16.mxu0 0
        %2691 = vmatpush2.bf16.msra.mxu0 %v1846
        %2692 = vmatprep.subr.bf16.mxu0 0
        %2693 = vmatpush2.bf16.msra.mxu0 %v1845
        %2694 = vmatprep.subr.bf16.mxu0 0
        %2695 = vmatpush2.bf16.msra.mxu0 %v1844
        %2696 = vmatprep.subr.bf16.mxu0 0
        %2697 = vmatpush2.bf16.msra.mxu0 %v1843
        %2698 = vmatprep.subr.bf16.mxu0 0
        %2699 = vmatpush2.bf16.msra.mxu0 %v1842
        %2700 = vmatprep.subr.bf16.mxu0 0
        %2701 = vmatpush2.bf16.msra.mxu0 %v1841
        %2702 = vmatprep.subr.bf16.mxu0 0
        %2703 = vmatpush2.bf16.msra.mxu0 %v1840
        %2704 = vmatprep.subr.bf16.mxu0 0
        %2705 = vmatpush2.bf16.msra.mxu0 %v1839
        %2706 = vmatprep.mubr.bf16.mxu0 %v1176
        %2707 = vmatmul.mubr.bf16.gmra.mxu0 %v494
        %v2708 = vpop.f32.mrf.mxu0
        %v2709 = vadd.f32 %v2460, %v2708
        %v2710 = vpop.f32.mrf.mxu0
        %v2711 = vpop.f32.mrf.mxu0
        %v2712 = vadd.f32 %v2463, %v2711
        %v2713 = vpop.f32.mrf.mxu0
        %2714 = vmatprep.mubr.bf16.mxu0 %v1185
        %2715 = vmatmul.mubr.bf16.gmra.mxu0 %v1184
        %v2716 = vpop.f32.mrf.mxu0
        %v2717 = vadd.f32 %v2468, %v2716
        %v2718 = vpop.f32.mrf.mxu0
        %v2719 = vpop.f32.mrf.mxu0
        %v2720 = vadd.f32 %v2471, %v2719
        %v2721 = vpop.f32.mrf.mxu0
        %2722 = vmatprep.mubr.bf16.mxu0 %v1194
        %2723 = vmatmul.mubr.bf16.gmra.mxu0 %v1193
        %v2724 = vpop.f32.mrf.mxu0
        %v2725 = vadd.f32 %v2476, %v2724
        %v2726 = vpop.f32.mrf.mxu0
        %v2727 = vpop.f32.mrf.mxu0
        %v2728 = vadd.f32 %v2479, %v2727
        %v2729 = vpop.f32.mrf.mxu0
        %2730 = vmatprep.mubr.bf16.mxu0 %v1198
        %2731 = vmatmul.mubr.bf16.gmra.mxu0 %v498
        %v2732 = vpop.f32.mrf.mxu0
        %v2733 = vadd.f32 %v2484, %v2732
        %v2734 = vpop.f32.mrf.mxu0
        %v2735 = vpop.f32.mrf.mxu0
        %v2736 = vadd.f32 %v2487, %v2735
        %v2737 = vpop.f32.mrf.mxu0
        %2738 = vmatprep.mubr.bf16.mxu0 %v1204
        %2739 = vmatmul.mubr.bf16.gmra.mxu0 %v1203
        %v2740 = vpop.f32.mrf.mxu0
        %v2741 = vadd.f32 %v2492, %v2740
        %v2742 = vpop.f32.mrf.mxu0
        %v2743 = vpop.f32.mrf.mxu0
        %v2744 = vadd.f32 %v2495, %v2743
        %v2745 = vpop.f32.mrf.mxu0
        %2746 = vmatprep.mubr.bf16.mxu0 %v1210
        %2747 = vmatmul.mubr.bf16.gmra.mxu0 %v1209
        %v2748 = vpop.f32.mrf.mxu0
        %v2749 = vadd.f32 %v2500, %v2748
        %v2750 = vpop.f32.mrf.mxu0
        %v2751 = vpop.f32.mrf.mxu0
        %v2752 = vadd.f32 %v2503, %v2751
        %v2753 = vpop.f32.mrf.mxu0
        %2754 = vmatprep.mubr.bf16.mxu0 %v1214
        %2755 = vmatmul.mubr.bf16.gmra.mxu0 %v502
        %v2756 = vpop.f32.mrf.mxu0
        %v2757 = vadd.f32 %v2508, %v2756
        %v2758 = vpop.f32.mrf.mxu0
        %v2759 = vpop.f32.mrf.mxu0
        %v2760 = vadd.f32 %v2511, %v2759
        %v2761 = vpop.f32.mrf.mxu0
        %2762 = vmatprep.mubr.bf16.mxu0 %v1220
        %2763 = vmatmul.mubr.bf16.gmra.mxu0 %v1219
        %v2764 = vpop.f32.mrf.mxu0
        %v2765 = vadd.f32 %v2516, %v2764
        %v2766 = vpop.f32.mrf.mxu0
        %v2767 = vpop.f32.mrf.mxu0
        %v2768 = vadd.f32 %v2519, %v2767
        %v2769 = vpop.f32.mrf.mxu0
        %2770 = vmatprep.mubr.bf16.mxu0 %v1226
        %2771 = vmatmul.mubr.bf16.gmra.mxu0 %v1225
        %v2772 = vpop.f32.mrf.mxu0
        %v2773 = vadd.f32 %v2524, %v2772
        %v2774 = vpop.f32.mrf.mxu0
        %v2775 = vpop.f32.mrf.mxu0
        %v2776 = vadd.f32 %v2527, %v2775
        %v2777 = vpop.f32.mrf.mxu0
        %2778 = vmatprep.mubr.bf16.mxu0 %v1230
        %2779 = vmatmul.mubr.bf16.gmra.mxu0 %v506
        %v2780 = vpop.f32.mrf.mxu0
        %v2781 = vadd.f32 %v2532, %v2780
        %v2782 = vpop.f32.mrf.mxu0
        %v2783 = vpop.f32.mrf.mxu0
        %v2784 = vadd.f32 %v2535, %v2783
        %v2785 = vpop.f32.mrf.mxu0
        %2786 = vmatprep.mubr.bf16.mxu0 %v1236
        %2787 = vmatmul.mubr.bf16.gmra.mxu0 %v1235
        %v2788 = vpop.f32.mrf.mxu0
        %v2789 = vadd.f32 %v2540, %v2788
        %v2790 = vpop.f32.mrf.mxu0
        %v2791 = vpop.f32.mrf.mxu0
        %v2792 = vadd.f32 %v2543, %v2791
        %v2793 = vpop.f32.mrf.mxu0
        %2794 = vmatprep.mubr.bf16.mxu0 %v1242
        %2795 = vmatmul.mubr.bf16.gmra.mxu0 %v1241
        %v2796 = vpop.f32.mrf.mxu0
        %v2797 = vadd.f32 %v2548, %v2796
        %v2798 = vpop.f32.mrf.mxu0
        %v2799 = vpop.f32.mrf.mxu0
        %v2800 = vadd.f32 %v2551, %v2799
        %v2801 = vpop.f32.mrf.mxu0
        %2802 = vmatprep.mubr.bf16.mxu0 %v1246
        %2803 = vmatmul.mubr.bf16.gmra.mxu0 %v510
        %v2804 = vpop.f32.mrf.mxu0
        %v2805 = vadd.f32 %v2556, %v2804
        %v2806 = vpop.f32.mrf.mxu0
        %v2807 = vpop.f32.mrf.mxu0
        %v2808 = vadd.f32 %v2559, %v2807
        %v2809 = vpop.f32.mrf.mxu0
        %2810 = vmatprep.mubr.bf16.mxu0 %v1252
        %2811 = vmatmul.mubr.bf16.gmra.mxu0 %v1251
        %v2812 = vpop.f32.mrf.mxu0
        %v2813 = vadd.f32 %v2564, %v2812
        %v2814 = vpop.f32.mrf.mxu0
        %v2815 = vpop.f32.mrf.mxu0
        %v2816 = vadd.f32 %v2567, %v2815
        %v2817 = vpop.f32.mrf.mxu0
        %2818 = vmatprep.mubr.bf16.mxu0 %v1258
        %2819 = vmatmul.mubr.bf16.gmra.mxu0 %v1257
        %v2820 = vpop.f32.mrf.mxu0
        %v2821 = vadd.f32 %v2572, %v2820
        %v2822 = vpop.f32.mrf.mxu0
        %v2823 = vpop.f32.mrf.mxu0
        %v2824 = vadd.f32 %v2575, %v2823
        %v2825 = vpop.f32.mrf.mxu0
        %2826 = vmatprep.mubr.bf16.mxu0 %v1262
        %2827 = vmatmul.mubr.bf16.gmra.mxu0 %v514
        %v2828 = vpop.f32.mrf.mxu0
        %v2829 = vadd.f32 %v2580, %v2828
        %v2830 = vpop.f32.mrf.mxu0
        %v2831 = vpop.f32.mrf.mxu0
        %v2832 = vadd.f32 %v2583, %v2831
        %v2833 = vpop.f32.mrf.mxu0
        %2834 = vmatprep.mubr.bf16.mxu0 %v1268
        %2835 = vmatmul.mubr.bf16.gmra.mxu0 %v1267
        %v2836 = vpop.f32.mrf.mxu0
        %v2837 = vadd.f32 %v2588, %v2836
        %v2838 = vpop.f32.mrf.mxu0
        %v2839 = vpop.f32.mrf.mxu0
        %v2840 = vadd.f32 %v2591, %v2839
        %v2841 = vpop.f32.mrf.mxu0
        %2842 = vmatprep.mubr.bf16.mxu0 %v1274
        %2843 = vmatmul.mubr.bf16.gmra.mxu0 %v1273
        %v2844 = vpop.f32.mrf.mxu0
        %v2845 = vadd.f32 %v2596, %v2844
        %v2846 = vpop.f32.mrf.mxu0
        %v2847 = vpop.f32.mrf.mxu0
        %v2848 = vadd.f32 %v2599, %v2847
        %v2849 = vpop.f32.mrf.mxu0
        %2850 = vmatprep.mubr.bf16.mxu0 %v1278
        %2851 = vmatmul.mubr.bf16.gmra.mxu0 %v518
        %v2852 = vpop.f32.mrf.mxu0
        %v2853 = vadd.f32 %v2604, %v2852
        %v2854 = vpop.f32.mrf.mxu0
        %v2855 = vpop.f32.mrf.mxu0
        %v2856 = vadd.f32 %v2607, %v2855
        %v2857 = vpop.f32.mrf.mxu0
        %2858 = vmatprep.mubr.bf16.mxu0 %v1284
        %2859 = vmatmul.mubr.bf16.gmra.mxu0 %v1283
        %v2860 = vpop.f32.mrf.mxu0
        %v2861 = vadd.f32 %v2612, %v2860
        %v2862 = vpop.f32.mrf.mxu0
        %v2863 = vpop.f32.mrf.mxu0
        %v2864 = vadd.f32 %v2615, %v2863
        %v2865 = vpop.f32.mrf.mxu0
        %2866 = vmatprep.mubr.bf16.mxu0 %v1290
        %2867 = vmatmul.mubr.bf16.gmra.mxu0 %v1289
        %v2868 = vpop.f32.mrf.mxu0
        %v2869 = vadd.f32 %v2620, %v2868
        %v2870 = vpop.f32.mrf.mxu0
        %v2871 = vpop.f32.mrf.mxu0
        %v2872 = vadd.f32 %v2623, %v2871
        %v2873 = vpop.f32.mrf.mxu0
        %2874 = vmatprep.mubr.bf16.mxu0 %v1294
        %2875 = vmatmul.mubr.bf16.gmra.mxu0 %v522
        %v2876 = vpop.f32.mrf.mxu0
        %v2877 = vadd.f32 %v2628, %v2876
        %v2878 = vpop.f32.mrf.mxu0
        %v2879 = vpop.f32.mrf.mxu0
        %v2880 = vadd.f32 %v2631, %v2879
        %v2881 = vpop.f32.mrf.mxu0
        %2882 = vmatprep.mubr.bf16.mxu0 %v1300
        %2883 = vmatmul.mubr.bf16.gmra.mxu0 %v1299
        %v2884 = vpop.f32.mrf.mxu0
        %v2885 = vadd.f32 %v2636, %v2884
        %v2886 = vpop.f32.mrf.mxu0
        %v2887 = vpop.f32.mrf.mxu0
        %v2888 = vadd.f32 %v2639, %v2887
        %v2889 = vpop.f32.mrf.mxu0
        %2890 = vmatprep.mubr.bf16.mxu0 %v1306
        %2891 = vmatmul.mubr.bf16.gmra.mxu0 %v1305
        %v2892 = vpop.f32.mrf.mxu0
        %v2893 = vadd.f32 %v2644, %v2892
        %v2894 = vpop.f32.mrf.mxu0
        %v2895 = vpop.f32.mrf.mxu0
        %v2896 = vadd.f32 %v2647, %v2895
        %v2897 = vpop.f32.mrf.mxu0
        %2898 = vmatprep.mubr.bf16.mxu0 %v1310
        %2899 = vmatmul.mubr.bf16.gmra.mxu0 %v860
        %v2900 = vpop.f32.mrf.mxu0
        %v2901 = vadd.f32 %v2652, %v2900
        %v2902 = vpop.f32.mrf.mxu0
        %v2903 = vpop.f32.mrf.mxu0
        %v2904 = vadd.f32 %v2655, %v2903
        %v2905 = vpop.f32.mrf.mxu0
        %2906 = vmatprep.mubr.bf16.mxu0 %v1316
        %2907 = vmatmul.mubr.bf16.gmra.mxu0 %v1315
        %v2908 = vpop.f32.mrf.mxu0
        %v2909 = vadd.f32 %v2660, %v2908
        %v2910 = vpop.f32.mrf.mxu0
        %v2911 = vpop.f32.mrf.mxu0
        %v2912 = vadd.f32 %v2663, %v2911
        %v2913 = vpop.f32.mrf.mxu0
        %2914 = vmatprep.mubr.bf16.mxu0 %v1322
        %2915 = vmatmul.mubr.bf16.gmra.mxu0 %v1321
        %v2916 = vpop.f32.mrf.mxu0
        %v2917 = vadd.f32 %v2668, %v2916
        %v2918 = vpop.f32.mrf.mxu0
        %v2919 = vpop.f32.mrf.mxu0
        %v2920 = vadd.f32 %v2671, %v2919
        %v2921 = vpop.f32.mrf.mxu0
        %2922 = vdwg.mxu0
        %2923 = vmatprep.subr.bf16.mxu0 0
        %2924 = vmatpush1.bf16.msra.mxu0 %v1854
        %2925 = vmatprep.subr.bf16.mxu0 0
        %2926 = vmatpush1.bf16.msra.mxu0 %v1853
        %2927 = vmatprep.subr.bf16.mxu0 0
        %2928 = vmatpush1.bf16.msra.mxu0 %v1852
        %2929 = vmatprep.subr.bf16.mxu0 0
        %2930 = vmatpush1.bf16.msra.mxu0 %v1851
        %2931 = vmatprep.subr.bf16.mxu0 0
        %2932 = vmatpush1.bf16.msra.mxu0 %v1850
        %2933 = vmatprep.subr.bf16.mxu0 0
        %2934 = vmatpush1.bf16.msra.mxu0 %v1849
        %2935 = vmatprep.subr.bf16.mxu0 0
        %2936 = vmatpush1.bf16.msra.mxu0 %v1848
        %2937 = vmatprep.subr.bf16.mxu0 0
        %2938 = vmatpush1.bf16.msra.mxu0 %v1847
        %2939 = vmatprep.subr.bf16.mxu0 0
        %2940 = vmatpush2.bf16.msra.mxu0 0
        %2941 = vmatprep.subr.bf16.mxu0 0
        %2942 = vmatpush2.bf16.msra.mxu0 0
        %2943 = vmatprep.subr.bf16.mxu0 0
        %2944 = vmatpush2.bf16.msra.mxu0 0
        %2945 = vmatprep.subr.bf16.mxu0 0
        %2946 = vmatpush2.bf16.msra.mxu0 0
        %2947 = vmatprep.subr.bf16.mxu0 0
        %2948 = vmatpush2.bf16.msra.mxu0 0
        %2949 = vmatprep.subr.bf16.mxu0 0
        %2950 = vmatpush2.bf16.msra.mxu0 0
        %2951 = vmatprep.subr.bf16.mxu0 0
        %2952 = vmatpush2.bf16.msra.mxu0 0
        %2953 = vmatprep.subr.bf16.mxu0 0
        %2954 = vmatpush2.bf16.msra.mxu0 0
        %2955 = vmatprep.mubr.bf16.mxu0 0
        %2956 = vmatmul.mubr.bf16.gmra.mxu0 %v1177
        %v2957 = vpop.f32.mrf.mxu0
        %v2958 = vadd.f32 %v2709, %v2957
        %v2959 = vpop.f32.mrf.mxu0
        %v2960 = vpop.f32.mrf.mxu0
        %v2961 = vadd.f32 %v2712, %v2960
        %v2962 = vpop.f32.mrf.mxu0
        %2963 = vmatprep.mubr.bf16.mxu0 0
        %2964 = vmatmul.mubr.bf16.gmra.mxu0 %v1186
        %v2965 = vpop.f32.mrf.mxu0
        %v2966 = vadd.f32 %v2717, %v2965
        %v2967 = vpop.f32.mrf.mxu0
        %v2968 = vpop.f32.mrf.mxu0
        %v2969 = vadd.f32 %v2720, %v2968
        %v2970 = vpop.f32.mrf.mxu0
        %2971 = vmatprep.mubr.bf16.mxu0 0
        %2972 = vmatmul.mubr.bf16.gmra.mxu0 %v1195
        %v2973 = vpop.f32.mrf.mxu0
        %v2974 = vadd.f32 %v2725, %v2973
        %v2975 = vpop.f32.mrf.mxu0
        %v2976 = vpop.f32.mrf.mxu0
        %v2977 = vadd.f32 %v2728, %v2976
        %v2978 = vpop.f32.mrf.mxu0
        %2979 = vmatprep.mubr.bf16.mxu0 0
        %2980 = vmatmul.mubr.bf16.gmra.mxu0 %v1199
        %v2981 = vpop.f32.mrf.mxu0
        %v2982 = vadd.f32 %v2733, %v2981
        %v2983 = vpop.f32.mrf.mxu0
        %v2984 = vpop.f32.mrf.mxu0
        %v2985 = vadd.f32 %v2736, %v2984
        %v2986 = vpop.f32.mrf.mxu0
        %2987 = vmatprep.mubr.bf16.mxu0 0
        %2988 = vmatmul.mubr.bf16.gmra.mxu0 %v1205
        %v2989 = vpop.f32.mrf.mxu0
        %v2990 = vadd.f32 %v2741, %v2989
        %v2991 = vpop.f32.mrf.mxu0
        %v2992 = vpop.f32.mrf.mxu0
        %v2993 = vadd.f32 %v2744, %v2992
        %v2994 = vpop.f32.mrf.mxu0
        %2995 = vmatprep.mubr.bf16.mxu0 0
        %2996 = vmatmul.mubr.bf16.gmra.mxu0 %v1211
        %v2997 = vpop.f32.mrf.mxu0
        %v2998 = vadd.f32 %v2749, %v2997
        %v2999 = vpop.f32.mrf.mxu0
        %v3000 = vpop.f32.mrf.mxu0
        %v3001 = vadd.f32 %v2752, %v3000
        %v3002 = vpop.f32.mrf.mxu0
        %3003 = vmatprep.mubr.bf16.mxu0 0
        %3004 = vmatmul.mubr.bf16.gmra.mxu0 %v1215
        %v3005 = vpop.f32.mrf.mxu0
        %v3006 = vadd.f32 %v2757, %v3005
        %v3007 = vpop.f32.mrf.mxu0
        %v3008 = vpop.f32.mrf.mxu0
        %v3009 = vadd.f32 %v2760, %v3008
        %v3010 = vpop.f32.mrf.mxu0
        %3011 = vmatprep.mubr.bf16.mxu0 0
        %3012 = vmatmul.mubr.bf16.gmra.mxu0 %v1221
        %v3013 = vpop.f32.mrf.mxu0
        %v3014 = vadd.f32 %v2765, %v3013
        %v3015 = vpop.f32.mrf.mxu0
        %v3016 = vpop.f32.mrf.mxu0
        %v3017 = vadd.f32 %v2768, %v3016
        %v3018 = vpop.f32.mrf.mxu0
        %3019 = vmatprep.mubr.bf16.mxu0 0
        %3020 = vmatmul.mubr.bf16.gmra.mxu0 %v1227
        %v3021 = vpop.f32.mrf.mxu0
        %v3022 = vadd.f32 %v2773, %v3021
        %v3023 = vpop.f32.mrf.mxu0
        %v3024 = vpop.f32.mrf.mxu0
        %v3025 = vadd.f32 %v2776, %v3024
        %v3026 = vpop.f32.mrf.mxu0
        %3027 = vmatprep.mubr.bf16.mxu0 0
        %3028 = vmatmul.mubr.bf16.gmra.mxu0 %v1231
        %v3029 = vpop.f32.mrf.mxu0
        %v3030 = vadd.f32 %v2781, %v3029
        %v3031 = vpop.f32.mrf.mxu0
        %v3032 = vpop.f32.mrf.mxu0
        %v3033 = vadd.f32 %v2784, %v3032
        %v3034 = vpop.f32.mrf.mxu0
        %3035 = vmatprep.mubr.bf16.mxu0 0
        %3036 = vmatmul.mubr.bf16.gmra.mxu0 %v1237
        %v3037 = vpop.f32.mrf.mxu0
        %v3038 = vadd.f32 %v2789, %v3037
        %v3039 = vpop.f32.mrf.mxu0
        %v3040 = vpop.f32.mrf.mxu0
        %v3041 = vadd.f32 %v2792, %v3040
        %v3042 = vpop.f32.mrf.mxu0
        %3043 = vmatprep.mubr.bf16.mxu0 0
        %3044 = vmatmul.mubr.bf16.gmra.mxu0 %v1243
        %v3045 = vpop.f32.mrf.mxu0
        %v3046 = vadd.f32 %v2797, %v3045
        %v3047 = vpop.f32.mrf.mxu0
        %v3048 = vpop.f32.mrf.mxu0
        %v3049 = vadd.f32 %v2800, %v3048
        %v3050 = vpop.f32.mrf.mxu0
        %3051 = vmatprep.mubr.bf16.mxu0 0
        %3052 = vmatmul.mubr.bf16.gmra.mxu0 %v1247
        %v3053 = vpop.f32.mrf.mxu0
        %v3054 = vadd.f32 %v2805, %v3053
        %v3055 = vpop.f32.mrf.mxu0
        %v3056 = vpop.f32.mrf.mxu0
        %v3057 = vadd.f32 %v2808, %v3056
        %v3058 = vpop.f32.mrf.mxu0
        %3059 = vmatprep.mubr.bf16.mxu0 0
        %3060 = vmatmul.mubr.bf16.gmra.mxu0 %v1253
        %v3061 = vpop.f32.mrf.mxu0
        %v3062 = vadd.f32 %v2813, %v3061
        %v3063 = vpop.f32.mrf.mxu0
        %v3064 = vpop.f32.mrf.mxu0
        %v3065 = vadd.f32 %v2816, %v3064
        %v3066 = vpop.f32.mrf.mxu0
        %3067 = vmatprep.mubr.bf16.mxu0 0
        %3068 = vmatmul.mubr.bf16.gmra.mxu0 %v1259
        %v3069 = vpop.f32.mrf.mxu0
        %v3070 = vadd.f32 %v2821, %v3069
        %v3071 = vpop.f32.mrf.mxu0
        %v3072 = vpop.f32.mrf.mxu0
        %v3073 = vadd.f32 %v2824, %v3072
        %v3074 = vpop.f32.mrf.mxu0
        %3075 = vmatprep.mubr.bf16.mxu0 0
        %3076 = vmatmul.mubr.bf16.gmra.mxu0 %v1263
        %v3077 = vpop.f32.mrf.mxu0
        %v3078 = vadd.f32 %v2829, %v3077
        %v3079 = vpop.f32.mrf.mxu0
        %v3080 = vpop.f32.mrf.mxu0
        %v3081 = vadd.f32 %v2832, %v3080
        %v3082 = vpop.f32.mrf.mxu0
        %3083 = vmatprep.mubr.bf16.mxu0 0
        %3084 = vmatmul.mubr.bf16.gmra.mxu0 %v1269
        %v3085 = vpop.f32.mrf.mxu0
        %v3086 = vadd.f32 %v2837, %v3085
        %v3087 = vpop.f32.mrf.mxu0
        %v3088 = vpop.f32.mrf.mxu0
        %v3089 = vadd.f32 %v2840, %v3088
        %v3090 = vpop.f32.mrf.mxu0
        %3091 = vmatprep.mubr.bf16.mxu0 0
        %3092 = vmatmul.mubr.bf16.gmra.mxu0 %v1275
        %v3093 = vpop.f32.mrf.mxu0
        %v3094 = vadd.f32 %v2845, %v3093
        %v3095 = vpop.f32.mrf.mxu0
        %v3096 = vpop.f32.mrf.mxu0
        %v3097 = vadd.f32 %v2848, %v3096
        %v3098 = vpop.f32.mrf.mxu0
        %3099 = vmatprep.mubr.bf16.mxu0 0
        %3100 = vmatmul.mubr.bf16.gmra.mxu0 %v1279
        %v3101 = vpop.f32.mrf.mxu0
        %v3102 = vadd.f32 %v2853, %v3101
        %v3103 = vpop.f32.mrf.mxu0
        %v3104 = vpop.f32.mrf.mxu0
        %v3105 = vadd.f32 %v2856, %v3104
        %v3106 = vpop.f32.mrf.mxu0
        %3107 = vmatprep.mubr.bf16.mxu0 0
        %3108 = vmatmul.mubr.bf16.gmra.mxu0 %v1285
        %v3109 = vpop.f32.mrf.mxu0
        %v3110 = vadd.f32 %v2861, %v3109
        %v3111 = vpop.f32.mrf.mxu0
        %v3112 = vpop.f32.mrf.mxu0
        %v3113 = vadd.f32 %v2864, %v3112
        %v3114 = vpop.f32.mrf.mxu0
        %3115 = vmatprep.mubr.bf16.mxu0 0
        %3116 = vmatmul.mubr.bf16.gmra.mxu0 %v1291
        %v3117 = vpop.f32.mrf.mxu0
        %v3118 = vadd.f32 %v2869, %v3117
        %v3119 = vpop.f32.mrf.mxu0
        %v3120 = vpop.f32.mrf.mxu0
        %v3121 = vadd.f32 %v2872, %v3120
        %v3122 = vpop.f32.mrf.mxu0
        %3123 = vmatprep.mubr.bf16.mxu0 0
        %3124 = vmatmul.mubr.bf16.gmra.mxu0 %v1295
        %v3125 = vpop.f32.mrf.mxu0
        %v3126 = vadd.f32 %v2877, %v3125
        %v3127 = vpop.f32.mrf.mxu0
        %v3128 = vpop.f32.mrf.mxu0
        %v3129 = vadd.f32 %v2880, %v3128
        %v3130 = vpop.f32.mrf.mxu0
        %3131 = vmatprep.mubr.bf16.mxu0 0
        %3132 = vmatmul.mubr.bf16.gmra.mxu0 %v1301
        %v3133 = vpop.f32.mrf.mxu0
        %v3134 = vadd.f32 %v2885, %v3133
        %v3135 = vpop.f32.mrf.mxu0
        %v3136 = vpop.f32.mrf.mxu0
        %v3137 = vadd.f32 %v2888, %v3136
        %v3138 = vpop.f32.mrf.mxu0
        %3139 = vmatprep.mubr.bf16.mxu0 0
        %3140 = vmatmul.mubr.bf16.gmra.mxu0 %v1307
        %v3141 = vpop.f32.mrf.mxu0
        %v3142 = vadd.f32 %v2893, %v3141
        %v3143 = vpop.f32.mrf.mxu0
        %v3144 = vpop.f32.mrf.mxu0
        %v3145 = vadd.f32 %v2896, %v3144
        %v3146 = vpop.f32.mrf.mxu0
        %3147 = vmatprep.mubr.bf16.mxu0 0
        %3148 = vmatmul.mubr.bf16.gmra.mxu0 %v1311
        %v3149 = vpop.f32.mrf.mxu0
        %v3150 = vadd.f32 %v2901, %v3149
        %v3151 = vpop.f32.mrf.mxu0
        %v3152 = vpop.f32.mrf.mxu0
        %v3153 = vadd.f32 %v2904, %v3152
        %v3154 = vpop.f32.mrf.mxu0
        %3155 = vmatprep.mubr.bf16.mxu0 0
        %3156 = vmatmul.mubr.bf16.gmra.mxu0 %v1317
        %v3157 = vpop.f32.mrf.mxu0
        %v3158 = vadd.f32 %v2909, %v3157
        %v3159 = vpop.f32.mrf.mxu0
        %v3160 = vpop.f32.mrf.mxu0
        %v3161 = vadd.f32 %v2912, %v3160
        %v3162 = vpop.f32.mrf.mxu0
        %3163 = vmatprep.mubr.bf16.mxu0 0
        %3164 = vmatmul.mubr.bf16.gmra.mxu0 %v1323
        %v3165 = vpop.f32.mrf.mxu0
        %v3166 = vadd.f32 %v2917, %v3165
        %v3167 = vpop.f32.mrf.mxu0
        %v3168 = vpop.f32.mrf.mxu0
        %v3169 = vadd.f32 %v2920, %v3168
        %v3170 = vpop.f32.mrf.mxu0
        %3171 = vdwg.mxu0
        %s3172 = smul.u32 %s19, 432
        %s3173 = scalar_lea.vmem [#allocation2], %s3172
        %3174 = vst [vmem:[%s3173] sm:$0xff] %v2958
        %3175 = vst [vmem:[%s3173 + $0x8] sm:$0xff] %v2961
        %3176 = vst [vmem:[%s3173 + $0x10] sm:$0xff] %v2966
        %3177 = vst [vmem:[%s3173 + $0x18] sm:$0xff] %v2969
        %3178 = vst [vmem:[%s3173 + $0x20] sm:$0xff] %v2974
        %3179 = vst [vmem:[%s3173 + $0x28] sm:$0xff] %v2977
        %3180 = vst [vmem:[%s3173 + $0x30] sm:$0xff] %v2982
        %3181 = vst [vmem:[%s3173 + $0x38] sm:$0xff] %v2985
        %3182 = vst [vmem:[%s3173 + $0x40] sm:$0xff] %v2990
        %3183 = vst [vmem:[%s3173 + $0x48] sm:$0xff] %v2993
        %3184 = vst [vmem:[%s3173 + $0x50] sm:$0xff] %v2998
        %3185 = vst [vmem:[%s3173 + $0x58] sm:$0xff] %v3001
        %3186 = vst [vmem:[%s3173 + $0x60] sm:$0xff] %v3006
        %3187 = vst [vmem:[%s3173 + $0x68] sm:$0xff] %v3009
        %3188 = vst [vmem:[%s3173 + $0x70] sm:$0xff] %v3014
        %3189 = vst [vmem:[%s3173 + $0x78] sm:$0xff] %v3017
        %3190 = vst [vmem:[%s3173 + $0x80] sm:$0xff] %v3022
        %3191 = vst [vmem:[%s3173 + $0x88] sm:$0xff] %v3025
        %3192 = vst [vmem:[%s3173 + $0x90] sm:$0xff] %v3030
        %3193 = vst [vmem:[%s3173 + $0x98] sm:$0xff] %v3033
        %3194 = vst [vmem:[%s3173 + $0xa0] sm:$0xff] %v3038
        %3195 = vst [vmem:[%s3173 + $0xa8] sm:$0xff] %v3041
        %3196 = vst [vmem:[%s3173 + $0xb0] sm:$0xff] %v3046
        %3197 = vst [vmem:[%s3173 + $0xb8] sm:$0xff] %v3049
        %3198 = vst [vmem:[%s3173 + $0xc0] sm:$0xff] %v3054
        %3199 = vst [vmem:[%s3173 + $0xc8] sm:$0xff] %v3057
        %3200 = vst [vmem:[%s3173 + $0xd0] sm:$0xff] %v3062
        %3201 = vst [vmem:[%s3173 + $0xd8] sm:$0xff] %v3065
        %3202 = vst [vmem:[%s3173 + $0xe0] sm:$0xff] %v3070
        %3203 = vst [vmem:[%s3173 + $0xe8] sm:$0xff] %v3073
        %3204 = vst [vmem:[%s3173 + $0xf0] sm:$0xff] %v3078
        %3205 = vst [vmem:[%s3173 + $0xf8] sm:$0xff] %v3081
        %3206 = vst [vmem:[%s3173 + $0x100] sm:$0xff] %v3086
        %3207 = vst [vmem:[%s3173 + $0x108] sm:$0xff] %v3089
        %3208 = vst [vmem:[%s3173 + $0x110] sm:$0xff] %v3094
        %3209 = vst [vmem:[%s3173 + $0x118] sm:$0xff] %v3097
        %3210 = vst [vmem:[%s3173 + $0x120] sm:$0xff] %v3102
        %3211 = vst [vmem:[%s3173 + $0x128] sm:$0xff] %v3105
        %3212 = vst [vmem:[%s3173 + $0x130] sm:$0xff] %v3110
        %3213 = vst [vmem:[%s3173 + $0x138] sm:$0xff] %v3113
        %3214 = vst [vmem:[%s3173 + $0x140] sm:$0xff] %v3118
        %3215 = vst [vmem:[%s3173 + $0x148] sm:$0xff] %v3121
        %3216 = vst [vmem:[%s3173 + $0x150] sm:$0xff] %v3126
        %3217 = vst [vmem:[%s3173 + $0x158] sm:$0xff] %v3129
        %3218 = vst [vmem:[%s3173 + $0x160] sm:$0xff] %v3134
        %3219 = vst [vmem:[%s3173 + $0x168] sm:$0xff] %v3137
        %3220 = vst [vmem:[%s3173 + $0x170] sm:$0xff] %v3142
        %3221 = vst [vmem:[%s3173 + $0x178] sm:$0xff] %v3145
        %3222 = vst [vmem:[%s3173 + $0x180] sm:$0xff] %v3150
        %3223 = vst [vmem:[%s3173 + $0x188] sm:$0xff] %v3153
        %3224 = vst [vmem:[%s3173 + $0x190] sm:$0xff] %v3158
        %3225 = vst [vmem:[%s3173 + $0x198] sm:$0xff] %v3161
        %3226 = vst [vmem:[%s3173 + $0x1a0] sm:$0xff] %v3166
        %3227 = vst [vmem:[%s3173 + $0x1a8] sm:$0xff] %v3169
        %p3228 = scmp.eq.s32.totalorder %s19, 1
        // Predicated region
        $region49: #{tpu_custom_call.1} parent=47 // pred_check
          %p3229 = pneg %p3228
        $region50: #{tpu_custom_call.1} parent=47 // pred_check_branch
          %3231 = sbr.rel (%p3229) target = $region52
        $region51: #{tpu_custom_call.1} parent=47 // pred_region
          %v3232 = vld [vmem:[#allocation2] sm:$0xff]
          %v3233 = vld [vmem:[#allocation2 + $0x8] sm:$0xff]
          %v3234 = vld [vmem:[#allocation2 + $0x10] sm:$0xff]
          %v3235 = vld [vmem:[#allocation2 + $0x18] sm:$0xff]
          %v3236 = vld [vmem:[#allocation2 + $0x20] sm:$0xff]
          %v3237 = vld [vmem:[#allocation2 + $0x28] sm:$0xff]
          %v3238 = vld [vmem:[#allocation2 + $0x30] sm:$0xff]
          %v3239 = vld [vmem:[#allocation2 + $0x38] sm:$0xff]
          %v3240 = vld [vmem:[#allocation2 + $0x40] sm:$0xff]
          %v3241 = vld [vmem:[#allocation2 + $0x48] sm:$0xff]
          %v3242 = vld [vmem:[#allocation2 + $0x50] sm:$0xff]
          %v3243 = vld [vmem:[#allocation2 + $0x58] sm:$0xff]
          %v3244 = vld [vmem:[#allocation2 + $0x60] sm:$0xff]
          %v3245 = vld [vmem:[#allocation2 + $0x68] sm:$0xff]
          %v3246 = vld [vmem:[#allocation2 + $0x70] sm:$0xff]
          %v3247 = vld [vmem:[#allocation2 + $0x78] sm:$0xff]
          %v3248 = vld [vmem:[#allocation2 + $0x80] sm:$0xff]
          %v3249 = vld [vmem:[#allocation2 + $0x88] sm:$0xff]
          %v3250 = vld [vmem:[#allocation2 + $0x90] sm:$0xff]
          %v3251 = vld [vmem:[#allocation2 + $0x98] sm:$0xff]
          %v3252 = vld [vmem:[#allocation2 + $0xa0] sm:$0xff]
          %v3253 = vld [vmem:[#allocation2 + $0xa8] sm:$0xff]
          %v3254 = vld [vmem:[#allocation2 + $0xb0] sm:$0xff]
          %v3255 = vld [vmem:[#allocation2 + $0xb8] sm:$0xff]
          %v3256 = vld [vmem:[#allocation2 + $0xc0] sm:$0xff]
          %v3257 = vld [vmem:[#allocation2 + $0xc8] sm:$0xff]
          %v3258 = vld [vmem:[#allocation2 + $0xd0] sm:$0xff]
          %v3259 = vld [vmem:[#allocation2 + $0xd8] sm:$0xff]
          %v3260 = vld [vmem:[#allocation2 + $0xe0] sm:$0xff]
          %v3261 = vld [vmem:[#allocation2 + $0xe8] sm:$0xff]
          %v3262 = vld [vmem:[#allocation2 + $0xf0] sm:$0xff]
          %v3263 = vld [vmem:[#allocation2 + $0xf8] sm:$0xff]
          %v3264 = vld [vmem:[#allocation2 + $0x100] sm:$0xff]
          %v3265 = vld [vmem:[#allocation2 + $0x108] sm:$0xff]
          %v3266 = vld [vmem:[#allocation2 + $0x110] sm:$0xff]
          %v3267 = vld [vmem:[#allocation2 + $0x118] sm:$0xff]
          %v3268 = vld [vmem:[#allocation2 + $0x120] sm:$0xff]
          %v3269 = vld [vmem:[#allocation2 + $0x128] sm:$0xff]
          %v3270 = vld [vmem:[#allocation2 + $0x130] sm:$0xff]
          %v3271 = vld [vmem:[#allocation2 + $0x138] sm:$0xff]
          %v3272 = vld [vmem:[#allocation2 + $0x140] sm:$0xff]
          %v3273 = vld [vmem:[#allocation2 + $0x148] sm:$0xff]
          %v3274 = vld [vmem:[#allocation2 + $0x150] sm:$0xff]
          %v3275 = vld [vmem:[#allocation2 + $0x158] sm:$0xff]
          %v3276 = vld [vmem:[#allocation2 + $0x160] sm:$0xff]
          %v3277 = vld [vmem:[#allocation2 + $0x168] sm:$0xff]
          %v3278 = vld [vmem:[#allocation2 + $0x170] sm:$0xff]
          %v3279 = vld [vmem:[#allocation2 + $0x178] sm:$0xff]
          %v3280 = vld [vmem:[#allocation2 + $0x180] sm:$0xff]
          %v3281 = vld [vmem:[#allocation2 + $0x188] sm:$0xff]
          %v3282 = vld [vmem:[#allocation2 + $0x190] sm:$0xff]
          %v3283 = vld [vmem:[#allocation2 + $0x198] sm:$0xff]
          %v3284 = vld [vmem:[#allocation2 + $0x1a0] sm:$0xff]
          %v3285 = vld [vmem:[#allocation2 + $0x1a8] sm:$0xff]
          %v3286 = vld [vmem:[#allocation2 + $0x1b0] sm:$0xff]
          %v3287 = vld [vmem:[#allocation2 + $0x1b8] sm:$0xff]
          %v3288 = vld [vmem:[#allocation2 + $0x1c0] sm:$0xff]
          %v3289 = vld [vmem:[#allocation2 + $0x1c8] sm:$0xff]
          %v3290 = vld [vmem:[#allocation2 + $0x1d0] sm:$0xff]
          %v3291 = vld [vmem:[#allocation2 + $0x1d8] sm:$0xff]
          %v3292 = vld [vmem:[#allocation2 + $0x1e0] sm:$0xff]
          %v3293 = vld [vmem:[#allocation2 + $0x1e8] sm:$0xff]
          %v3294 = vld [vmem:[#allocation2 + $0x1f0] sm:$0xff]
          %v3295 = vld [vmem:[#allocation2 + $0x1f8] sm:$0xff]
          %v3296 = vld [vmem:[#allocation2 + $0x200] sm:$0xff]
          %v3297 = vld [vmem:[#allocation2 + $0x208] sm:$0xff]
          %v3298 = vld [vmem:[#allocation2 + $0x210] sm:$0xff]
          %v3299 = vld [vmem:[#allocation2 + $0x218] sm:$0xff]
          %v3300 = vld [vmem:[#allocation2 + $0x220] sm:$0xff]
          %v3301 = vld [vmem:[#allocation2 + $0x228] sm:$0xff]
          %v3302 = vld [vmem:[#allocation2 + $0x230] sm:$0xff]
          %v3303 = vld [vmem:[#allocation2 + $0x238] sm:$0xff]
          %v3304 = vld [vmem:[#allocation2 + $0x240] sm:$0xff]
          %v3305 = vld [vmem:[#allocation2 + $0x248] sm:$0xff]
          %v3306 = vld [vmem:[#allocation2 + $0x250] sm:$0xff]
          %v3307 = vld [vmem:[#allocation2 + $0x258] sm:$0xff]
          %v3308 = vld [vmem:[#allocation2 + $0x260] sm:$0xff]
          %v3309 = vld [vmem:[#allocation2 + $0x268] sm:$0xff]
          %v3310 = vld [vmem:[#allocation2 + $0x270] sm:$0xff]
          %v3311 = vld [vmem:[#allocation2 + $0x278] sm:$0xff]
          %v3312 = vld [vmem:[#allocation2 + $0x280] sm:$0xff]
          %v3313 = vld [vmem:[#allocation2 + $0x288] sm:$0xff]
          %v3314 = vld [vmem:[#allocation2 + $0x290] sm:$0xff]
          %v3315 = vld [vmem:[#allocation2 + $0x298] sm:$0xff]
          %v3316 = vld [vmem:[#allocation2 + $0x2a0] sm:$0xff]
          %v3317 = vld [vmem:[#allocation2 + $0x2a8] sm:$0xff]
          %v3318 = vld [vmem:[#allocation2 + $0x2b0] sm:$0xff]
          %v3319 = vld [vmem:[#allocation2 + $0x2b8] sm:$0xff]
          %v3320 = vld [vmem:[#allocation2 + $0x2c0] sm:$0xff]
          %v3321 = vld [vmem:[#allocation2 + $0x2c8] sm:$0xff]
          %v3322 = vld [vmem:[#allocation2 + $0x2d0] sm:$0xff]
          %v3323 = vld [vmem:[#allocation2 + $0x2d8] sm:$0xff]
          %v3324 = vld [vmem:[#allocation2 + $0x2e0] sm:$0xff]
          %v3325 = vld [vmem:[#allocation2 + $0x2e8] sm:$0xff]
          %v3326 = vld [vmem:[#allocation2 + $0x2f0] sm:$0xff]
          %v3327 = vld [vmem:[#allocation2 + $0x2f8] sm:$0xff]
          %v3328 = vld [vmem:[#allocation2 + $0x300] sm:$0xff]
          %v3329 = vld [vmem:[#allocation2 + $0x308] sm:$0xff]
          %v3330 = vld [vmem:[#allocation2 + $0x310] sm:$0xff]
          %v3331 = vld [vmem:[#allocation2 + $0x318] sm:$0xff]
          %v3332 = vld [vmem:[#allocation2 + $0x320] sm:$0xff]
          %v3333 = vld [vmem:[#allocation2 + $0x328] sm:$0xff]
          %v3334 = vld [vmem:[#allocation2 + $0x330] sm:$0xff]
          %v3335 = vld [vmem:[#allocation2 + $0x338] sm:$0xff]
          %v3336 = vld [vmem:[#allocation2 + $0x340] sm:$0xff]
          %v3337 = vld [vmem:[#allocation2 + $0x348] sm:$0xff]
          %v3338 = vld [vmem:[#allocation2 + $0x350] sm:$0xff]
          %v3339 = vld [vmem:[#allocation2 + $0x358] sm:$0xff]
          %v3340 = vlaneseq
          %v3341 = vshrl.u32 %v3340, 7
          %v3342 = vadd.s32 %v3341, 8
          %v3343 = vadd.s32 %v3341, 16
          %vm3344 = vcmp.ge.s32.totalorder %v3341, 1
          %vm3345 = vcmp.ge.s32.totalorder %v3342, 1
          %vm3346 = vcmp.ge.s32.totalorder %v3343, 1
          %vm3347 = vmand 0, %vm3344
          %vm3348 = vmand 0, %vm3345
          %vm3349 = vmand 0, %vm3346
          %vm3350 = vmand 1, %vm3344
          %vm3351 = vmand 1, %vm3345
          %vm3352 = vmand 1, %vm3346
          %vm3353 = vcmp.le.s32.totalorder %v3341, 16
          %vm3354 = vcmp.le.s32.totalorder %v3342, 16
          %vm3355 = vcmp.le.s32.totalorder %v3343, 16
          %vm3356 = vmand %vm3347, %vm3353
          %vm3357 = vmand %vm3348, %vm3354
          %vm3358 = vmand %vm3349, %vm3355
          %vm3359 = vmand %vm3350, %vm3353
          %vm3360 = vmand %vm3351, %vm3354
          %vm3361 = vmand %vm3352, %vm3355
          %v3362 = vsel %vm3356, %v3232, 0.0
          %v3363 = vsel %vm3357, %v3233, 0.0
          %v3364 = vsel %vm3358, %v3234, 0.0
          %v3365 = vsel %vm3359, %v3235, 0.0
          %v3366 = vsel %vm3360, %v3236, 0.0
          %v3367 = vsel %vm3361, %v3237, 0.0
          %v3368 = vsel %vm3359, %v3238, 0.0
          %v3369 = vsel %vm3360, %v3239, 0.0
          %v3370 = vsel %vm3361, %v3240, 0.0
          %v3371 = vsel %vm3359, %v3241, 0.0
          %v3372 = vsel %vm3360, %v3242, 0.0
          %v3373 = vsel %vm3361, %v3243, 0.0
          %v3374 = vsel %vm3359, %v3244, 0.0
          %v3375 = vsel %vm3360, %v3245, 0.0
          %v3376 = vsel %vm3361, %v3246, 0.0
          %v3377 = vsel %vm3359, %v3247, 0.0
          %v3378 = vsel %vm3360, %v3248, 0.0
          %v3379 = vsel %vm3361, %v3249, 0.0
          %v3380 = vsel %vm3359, %v3250, 0.0
          %v3381 = vsel %vm3360, %v3251, 0.0
          %v3382 = vsel %vm3361, %v3252, 0.0
          %v3383 = vsel %vm3359, %v3253, 0.0
          %v3384 = vsel %vm3360, %v3254, 0.0
          %v3385 = vsel %vm3361, %v3255, 0.0
          %v3386 = vsel %vm3359, %v3256, 0.0
          %v3387 = vsel %vm3360, %v3257, 0.0
          %v3388 = vsel %vm3361, %v3258, 0.0
          %v3389 = vsel %vm3359, %v3259, 0.0
          %v3390 = vsel %vm3360, %v3260, 0.0
          %v3391 = vsel %vm3361, %v3261, 0.0
          %v3392 = vsel %vm3359, %v3262, 0.0
          %v3393 = vsel %vm3360, %v3263, 0.0
          %v3394 = vsel %vm3361, %v3264, 0.0
          %v3395 = vsel %vm3359, %v3265, 0.0
          %v3396 = vsel %vm3360, %v3266, 0.0
          %v3397 = vsel %vm3361, %v3267, 0.0
          %v3398 = vsel %vm3359, %v3268, 0.0
          %v3399 = vsel %vm3360, %v3269, 0.0
          %v3400 = vsel %vm3361, %v3270, 0.0
          %v3401 = vsel %vm3359, %v3271, 0.0
          %v3402 = vsel %vm3360, %v3272, 0.0
          %v3403 = vsel %vm3361, %v3273, 0.0
          %v3404 = vsel %vm3359, %v3274, 0.0
          %v3405 = vsel %vm3360, %v3275, 0.0
          %v3406 = vsel %vm3361, %v3276, 0.0
          %v3407 = vsel %vm3359, %v3277, 0.0
          %v3408 = vsel %vm3360, %v3278, 0.0
          %v3409 = vsel %vm3361, %v3279, 0.0
          %v3410 = vsel %vm3359, %v3280, 0.0
          %v3411 = vsel %vm3360, %v3281, 0.0
          %v3412 = vsel %vm3361, %v3282, 0.0
          %v3413 = vsel %vm3356, %v3283, 0.0
          %v3414 = vsel %vm3357, %v3284, 0.0
          %v3415 = vsel %vm3358, %v3285, 0.0
          %v3416 = vsel %vm3356, %v3286, 0.0
          %v3417 = vsel %vm3357, %v3287, 0.0
          %v3418 = vsel %vm3358, %v3288, 0.0
          %v3419 = vsel %vm3359, %v3289, 0.0
          %v3420 = vsel %vm3360, %v3290, 0.0
          %v3421 = vsel %vm3361, %v3291, 0.0
          %v3422 = vsel %vm3359, %v3292, 0.0
          %v3423 = vsel %vm3360, %v3293, 0.0
          %v3424 = vsel %vm3361, %v3294, 0.0
          %v3425 = vsel %vm3359, %v3295, 0.0
          %v3426 = vsel %vm3360, %v3296, 0.0
          %v3427 = vsel %vm3361, %v3297, 0.0
          %v3428 = vsel %vm3359, %v3298, 0.0
          %v3429 = vsel %vm3360, %v3299, 0.0
          %v3430 = vsel %vm3361, %v3300, 0.0
          %v3431 = vsel %vm3359, %v3301, 0.0
          %v3432 = vsel %vm3360, %v3302, 0.0
          %v3433 = vsel %vm3361, %v3303, 0.0
          %v3434 = vsel %vm3359, %v3304, 0.0
          %v3435 = vsel %vm3360, %v3305, 0.0
          %v3436 = vsel %vm3361, %v3306, 0.0
          %v3437 = vsel %vm3359, %v3307, 0.0
          %v3438 = vsel %vm3360, %v3308, 0.0
          %v3439 = vsel %vm3361, %v3309, 0.0
          %v3440 = vsel %vm3359, %v3310, 0.0
          %v3441 = vsel %vm3360, %v3311, 0.0
          %v3442 = vsel %vm3361, %v3312, 0.0
          %v3443 = vsel %vm3359, %v3313, 0.0
          %v3444 = vsel %vm3360, %v3314, 0.0
          %v3445 = vsel %vm3361, %v3315, 0.0
          %v3446 = vsel %vm3359, %v3316, 0.0
          %v3447 = vsel %vm3360, %v3317, 0.0
          %v3448 = vsel %vm3361, %v3318, 0.0
          %v3449 = vsel %vm3359, %v3319, 0.0
          %v3450 = vsel %vm3360, %v3320, 0.0
          %v3451 = vsel %vm3361, %v3321, 0.0
          %v3452 = vsel %vm3359, %v3322, 0.0
          %v3453 = vsel %vm3360, %v3323, 0.0
          %v3454 = vsel %vm3361, %v3324, 0.0
          %v3455 = vsel %vm3359, %v3325, 0.0
          %v3456 = vsel %vm3360, %v3326, 0.0
          %v3457 = vsel %vm3361, %v3327, 0.0
          %v3458 = vsel %vm3359, %v3328, 0.0
          %v3459 = vsel %vm3360, %v3329, 0.0
          %v3460 = vsel %vm3361, %v3330, 0.0
          %v3461 = vsel %vm3359, %v3331, 0.0
          %v3462 = vsel %vm3360, %v3332, 0.0
          %v3463 = vsel %vm3361, %v3333, 0.0
          %v3464 = vsel %vm3359, %v3334, 0.0
          %v3465 = vsel %vm3360, %v3335, 0.0
          %v3466 = vsel %vm3361, %v3336, 0.0
          %v3467 = vsel %vm3356, %v3337, 0.0
          %v3468 = vsel %vm3357, %v3338, 0.0
          %v3469 = vsel %vm3358, %v3339, 0.0
          %v3470 = vadd.f32 %v3362, %v3363
          %v3471 = vadd.f32 %v3470, %v3364
          %v3472 = vadd.f32 %v3471, %v3365
          %v3473 = vadd.f32 %v3472, %v3366
          %v3474 = vadd.f32 %v3473, %v3367
          %v3475 = vadd.f32 %v3474, %v3368
          %v3476 = vadd.f32 %v3475, %v3369
          %v3477 = vadd.f32 %v3476, %v3370
          %v3478 = vadd.f32 %v3477, %v3371
          %v3479 = vadd.f32 %v3478, %v3372
          %v3480 = vadd.f32 %v3479, %v3373
          %v3481 = vadd.f32 %v3480, %v3374
          %v3482 = vadd.f32 %v3481, %v3375
          %v3483 = vadd.f32 %v3482, %v3376
          %v3484 = vadd.f32 %v3483, %v3377
          %v3485 = vadd.f32 %v3484, %v3378
          %v3486 = vadd.f32 %v3485, %v3379
          %v3487 = vadd.f32 %v3486, %v3380
          %v3488 = vadd.f32 %v3487, %v3381
          %v3489 = vadd.f32 %v3488, %v3382
          %v3490 = vadd.f32 %v3489, %v3383
          %v3491 = vadd.f32 %v3490, %v3384
          %v3492 = vadd.f32 %v3491, %v3385
          %v3493 = vadd.f32 %v3492, %v3386
          %v3494 = vadd.f32 %v3493, %v3387
          %v3495 = vadd.f32 %v3494, %v3388
          %v3496 = vadd.f32 %v3495, %v3389
          %v3497 = vadd.f32 %v3496, %v3390
          %v3498 = vadd.f32 %v3497, %v3391
          %v3499 = vadd.f32 %v3498, %v3392
          %v3500 = vadd.f32 %v3499, %v3393
          %v3501 = vadd.f32 %v3500, %v3394
          %v3502 = vadd.f32 %v3501, %v3395
          %v3503 = vadd.f32 %v3502, %v3396
          %v3504 = vadd.f32 %v3503, %v3397
          %v3505 = vadd.f32 %v3504, %v3398
          %v3506 = vadd.f32 %v3505, %v3399
          %v3507 = vadd.f32 %v3506, %v3400
          %v3508 = vadd.f32 %v3507, %v3401
          %v3509 = vadd.f32 %v3508, %v3402
          %v3510 = vadd.f32 %v3509, %v3403
          %v3511 = vadd.f32 %v3510, %v3404
          %v3512 = vadd.f32 %v3511, %v3405
          %v3513 = vadd.f32 %v3512, %v3406
          %v3514 = vadd.f32 %v3513, %v3407
          %v3515 = vadd.f32 %v3514, %v3408
          %v3516 = vadd.f32 %v3515, %v3409
          %v3517 = vadd.f32 %v3516, %v3410
          %v3518 = vadd.f32 %v3517, %v3411
          %v3519 = vadd.f32 %v3518, %v3412
          %v3520 = vadd.f32 %v3519, %v3413
          %v3521 = vadd.f32 %v3520, %v3414
          %v3522 = vadd.f32 %v3521, %v3415
          %v3523 = vadd.f32 %v3522, %v3416
          %v3524 = vadd.f32 %v3523, %v3417
          %v3525 = vadd.f32 %v3524, %v3418
          %v3526 = vadd.f32 %v3525, %v3419
          %v3527 = vadd.f32 %v3526, %v3420
          %v3528 = vadd.f32 %v3527, %v3421
          %v3529 = vadd.f32 %v3528, %v3422
          %v3530 = vadd.f32 %v3529, %v3423
          %v3531 = vadd.f32 %v3530, %v3424
          %v3532 = vadd.f32 %v3531, %v3425
          %v3533 = vadd.f32 %v3532, %v3426
          %v3534 = vadd.f32 %v3533, %v3427
          %v3535 = vadd.f32 %v3534, %v3428
          %v3536 = vadd.f32 %v3535, %v3429
          %v3537 = vadd.f32 %v3536, %v3430
          %v3538 = vadd.f32 %v3537, %v3431
          %v3539 = vadd.f32 %v3538, %v3432
          %v3540 = vadd.f32 %v3539, %v3433
          %v3541 = vadd.f32 %v3540, %v3434
          %v3542 = vadd.f32 %v3541, %v3435
          %v3543 = vadd.f32 %v3542, %v3436
          %v3544 = vadd.f32 %v3543, %v3437
          %v3545 = vadd.f32 %v3544, %v3438
          %v3546 = vadd.f32 %v3545, %v3439
          %v3547 = vadd.f32 %v3546, %v3440
          %v3548 = vadd.f32 %v3547, %v3441
          %v3549 = vadd.f32 %v3548, %v3442
          %v3550 = vadd.f32 %v3549, %v3443
          %v3551 = vadd.f32 %v3550, %v3444
          %v3552 = vadd.f32 %v3551, %v3445
          %v3553 = vadd.f32 %v3552, %v3446
          %v3554 = vadd.f32 %v3553, %v3447
          %v3555 = vadd.f32 %v3554, %v3448
          %v3556 = vadd.f32 %v3555, %v3449
          %v3557 = vadd.f32 %v3556, %v3450
          %v3558 = vadd.f32 %v3557, %v3451
          %v3559 = vadd.f32 %v3558, %v3452
          %v3560 = vadd.f32 %v3559, %v3453
          %v3561 = vadd.f32 %v3560, %v3454
          %v3562 = vadd.f32 %v3561, %v3455
          %v3563 = vadd.f32 %v3562, %v3456
          %v3564 = vadd.f32 %v3563, %v3457
          %v3565 = vadd.f32 %v3564, %v3458
          %v3566 = vadd.f32 %v3565, %v3459
          %v3567 = vadd.f32 %v3566, %v3460
          %v3568 = vadd.f32 %v3567, %v3461
          %v3569 = vadd.f32 %v3568, %v3462
          %v3570 = vadd.f32 %v3569, %v3463
          %v3571 = vadd.f32 %v3570, %v3464
          %v3572 = vadd.f32 %v3571, %v3465
          %v3573 = vadd.f32 %v3572, %v3466
          %v3574 = vadd.f32 %v3573, %v3467
          %v3575 = vadd.f32 %v3574, %v3468
          %v3576 = vadd.f32 %v3575, %v3469
          %v3577 = vrot.slane %v3576, 4
          %v3578 = vadd.f32 %v3576, %v3577
          %v3579 = vrot.slane %v3578, 2
          %v3580 = vadd.f32 %v3578, %v3579
          %v3581 = vrot.slane %v3580, 1
          %v3582 = vadd.f32 %v3580, %v3581
          %v3583 = vmul.f32 %v3362, %v3362
          %v3584 = vmul.f32 %v3363, %v3363
          %v3585 = vmul.f32 %v3364, %v3364
          %v3586 = vmul.f32 %v3365, %v3365
          %v3587 = vmul.f32 %v3366, %v3366
          %v3588 = vmul.f32 %v3367, %v3367
          %v3589 = vmul.f32 %v3368, %v3368
          %v3590 = vmul.f32 %v3369, %v3369
          %v3591 = vmul.f32 %v3370, %v3370
          %v3592 = vmul.f32 %v3371, %v3371
          %v3593 = vmul.f32 %v3372, %v3372
          %v3594 = vmul.f32 %v3373, %v3373
          %v3595 = vmul.f32 %v3374, %v3374
          %v3596 = vmul.f32 %v3375, %v3375
          %v3597 = vmul.f32 %v3376, %v3376
          %v3598 = vmul.f32 %v3377, %v3377
          %v3599 = vmul.f32 %v3378, %v3378
          %v3600 = vmul.f32 %v3379, %v3379
          %v3601 = vmul.f32 %v3380, %v3380
          %v3602 = vmul.f32 %v3381, %v3381
          %v3603 = vmul.f32 %v3382, %v3382
          %v3604 = vmul.f32 %v3383, %v3383
          %v3605 = vmul.f32 %v3384, %v3384
          %v3606 = vmul.f32 %v3385, %v3385
          %v3607 = vmul.f32 %v3386, %v3386
          %v3608 = vmul.f32 %v3387, %v3387
          %v3609 = vmul.f32 %v3388, %v3388
          %v3610 = vmul.f32 %v3389, %v3389
          %v3611 = vmul.f32 %v3390, %v3390
          %v3612 = vmul.f32 %v3391, %v3391
          %v3613 = vmul.f32 %v3392, %v3392
          %v3614 = vmul.f32 %v3393, %v3393
          %v3615 = vmul.f32 %v3394, %v3394
          %v3616 = vmul.f32 %v3395, %v3395
          %v3617 = vmul.f32 %v3396, %v3396
          %v3618 = vmul.f32 %v3397, %v3397
          %v3619 = vmul.f32 %v3398, %v3398
          %v3620 = vmul.f32 %v3399, %v3399
          %v3621 = vmul.f32 %v3400, %v3400
          %v3622 = vmul.f32 %v3401, %v3401
          %v3623 = vmul.f32 %v3402, %v3402
          %v3624 = vmul.f32 %v3403, %v3403
          %v3625 = vmul.f32 %v3404, %v3404
          %v3626 = vmul.f32 %v3405, %v3405
          %v3627 = vmul.f32 %v3406, %v3406
          %v3628 = vmul.f32 %v3407, %v3407
          %v3629 = vmul.f32 %v3408, %v3408
          %v3630 = vmul.f32 %v3409, %v3409
          %v3631 = vmul.f32 %v3410, %v3410
          %v3632 = vmul.f32 %v3411, %v3411
          %v3633 = vmul.f32 %v3412, %v3412
          %v3634 = vmul.f32 %v3413, %v3413
          %v3635 = vmul.f32 %v3414, %v3414
          %v3636 = vmul.f32 %v3415, %v3415
          %v3637 = vmul.f32 %v3416, %v3416
          %v3638 = vmul.f32 %v3417, %v3417
          %v3639 = vmul.f32 %v3418, %v3418
          %v3640 = vmul.f32 %v3419, %v3419
          %v3641 = vmul.f32 %v3420, %v3420
          %v3642 = vmul.f32 %v3421, %v3421
          %v3643 = vmul.f32 %v3422, %v3422
          %v3644 = vmul.f32 %v3423, %v3423
          %v3645 = vmul.f32 %v3424, %v3424
          %v3646 = vmul.f32 %v3425, %v3425
          %v3647 = vmul.f32 %v3426, %v3426
          %v3648 = vmul.f32 %v3427, %v3427
          %v3649 = vmul.f32 %v3428, %v3428
          %v3650 = vmul.f32 %v3429, %v3429
          %v3651 = vmul.f32 %v3430, %v3430
          %v3652 = vmul.f32 %v3431, %v3431
          %v3653 = vmul.f32 %v3432, %v3432
          %v3654 = vmul.f32 %v3433, %v3433
          %v3655 = vmul.f32 %v3434, %v3434
          %v3656 = vmul.f32 %v3435, %v3435
          %v3657 = vmul.f32 %v3436, %v3436
          %v3658 = vmul.f32 %v3437, %v3437
          %v3659 = vmul.f32 %v3438, %v3438
          %v3660 = vmul.f32 %v3439, %v3439
          %v3661 = vmul.f32 %v3440, %v3440
          %v3662 = vmul.f32 %v3441, %v3441
          %v3663 = vmul.f32 %v3442, %v3442
          %v3664 = vmul.f32 %v3443, %v3443
          %v3665 = vmul.f32 %v3444, %v3444
          %v3666 = vmul.f32 %v3445, %v3445
          %v3667 = vmul.f32 %v3446, %v3446
          %v3668 = vmul.f32 %v3447, %v3447
          %v3669 = vmul.f32 %v3448, %v3448
          %v3670 = vmul.f32 %v3449, %v3449
          %v3671 = vmul.f32 %v3450, %v3450
          %v3672 = vmul.f32 %v3451, %v3451
          %v3673 = vmul.f32 %v3452, %v3452
          %v3674 = vmul.f32 %v3453, %v3453
          %v3675 = vmul.f32 %v3454, %v3454
          %v3676 = vmul.f32 %v3455, %v3455
          %v3677 = vmul.f32 %v3456, %v3456
          %v3678 = vmul.f32 %v3457, %v3457
          %v3679 = vmul.f32 %v3458, %v3458
          %v3680 = vmul.f32 %v3459, %v3459
          %v3681 = vmul.f32 %v3460, %v3460
          %v3682 = vmul.f32 %v3461, %v3461
          %v3683 = vmul.f32 %v3462, %v3462
          %v3684 = vmul.f32 %v3463, %v3463
          %v3685 = vmul.f32 %v3464, %v3464
          %v3686 = vmul.f32 %v3465, %v3465
          %v3687 = vmul.f32 %v3466, %v3466
          %v3688 = vmul.f32 %v3467, %v3467
          %v3689 = vmul.f32 %v3468, %v3468
          %v3690 = vmul.f32 %v3469, %v3469
          %v3691 = vadd.f32 %v3583, %v3584
          %v3692 = vadd.f32 %v3691, %v3585
          %v3693 = vadd.f32 %v3692, %v3586
          %v3694 = vadd.f32 %v3693, %v3587
          %v3695 = vadd.f32 %v3694, %v3588
          %v3696 = vadd.f32 %v3695, %v3589
          %v3697 = vadd.f32 %v3696, %v3590
          %v3698 = vadd.f32 %v3697, %v3591
          %v3699 = vadd.f32 %v3698, %v3592
          %v3700 = vadd.f32 %v3699, %v3593
          %v3701 = vadd.f32 %v3700, %v3594
          %v3702 = vadd.f32 %v3701, %v3595
          %v3703 = vadd.f32 %v3702, %v3596
          %v3704 = vadd.f32 %v3703, %v3597
          %v3705 = vadd.f32 %v3704, %v3598
          %v3706 = vadd.f32 %v3705, %v3599
          %v3707 = vadd.f32 %v3706, %v3600
          %v3708 = vadd.f32 %v3707, %v3601
          %v3709 = vadd.f32 %v3708, %v3602
          %v3710 = vadd.f32 %v3709, %v3603
          %v3711 = vadd.f32 %v3710, %v3604
          %v3712 = vadd.f32 %v3711, %v3605
          %v3713 = vadd.f32 %v3712, %v3606
          %v3714 = vadd.f32 %v3713, %v3607
          %v3715 = vadd.f32 %v3714, %v3608
          %v3716 = vadd.f32 %v3715, %v3609
          %v3717 = vadd.f32 %v3716, %v3610
          %v3718 = vadd.f32 %v3717, %v3611
          %v3719 = vadd.f32 %v3718, %v3612
          %v3720 = vadd.f32 %v3719, %v3613
          %v3721 = vadd.f32 %v3720, %v3614
          %v3722 = vadd.f32 %v3721, %v3615
          %v3723 = vadd.f32 %v3722, %v3616
          %v3724 = vadd.f32 %v3723, %v3617
          %v3725 = vadd.f32 %v3724, %v3618
          %v3726 = vadd.f32 %v3725, %v3619
          %v3727 = vadd.f32 %v3726, %v3620
          %v3728 = vadd.f32 %v3727, %v3621
          %v3729 = vadd.f32 %v3728, %v3622
          %v3730 = vadd.f32 %v3729, %v3623
          %v3731 = vadd.f32 %v3730, %v3624
          %v3732 = vadd.f32 %v3731, %v3625
          %v3733 = vadd.f32 %v3732, %v3626
          %v3734 = vadd.f32 %v3733, %v3627
          %v3735 = vadd.f32 %v3734, %v3628
          %v3736 = vadd.f32 %v3735, %v3629
          %v3737 = vadd.f32 %v3736, %v3630
          %v3738 = vadd.f32 %v3737, %v3631
          %v3739 = vadd.f32 %v3738, %v3632
          %v3740 = vadd.f32 %v3739, %v3633
          %v3741 = vadd.f32 %v3740, %v3634
          %v3742 = vadd.f32 %v3741, %v3635
          %v3743 = vadd.f32 %v3742, %v3636
          %v3744 = vadd.f32 %v3743, %v3637
          %v3745 = vadd.f32 %v3744, %v3638
          %v3746 = vadd.f32 %v3745, %v3639
          %v3747 = vadd.f32 %v3746, %v3640
          %v3748 = vadd.f32 %v3747, %v3641
          %v3749 = vadd.f32 %v3748, %v3642
          %v3750 = vadd.f32 %v3749, %v3643
          %v3751 = vadd.f32 %v3750, %v3644
          %v3752 = vadd.f32 %v3751, %v3645
          %v3753 = vadd.f32 %v3752, %v3646
          %v3754 = vadd.f32 %v3753, %v3647
          %v3755 = vadd.f32 %v3754, %v3648
          %v3756 = vadd.f32 %v3755, %v3649
          %v3757 = vadd.f32 %v3756, %v3650
          %v3758 = vadd.f32 %v3757, %v3651
          %v3759 = vadd.f32 %v3758, %v3652
          %v3760 = vadd.f32 %v3759, %v3653
          %v3761 = vadd.f32 %v3760, %v3654
          %v3762 = vadd.f32 %v3761, %v3655
          %v3763 = vadd.f32 %v3762, %v3656
          %v3764 = vadd.f32 %v3763, %v3657
          %v3765 = vadd.f32 %v3764, %v3658
          %v3766 = vadd.f32 %v3765, %v3659
          %v3767 = vadd.f32 %v3766, %v3660
          %v3768 = vadd.f32 %v3767, %v3661
          %v3769 = vadd.f32 %v3768, %v3662
          %v3770 = vadd.f32 %v3769, %v3663
          %v3771 = vadd.f32 %v3770, %v3664
          %v3772 = vadd.f32 %v3771, %v3665
          %v3773 = vadd.f32 %v3772, %v3666
          %v3774 = vadd.f32 %v3773, %v3667
          %v3775 = vadd.f32 %v3774, %v3668
          %v3776 = vadd.f32 %v3775, %v3669
          %v3777 = vadd.f32 %v3776, %v3670
          %v3778 = vadd.f32 %v3777, %v3671
          %v3779 = vadd.f32 %v3778, %v3672
          %v3780 = vadd.f32 %v3779, %v3673
          %v3781 = vadd.f32 %v3780, %v3674
          %v3782 = vadd.f32 %v3781, %v3675
          %v3783 = vadd.f32 %v3782, %v3676
          %v3784 = vadd.f32 %v3783, %v3677
          %v3785 = vadd.f32 %v3784, %v3678
          %v3786 = vadd.f32 %v3785, %v3679
          %v3787 = vadd.f32 %v3786, %v3680
          %v3788 = vadd.f32 %v3787, %v3681
          %v3789 = vadd.f32 %v3788, %v3682
          %v3790 = vadd.f32 %v3789, %v3683
          %v3791 = vadd.f32 %v3790, %v3684
          %v3792 = vadd.f32 %v3791, %v3685
          %v3793 = vadd.f32 %v3792, %v3686
          %v3794 = vadd.f32 %v3793, %v3687
          %v3795 = vadd.f32 %v3794, %v3688
          %v3796 = vadd.f32 %v3795, %v3689
          %v3797 = vadd.f32 %v3796, %v3690
          %v3798 = vrot.slane %v3797, 4
          %v3799 = vadd.f32 %v3797, %v3798
          %v3800 = vrot.slane %v3799, 2
          %v3801 = vadd.f32 %v3799, %v3800
          %v3802 = vrot.slane %v3801, 1
          %v3803 = vadd.f32 %v3801, %v3802
          %v3804 = vmul.f32 %v3582, 0.001953125
          %v3805 = vmul.f32 %v3803, 0.001953125
          %v3806 = vmul.f32 %v3804, %v3804
          %v3807 = vsub.f32 %v3805, %v3806
          %v3808 = vld [vmem:[%s2] sm:$0x1]
          %v3809 = vadd.f32 %v3807, 1e-05
          %v3810 = vrsqrt.pop %v3809
          %v3811 = vmul.f32 %v3808, %v3810
          %v3812 = vld [vmem:[%s3] sm:$0x1]
          %v3813 = vmul.f32 %v3804, %v3811
          %v3814 = vsub.f32 %v3812, %v3813
          %v3816 = vlaneseq
          %v3817 = vshrl.u32 %v3816, 7
          %v3818 = vsub.s32 0, %v3817
          %v3819 = vrot.slane %v3811, %v3818
          %v3821 = vmul.f32 %v3362, %v3819
          %v3822 = vmul.f32 %v3363, %v3819
          %v3823 = vmul.f32 %v3364, %v3819
          %v3824 = vmul.f32 %v3365, %v3819
          %v3825 = vmul.f32 %v3366, %v3819
          %v3826 = vmul.f32 %v3367, %v3819
          %v3827 = vmul.f32 %v3368, %v3819
          %v3828 = vmul.f32 %v3369, %v3819
          %v3829 = vmul.f32 %v3370, %v3819
          %v3830 = vmul.f32 %v3371, %v3819
          %v3831 = vmul.f32 %v3372, %v3819
          %v3832 = vmul.f32 %v3373, %v3819
          %v3833 = vmul.f32 %v3374, %v3819
          %v3834 = vmul.f32 %v3375, %v3819
          %v3835 = vmul.f32 %v3376, %v3819
          %v3836 = vmul.f32 %v3377, %v3819
          %v3837 = vmul.f32 %v3378, %v3819
          %v3838 = vmul.f32 %v3379, %v3819
          %v3839 = vmul.f32 %v3380, %v3819
          %v3840 = vmul.f32 %v3381, %v3819
          %v3841 = vmul.f32 %v3382, %v3819
          %v3842 = vmul.f32 %v3383, %v3819
          %v3843 = vmul.f32 %v3384, %v3819
          %v3844 = vmul.f32 %v3385, %v3819
          %v3845 = vmul.f32 %v3386, %v3819
          %v3846 = vmul.f32 %v3387, %v3819
          %v3847 = vmul.f32 %v3388, %v3819
          %v3848 = vmul.f32 %v3389, %v3819
          %v3849 = vmul.f32 %v3390, %v3819
          %v3850 = vmul.f32 %v3391, %v3819
          %v3851 = vmul.f32 %v3392, %v3819
          %v3852 = vmul.f32 %v3393, %v3819
          %v3853 = vmul.f32 %v3394, %v3819
          %v3854 = vmul.f32 %v3395, %v3819
          %v3855 = vmul.f32 %v3396, %v3819
          %v3856 = vmul.f32 %v3397, %v3819
          %v3857 = vmul.f32 %v3398, %v3819
          %v3858 = vmul.f32 %v3399, %v3819
          %v3859 = vmul.f32 %v3400, %v3819
          %v3860 = vmul.f32 %v3401, %v3819
          %v3861 = vmul.f32 %v3402, %v3819
          %v3862 = vmul.f32 %v3403, %v3819
          %v3863 = vmul.f32 %v3404, %v3819
          %v3864 = vmul.f32 %v3405, %v3819
          %v3865 = vmul.f32 %v3406, %v3819
          %v3866 = vmul.f32 %v3407, %v3819
          %v3867 = vmul.f32 %v3408, %v3819
          %v3868 = vmul.f32 %v3409, %v3819
          %v3869 = vmul.f32 %v3410, %v3819
          %v3870 = vmul.f32 %v3411, %v3819
          %v3871 = vmul.f32 %v3412, %v3819
          %v3872 = vmul.f32 %v3413, %v3819
          %v3873 = vmul.f32 %v3414, %v3819
          %v3874 = vmul.f32 %v3415, %v3819
          %v3875 = vmul.f32 %v3416, %v3819
          %v3876 = vmul.f32 %v3417, %v3819
          %v3877 = vmul.f32 %v3418, %v3819
          %v3878 = vmul.f32 %v3419, %v3819
          %v3879 = vmul.f32 %v3420, %v3819
          %v3880 = vmul.f32 %v3421, %v3819
          %v3881 = vmul.f32 %v3422, %v3819
          %v3882 = vmul.f32 %v3423, %v3819
          %v3883 = vmul.f32 %v3424, %v3819
          %v3884 = vmul.f32 %v3425, %v3819
          %v3885 = vmul.f32 %v3426, %v3819
          %v3886 = vmul.f32 %v3427, %v3819
          %v3887 = vmul.f32 %v3428, %v3819
          %v3888 = vmul.f32 %v3429, %v3819
          %v3889 = vmul.f32 %v3430, %v3819
          %v3890 = vmul.f32 %v3431, %v3819
          %v3891 = vmul.f32 %v3432, %v3819
          %v3892 = vmul.f32 %v3433, %v3819
          %v3893 = vmul.f32 %v3434, %v3819
          %v3894 = vmul.f32 %v3435, %v3819
          %v3895 = vmul.f32 %v3436, %v3819
          %v3896 = vmul.f32 %v3437, %v3819
          %v3897 = vmul.f32 %v3438, %v3819
          %v3898 = vmul.f32 %v3439, %v3819
          %v3899 = vmul.f32 %v3440, %v3819
          %v3900 = vmul.f32 %v3441, %v3819
          %v3901 = vmul.f32 %v3442, %v3819
          %v3902 = vmul.f32 %v3443, %v3819
          %v3903 = vmul.f32 %v3444, %v3819
          %v3904 = vmul.f32 %v3445, %v3819
          %v3905 = vmul.f32 %v3446, %v3819
          %v3906 = vmul.f32 %v3447, %v3819
          %v3907 = vmul.f32 %v3448, %v3819
          %v3908 = vmul.f32 %v3449, %v3819
          %v3909 = vmul.f32 %v3450, %v3819
          %v3910 = vmul.f32 %v3451, %v3819
          %v3911 = vmul.f32 %v3452, %v3819
          %v3912 = vmul.f32 %v3453, %v3819
          %v3913 = vmul.f32 %v3454, %v3819
          %v3914 = vmul.f32 %v3455, %v3819
          %v3915 = vmul.f32 %v3456, %v3819
          %v3916 = vmul.f32 %v3457, %v3819
          %v3917 = vmul.f32 %v3458, %v3819
          %v3918 = vmul.f32 %v3459, %v3819
          %v3919 = vmul.f32 %v3460, %v3819
          %v3920 = vmul.f32 %v3461, %v3819
          %v3921 = vmul.f32 %v3462, %v3819
          %v3922 = vmul.f32 %v3463, %v3819
          %v3923 = vmul.f32 %v3464, %v3819
          %v3924 = vmul.f32 %v3465, %v3819
          %v3925 = vmul.f32 %v3466, %v3819
          %v3926 = vmul.f32 %v3467, %v3819
          %v3927 = vmul.f32 %v3468, %v3819
          %v3928 = vmul.f32 %v3469, %v3819
          %v3930 = vlaneseq
          %v3931 = vshrl.u32 %v3930, 7
          %v3932 = vsub.s32 0, %v3931
          %v3933 = vrot.slane %v3814, %v3932
          %v3935 = vadd.f32 %v3821, %v3933
          %v3936 = vadd.f32 %v3822, %v3933
          %v3937 = vadd.f32 %v3823, %v3933
          %v3938 = vadd.f32 %v3824, %v3933
          %v3939 = vadd.f32 %v3825, %v3933
          %v3940 = vadd.f32 %v3826, %v3933
          %v3941 = vadd.f32 %v3827, %v3933
          %v3942 = vadd.f32 %v3828, %v3933
          %v3943 = vadd.f32 %v3829, %v3933
          %v3944 = vadd.f32 %v3830, %v3933
          %v3945 = vadd.f32 %v3831, %v3933
          %v3946 = vadd.f32 %v3832, %v3933
          %v3947 = vadd.f32 %v3833, %v3933
          %v3948 = vadd.f32 %v3834, %v3933
          %v3949 = vadd.f32 %v3835, %v3933
          %v3950 = vadd.f32 %v3836, %v3933
          %v3951 = vadd.f32 %v3837, %v3933
          %v3952 = vadd.f32 %v3838, %v3933
          %v3953 = vadd.f32 %v3839, %v3933
          %v3954 = vadd.f32 %v3840, %v3933
          %v3955 = vadd.f32 %v3841, %v3933
          %v3956 = vadd.f32 %v3842, %v3933
          %v3957 = vadd.f32 %v3843, %v3933
          %v3958 = vadd.f32 %v3844, %v3933
          %v3959 = vadd.f32 %v3845, %v3933
          %v3960 = vadd.f32 %v3846, %v3933
          %v3961 = vadd.f32 %v3847, %v3933
          %v3962 = vadd.f32 %v3848, %v3933
          %v3963 = vadd.f32 %v3849, %v3933
          %v3964 = vadd.f32 %v3850, %v3933
          %v3965 = vadd.f32 %v3851, %v3933
          %v3966 = vadd.f32 %v3852, %v3933
          %v3967 = vadd.f32 %v3853, %v3933
          %v3968 = vadd.f32 %v3854, %v3933
          %v3969 = vadd.f32 %v3855, %v3933
          %v3970 = vadd.f32 %v3856, %v3933
          %v3971 = vadd.f32 %v3857, %v3933
          %v3972 = vadd.f32 %v3858, %v3933
          %v3973 = vadd.f32 %v3859, %v3933
          %v3974 = vadd.f32 %v3860, %v3933
          %v3975 = vadd.f32 %v3861, %v3933
          %v3976 = vadd.f32 %v3862, %v3933
          %v3977 = vadd.f32 %v3863, %v3933
          %v3978 = vadd.f32 %v3864, %v3933
          %v3979 = vadd.f32 %v3865, %v3933
          %v3980 = vadd.f32 %v3866, %v3933
          %v3981 = vadd.f32 %v3867, %v3933
          %v3982 = vadd.f32 %v3868, %v3933
          %v3983 = vadd.f32 %v3869, %v3933
          %v3984 = vadd.f32 %v3870, %v3933
          %v3985 = vadd.f32 %v3871, %v3933
          %v3986 = vadd.f32 %v3872, %v3933
          %v3987 = vadd.f32 %v3873, %v3933
          %v3988 = vadd.f32 %v3874, %v3933
          %v3989 = vadd.f32 %v3875, %v3933
          %v3990 = vadd.f32 %v3876, %v3933
          %v3991 = vadd.f32 %v3877, %v3933
          %v3992 = vadd.f32 %v3878, %v3933
          %v3993 = vadd.f32 %v3879, %v3933
          %v3994 = vadd.f32 %v3880, %v3933
          %v3995 = vadd.f32 %v3881, %v3933
          %v3996 = vadd.f32 %v3882, %v3933
          %v3997 = vadd.f32 %v3883, %v3933
          %v3998 = vadd.f32 %v3884, %v3933
          %v3999 = vadd.f32 %v3885, %v3933
          %v4000 = vadd.f32 %v3886, %v3933
          %v4001 = vadd.f32 %v3887, %v3933
          %v4002 = vadd.f32 %v3888, %v3933
          %v4003 = vadd.f32 %v3889, %v3933
          %v4004 = vadd.f32 %v3890, %v3933
          %v4005 = vadd.f32 %v3891, %v3933
          %v4006 = vadd.f32 %v3892, %v3933
          %v4007 = vadd.f32 %v3893, %v3933
          %v4008 = vadd.f32 %v3894, %v3933
          %v4009 = vadd.f32 %v3895, %v3933
          %v4010 = vadd.f32 %v3896, %v3933
          %v4011 = vadd.f32 %v3897, %v3933
          %v4012 = vadd.f32 %v3898, %v3933
          %v4013 = vadd.f32 %v3899, %v3933
          %v4014 = vadd.f32 %v3900, %v3933
          %v4015 = vadd.f32 %v3901, %v3933
          %v4016 = vadd.f32 %v3902, %v3933
          %v4017 = vadd.f32 %v3903, %v3933
          %v4018 = vadd.f32 %v3904, %v3933
          %v4019 = vadd.f32 %v3905, %v3933
          %v4020 = vadd.f32 %v3906, %v3933
          %v4021 = vadd.f32 %v3907, %v3933
          %v4022 = vadd.f32 %v3908, %v3933
          %v4023 = vadd.f32 %v3909, %v3933
          %v4024 = vadd.f32 %v3910, %v3933
          %v4025 = vadd.f32 %v3911, %v3933
          %v4026 = vadd.f32 %v3912, %v3933
          %v4027 = vadd.f32 %v3913, %v3933
          %v4028 = vadd.f32 %v3914, %v3933
          %v4029 = vadd.f32 %v3915, %v3933
          %v4030 = vadd.f32 %v3916, %v3933
          %v4031 = vadd.f32 %v3917, %v3933
          %v4032 = vadd.f32 %v3918, %v3933
          %v4033 = vadd.f32 %v3919, %v3933
          %v4034 = vadd.f32 %v3920, %v3933
          %v4035 = vadd.f32 %v3921, %v3933
          %v4036 = vadd.f32 %v3922, %v3933
          %v4037 = vadd.f32 %v3923, %v3933
          %v4038 = vadd.f32 %v3924, %v3933
          %v4039 = vadd.f32 %v3925, %v3933
          %v4040 = vadd.f32 %v3926, %v3933
          %v4041 = vadd.f32 %v3927, %v3933
          %v4042 = vadd.f32 %v3928, %v3933
          %v4043 = vmax.f32 %v3935, 0.0
          %v4044 = vmax.f32 %v3936, 0.0
          %v4045 = vmax.f32 %v3937, 0.0
          %v4046 = vmax.f32 %v3938, 0.0
          %v4047 = vmax.f32 %v3939, 0.0
          %v4048 = vmax.f32 %v3940, 0.0
          %v4049 = vmax.f32 %v3941, 0.0
          %v4050 = vmax.f32 %v3942, 0.0
          %v4051 = vmax.f32 %v3943, 0.0
          %v4052 = vmax.f32 %v3944, 0.0
          %v4053 = vmax.f32 %v3945, 0.0
          %v4054 = vmax.f32 %v3946, 0.0
          %v4055 = vmax.f32 %v3947, 0.0
          %v4056 = vmax.f32 %v3948, 0.0
          %v4057 = vmax.f32 %v3949, 0.0
          %v4058 = vmax.f32 %v3950, 0.0
          %v4059 = vmax.f32 %v3951, 0.0
          %v4060 = vmax.f32 %v3952, 0.0
          %v4061 = vmax.f32 %v3953, 0.0
          %v4062 = vmax.f32 %v3954, 0.0
          %v4063 = vmax.f32 %v3955, 0.0
          %v4064 = vmax.f32 %v3956, 0.0
          %v4065 = vmax.f32 %v3957, 0.0
          %v4066 = vmax.f32 %v3958, 0.0
          %v4067 = vmax.f32 %v3959, 0.0
          %v4068 = vmax.f32 %v3960, 0.0
          %v4069 = vmax.f32 %v3961, 0.0
          %v4070 = vmax.f32 %v3962, 0.0
          %v4071 = vmax.f32 %v3963, 0.0
          %v4072 = vmax.f32 %v3964, 0.0
          %v4073 = vmax.f32 %v3965, 0.0
          %v4074 = vmax.f32 %v3966, 0.0
          %v4075 = vmax.f32 %v3967, 0.0
          %v4076 = vmax.f32 %v3968, 0.0
          %v4077 = vmax.f32 %v3969, 0.0
          %v4078 = vmax.f32 %v3970, 0.0
          %v4079 = vmax.f32 %v3971, 0.0
          %v4080 = vmax.f32 %v3972, 0.0
          %v4081 = vmax.f32 %v3973, 0.0
          %v4082 = vmax.f32 %v3974, 0.0
          %v4083 = vmax.f32 %v3975, 0.0
          %v4084 = vmax.f32 %v3976, 0.0
          %v4085 = vmax.f32 %v3977, 0.0
          %v4086 = vmax.f32 %v3978, 0.0
          %v4087 = vmax.f32 %v3979, 0.0
          %v4088 = vmax.f32 %v3980, 0.0
          %v4089 = vmax.f32 %v3981, 0.0
          %v4090 = vmax.f32 %v3982, 0.0
          %v4091 = vmax.f32 %v3983, 0.0
          %v4092 = vmax.f32 %v3984, 0.0
          %v4093 = vmax.f32 %v3985, 0.0
          %v4094 = vmax.f32 %v3986, 0.0
          %v4095 = vmax.f32 %v3987, 0.0
          %v4096 = vmax.f32 %v3988, 0.0
          %v4097 = vmax.f32 %v3989, 0.0
          %v4098 = vmax.f32 %v3990, 0.0
          %v4099 = vmax.f32 %v3991, 0.0
          %v4100 = vmax.f32 %v3992, 0.0
          %v4101 = vmax.f32 %v3993, 0.0
          %v4102 = vmax.f32 %v3994, 0.0
          %v4103 = vmax.f32 %v3995, 0.0
          %v4104 = vmax.f32 %v3996, 0.0
          %v4105 = vmax.f32 %v3997, 0.0
          %v4106 = vmax.f32 %v3998, 0.0
          %v4107 = vmax.f32 %v3999, 0.0
          %v4108 = vmax.f32 %v4000, 0.0
          %v4109 = vmax.f32 %v4001, 0.0
          %v4110 = vmax.f32 %v4002, 0.0
          %v4111 = vmax.f32 %v4003, 0.0
          %v4112 = vmax.f32 %v4004, 0.0
          %v4113 = vmax.f32 %v4005, 0.0
          %v4114 = vmax.f32 %v4006, 0.0
          %v4115 = vmax.f32 %v4007, 0.0
          %v4116 = vmax.f32 %v4008, 0.0
          %v4117 = vmax.f32 %v4009, 0.0
          %v4118 = vmax.f32 %v4010, 0.0
          %v4119 = vmax.f32 %v4011, 0.0
          %v4120 = vmax.f32 %v4012, 0.0
          %v4121 = vmax.f32 %v4013, 0.0
          %v4122 = vmax.f32 %v4014, 0.0
          %v4123 = vmax.f32 %v4015, 0.0
          %v4124 = vmax.f32 %v4016, 0.0
          %v4125 = vmax.f32 %v4017, 0.0
          %v4126 = vmax.f32 %v4018, 0.0
          %v4127 = vmax.f32 %v4019, 0.0
          %v4128 = vmax.f32 %v4020, 0.0
          %v4129 = vmax.f32 %v4021, 0.0
          %v4130 = vmax.f32 %v4022, 0.0
          %v4131 = vmax.f32 %v4023, 0.0
          %v4132 = vmax.f32 %v4024, 0.0
          %v4133 = vmax.f32 %v4025, 0.0
          %v4134 = vmax.f32 %v4026, 0.0
          %v4135 = vmax.f32 %v4027, 0.0
          %v4136 = vmax.f32 %v4028, 0.0
          %v4137 = vmax.f32 %v4029, 0.0
          %v4138 = vmax.f32 %v4030, 0.0
          %v4139 = vmax.f32 %v4031, 0.0
          %v4140 = vmax.f32 %v4032, 0.0
          %v4141 = vmax.f32 %v4033, 0.0
          %v4142 = vmax.f32 %v4034, 0.0
          %v4143 = vmax.f32 %v4035, 0.0
          %v4144 = vmax.f32 %v4036, 0.0
          %v4145 = vmax.f32 %v4037, 0.0
          %v4146 = vmax.f32 %v4038, 0.0
          %v4147 = vmax.f32 %v4039, 0.0
          %v4148 = vmax.f32 %v4040, 0.0
          %v4149 = vmax.f32 %v4041, 0.0
          %v4150 = vmax.f32 %v4042, 0.0
          %v4151 = vsel %vm3356, %v4043, 0.0
          %v4152 = vsel %vm3357, %v4044, 0.0
          %v4153 = vsel %vm3358, %v4045, 0.0
          %v4154 = vsel %vm3359, %v4046, 0.0
          %v4155 = vsel %vm3360, %v4047, 0.0
          %v4156 = vsel %vm3361, %v4048, 0.0
          %v4157 = vsel %vm3359, %v4049, 0.0
          %v4158 = vsel %vm3360, %v4050, 0.0
          %v4159 = vsel %vm3361, %v4051, 0.0
          %v4160 = vsel %vm3359, %v4052, 0.0
          %v4161 = vsel %vm3360, %v4053, 0.0
          %v4162 = vsel %vm3361, %v4054, 0.0
          %v4163 = vsel %vm3359, %v4055, 0.0
          %v4164 = vsel %vm3360, %v4056, 0.0
          %v4165 = vsel %vm3361, %v4057, 0.0
          %v4166 = vsel %vm3359, %v4058, 0.0
          %v4167 = vsel %vm3360, %v4059, 0.0
          %v4168 = vsel %vm3361, %v4060, 0.0
          %v4169 = vsel %vm3359, %v4061, 0.0
          %v4170 = vsel %vm3360, %v4062, 0.0
          %v4171 = vsel %vm3361, %v4063, 0.0
          %v4172 = vsel %vm3359, %v4064, 0.0
          %v4173 = vsel %vm3360, %v4065, 0.0
          %v4174 = vsel %vm3361, %v4066, 0.0
          %v4175 = vsel %vm3359, %v4067, 0.0
          %v4176 = vsel %vm3360, %v4068, 0.0
          %v4177 = vsel %vm3361, %v4069, 0.0
          %v4178 = vsel %vm3359, %v4070, 0.0
          %v4179 = vsel %vm3360, %v4071, 0.0
          %v4180 = vsel %vm3361, %v4072, 0.0
          %v4181 = vsel %vm3359, %v4073, 0.0
          %v4182 = vsel %vm3360, %v4074, 0.0
          %v4183 = vsel %vm3361, %v4075, 0.0
          %v4184 = vsel %vm3359, %v4076, 0.0
          %v4185 = vsel %vm3360, %v4077, 0.0
          %v4186 = vsel %vm3361, %v4078, 0.0
          %v4187 = vsel %vm3359, %v4079, 0.0
          %v4188 = vsel %vm3360, %v4080, 0.0
          %v4189 = vsel %vm3361, %v4081, 0.0
          %v4190 = vsel %vm3359, %v4082, 0.0
          %v4191 = vsel %vm3360, %v4083, 0.0
          %v4192 = vsel %vm3361, %v4084, 0.0
          %v4193 = vsel %vm3359, %v4085, 0.0
          %v4194 = vsel %vm3360, %v4086, 0.0
          %v4195 = vsel %vm3361, %v4087, 0.0
          %v4196 = vsel %vm3359, %v4088, 0.0
          %v4197 = vsel %vm3360, %v4089, 0.0
          %v4198 = vsel %vm3361, %v4090, 0.0
          %v4199 = vsel %vm3359, %v4091, 0.0
          %v4200 = vsel %vm3360, %v4092, 0.0
          %v4201 = vsel %vm3361, %v4093, 0.0
          %v4202 = vsel %vm3356, %v4094, 0.0
          %v4203 = vsel %vm3357, %v4095, 0.0
          %v4204 = vsel %vm3358, %v4096, 0.0
          %v4205 = vsel %vm3356, %v4097, 0.0
          %v4206 = vsel %vm3357, %v4098, 0.0
          %v4207 = vsel %vm3358, %v4099, 0.0
          %v4208 = vsel %vm3359, %v4100, 0.0
          %v4209 = vsel %vm3360, %v4101, 0.0
          %v4210 = vsel %vm3361, %v4102, 0.0
          %v4211 = vsel %vm3359, %v4103, 0.0
          %v4212 = vsel %vm3360, %v4104, 0.0
          %v4213 = vsel %vm3361, %v4105, 0.0
          %v4214 = vsel %vm3359, %v4106, 0.0
          %v4215 = vsel %vm3360, %v4107, 0.0
          %v4216 = vsel %vm3361, %v4108, 0.0
          %v4217 = vsel %vm3359, %v4109, 0.0
          %v4218 = vsel %vm3360, %v4110, 0.0
          %v4219 = vsel %vm3361, %v4111, 0.0
          %v4220 = vsel %vm3359, %v4112, 0.0
          %v4221 = vsel %vm3360, %v4113, 0.0
          %v4222 = vsel %vm3361, %v4114, 0.0
          %v4223 = vsel %vm3359, %v4115, 0.0
          %v4224 = vsel %vm3360, %v4116, 0.0
          %v4225 = vsel %vm3361, %v4117, 0.0
          %v4226 = vsel %vm3359, %v4118, 0.0
          %v4227 = vsel %vm3360, %v4119, 0.0
          %v4228 = vsel %vm3361, %v4120, 0.0
          %v4229 = vsel %vm3359, %v4121, 0.0
          %v4230 = vsel %vm3360, %v4122, 0.0
          %v4231 = vsel %vm3361, %v4123, 0.0
          %v4232 = vsel %vm3359, %v4124, 0.0
          %v4233 = vsel %vm3360, %v4125, 0.0
          %v4234 = vsel %vm3361, %v4126, 0.0
          %v4235 = vsel %vm3359, %v4127, 0.0
          %v4236 = vsel %vm3360, %v4128, 0.0
          %v4237 = vsel %vm3361, %v4129, 0.0
          %v4238 = vsel %vm3359, %v4130, 0.0
          %v4239 = vsel %vm3360, %v4131, 0.0
          %v4240 = vsel %vm3361, %v4132, 0.0
          %v4241 = vsel %vm3359, %v4133, 0.0
          %v4242 = vsel %vm3360, %v4134, 0.0
          %v4243 = vsel %vm3361, %v4135, 0.0
          %v4244 = vsel %vm3359, %v4136, 0.0
          %v4245 = vsel %vm3360, %v4137, 0.0
          %v4246 = vsel %vm3361, %v4138, 0.0
          %v4247 = vsel %vm3359, %v4139, 0.0
          %v4248 = vsel %vm3360, %v4140, 0.0
          %v4249 = vsel %vm3361, %v4141, 0.0
          %v4250 = vsel %vm3359, %v4142, 0.0
          %v4251 = vsel %vm3360, %v4143, 0.0
          %v4252 = vsel %vm3361, %v4144, 0.0
          %v4253 = vsel %vm3359, %v4145, 0.0
          %v4254 = vsel %vm3360, %v4146, 0.0
          %v4255 = vsel %vm3361, %v4147, 0.0
          %v4256 = vsel %vm3356, %v4148, 0.0
          %v4257 = vsel %vm3357, %v4149, 0.0
          %v4258 = vsel %vm3358, %v4150, 0.0
          %v4259 = vpack.c.bf16 %v4152, %v4151
          %v4260 = vpack.c.bf16 %v4153, %v4153
          %v4261 = vpack.c.bf16 %v4155, %v4154
          %v4262 = vpack.c.bf16 %v4156, %v4156
          %v4263 = vpack.c.bf16 %v4158, %v4157
          %v4264 = vpack.c.bf16 %v4159, %v4159
          %v4265 = vpack.c.bf16 %v4161, %v4160
          %v4266 = vpack.c.bf16 %v4162, %v4162
          %v4267 = vpack.c.bf16 %v4164, %v4163
          %v4268 = vpack.c.bf16 %v4165, %v4165
          %v4269 = vpack.c.bf16 %v4167, %v4166
          %v4270 = vpack.c.bf16 %v4168, %v4168
          %v4271 = vpack.c.bf16 %v4170, %v4169
          %v4272 = vpack.c.bf16 %v4171, %v4171
          %v4273 = vpack.c.bf16 %v4173, %v4172
          %v4274 = vpack.c.bf16 %v4174, %v4174
          %v4275 = vpack.c.bf16 %v4176, %v4175
          %v4276 = vpack.c.bf16 %v4177, %v4177
          %v4277 = vpack.c.bf16 %v4179, %v4178
          %v4278 = vpack.c.bf16 %v4180, %v4180
          %v4279 = vpack.c.bf16 %v4182, %v4181
          %v4280 = vpack.c.bf16 %v4183, %v4183
          %v4281 = vpack.c.bf16 %v4185, %v4184
          %v4282 = vpack.c.bf16 %v4186, %v4186
          %v4283 = vpack.c.bf16 %v4188, %v4187
          %v4284 = vpack.c.bf16 %v4189, %v4189
          %v4285 = vpack.c.bf16 %v4191, %v4190
          %v4286 = vpack.c.bf16 %v4192, %v4192
          %v4287 = vpack.c.bf16 %v4194, %v4193
          %v4288 = vpack.c.bf16 %v4195, %v4195
          %v4289 = vpack.c.bf16 %v4197, %v4196
          %v4290 = vpack.c.bf16 %v4198, %v4198
          %v4291 = vpack.c.bf16 %v4200, %v4199
          %v4292 = vpack.c.bf16 %v4201, %v4201
          %v4293 = vpack.c.bf16 %v4203, %v4202
          %v4294 = vpack.c.bf16 %v4204, %v4204
          %v4295 = vpack.c.bf16 %v4206, %v4205
          %v4296 = vpack.c.bf16 %v4207, %v4207
          %v4297 = vpack.c.bf16 %v4209, %v4208
          %v4298 = vpack.c.bf16 %v4210, %v4210
          %v4299 = vpack.c.bf16 %v4212, %v4211
          %v4300 = vpack.c.bf16 %v4213, %v4213
          %v4301 = vpack.c.bf16 %v4215, %v4214
          %v4302 = vpack.c.bf16 %v4216, %v4216
          %v4303 = vpack.c.bf16 %v4218, %v4217
          %v4304 = vpack.c.bf16 %v4219, %v4219
          %v4305 = vpack.c.bf16 %v4221, %v4220
          %v4306 = vpack.c.bf16 %v4222, %v4222
          %v4307 = vpack.c.bf16 %v4224, %v4223
          %v4308 = vpack.c.bf16 %v4225, %v4225
          %v4309 = vpack.c.bf16 %v4227, %v4226
          %v4310 = vpack.c.bf16 %v4228, %v4228
          %v4311 = vpack.c.bf16 %v4230, %v4229
          %v4312 = vpack.c.bf16 %v4231, %v4231
          %v4313 = vpack.c.bf16 %v4233, %v4232
          %v4314 = vpack.c.bf16 %v4234, %v4234
          %v4315 = vpack.c.bf16 %v4236, %v4235
          %v4316 = vpack.c.bf16 %v4237, %v4237
          %v4317 = vpack.c.bf16 %v4239, %v4238
          %v4318 = vpack.c.bf16 %v4240, %v4240
          %v4319 = vpack.c.bf16 %v4242, %v4241
          %v4320 = vpack.c.bf16 %v4243, %v4243
          %v4321 = vpack.c.bf16 %v4245, %v4244
          %v4322 = vpack.c.bf16 %v4246, %v4246
          %v4323 = vpack.c.bf16 %v4248, %v4247
          %v4324 = vpack.c.bf16 %v4249, %v4249
          %v4325 = vpack.c.bf16 %v4251, %v4250
          %v4326 = vpack.c.bf16 %v4252, %v4252
          %v4327 = vpack.c.bf16 %v4254, %v4253
          %v4328 = vpack.c.bf16 %v4255, %v4255
          %v4329 = vpack.c.bf16 %v4257, %v4256
          %v4330 = vpack.c.bf16 %v4258, %v4258
          %v4332 = vshrl.u32 %v4259, 16
          %v4334 = vshll.u32 %v4259, 16
          %v4336 = vrot.slane %v4334, 1
          %v4337 = vor.u32 %v4332, %v4336
          %v4339 = vshll.u32 %v4260, 16
          %v4341 = vrot.slane %v4339, 1
          %v4342 = vsel %vm526, %v4337, %v4341
          %v4344 = vshrl.u32 %v4261, 16
          %v4346 = vshll.u32 %v4261, 16
          %v4348 = vrot.slane %v4346, 1
          %v4349 = vor.u32 %v4344, %v4348
          %v4351 = vshll.u32 %v4262, 16
          %v4353 = vrot.slane %v4351, 1
          %v4354 = vsel %vm526, %v4349, %v4353
          %v4356 = vshrl.u32 %v4263, 16
          %v4358 = vshll.u32 %v4263, 16
          %v4360 = vrot.slane %v4358, 1
          %v4361 = vor.u32 %v4356, %v4360
          %v4363 = vshll.u32 %v4264, 16
          %v4365 = vrot.slane %v4363, 1
          %v4366 = vsel %vm526, %v4361, %v4365
          %v4368 = vshrl.u32 %v4265, 16
          %v4370 = vshll.u32 %v4265, 16
          %v4372 = vrot.slane %v4370, 1
          %v4373 = vor.u32 %v4368, %v4372
          %v4375 = vshll.u32 %v4266, 16
          %v4377 = vrot.slane %v4375, 1
          %v4378 = vsel %vm526, %v4373, %v4377
          %v4380 = vshrl.u32 %v4267, 16
          %v4382 = vshll.u32 %v4267, 16
          %v4384 = vrot.slane %v4382, 1
          %v4385 = vor.u32 %v4380, %v4384
          %v4387 = vshll.u32 %v4268, 16
          %v4389 = vrot.slane %v4387, 1
          %v4390 = vsel %vm526, %v4385, %v4389
          %v4392 = vshrl.u32 %v4269, 16
          %v4394 = vshll.u32 %v4269, 16
          %v4396 = vrot.slane %v4394, 1
          %v4397 = vor.u32 %v4392, %v4396
          %v4399 = vshll.u32 %v4270, 16
          %v4401 = vrot.slane %v4399, 1
          %v4402 = vsel %vm526, %v4397, %v4401
          %v4404 = vshrl.u32 %v4271, 16
          %v4406 = vshll.u32 %v4271, 16
          %v4408 = vrot.slane %v4406, 1
          %v4409 = vor.u32 %v4404, %v4408
          %v4411 = vshll.u32 %v4272, 16
          %v4413 = vrot.slane %v4411, 1
          %v4414 = vsel %vm526, %v4409, %v4413
          %v4416 = vshrl.u32 %v4273, 16
          %v4418 = vshll.u32 %v4273, 16
          %v4420 = vrot.slane %v4418, 1
          %v4421 = vor.u32 %v4416, %v4420
          %v4423 = vshll.u32 %v4274, 16
          %v4425 = vrot.slane %v4423, 1
          %v4426 = vsel %vm526, %v4421, %v4425
          %v4428 = vshrl.u32 %v4275, 16
          %v4430 = vshll.u32 %v4275, 16
          %v4432 = vrot.slane %v4430, 1
          %v4433 = vor.u32 %v4428, %v4432
          %v4435 = vshll.u32 %v4276, 16
          %v4437 = vrot.slane %v4435, 1
          %v4438 = vsel %vm526, %v4433, %v4437
          %v4440 = vshrl.u32 %v4277, 16
          %v4442 = vshll.u32 %v4277, 16
          %v4444 = vrot.slane %v4442, 1
          %v4445 = vor.u32 %v4440, %v4444
          %v4447 = vshll.u32 %v4278, 16
          %v4449 = vrot.slane %v4447, 1
          %v4450 = vsel %vm526, %v4445, %v4449
          %v4452 = vshrl.u32 %v4279, 16
          %v4454 = vshll.u32 %v4279, 16
          %v4456 = vrot.slane %v4454, 1
          %v4457 = vor.u32 %v4452, %v4456
          %v4459 = vshll.u32 %v4280, 16
          %v4461 = vrot.slane %v4459, 1
          %v4462 = vsel %vm526, %v4457, %v4461
          %v4464 = vshrl.u32 %v4281, 16
          %v4466 = vshll.u32 %v4281, 16
          %v4468 = vrot.slane %v4466, 1
          %v4469 = vor.u32 %v4464, %v4468
          %v4471 = vshll.u32 %v4282, 16
          %v4473 = vrot.slane %v4471, 1
          %v4474 = vsel %vm526, %v4469, %v4473
          %v4476 = vshrl.u32 %v4283, 16
          %v4478 = vshll.u32 %v4283, 16
          %v4480 = vrot.slane %v4478, 1
          %v4481 = vor.u32 %v4476, %v4480
          %v4483 = vshll.u32 %v4284, 16
          %v4485 = vrot.slane %v4483, 1
          %v4486 = vsel %vm526, %v4481, %v4485
          %v4488 = vshrl.u32 %v4285, 16
          %v4490 = vshll.u32 %v4285, 16
          %v4492 = vrot.slane %v4490, 1
          %v4493 = vor.u32 %v4488, %v4492
          %v4495 = vshll.u32 %v4286, 16
          %v4497 = vrot.slane %v4495, 1
          %v4498 = vsel %vm526, %v4493, %v4497
          %v4500 = vshrl.u32 %v4287, 16
          %v4502 = vshll.u32 %v4287, 16
          %v4504 = vrot.slane %v4502, 1
          %v4505 = vor.u32 %v4500, %v4504
          %v4507 = vshll.u32 %v4288, 16
          %v4509 = vrot.slane %v4507, 1
          %v4510 = vsel %vm526, %v4505, %v4509
          %v4512 = vshrl.u32 %v4289, 16
          %v4514 = vshll.u32 %v4289, 16
          %v4516 = vrot.slane %v4514, 1
          %v4517 = vor.u32 %v4512, %v4516
          %v4519 = vshll.u32 %v4290, 16
          %v4521 = vrot.slane %v4519, 1
          %v4522 = vsel %vm526, %v4517, %v4521
          %v4524 = vshrl.u32 %v4295, 16
          %v4526 = vshll.u32 %v4295, 16
          %v4528 = vrot.slane %v4526, 1
          %v4529 = vor.u32 %v4524, %v4528
          %v4531 = vshll.u32 %v4296, 16
          %v4533 = vrot.slane %v4531, 1
          %v4534 = vsel %vm526, %v4529, %v4533
          %v4536 = vshrl.u32 %v4297, 16
          %v4538 = vshll.u32 %v4297, 16
          %v4540 = vrot.slane %v4538, 1
          %v4541 = vor.u32 %v4536, %v4540
          %v4543 = vshll.u32 %v4298, 16
          %v4545 = vrot.slane %v4543, 1
          %v4546 = vsel %vm526, %v4541, %v4545
          %v4548 = vshrl.u32 %v4299, 16
          %v4550 = vshll.u32 %v4299, 16
          %v4552 = vrot.slane %v4550, 1
          %v4553 = vor.u32 %v4548, %v4552
          %v4555 = vshll.u32 %v4300, 16
          %v4557 = vrot.slane %v4555, 1
          %v4558 = vsel %vm526, %v4553, %v4557
          %v4560 = vshrl.u32 %v4301, 16
          %v4562 = vshll.u32 %v4301, 16
          %v4564 = vrot.slane %v4562, 1
          %v4565 = vor.u32 %v4560, %v4564
          %v4567 = vshll.u32 %v4302, 16
          %v4569 = vrot.slane %v4567, 1
          %v4570 = vsel %vm526, %v4565, %v4569
          %v4572 = vshrl.u32 %v4303, 16
          %v4574 = vshll.u32 %v4303, 16
          %v4576 = vrot.slane %v4574, 1
          %v4577 = vor.u32 %v4572, %v4576
          %v4579 = vshll.u32 %v4304, 16
          %v4581 = vrot.slane %v4579, 1
          %v4582 = vsel %vm526, %v4577, %v4581
          %v4584 = vshrl.u32 %v4305, 16
          %v4586 = vshll.u32 %v4305, 16
          %v4588 = vrot.slane %v4586, 1
          %v4589 = vor.u32 %v4584, %v4588
          %v4591 = vshll.u32 %v4306, 16
          %v4593 = vrot.slane %v4591, 1
          %v4594 = vsel %vm526, %v4589, %v4593
          %v4596 = vshrl.u32 %v4307, 16
          %v4598 = vshll.u32 %v4307, 16
          %v4600 = vrot.slane %v4598, 1
          %v4601 = vor.u32 %v4596, %v4600
          %v4603 = vshll.u32 %v4308, 16
          %v4605 = vrot.slane %v4603, 1
          %v4606 = vsel %vm526, %v4601, %v4605
          %v4608 = vshrl.u32 %v4309, 16
          %v4610 = vshll.u32 %v4309, 16
          %v4612 = vrot.slane %v4610, 1
          %v4613 = vor.u32 %v4608, %v4612
          %v4615 = vshll.u32 %v4310, 16
          %v4617 = vrot.slane %v4615, 1
          %v4618 = vsel %vm526, %v4613, %v4617
          %v4620 = vshrl.u32 %v4311, 16
          %v4622 = vshll.u32 %v4311, 16
          %v4624 = vrot.slane %v4622, 1
          %v4625 = vor.u32 %v4620, %v4624
          %v4627 = vshll.u32 %v4312, 16
          %v4629 = vrot.slane %v4627, 1
          %v4630 = vsel %vm526, %v4625, %v4629
          %v4632 = vshrl.u32 %v4313, 16
          %v4634 = vshll.u32 %v4313, 16
          %v4636 = vrot.slane %v4634, 1
          %v4637 = vor.u32 %v4632, %v4636
          %v4639 = vshll.u32 %v4314, 16
          %v4641 = vrot.slane %v4639, 1
          %v4642 = vsel %vm526, %v4637, %v4641
          %v4644 = vshrl.u32 %v4315, 16
          %v4646 = vshll.u32 %v4315, 16
          %v4648 = vrot.slane %v4646, 1
          %v4649 = vor.u32 %v4644, %v4648
          %v4651 = vshll.u32 %v4316, 16
          %v4653 = vrot.slane %v4651, 1
          %v4654 = vsel %vm526, %v4649, %v4653
          %v4656 = vshrl.u32 %v4317, 16
          %v4658 = vshll.u32 %v4317, 16
          %v4660 = vrot.slane %v4658, 1
          %v4661 = vor.u32 %v4656, %v4660
          %v4663 = vshll.u32 %v4318, 16
          %v4665 = vrot.slane %v4663, 1
          %v4666 = vsel %vm526, %v4661, %v4665
          %v4668 = vshrl.u32 %v4319, 16
          %v4670 = vshll.u32 %v4319, 16
          %v4672 = vrot.slane %v4670, 1
          %v4673 = vor.u32 %v4668, %v4672
          %v4675 = vshll.u32 %v4320, 16
          %v4677 = vrot.slane %v4675, 1
          %v4678 = vsel %vm526, %v4673, %v4677
          %v4680 = vshrl.u32 %v4321, 16
          %v4682 = vshll.u32 %v4321, 16
          %v4684 = vrot.slane %v4682, 1
          %v4685 = vor.u32 %v4680, %v4684
          %v4687 = vshll.u32 %v4322, 16
          %v4689 = vrot.slane %v4687, 1
          %v4690 = vsel %vm526, %v4685, %v4689
          %v4692 = vshrl.u32 %v4323, 16
          %v4694 = vshll.u32 %v4323, 16
          %v4696 = vrot.slane %v4694, 1
          %v4697 = vor.u32 %v4692, %v4696
          %v4699 = vshll.u32 %v4324, 16
          %v4701 = vrot.slane %v4699, 1
          %v4702 = vsel %vm526, %v4697, %v4701
          %v4704 = vshrl.u32 %v4325, 16
          %v4706 = vshll.u32 %v4325, 16
          %v4708 = vrot.slane %v4706, 1
          %v4709 = vor.u32 %v4704, %v4708
          %v4711 = vshll.u32 %v4326, 16
          %v4713 = vrot.slane %v4711, 1
          %v4714 = vsel %vm526, %v4709, %v4713
          %v4811 = vrot.slane %v4259, 1
          %v4812 = vrot.slane %v4260, 1
          %v4813 = vsel %vm797, %v4811, %v4812
          %v4814 = vrot.slane %v4261, 1
          %v4815 = vrot.slane %v4262, 1
          %v4816 = vsel %vm797, %v4814, %v4815
          %v4817 = vrot.slane %v4263, 1
          %v4818 = vrot.slane %v4264, 1
          %v4819 = vsel %vm797, %v4817, %v4818
          %v4820 = vrot.slane %v4265, 1
          %v4821 = vrot.slane %v4266, 1
          %v4822 = vsel %vm797, %v4820, %v4821
          %v4823 = vrot.slane %v4267, 1
          %v4824 = vrot.slane %v4268, 1
          %v4825 = vsel %vm797, %v4823, %v4824
          %v4826 = vrot.slane %v4269, 1
          %v4827 = vrot.slane %v4270, 1
          %v4828 = vsel %vm797, %v4826, %v4827
          %v4829 = vrot.slane %v4271, 1
          %v4830 = vrot.slane %v4272, 1
          %v4831 = vsel %vm797, %v4829, %v4830
          %v4832 = vrot.slane %v4273, 1
          %v4833 = vrot.slane %v4274, 1
          %v4834 = vsel %vm797, %v4832, %v4833
          %v4835 = vrot.slane %v4275, 1
          %v4836 = vrot.slane %v4276, 1
          %v4837 = vsel %vm797, %v4835, %v4836
          %v4838 = vrot.slane %v4277, 1
          %v4839 = vrot.slane %v4278, 1
          %v4840 = vsel %vm797, %v4838, %v4839
          %v4841 = vrot.slane %v4279, 1
          %v4842 = vrot.slane %v4280, 1
          %v4843 = vsel %vm797, %v4841, %v4842
          %v4844 = vrot.slane %v4281, 1
          %v4845 = vrot.slane %v4282, 1
          %v4846 = vsel %vm797, %v4844, %v4845
          %v4847 = vrot.slane %v4283, 1
          %v4848 = vrot.slane %v4284, 1
          %v4849 = vsel %vm797, %v4847, %v4848
          %v4850 = vrot.slane %v4285, 1
          %v4851 = vrot.slane %v4286, 1
          %v4852 = vsel %vm797, %v4850, %v4851
          %v4853 = vrot.slane %v4287, 1
          %v4854 = vrot.slane %v4288, 1
          %v4855 = vsel %vm797, %v4853, %v4854
          %v4856 = vrot.slane %v4289, 1
          %v4857 = vrot.slane %v4290, 1
          %v4858 = vsel %vm797, %v4856, %v4857
          %v4859 = vrot.slane %v4295, 1
          %v4860 = vrot.slane %v4296, 1
          %v4861 = vsel %vm797, %v4859, %v4860
          %v4862 = vrot.slane %v4297, 1
          %v4863 = vrot.slane %v4298, 1
          %v4864 = vsel %vm797, %v4862, %v4863
          %v4865 = vrot.slane %v4299, 1
          %v4866 = vrot.slane %v4300, 1
          %v4867 = vsel %vm797, %v4865, %v4866
          %v4868 = vrot.slane %v4301, 1
          %v4869 = vrot.slane %v4302, 1
          %v4870 = vsel %vm797, %v4868, %v4869
          %v4871 = vrot.slane %v4303, 1
          %v4872 = vrot.slane %v4304, 1
          %v4873 = vsel %vm797, %v4871, %v4872
          %v4874 = vrot.slane %v4305, 1
          %v4875 = vrot.slane %v4306, 1
          %v4876 = vsel %vm797, %v4874, %v4875
          %v4877 = vrot.slane %v4307, 1
          %v4878 = vrot.slane %v4308, 1
          %v4879 = vsel %vm797, %v4877, %v4878
          %v4880 = vrot.slane %v4309, 1
          %v4881 = vrot.slane %v4310, 1
          %v4882 = vsel %vm797, %v4880, %v4881
          %v4883 = vrot.slane %v4311, 1
          %v4884 = vrot.slane %v4312, 1
          %v4885 = vsel %vm797, %v4883, %v4884
          %v4886 = vrot.slane %v4313, 1
          %v4887 = vrot.slane %v4314, 1
          %v4888 = vsel %vm797, %v4886, %v4887
          %v4889 = vrot.slane %v4315, 1
          %v4890 = vrot.slane %v4316, 1
          %v4891 = vsel %vm797, %v4889, %v4890
          %v4892 = vrot.slane %v4317, 1
          %v4893 = vrot.slane %v4318, 1
          %v4894 = vsel %vm797, %v4892, %v4893
          %v4895 = vrot.slane %v4319, 1
          %v4896 = vrot.slane %v4320, 1
          %v4897 = vsel %vm797, %v4895, %v4896
          %v4898 = vrot.slane %v4321, 1
          %v4899 = vrot.slane %v4322, 1
          %v4900 = vsel %vm797, %v4898, %v4899
          %v4901 = vrot.slane %v4323, 1
          %v4902 = vrot.slane %v4324, 1
          %v4903 = vsel %vm797, %v4901, %v4902
          %v4904 = vrot.slane %v4325, 1
          %v4905 = vrot.slane %v4326, 1
          %v4906 = vsel %vm797, %v4904, %v4905
          %v4940 = vshrl.u32 %v4291, 16
          %v4942 = vshll.u32 %v4291, 16
          %v4944 = vrot.slane %v4942, 1
          %v4945 = vor.u32 %v4940, %v4944
          %v4947 = vshll.u32 %v4292, 16
          %v4949 = vrot.slane %v4947, 1
          %v4950 = vsel %vm526, %v4945, %v4949
          %v4952 = vshrl.u32 %v4327, 16
          %v4954 = vshll.u32 %v4327, 16
          %v4956 = vrot.slane %v4954, 1
          %v4957 = vor.u32 %v4952, %v4956
          %v4959 = vshll.u32 %v4328, 16
          %v4961 = vrot.slane %v4959, 1
          %v4962 = vsel %vm526, %v4957, %v4961
          %v4969 = vrot.slane %v4291, 1
          %v4970 = vrot.slane %v4292, 1
          %v4971 = vsel %vm797, %v4969, %v4970
          %v4972 = vrot.slane %v4327, 1
          %v4973 = vrot.slane %v4328, 1
          %v4974 = vsel %vm797, %v4972, %v4973
          %v4978 = vshrl.u32 %v4293, 16
          %v4980 = vshll.u32 %v4293, 16
          %v4982 = vrot.slane %v4980, 1
          %v4983 = vor.u32 %v4978, %v4982
          %v4985 = vshll.u32 %v4294, 16
          %v4987 = vrot.slane %v4985, 1
          %v4988 = vsel %vm526, %v4983, %v4987
          %v4990 = vshrl.u32 %v4329, 16
          %v4992 = vshll.u32 %v4329, 16
          %v4994 = vrot.slane %v4992, 1
          %v4995 = vor.u32 %v4990, %v4994
          %v4997 = vshll.u32 %v4330, 16
          %v4999 = vrot.slane %v4997, 1
          %v5000 = vsel %vm526, %v4995, %v4999
          %v5007 = vrot.slane %v4293, 1
          %v5008 = vrot.slane %v4294, 1
          %v5009 = vsel %vm797, %v5007, %v5008
          %v5010 = vrot.slane %v4329, 1
          %v5011 = vrot.slane %v4330, 1
          %v5012 = vsel %vm797, %v5010, %v5011
          %v5015 = vld [vmem:[%s4] sm:$0xf]
          %v5016 = vld [vmem:[%s4 + $0x4] sm:$0xf]
          %v5017 = vld [vmem:[%s4 + $0x8] sm:$0xf]
          %v5018 = vld [vmem:[%s4 + $0xc] sm:$0xf]
          %v5019 = vld [vmem:[%s4 + $0x10] sm:$0xf]
          %v5020 = vld [vmem:[%s4 + $0x14] sm:$0xf]
          %v5021 = vld [vmem:[%s4 + $0x18] sm:$0xf]
          %v5022 = vld [vmem:[%s4 + $0x1c] sm:$0xf]
          %v5023 = vld [vmem:[%s4 + $0x20] sm:$0xf]
          %v5024 = vld [vmem:[%s4 + $0x24] sm:$0xf]
          %v5025 = vld [vmem:[%s4 + $0x28] sm:$0xf]
          %v5026 = vld [vmem:[%s4 + $0x2c] sm:$0xf]
          %v5027 = vld [vmem:[%s4 + $0x30] sm:$0xf]
          %v5028 = vld [vmem:[%s4 + $0x34] sm:$0xf]
          %v5029 = vld [vmem:[%s4 + $0x38] sm:$0xf]
          %v5030 = vld [vmem:[%s4 + $0x3c] sm:$0xf]
          %v5031 = vld [vmem:[%s4 + $0x40] sm:$0xf]
          %v5032 = vld [vmem:[%s4 + $0x44] sm:$0xf]
          %v5033 = vld [vmem:[%s4 + $0x48] sm:$0xf]
          %v5034 = vld [vmem:[%s4 + $0x4c] sm:$0xf]
          %v5035 = vld [vmem:[%s4 + $0x50] sm:$0xf]
          %v5036 = vld [vmem:[%s4 + $0x54] sm:$0xf]
          %v5037 = vld [vmem:[%s4 + $0x58] sm:$0xf]
          %v5038 = vld [vmem:[%s4 + $0x5c] sm:$0xf]
          %v5039 = vld [vmem:[%s4 + $0x60] sm:$0xf]
          %v5040 = vld [vmem:[%s4 + $0x64] sm:$0xf]
          %v5041 = vld [vmem:[%s4 + $0x68] sm:$0xf]
          %v5042 = vld [vmem:[%s4 + $0x6c] sm:$0xf]
          %v5043 = vld [vmem:[%s4 + $0x70] sm:$0xf]
          %v5044 = vld [vmem:[%s4 + $0x74] sm:$0xf]
          %v5045 = vld [vmem:[%s4 + $0x78] sm:$0xf]
          %v5046 = vld [vmem:[%s4 + $0x7c] sm:$0xf]
          %v5047 = vld [vmem:[%s4 + $0x80] sm:$0xf]
          %v5048 = vld [vmem:[%s4 + $0x84] sm:$0xf]
          %v5049 = vld [vmem:[%s4 + $0x88] sm:$0xf]
          %v5050 = vld [vmem:[%s4 + $0x8c] sm:$0xf]
          %v5051 = vld [vmem:[%s4 + $0x90] sm:$0xf]
          %v5052 = vld [vmem:[%s4 + $0x94] sm:$0xf]
          %v5053 = vld [vmem:[%s4 + $0x98] sm:$0xf]
          %v5054 = vld [vmem:[%s4 + $0x9c] sm:$0xf]
          %v5055 = vld [vmem:[%s4 + $0xa0] sm:$0xf]
          %v5056 = vld [vmem:[%s4 + $0xa4] sm:$0xf]
          %v5057 = vld [vmem:[%s4 + $0xa8] sm:$0xf]
          %v5058 = vld [vmem:[%s4 + $0xac] sm:$0xf]
          %v5059 = vld [vmem:[%s4 + $0xb0] sm:$0xf]
          %v5060 = vld [vmem:[%s4 + $0xb4] sm:$0xf]
          %v5061 = vld [vmem:[%s4 + $0xb8] sm:$0xf]
          %v5062 = vld [vmem:[%s4 + $0xbc] sm:$0xf]
          %v5063 = vld [vmem:[%s4 + $0xc0] sm:$0xf]
          %v5064 = vld [vmem:[%s4 + $0xc4] sm:$0xf]
          %v5065 = vld [vmem:[%s4 + $0xc8] sm:$0xf]
          %v5066 = vld [vmem:[%s4 + $0xcc] sm:$0xf]
          %v5067 = vld [vmem:[%s4 + $0xd0] sm:$0xf]
          %v5068 = vld [vmem:[%s4 + $0xd4] sm:$0xf]
          %v5069 = vld [vmem:[%s4 + $0xd8] sm:$0xf]
          %v5070 = vld [vmem:[%s4 + $0xdc] sm:$0xf]
          %v5071 = vld [vmem:[%s4 + $0xe0] sm:$0xf]
          %v5072 = vld [vmem:[%s4 + $0xe4] sm:$0xf]
          %v5073 = vld [vmem:[%s4 + $0xe8] sm:$0xf]
          %v5074 = vld [vmem:[%s4 + $0xec] sm:$0xf]
          %v5075 = vld [vmem:[%s4 + $0xf0] sm:$0xf]
          %v5076 = vld [vmem:[%s4 + $0xf4] sm:$0xf]
          %v5077 = vld [vmem:[%s4 + $0xf8] sm:$0xf]
          %v5078 = vld [vmem:[%s4 + $0xfc] sm:$0xf]
          %v5079 = vld [vmem:[%s4 + $0x100] sm:$0xf]
          %v5080 = vld [vmem:[%s4 + $0x104] sm:$0xf]
          %v5081 = vld [vmem:[%s4 + $0x108] sm:$0xf]
          %v5082 = vld [vmem:[%s4 + $0x10c] sm:$0xf]
          %v5083 = vld [vmem:[%s4 + $0x110] sm:$0xf]
          %v5084 = vld [vmem:[%s4 + $0x114] sm:$0xf]
          %v5085 = vld [vmem:[%s4 + $0x118] sm:$0xf]
          %v5086 = vld [vmem:[%s4 + $0x11c] sm:$0xf]
          %v5087 = vld [vmem:[%s4 + $0x120] sm:$0xf]
          %v5088 = vld [vmem:[%s4 + $0x124] sm:$0xf]
          %v5089 = vld [vmem:[%s4 + $0x128] sm:$0xf]
          %v5090 = vld [vmem:[%s4 + $0x12c] sm:$0xf]
          %v5091 = vld [vmem:[%s4 + $0x130] sm:$0xf]
          %v5092 = vld [vmem:[%s4 + $0x134] sm:$0xf]
          %v5093 = vld [vmem:[%s4 + $0x138] sm:$0xf]
          %v5094 = vld [vmem:[%s4 + $0x13c] sm:$0xf]
          %v5095 = vld [vmem:[%s4 + $0x140] sm:$0xf]
          %v5096 = vld [vmem:[%s4 + $0x144] sm:$0xf]
          %v5097 = vld [vmem:[%s4 + $0x148] sm:$0xf]
          %v5098 = vld [vmem:[%s4 + $0x14c] sm:$0xf]
          %v5099 = vld [vmem:[%s4 + $0x150] sm:$0xf]
          %v5100 = vld [vmem:[%s4 + $0x154] sm:$0xf]
          %v5101 = vld [vmem:[%s4 + $0x158] sm:$0xf]
          %v5102 = vld [vmem:[%s4 + $0x15c] sm:$0xf]
          %v5103 = vld [vmem:[%s4 + $0x160] sm:$0xf]
          %v5104 = vld [vmem:[%s4 + $0x164] sm:$0xf]
          %v5105 = vld [vmem:[%s4 + $0x168] sm:$0xf]
          %v5106 = vld [vmem:[%s4 + $0x16c] sm:$0xf]
          %v5107 = vld [vmem:[%s4 + $0x170] sm:$0xf]
          %v5108 = vld [vmem:[%s4 + $0x174] sm:$0xf]
          %v5109 = vld [vmem:[%s4 + $0x178] sm:$0xf]
          %v5110 = vld [vmem:[%s4 + $0x17c] sm:$0xf]
          %v5111 = vld [vmem:[%s4 + $0x180] sm:$0xf]
          %v5112 = vld [vmem:[%s4 + $0x184] sm:$0xf]
          %v5113 = vld [vmem:[%s4 + $0x188] sm:$0xf]
          %v5114 = vld [vmem:[%s4 + $0x18c] sm:$0xf]
          %v5115 = vld [vmem:[%s4 + $0x190] sm:$0xf]
          %v5116 = vld [vmem:[%s4 + $0x194] sm:$0xf]
          %v5117 = vld [vmem:[%s4 + $0x198] sm:$0xf]
          %v5118 = vld [vmem:[%s4 + $0x19c] sm:$0xf]
          %v5119 = vld [vmem:[%s4 + $0x1a0] sm:$0xf]
          %v5120 = vld [vmem:[%s4 + $0x1a4] sm:$0xf]
          %v5121 = vld [vmem:[%s4 + $0x1a8] sm:$0xf]
          %v5122 = vld [vmem:[%s4 + $0x1ac] sm:$0xf]
          %v5123 = vld [vmem:[%s4 + $0x1b0] sm:$0xf]
          %v5124 = vld [vmem:[%s4 + $0x1b4] sm:$0xf]
          %v5125 = vld [vmem:[%s4 + $0x1b8] sm:$0xf]
          %v5126 = vld [vmem:[%s4 + $0x1bc] sm:$0xf]
          %v5127 = vld [vmem:[%s4 + $0x1c0] sm:$0xf]
          %v5128 = vld [vmem:[%s4 + $0x1c4] sm:$0xf]
          %v5129 = vld [vmem:[%s4 + $0x1c8] sm:$0xf]
          %v5130 = vld [vmem:[%s4 + $0x1cc] sm:$0xf]
          %v5131 = vld [vmem:[%s4 + $0x1d0] sm:$0xf]
          %v5132 = vld [vmem:[%s4 + $0x1d4] sm:$0xf]
          %v5133 = vld [vmem:[%s4 + $0x1d8] sm:$0xf]
          %v5134 = vld [vmem:[%s4 + $0x1dc] sm:$0xf]
          %v5135 = vld [vmem:[%s4 + $0x1e0] sm:$0xf]
          %v5136 = vld [vmem:[%s4 + $0x1e4] sm:$0xf]
          %v5137 = vld [vmem:[%s4 + $0x1e8] sm:$0xf]
          %v5138 = vld [vmem:[%s4 + $0x1ec] sm:$0xf]
          %v5139 = vld [vmem:[%s4 + $0x1f0] sm:$0xf]
          %v5140 = vld [vmem:[%s4 + $0x1f4] sm:$0xf]
          %v5141 = vld [vmem:[%s4 + $0x1f8] sm:$0xf]
          %v5142 = vld [vmem:[%s4 + $0x1fc] sm:$0xf]
          %v5143 = vld [vmem:[%s4 + $0x200] sm:$0xf]
          %v5144 = vld [vmem:[%s4 + $0x204] sm:$0xf]
          %v5145 = vld [vmem:[%s4 + $0x208] sm:$0xf]
          %v5146 = vld [vmem:[%s4 + $0x20c] sm:$0xf]
          %v5147 = vld [vmem:[%s4 + $0x210] sm:$0xf]
          %v5148 = vld [vmem:[%s4 + $0x214] sm:$0xf]
          %v5149 = vld [vmem:[%s4 + $0x218] sm:$0xf]
          %v5150 = vld [vmem:[%s4 + $0x21c] sm:$0xf]
          %v5151 = vld [vmem:[%s4 + $0x220] sm:$0xf]
          %v5152 = vld [vmem:[%s4 + $0x224] sm:$0xf]
          %v5153 = vld [vmem:[%s4 + $0x228] sm:$0xf]
          %v5154 = vld [vmem:[%s4 + $0x22c] sm:$0xf]
          %v5155 = vld [vmem:[%s4 + $0x230] sm:$0xf]
          %v5156 = vld [vmem:[%s4 + $0x234] sm:$0xf]
          %v5157 = vld [vmem:[%s4 + $0x238] sm:$0xf]
          %v5158 = vld [vmem:[%s4 + $0x23c] sm:$0xf]
          %v5303 = vunpack.c.l.b16 %v5015
          %v5304 = vunpack.c.l.b16 %v5016
          %v5305 = vunpack.c.l.b16 %v5017
          %v5306 = vunpack.c.l.b16 %v5018
          %v5307 = vunpack.c.l.b16 %v5019
          %v5308 = vunpack.c.l.b16 %v5020
          %v5309 = vunpack.c.l.b16 %v5021
          %v5310 = vunpack.c.l.b16 %v5022
          %v5311 = vunpack.c.l.b16 %v5023
          %v5312 = vunpack.c.l.b16 %v5024
          %v5313 = vunpack.c.l.b16 %v5025
          %v5314 = vunpack.c.l.b16 %v5026
          %v5315 = vunpack.c.l.b16 %v5027
          %v5316 = vunpack.c.l.b16 %v5028
          %v5317 = vunpack.c.l.b16 %v5029
          %v5318 = vunpack.c.l.b16 %v5030
          %v5319 = vunpack.c.l.b16 %v5031
          %v5320 = vunpack.c.l.b16 %v5032
          %v5321 = vunpack.c.l.b16 %v5033
          %v5322 = vunpack.c.l.b16 %v5034
          %v5323 = vunpack.c.l.b16 %v5035
          %v5324 = vunpack.c.l.b16 %v5036
          %v5325 = vunpack.c.l.b16 %v5037
          %v5326 = vunpack.c.l.b16 %v5038
          %v5327 = vunpack.c.l.b16 %v5039
          %v5328 = vunpack.c.l.b16 %v5040
          %v5329 = vunpack.c.l.b16 %v5041
          %v5330 = vunpack.c.l.b16 %v5042
          %v5331 = vunpack.c.l.b16 %v5043
          %v5332 = vunpack.c.l.b16 %v5044
          %v5333 = vunpack.c.l.b16 %v5045
          %v5334 = vunpack.c.l.b16 %v5046
          %v5335 = vunpack.c.l.b16 %v5047
          %v5336 = vunpack.c.l.b16 %v5048
          %v5337 = vunpack.c.l.b16 %v5049
          %v5338 = vunpack.c.l.b16 %v5050
          %v5339 = vunpack.c.l.b16 %v5051
          %v5340 = vunpack.c.l.b16 %v5052
          %v5341 = vunpack.c.l.b16 %v5053
          %v5342 = vunpack.c.l.b16 %v5054
          %v5343 = vunpack.c.l.b16 %v5055
          %v5344 = vunpack.c.l.b16 %v5056
          %v5345 = vunpack.c.l.b16 %v5057
          %v5346 = vunpack.c.l.b16 %v5058
          %v5347 = vunpack.c.l.b16 %v5059
          %v5348 = vunpack.c.l.b16 %v5060
          %v5349 = vunpack.c.l.b16 %v5061
          %v5350 = vunpack.c.l.b16 %v5062
          %v5351 = vunpack.c.l.b16 %v5063
          %v5352 = vunpack.c.l.b16 %v5064
          %v5353 = vunpack.c.l.b16 %v5065
          %v5354 = vunpack.c.l.b16 %v5066
          %v5355 = vunpack.c.l.b16 %v5067
          %v5356 = vunpack.c.l.b16 %v5068
          %v5357 = vunpack.c.l.b16 %v5069
          %v5358 = vunpack.c.l.b16 %v5070
          %v5359 = vunpack.c.l.b16 %v5071
          %v5360 = vunpack.c.l.b16 %v5072
          %v5361 = vunpack.c.l.b16 %v5073
          %v5362 = vunpack.c.l.b16 %v5074
          %v5363 = vunpack.c.l.b16 %v5075
          %v5364 = vunpack.c.l.b16 %v5076
          %v5365 = vunpack.c.l.b16 %v5077
          %v5366 = vunpack.c.l.b16 %v5078
          %v5367 = vunpack.c.l.b16 %v5079
          %v5368 = vunpack.c.l.b16 %v5080
          %v5369 = vunpack.c.l.b16 %v5081
          %v5370 = vunpack.c.l.b16 %v5082
          %v5371 = vunpack.c.l.b16 %v5083
          %v5372 = vunpack.c.l.b16 %v5084
          %v5373 = vunpack.c.l.b16 %v5085
          %v5374 = vunpack.c.l.b16 %v5086
          %v5375 = vunpack.c.l.b16 %v5087
          %v5376 = vunpack.c.l.b16 %v5088
          %v5377 = vunpack.c.l.b16 %v5089
          %v5378 = vunpack.c.l.b16 %v5090
          %v5379 = vunpack.c.l.b16 %v5091
          %v5380 = vunpack.c.l.b16 %v5092
          %v5381 = vunpack.c.l.b16 %v5093
          %v5382 = vunpack.c.l.b16 %v5094
          %v5383 = vunpack.c.l.b16 %v5095
          %v5384 = vunpack.c.l.b16 %v5096
          %v5385 = vunpack.c.l.b16 %v5097
          %v5386 = vunpack.c.l.b16 %v5098
          %v5387 = vunpack.c.l.b16 %v5099
          %v5388 = vunpack.c.l.b16 %v5100
          %v5389 = vunpack.c.l.b16 %v5101
          %v5390 = vunpack.c.l.b16 %v5102
          %v5391 = vunpack.c.l.b16 %v5103
          %v5392 = vunpack.c.l.b16 %v5104
          %v5393 = vunpack.c.l.b16 %v5105
          %v5394 = vunpack.c.l.b16 %v5106
          %v5395 = vunpack.c.l.b16 %v5107
          %v5396 = vunpack.c.l.b16 %v5108
          %v5397 = vunpack.c.l.b16 %v5109
          %v5398 = vunpack.c.l.b16 %v5110
          %v5399 = vunpack.c.l.b16 %v5111
          %v5400 = vunpack.c.l.b16 %v5112
          %v5401 = vunpack.c.l.b16 %v5113
          %v5402 = vunpack.c.l.b16 %v5114
          %v5403 = vunpack.c.l.b16 %v5115
          %v5404 = vunpack.c.l.b16 %v5116
          %v5405 = vunpack.c.l.b16 %v5117
          %v5406 = vunpack.c.l.b16 %v5118
          %v5407 = vunpack.c.l.b16 %v5119
          %v5408 = vunpack.c.l.b16 %v5120
          %v5409 = vunpack.c.l.b16 %v5121
          %v5410 = vunpack.c.l.b16 %v5122
          %v5411 = vunpack.c.l.b16 %v5123
          %v5412 = vunpack.c.l.b16 %v5124
          %v5413 = vunpack.c.l.b16 %v5125
          %v5414 = vunpack.c.l.b16 %v5126
          %v5415 = vunpack.c.l.b16 %v5127
          %v5416 = vunpack.c.l.b16 %v5128
          %v5417 = vunpack.c.l.b16 %v5129
          %v5418 = vunpack.c.l.b16 %v5130
          %v5419 = vunpack.c.l.b16 %v5131
          %v5420 = vunpack.c.l.b16 %v5132
          %v5421 = vunpack.c.l.b16 %v5133
          %v5422 = vunpack.c.l.b16 %v5134
          %v5423 = vunpack.c.l.b16 %v5135
          %v5424 = vunpack.c.l.b16 %v5136
          %v5425 = vunpack.c.l.b16 %v5137
          %v5426 = vunpack.c.l.b16 %v5138
          %v5427 = vunpack.c.l.b16 %v5139
          %v5428 = vunpack.c.l.b16 %v5140
          %v5429 = vunpack.c.l.b16 %v5141
          %v5430 = vunpack.c.l.b16 %v5142
          %v5431 = vunpack.c.l.b16 %v5143
          %v5432 = vunpack.c.l.b16 %v5144
          %v5433 = vunpack.c.l.b16 %v5145
          %v5434 = vunpack.c.l.b16 %v5146
          %v5435 = vunpack.c.l.b16 %v5147
          %v5436 = vunpack.c.l.b16 %v5148
          %v5437 = vunpack.c.l.b16 %v5149
          %v5438 = vunpack.c.l.b16 %v5150
          %v5439 = vunpack.c.l.b16 %v5151
          %v5440 = vunpack.c.l.b16 %v5152
          %v5441 = vunpack.c.l.b16 %v5153
          %v5442 = vunpack.c.l.b16 %v5154
          %v5443 = vunpack.c.l.b16 %v5155
          %v5444 = vunpack.c.l.b16 %v5156
          %v5445 = vunpack.c.l.b16 %v5157
          %v5446 = vunpack.c.l.b16 %v5158
          %v5447 = vpack.c.b16 %v5304, %v5303
          %v5448 = vpack.c.b16 %v5306, %v5305
          %v5449 = vpack.c.b16 %v5308, %v5307
          %v5450 = vpack.c.b16 %v5310, %v5309
          %v5451 = vpack.c.b16 %v5312, %v5311
          %v5452 = vpack.c.b16 %v5314, %v5313
          %v5453 = vpack.c.b16 %v5316, %v5315
          %v5454 = vpack.c.b16 %v5318, %v5317
          %v5455 = vpack.c.b16 %v5320, %v5319
          %v5456 = vpack.c.b16 %v5322, %v5321
          %v5457 = vpack.c.b16 %v5324, %v5323
          %v5458 = vpack.c.b16 %v5326, %v5325
          %v5459 = vpack.c.b16 %v5328, %v5327
          %v5460 = vpack.c.b16 %v5330, %v5329
          %v5461 = vpack.c.b16 %v5332, %v5331
          %v5462 = vpack.c.b16 %v5334, %v5333
          %v5463 = vpack.c.b16 %v5336, %v5335
          %v5464 = vpack.c.b16 %v5338, %v5337
          %v5465 = vpack.c.b16 %v5340, %v5339
          %v5466 = vpack.c.b16 %v5342, %v5341
          %v5467 = vpack.c.b16 %v5344, %v5343
          %v5468 = vpack.c.b16 %v5346, %v5345
          %v5469 = vpack.c.b16 %v5348, %v5347
          %v5470 = vpack.c.b16 %v5350, %v5349
          %v5471 = vpack.c.b16 %v5352, %v5351
          %v5472 = vpack.c.b16 %v5354, %v5353
          %v5473 = vpack.c.b16 %v5356, %v5355
          %v5474 = vpack.c.b16 %v5358, %v5357
          %v5475 = vpack.c.b16 %v5360, %v5359
          %v5476 = vpack.c.b16 %v5362, %v5361
          %v5477 = vpack.c.b16 %v5364, %v5363
          %v5478 = vpack.c.b16 %v5366, %v5365
          %v5479 = vpack.c.b16 %v5368, %v5367
          %v5480 = vpack.c.b16 %v5370, %v5369
          %v5481 = vpack.c.b16 %v5372, %v5371
          %v5482 = vpack.c.b16 %v5374, %v5373
          %v5483 = vpack.c.b16 %v5376, %v5375
          %v5484 = vpack.c.b16 %v5378, %v5377
          %v5485 = vpack.c.b16 %v5380, %v5379
          %v5486 = vpack.c.b16 %v5382, %v5381
          %v5487 = vpack.c.b16 %v5384, %v5383
          %v5488 = vpack.c.b16 %v5386, %v5385
          %v5489 = vpack.c.b16 %v5388, %v5387
          %v5490 = vpack.c.b16 %v5390, %v5389
          %v5491 = vpack.c.b16 %v5392, %v5391
          %v5492 = vpack.c.b16 %v5394, %v5393
          %v5493 = vpack.c.b16 %v5396, %v5395
          %v5494 = vpack.c.b16 %v5398, %v5397
          %v5495 = vpack.c.b16 %v5400, %v5399
          %v5496 = vpack.c.b16 %v5402, %v5401
          %v5497 = vpack.c.b16 %v5404, %v5403
          %v5498 = vpack.c.b16 %v5406, %v5405
          %v5499 = vpack.c.b16 %v5408, %v5407
          %v5500 = vpack.c.b16 %v5410, %v5409
          %v5501 = vpack.c.b16 %v5412, %v5411
          %v5502 = vpack.c.b16 %v5414, %v5413
          %v5503 = vpack.c.b16 %v5416, %v5415
          %v5504 = vpack.c.b16 %v5418, %v5417
          %v5505 = vpack.c.b16 %v5420, %v5419
          %v5506 = vpack.c.b16 %v5422, %v5421
          %v5507 = vpack.c.b16 %v5424, %v5423
          %v5508 = vpack.c.b16 %v5426, %v5425
          %v5509 = vpack.c.b16 %v5428, %v5427
          %v5510 = vpack.c.b16 %v5430, %v5429
          %v5511 = vpack.c.b16 %v5432, %v5431
          %v5512 = vpack.c.b16 %v5434, %v5433
          %v5513 = vpack.c.b16 %v5436, %v5435
          %v5514 = vpack.c.b16 %v5438, %v5437
          %v5515 = vpack.c.b16 %v5440, %v5439
          %v5516 = vpack.c.b16 %v5442, %v5441
          %v5517 = vpack.c.b16 %v5444, %v5443
          %v5518 = vpack.c.b16 %v5446, %v5445
          %5591 = vmatprep.subr.bf16.mxu0 0
          %5592 = vmatpush1.bf16.msra.mxu0 %v5454
          %5593 = vmatprep.subr.bf16.mxu0 0
          %5594 = vmatpush1.bf16.msra.mxu0 %v5453
          %5595 = vmatprep.subr.bf16.mxu0 0
          %5596 = vmatpush1.bf16.msra.mxu0 %v5452
          %5597 = vmatprep.subr.bf16.mxu0 0
          %5598 = vmatpush1.bf16.msra.mxu0 %v5451
          %5599 = vmatprep.subr.bf16.mxu0 0
          %5600 = vmatpush1.bf16.msra.mxu0 %v5450
          %5601 = vmatprep.subr.bf16.mxu0 0
          %5602 = vmatpush1.bf16.msra.mxu0 %v5449
          %5603 = vmatprep.subr.bf16.mxu0 0
          %5604 = vmatpush1.bf16.msra.mxu0 %v5448
          %5605 = vmatprep.subr.bf16.mxu0 0
          %5606 = vmatpush1.bf16.msra.mxu0 %v5447
          %5607 = vmatprep.subr.bf16.mxu0 0
          %5608 = vmatpush2.bf16.msra.mxu0 %v5462
          %5609 = vmatprep.subr.bf16.mxu0 0
          %5610 = vmatpush2.bf16.msra.mxu0 %v5461
          %5611 = vmatprep.subr.bf16.mxu0 0
          %5612 = vmatpush2.bf16.msra.mxu0 %v5460
          %5613 = vmatprep.subr.bf16.mxu0 0
          %5614 = vmatpush2.bf16.msra.mxu0 %v5459
          %5615 = vmatprep.subr.bf16.mxu0 0
          %5616 = vmatpush2.bf16.msra.mxu0 %v5458
          %5617 = vmatprep.subr.bf16.mxu0 0
          %5618 = vmatpush2.bf16.msra.mxu0 %v5457
          %5619 = vmatprep.subr.bf16.mxu0 0
          %5620 = vmatpush2.bf16.msra.mxu0 %v5456
          %5621 = vmatprep.subr.bf16.mxu0 0
          %5622 = vmatpush2.bf16.msra.mxu0 %v5455
          %5623 = vmatprep.mubr.bf16.mxu0 %v4342
          %5624 = vmatmul.mubr.bf16.gmra.mxu0 %v4259
          %v5625 = vpop.f32.mrf.mxu0
          %v5626 = vadd.f32 0.0, %v5625
          %v5627 = vpop.f32.mrf.mxu0
          %v5628 = vpop.f32.mrf.mxu0
          %v5629 = vadd.f32 0.0, %v5628
          %v5630 = vpop.f32.mrf.mxu0
          %5631 = vmatprep.mubr.bf16.mxu0 %v4354
          %5632 = vmatmul.mubr.bf16.gmra.mxu0 %v4261
          %v5633 = vpop.f32.mrf.mxu0
          %v5634 = vadd.f32 0.0, %v5633
          %v5635 = vpop.f32.mrf.mxu0
          %v5636 = vpop.f32.mrf.mxu0
          %v5637 = vadd.f32 0.0, %v5636
          %v5638 = vpop.f32.mrf.mxu0
          %5639 = vmatprep.mubr.bf16.mxu0 %v4366
          %5640 = vmatmul.mubr.bf16.gmra.mxu0 %v4263
          %v5641 = vpop.f32.mrf.mxu0
          %v5642 = vadd.f32 0.0, %v5641
          %v5643 = vpop.f32.mrf.mxu0
          %v5644 = vpop.f32.mrf.mxu0
          %v5645 = vadd.f32 0.0, %v5644
          %v5646 = vpop.f32.mrf.mxu0
          %5647 = vmatprep.mubr.bf16.mxu0 %v4378
          %5648 = vmatmul.mubr.bf16.gmra.mxu0 %v4265
          %v5649 = vpop.f32.mrf.mxu0
          %v5650 = vadd.f32 0.0, %v5649
          %v5651 = vpop.f32.mrf.mxu0
          %v5652 = vpop.f32.mrf.mxu0
          %v5653 = vadd.f32 0.0, %v5652
          %v5654 = vpop.f32.mrf.mxu0
          %5655 = vmatprep.mubr.bf16.mxu0 %v4390
          %5656 = vmatmul.mubr.bf16.gmra.mxu0 %v4267
          %v5657 = vpop.f32.mrf.mxu0
          %v5658 = vadd.f32 0.0, %v5657
          %v5659 = vpop.f32.mrf.mxu0
          %v5660 = vpop.f32.mrf.mxu0
          %v5661 = vadd.f32 0.0, %v5660
          %v5662 = vpop.f32.mrf.mxu0
          %5663 = vmatprep.mubr.bf16.mxu0 %v4402
          %5664 = vmatmul.mubr.bf16.gmra.mxu0 %v4269
          %v5665 = vpop.f32.mrf.mxu0
          %v5666 = vadd.f32 0.0, %v5665
          %v5667 = vpop.f32.mrf.mxu0
          %v5668 = vpop.f32.mrf.mxu0
          %v5669 = vadd.f32 0.0, %v5668
          %v5670 = vpop.f32.mrf.mxu0
          %5671 = vmatprep.mubr.bf16.mxu0 %v4414
          %5672 = vmatmul.mubr.bf16.gmra.mxu0 %v4271
          %v5673 = vpop.f32.mrf.mxu0
          %v5674 = vadd.f32 0.0, %v5673
          %v5675 = vpop.f32.mrf.mxu0
          %v5676 = vpop.f32.mrf.mxu0
          %v5677 = vadd.f32 0.0, %v5676
          %v5678 = vpop.f32.mrf.mxu0
          %5679 = vmatprep.mubr.bf16.mxu0 %v4426
          %5680 = vmatmul.mubr.bf16.gmra.mxu0 %v4273
          %v5681 = vpop.f32.mrf.mxu0
          %v5682 = vadd.f32 0.0, %v5681
          %v5683 = vpop.f32.mrf.mxu0
          %v5684 = vpop.f32.mrf.mxu0
          %v5685 = vadd.f32 0.0, %v5684
          %v5686 = vpop.f32.mrf.mxu0
          %5687 = vmatprep.mubr.bf16.mxu0 %v4438
          %5688 = vmatmul.mubr.bf16.gmra.mxu0 %v4275
          %v5689 = vpop.f32.mrf.mxu0
          %v5690 = vadd.f32 0.0, %v5689
          %v5691 = vpop.f32.mrf.mxu0
          %v5692 = vpop.f32.mrf.mxu0
          %v5693 = vadd.f32 0.0, %v5692
          %v5694 = vpop.f32.mrf.mxu0
          %5695 = vmatprep.mubr.bf16.mxu0 %v4450
          %5696 = vmatmul.mubr.bf16.gmra.mxu0 %v4277
          %v5697 = vpop.f32.mrf.mxu0
          %v5698 = vadd.f32 0.0, %v5697
          %v5699 = vpop.f32.mrf.mxu0
          %v5700 = vpop.f32.mrf.mxu0
          %v5701 = vadd.f32 0.0, %v5700
          %v5702 = vpop.f32.mrf.mxu0
          %5703 = vmatprep.mubr.bf16.mxu0 %v4462
          %5704 = vmatmul.mubr.bf16.gmra.mxu0 %v4279
          %v5705 = vpop.f32.mrf.mxu0
          %v5706 = vadd.f32 0.0, %v5705
          %v5707 = vpop.f32.mrf.mxu0
          %v5708 = vpop.f32.mrf.mxu0
          %v5709 = vadd.f32 0.0, %v5708
          %v5710 = vpop.f32.mrf.mxu0
          %5711 = vmatprep.mubr.bf16.mxu0 %v4474
          %5712 = vmatmul.mubr.bf16.gmra.mxu0 %v4281
          %v5713 = vpop.f32.mrf.mxu0
          %v5714 = vadd.f32 0.0, %v5713
          %v5715 = vpop.f32.mrf.mxu0
          %v5716 = vpop.f32.mrf.mxu0
          %v5717 = vadd.f32 0.0, %v5716
          %v5718 = vpop.f32.mrf.mxu0
          %5719 = vmatprep.mubr.bf16.mxu0 %v4486
          %5720 = vmatmul.mubr.bf16.gmra.mxu0 %v4283
          %v5721 = vpop.f32.mrf.mxu0
          %v5722 = vadd.f32 0.0, %v5721
          %v5723 = vpop.f32.mrf.mxu0
          %v5724 = vpop.f32.mrf.mxu0
          %v5725 = vadd.f32 0.0, %v5724
          %v5726 = vpop.f32.mrf.mxu0
          %5727 = vmatprep.mubr.bf16.mxu0 %v4498
          %5728 = vmatmul.mubr.bf16.gmra.mxu0 %v4285
          %v5729 = vpop.f32.mrf.mxu0
          %v5730 = vadd.f32 0.0, %v5729
          %v5731 = vpop.f32.mrf.mxu0
          %v5732 = vpop.f32.mrf.mxu0
          %v5733 = vadd.f32 0.0, %v5732
          %v5734 = vpop.f32.mrf.mxu0
          %5735 = vmatprep.mubr.bf16.mxu0 %v4510
          %5736 = vmatmul.mubr.bf16.gmra.mxu0 %v4287
          %v5737 = vpop.f32.mrf.mxu0
          %v5738 = vadd.f32 0.0, %v5737
          %v5739 = vpop.f32.mrf.mxu0
          %v5740 = vpop.f32.mrf.mxu0
          %v5741 = vadd.f32 0.0, %v5740
          %v5742 = vpop.f32.mrf.mxu0
          %5743 = vmatprep.mubr.bf16.mxu0 %v4522
          %5744 = vmatmul.mubr.bf16.gmra.mxu0 %v4289
          %v5745 = vpop.f32.mrf.mxu0
          %v5746 = vadd.f32 0.0, %v5745
          %v5747 = vpop.f32.mrf.mxu0
          %v5748 = vpop.f32.mrf.mxu0
          %v5749 = vadd.f32 0.0, %v5748
          %v5750 = vpop.f32.mrf.mxu0
          %5751 = vmatprep.mubr.bf16.mxu0 %v4534
          %5752 = vmatmul.mubr.bf16.gmra.mxu0 %v4295
          %v5753 = vpop.f32.mrf.mxu0
          %v5754 = vadd.f32 0.0, %v5753
          %v5755 = vpop.f32.mrf.mxu0
          %v5756 = vpop.f32.mrf.mxu0
          %v5757 = vadd.f32 0.0, %v5756
          %v5758 = vpop.f32.mrf.mxu0
          %5759 = vmatprep.mubr.bf16.mxu0 %v4546
          %5760 = vmatmul.mubr.bf16.gmra.mxu0 %v4297
          %v5761 = vpop.f32.mrf.mxu0
          %v5762 = vadd.f32 0.0, %v5761
          %v5763 = vpop.f32.mrf.mxu0
          %v5764 = vpop.f32.mrf.mxu0
          %v5765 = vadd.f32 0.0, %v5764
          %v5766 = vpop.f32.mrf.mxu0
          %5767 = vmatprep.mubr.bf16.mxu0 %v4558
          %5768 = vmatmul.mubr.bf16.gmra.mxu0 %v4299
          %v5769 = vpop.f32.mrf.mxu0
          %v5770 = vadd.f32 0.0, %v5769
          %v5771 = vpop.f32.mrf.mxu0
          %v5772 = vpop.f32.mrf.mxu0
          %v5773 = vadd.f32 0.0, %v5772
          %v5774 = vpop.f32.mrf.mxu0
          %5775 = vmatprep.mubr.bf16.mxu0 %v4570
          %5776 = vmatmul.mubr.bf16.gmra.mxu0 %v4301
          %v5777 = vpop.f32.mrf.mxu0
          %v5778 = vadd.f32 0.0, %v5777
          %v5779 = vpop.f32.mrf.mxu0
          %v5780 = vpop.f32.mrf.mxu0
          %v5781 = vadd.f32 0.0, %v5780
          %v5782 = vpop.f32.mrf.mxu0
          %5783 = vmatprep.mubr.bf16.mxu0 %v4582
          %5784 = vmatmul.mubr.bf16.gmra.mxu0 %v4303
          %v5785 = vpop.f32.mrf.mxu0
          %v5786 = vadd.f32 0.0, %v5785
          %v5787 = vpop.f32.mrf.mxu0
          %v5788 = vpop.f32.mrf.mxu0
          %v5789 = vadd.f32 0.0, %v5788
          %v5790 = vpop.f32.mrf.mxu0
          %5791 = vmatprep.mubr.bf16.mxu0 %v4594
          %5792 = vmatmul.mubr.bf16.gmra.mxu0 %v4305
          %v5793 = vpop.f32.mrf.mxu0
          %v5794 = vadd.f32 0.0, %v5793
          %v5795 = vpop.f32.mrf.mxu0
          %v5796 = vpop.f32.mrf.mxu0
          %v5797 = vadd.f32 0.0, %v5796
          %v5798 = vpop.f32.mrf.mxu0
          %5799 = vmatprep.mubr.bf16.mxu0 %v4606
          %5800 = vmatmul.mubr.bf16.gmra.mxu0 %v4307
          %v5801 = vpop.f32.mrf.mxu0
          %v5802 = vadd.f32 0.0, %v5801
          %v5803 = vpop.f32.mrf.mxu0
          %v5804 = vpop.f32.mrf.mxu0
          %v5805 = vadd.f32 0.0, %v5804
          %v5806 = vpop.f32.mrf.mxu0
          %5807 = vmatprep.mubr.bf16.mxu0 %v4618
          %5808 = vmatmul.mubr.bf16.gmra.mxu0 %v4309
          %v5809 = vpop.f32.mrf.mxu0
          %v5810 = vadd.f32 0.0, %v5809
          %v5811 = vpop.f32.mrf.mxu0
          %v5812 = vpop.f32.mrf.mxu0
          %v5813 = vadd.f32 0.0, %v5812
          %v5814 = vpop.f32.mrf.mxu0
          %5815 = vmatprep.mubr.bf16.mxu0 %v4630
          %5816 = vmatmul.mubr.bf16.gmra.mxu0 %v4311
          %v5817 = vpop.f32.mrf.mxu0
          %v5818 = vadd.f32 0.0, %v5817
          %v5819 = vpop.f32.mrf.mxu0
          %v5820 = vpop.f32.mrf.mxu0
          %v5821 = vadd.f32 0.0, %v5820
          %v5822 = vpop.f32.mrf.mxu0
          %5823 = vmatprep.mubr.bf16.mxu0 %v4642
          %5824 = vmatmul.mubr.bf16.gmra.mxu0 %v4313
          %v5825 = vpop.f32.mrf.mxu0
          %v5826 = vadd.f32 0.0, %v5825
          %v5827 = vpop.f32.mrf.mxu0
          %v5828 = vpop.f32.mrf.mxu0
          %v5829 = vadd.f32 0.0, %v5828
          %v5830 = vpop.f32.mrf.mxu0
          %5831 = vmatprep.mubr.bf16.mxu0 %v4654
          %5832 = vmatmul.mubr.bf16.gmra.mxu0 %v4315
          %v5833 = vpop.f32.mrf.mxu0
          %v5834 = vadd.f32 0.0, %v5833
          %v5835 = vpop.f32.mrf.mxu0
          %v5836 = vpop.f32.mrf.mxu0
          %v5837 = vadd.f32 0.0, %v5836
          %v5838 = vpop.f32.mrf.mxu0
          %5839 = vmatprep.mubr.bf16.mxu0 %v4666
          %5840 = vmatmul.mubr.bf16.gmra.mxu0 %v4317
          %v5841 = vpop.f32.mrf.mxu0
          %v5842 = vadd.f32 0.0, %v5841
          %v5843 = vpop.f32.mrf.mxu0
          %v5844 = vpop.f32.mrf.mxu0
          %v5845 = vadd.f32 0.0, %v5844
          %v5846 = vpop.f32.mrf.mxu0
          %5847 = vmatprep.mubr.bf16.mxu0 %v4678
          %5848 = vmatmul.mubr.bf16.gmra.mxu0 %v4319
          %v5849 = vpop.f32.mrf.mxu0
          %v5850 = vadd.f32 0.0, %v5849
          %v5851 = vpop.f32.mrf.mxu0
          %v5852 = vpop.f32.mrf.mxu0
          %v5853 = vadd.f32 0.0, %v5852
          %v5854 = vpop.f32.mrf.mxu0
          %5855 = vmatprep.mubr.bf16.mxu0 %v4690
          %5856 = vmatmul.mubr.bf16.gmra.mxu0 %v4321
          %v5857 = vpop.f32.mrf.mxu0
          %v5858 = vadd.f32 0.0, %v5857
          %v5859 = vpop.f32.mrf.mxu0
          %v5860 = vpop.f32.mrf.mxu0
          %v5861 = vadd.f32 0.0, %v5860
          %v5862 = vpop.f32.mrf.mxu0
          %5863 = vmatprep.mubr.bf16.mxu0 %v4702
          %5864 = vmatmul.mubr.bf16.gmra.mxu0 %v4323
          %v5865 = vpop.f32.mrf.mxu0
          %v5866 = vadd.f32 0.0, %v5865
          %v5867 = vpop.f32.mrf.mxu0
          %v5868 = vpop.f32.mrf.mxu0
          %v5869 = vadd.f32 0.0, %v5868
          %v5870 = vpop.f32.mrf.mxu0
          %5871 = vmatprep.mubr.bf16.mxu0 %v4714
          %5872 = vmatmul.mubr.bf16.gmra.mxu0 %v4325
          %v5873 = vpop.f32.mrf.mxu0
          %v5874 = vadd.f32 0.0, %v5873
          %v5875 = vpop.f32.mrf.mxu0
          %v5876 = vpop.f32.mrf.mxu0
          %v5877 = vadd.f32 0.0, %v5876
          %v5878 = vpop.f32.mrf.mxu0
          %5879 = vdwg.mxu0
          %5880 = vmatprep.subr.bf16.mxu0 0
          %5881 = vmatpush1.bf16.msra.mxu0 %v5470
          %5882 = vmatprep.subr.bf16.mxu0 0
          %5883 = vmatpush1.bf16.msra.mxu0 %v5469
          %5884 = vmatprep.subr.bf16.mxu0 0
          %5885 = vmatpush1.bf16.msra.mxu0 %v5468
          %5886 = vmatprep.subr.bf16.mxu0 0
          %5887 = vmatpush1.bf16.msra.mxu0 %v5467
          %5888 = vmatprep.subr.bf16.mxu0 0
          %5889 = vmatpush1.bf16.msra.mxu0 %v5466
          %5890 = vmatprep.subr.bf16.mxu0 0
          %5891 = vmatpush1.bf16.msra.mxu0 %v5465
          %5892 = vmatprep.subr.bf16.mxu0 0
          %5893 = vmatpush1.bf16.msra.mxu0 %v5464
          %5894 = vmatprep.subr.bf16.mxu0 0
          %5895 = vmatpush1.bf16.msra.mxu0 %v5463
          %5896 = vmatprep.subr.bf16.mxu0 0
          %5897 = vmatpush2.bf16.msra.mxu0 %v5478
          %5898 = vmatprep.subr.bf16.mxu0 0
          %5899 = vmatpush2.bf16.msra.mxu0 %v5477
          %5900 = vmatprep.subr.bf16.mxu0 0
          %5901 = vmatpush2.bf16.msra.mxu0 %v5476
          %5902 = vmatprep.subr.bf16.mxu0 0
          %5903 = vmatpush2.bf16.msra.mxu0 %v5475
          %5904 = vmatprep.subr.bf16.mxu0 0
          %5905 = vmatpush2.bf16.msra.mxu0 %v5474
          %5906 = vmatprep.subr.bf16.mxu0 0
          %5907 = vmatpush2.bf16.msra.mxu0 %v5473
          %5908 = vmatprep.subr.bf16.mxu0 0
          %5909 = vmatpush2.bf16.msra.mxu0 %v5472
          %5910 = vmatprep.subr.bf16.mxu0 0
          %5911 = vmatpush2.bf16.msra.mxu0 %v5471
          %5912 = vmatprep.mubr.bf16.mxu0 %v4261
          %5913 = vmatmul.mubr.bf16.gmra.mxu0 %v4813
          %v5914 = vpop.f32.mrf.mxu0
          %v5915 = vadd.f32 %v5626, %v5914
          %v5916 = vpop.f32.mrf.mxu0
          %v5917 = vpop.f32.mrf.mxu0
          %v5918 = vadd.f32 %v5629, %v5917
          %v5919 = vpop.f32.mrf.mxu0
          %5920 = vmatprep.mubr.bf16.mxu0 %v4263
          %5921 = vmatmul.mubr.bf16.gmra.mxu0 %v4816
          %v5922 = vpop.f32.mrf.mxu0
          %v5923 = vadd.f32 %v5634, %v5922
          %v5924 = vpop.f32.mrf.mxu0
          %v5925 = vpop.f32.mrf.mxu0
          %v5926 = vadd.f32 %v5637, %v5925
          %v5927 = vpop.f32.mrf.mxu0
          %5928 = vmatprep.mubr.bf16.mxu0 %v4265
          %5929 = vmatmul.mubr.bf16.gmra.mxu0 %v4819
          %v5930 = vpop.f32.mrf.mxu0
          %v5931 = vadd.f32 %v5642, %v5930
          %v5932 = vpop.f32.mrf.mxu0
          %v5933 = vpop.f32.mrf.mxu0
          %v5934 = vadd.f32 %v5645, %v5933
          %v5935 = vpop.f32.mrf.mxu0
          %5936 = vmatprep.mubr.bf16.mxu0 %v4267
          %5937 = vmatmul.mubr.bf16.gmra.mxu0 %v4822
          %v5938 = vpop.f32.mrf.mxu0
          %v5939 = vadd.f32 %v5650, %v5938
          %v5940 = vpop.f32.mrf.mxu0
          %v5941 = vpop.f32.mrf.mxu0
          %v5942 = vadd.f32 %v5653, %v5941
          %v5943 = vpop.f32.mrf.mxu0
          %5944 = vmatprep.mubr.bf16.mxu0 %v4269
          %5945 = vmatmul.mubr.bf16.gmra.mxu0 %v4825
          %v5946 = vpop.f32.mrf.mxu0
          %v5947 = vadd.f32 %v5658, %v5946
          %v5948 = vpop.f32.mrf.mxu0
          %v5949 = vpop.f32.mrf.mxu0
          %v5950 = vadd.f32 %v5661, %v5949
          %v5951 = vpop.f32.mrf.mxu0
          %5952 = vmatprep.mubr.bf16.mxu0 %v4271
          %5953 = vmatmul.mubr.bf16.gmra.mxu0 %v4828
          %v5954 = vpop.f32.mrf.mxu0
          %v5955 = vadd.f32 %v5666, %v5954
          %v5956 = vpop.f32.mrf.mxu0
          %v5957 = vpop.f32.mrf.mxu0
          %v5958 = vadd.f32 %v5669, %v5957
          %v5959 = vpop.f32.mrf.mxu0
          %5960 = vmatprep.mubr.bf16.mxu0 %v4273
          %5961 = vmatmul.mubr.bf16.gmra.mxu0 %v4831
          %v5962 = vpop.f32.mrf.mxu0
          %v5963 = vadd.f32 %v5674, %v5962
          %v5964 = vpop.f32.mrf.mxu0
          %v5965 = vpop.f32.mrf.mxu0
          %v5966 = vadd.f32 %v5677, %v5965
          %v5967 = vpop.f32.mrf.mxu0
          %5968 = vmatprep.mubr.bf16.mxu0 %v4275
          %5969 = vmatmul.mubr.bf16.gmra.mxu0 %v4834
          %v5970 = vpop.f32.mrf.mxu0
          %v5971 = vadd.f32 %v5682, %v5970
          %v5972 = vpop.f32.mrf.mxu0
          %v5973 = vpop.f32.mrf.mxu0
          %v5974 = vadd.f32 %v5685, %v5973
          %v5975 = vpop.f32.mrf.mxu0
          %5976 = vmatprep.mubr.bf16.mxu0 %v4277
          %5977 = vmatmul.mubr.bf16.gmra.mxu0 %v4837
          %v5978 = vpop.f32.mrf.mxu0
          %v5979 = vadd.f32 %v5690, %v5978
          %v5980 = vpop.f32.mrf.mxu0
          %v5981 = vpop.f32.mrf.mxu0
          %v5982 = vadd.f32 %v5693, %v5981
          %v5983 = vpop.f32.mrf.mxu0
          %5984 = vmatprep.mubr.bf16.mxu0 %v4279
          %5985 = vmatmul.mubr.bf16.gmra.mxu0 %v4840
          %v5986 = vpop.f32.mrf.mxu0
          %v5987 = vadd.f32 %v5698, %v5986
          %v5988 = vpop.f32.mrf.mxu0
          %v5989 = vpop.f32.mrf.mxu0
          %v5990 = vadd.f32 %v5701, %v5989
          %v5991 = vpop.f32.mrf.mxu0
          %5992 = vmatprep.mubr.bf16.mxu0 %v4281
          %5993 = vmatmul.mubr.bf16.gmra.mxu0 %v4843
          %v5994 = vpop.f32.mrf.mxu0
          %v5995 = vadd.f32 %v5706, %v5994
          %v5996 = vpop.f32.mrf.mxu0
          %v5997 = vpop.f32.mrf.mxu0
          %v5998 = vadd.f32 %v5709, %v5997
          %v5999 = vpop.f32.mrf.mxu0
          %6000 = vmatprep.mubr.bf16.mxu0 %v4283
          %6001 = vmatmul.mubr.bf16.gmra.mxu0 %v4846
          %v6002 = vpop.f32.mrf.mxu0
          %v6003 = vadd.f32 %v5714, %v6002
          %v6004 = vpop.f32.mrf.mxu0
          %v6005 = vpop.f32.mrf.mxu0
          %v6006 = vadd.f32 %v5717, %v6005
          %v6007 = vpop.f32.mrf.mxu0
          %6008 = vmatprep.mubr.bf16.mxu0 %v4285
          %6009 = vmatmul.mubr.bf16.gmra.mxu0 %v4849
          %v6010 = vpop.f32.mrf.mxu0
          %v6011 = vadd.f32 %v5722, %v6010
          %v6012 = vpop.f32.mrf.mxu0
          %v6013 = vpop.f32.mrf.mxu0
          %v6014 = vadd.f32 %v5725, %v6013
          %v6015 = vpop.f32.mrf.mxu0
          %6016 = vmatprep.mubr.bf16.mxu0 %v4287
          %6017 = vmatmul.mubr.bf16.gmra.mxu0 %v4852
          %v6018 = vpop.f32.mrf.mxu0
          %v6019 = vadd.f32 %v5730, %v6018
          %v6020 = vpop.f32.mrf.mxu0
          %v6021 = vpop.f32.mrf.mxu0
          %v6022 = vadd.f32 %v5733, %v6021
          %v6023 = vpop.f32.mrf.mxu0
          %6024 = vmatprep.mubr.bf16.mxu0 %v4289
          %6025 = vmatmul.mubr.bf16.gmra.mxu0 %v4855
          %v6026 = vpop.f32.mrf.mxu0
          %v6027 = vadd.f32 %v5738, %v6026
          %v6028 = vpop.f32.mrf.mxu0
          %v6029 = vpop.f32.mrf.mxu0
          %v6030 = vadd.f32 %v5741, %v6029
          %v6031 = vpop.f32.mrf.mxu0
          %6032 = vmatprep.mubr.bf16.mxu0 %v4291
          %6033 = vmatmul.mubr.bf16.gmra.mxu0 %v4858
          %v6034 = vpop.f32.mrf.mxu0
          %v6035 = vadd.f32 %v5746, %v6034
          %v6036 = vpop.f32.mrf.mxu0
          %v6037 = vpop.f32.mrf.mxu0
          %v6038 = vadd.f32 %v5749, %v6037
          %v6039 = vpop.f32.mrf.mxu0
          %6040 = vmatprep.mubr.bf16.mxu0 %v4297
          %6041 = vmatmul.mubr.bf16.gmra.mxu0 %v4861
          %v6042 = vpop.f32.mrf.mxu0
          %v6043 = vadd.f32 %v5754, %v6042
          %v6044 = vpop.f32.mrf.mxu0
          %v6045 = vpop.f32.mrf.mxu0
          %v6046 = vadd.f32 %v5757, %v6045
          %v6047 = vpop.f32.mrf.mxu0
          %6048 = vmatprep.mubr.bf16.mxu0 %v4299
          %6049 = vmatmul.mubr.bf16.gmra.mxu0 %v4864
          %v6050 = vpop.f32.mrf.mxu0
          %v6051 = vadd.f32 %v5762, %v6050
          %v6052 = vpop.f32.mrf.mxu0
          %v6053 = vpop.f32.mrf.mxu0
          %v6054 = vadd.f32 %v5765, %v6053
          %v6055 = vpop.f32.mrf.mxu0
          %6056 = vmatprep.mubr.bf16.mxu0 %v4301
          %6057 = vmatmul.mubr.bf16.gmra.mxu0 %v4867
          %v6058 = vpop.f32.mrf.mxu0
          %v6059 = vadd.f32 %v5770, %v6058
          %v6060 = vpop.f32.mrf.mxu0
          %v6061 = vpop.f32.mrf.mxu0
          %v6062 = vadd.f32 %v5773, %v6061
          %v6063 = vpop.f32.mrf.mxu0
          %6064 = vmatprep.mubr.bf16.mxu0 %v4303
          %6065 = vmatmul.mubr.bf16.gmra.mxu0 %v4870
          %v6066 = vpop.f32.mrf.mxu0
          %v6067 = vadd.f32 %v5778, %v6066
          %v6068 = vpop.f32.mrf.mxu0
          %v6069 = vpop.f32.mrf.mxu0
          %v6070 = vadd.f32 %v5781, %v6069
          %v6071 = vpop.f32.mrf.mxu0
          %6072 = vmatprep.mubr.bf16.mxu0 %v4305
          %6073 = vmatmul.mubr.bf16.gmra.mxu0 %v4873
          %v6074 = vpop.f32.mrf.mxu0
          %v6075 = vadd.f32 %v5786, %v6074
          %v6076 = vpop.f32.mrf.mxu0
          %v6077 = vpop.f32.mrf.mxu0
          %v6078 = vadd.f32 %v5789, %v6077
          %v6079 = vpop.f32.mrf.mxu0
          %6080 = vmatprep.mubr.bf16.mxu0 %v4307
          %6081 = vmatmul.mubr.bf16.gmra.mxu0 %v4876
          %v6082 = vpop.f32.mrf.mxu0
          %v6083 = vadd.f32 %v5794, %v6082
          %v6084 = vpop.f32.mrf.mxu0
          %v6085 = vpop.f32.mrf.mxu0
          %v6086 = vadd.f32 %v5797, %v6085
          %v6087 = vpop.f32.mrf.mxu0
          %6088 = vmatprep.mubr.bf16.mxu0 %v4309
          %6089 = vmatmul.mubr.bf16.gmra.mxu0 %v4879
          %v6090 = vpop.f32.mrf.mxu0
          %v6091 = vadd.f32 %v5802, %v6090
          %v6092 = vpop.f32.mrf.mxu0
          %v6093 = vpop.f32.mrf.mxu0
          %v6094 = vadd.f32 %v5805, %v6093
          %v6095 = vpop.f32.mrf.mxu0
          %6096 = vmatprep.mubr.bf16.mxu0 %v4311
          %6097 = vmatmul.mubr.bf16.gmra.mxu0 %v4882
          %v6098 = vpop.f32.mrf.mxu0
          %v6099 = vadd.f32 %v5810, %v6098
          %v6100 = vpop.f32.mrf.mxu0
          %v6101 = vpop.f32.mrf.mxu0
          %v6102 = vadd.f32 %v5813, %v6101
          %v6103 = vpop.f32.mrf.mxu0
          %6104 = vmatprep.mubr.bf16.mxu0 %v4313
          %6105 = vmatmul.mubr.bf16.gmra.mxu0 %v4885
          %v6106 = vpop.f32.mrf.mxu0
          %v6107 = vadd.f32 %v5818, %v6106
          %v6108 = vpop.f32.mrf.mxu0
          %v6109 = vpop.f32.mrf.mxu0
          %v6110 = vadd.f32 %v5821, %v6109
          %v6111 = vpop.f32.mrf.mxu0
          %6112 = vmatprep.mubr.bf16.mxu0 %v4315
          %6113 = vmatmul.mubr.bf16.gmra.mxu0 %v4888
          %v6114 = vpop.f32.mrf.mxu0
          %v6115 = vadd.f32 %v5826, %v6114
          %v6116 = vpop.f32.mrf.mxu0
          %v6117 = vpop.f32.mrf.mxu0
          %v6118 = vadd.f32 %v5829, %v6117
          %v6119 = vpop.f32.mrf.mxu0
          %6120 = vmatprep.mubr.bf16.mxu0 %v4317
          %6121 = vmatmul.mubr.bf16.gmra.mxu0 %v4891
          %v6122 = vpop.f32.mrf.mxu0
          %v6123 = vadd.f32 %v5834, %v6122
          %v6124 = vpop.f32.mrf.mxu0
          %v6125 = vpop.f32.mrf.mxu0
          %v6126 = vadd.f32 %v5837, %v6125
          %v6127 = vpop.f32.mrf.mxu0
          %6128 = vmatprep.mubr.bf16.mxu0 %v4319
          %6129 = vmatmul.mubr.bf16.gmra.mxu0 %v4894
          %v6130 = vpop.f32.mrf.mxu0
          %v6131 = vadd.f32 %v5842, %v6130
          %v6132 = vpop.f32.mrf.mxu0
          %v6133 = vpop.f32.mrf.mxu0
          %v6134 = vadd.f32 %v5845, %v6133
          %v6135 = vpop.f32.mrf.mxu0
          %6136 = vmatprep.mubr.bf16.mxu0 %v4321
          %6137 = vmatmul.mubr.bf16.gmra.mxu0 %v4897
          %v6138 = vpop.f32.mrf.mxu0
          %v6139 = vadd.f32 %v5850, %v6138
          %v6140 = vpop.f32.mrf.mxu0
          %v6141 = vpop.f32.mrf.mxu0
          %v6142 = vadd.f32 %v5853, %v6141
          %v6143 = vpop.f32.mrf.mxu0
          %6144 = vmatprep.mubr.bf16.mxu0 %v4323
          %6145 = vmatmul.mubr.bf16.gmra.mxu0 %v4900
          %v6146 = vpop.f32.mrf.mxu0
          %v6147 = vadd.f32 %v5858, %v6146
          %v6148 = vpop.f32.mrf.mxu0
          %v6149 = vpop.f32.mrf.mxu0
          %v6150 = vadd.f32 %v5861, %v6149
          %v6151 = vpop.f32.mrf.mxu0
          %6152 = vmatprep.mubr.bf16.mxu0 %v4325
          %6153 = vmatmul.mubr.bf16.gmra.mxu0 %v4903
          %v6154 = vpop.f32.mrf.mxu0
          %v6155 = vadd.f32 %v5866, %v6154
          %v6156 = vpop.f32.mrf.mxu0
          %v6157 = vpop.f32.mrf.mxu0
          %v6158 = vadd.f32 %v5869, %v6157
          %v6159 = vpop.f32.mrf.mxu0
          %6160 = vmatprep.mubr.bf16.mxu0 %v4327
          %6161 = vmatmul.mubr.bf16.gmra.mxu0 %v4906
          %v6162 = vpop.f32.mrf.mxu0
          %v6163 = vadd.f32 %v5874, %v6162
          %v6164 = vpop.f32.mrf.mxu0
          %v6165 = vpop.f32.mrf.mxu0
          %v6166 = vadd.f32 %v5877, %v6165
          %v6167 = vpop.f32.mrf.mxu0
          %6168 = vdwg.mxu0
          %6169 = vmatprep.subr.bf16.mxu0 0
          %6170 = vmatpush1.bf16.msra.mxu0 %v5486
          %6171 = vmatprep.subr.bf16.mxu0 0
          %6172 = vmatpush1.bf16.msra.mxu0 %v5485
          %6173 = vmatprep.subr.bf16.mxu0 0
          %6174 = vmatpush1.bf16.msra.mxu0 %v5484
          %6175 = vmatprep.subr.bf16.mxu0 0
          %6176 = vmatpush1.bf16.msra.mxu0 %v5483
          %6177 = vmatprep.subr.bf16.mxu0 0
          %6178 = vmatpush1.bf16.msra.mxu0 %v5482
          %6179 = vmatprep.subr.bf16.mxu0 0
          %6180 = vmatpush1.bf16.msra.mxu0 %v5481
          %6181 = vmatprep.subr.bf16.mxu0 0
          %6182 = vmatpush1.bf16.msra.mxu0 %v5480
          %6183 = vmatprep.subr.bf16.mxu0 0
          %6184 = vmatpush1.bf16.msra.mxu0 %v5479
          %6185 = vmatprep.subr.bf16.mxu0 0
          %6186 = vmatpush2.bf16.msra.mxu0 %v5494
          %6187 = vmatprep.subr.bf16.mxu0 0
          %6188 = vmatpush2.bf16.msra.mxu0 %v5493
          %6189 = vmatprep.subr.bf16.mxu0 0
          %6190 = vmatpush2.bf16.msra.mxu0 %v5492
          %6191 = vmatprep.subr.bf16.mxu0 0
          %6192 = vmatpush2.bf16.msra.mxu0 %v5491
          %6193 = vmatprep.subr.bf16.mxu0 0
          %6194 = vmatpush2.bf16.msra.mxu0 %v5490
          %6195 = vmatprep.subr.bf16.mxu0 0
          %6196 = vmatpush2.bf16.msra.mxu0 %v5489
          %6197 = vmatprep.subr.bf16.mxu0 0
          %6198 = vmatpush2.bf16.msra.mxu0 %v5488
          %6199 = vmatprep.subr.bf16.mxu0 0
          %6200 = vmatpush2.bf16.msra.mxu0 %v5487
          %6201 = vmatprep.mubr.bf16.mxu0 %v4816
          %6202 = vmatmul.mubr.bf16.gmra.mxu0 %v4354
          %v6203 = vpop.f32.mrf.mxu0
          %v6204 = vadd.f32 %v5915, %v6203
          %v6205 = vpop.f32.mrf.mxu0
          %v6206 = vpop.f32.mrf.mxu0
          %v6207 = vadd.f32 %v5918, %v6206
          %v6208 = vpop.f32.mrf.mxu0
          %6209 = vmatprep.mubr.bf16.mxu0 %v4819
          %6210 = vmatmul.mubr.bf16.gmra.mxu0 %v4366
          %v6211 = vpop.f32.mrf.mxu0
          %v6212 = vadd.f32 %v5923, %v6211
          %v6213 = vpop.f32.mrf.mxu0
          %v6214 = vpop.f32.mrf.mxu0
          %v6215 = vadd.f32 %v5926, %v6214
          %v6216 = vpop.f32.mrf.mxu0
          %6217 = vmatprep.mubr.bf16.mxu0 %v4822
          %6218 = vmatmul.mubr.bf16.gmra.mxu0 %v4378
          %v6219 = vpop.f32.mrf.mxu0
          %v6220 = vadd.f32 %v5931, %v6219
          %v6221 = vpop.f32.mrf.mxu0
          %v6222 = vpop.f32.mrf.mxu0
          %v6223 = vadd.f32 %v5934, %v6222
          %v6224 = vpop.f32.mrf.mxu0
          %6225 = vmatprep.mubr.bf16.mxu0 %v4825
          %6226 = vmatmul.mubr.bf16.gmra.mxu0 %v4390
          %v6227 = vpop.f32.mrf.mxu0
          %v6228 = vadd.f32 %v5939, %v6227
          %v6229 = vpop.f32.mrf.mxu0
          %v6230 = vpop.f32.mrf.mxu0
          %v6231 = vadd.f32 %v5942, %v6230
          %v6232 = vpop.f32.mrf.mxu0
          %6233 = vmatprep.mubr.bf16.mxu0 %v4828
          %6234 = vmatmul.mubr.bf16.gmra.mxu0 %v4402
          %v6235 = vpop.f32.mrf.mxu0
          %v6236 = vadd.f32 %v5947, %v6235
          %v6237 = vpop.f32.mrf.mxu0
          %v6238 = vpop.f32.mrf.mxu0
          %v6239 = vadd.f32 %v5950, %v6238
          %v6240 = vpop.f32.mrf.mxu0
          %6241 = vmatprep.mubr.bf16.mxu0 %v4831
          %6242 = vmatmul.mubr.bf16.gmra.mxu0 %v4414
          %v6243 = vpop.f32.mrf.mxu0
          %v6244 = vadd.f32 %v5955, %v6243
          %v6245 = vpop.f32.mrf.mxu0
          %v6246 = vpop.f32.mrf.mxu0
          %v6247 = vadd.f32 %v5958, %v6246
          %v6248 = vpop.f32.mrf.mxu0
          %6249 = vmatprep.mubr.bf16.mxu0 %v4834
          %6250 = vmatmul.mubr.bf16.gmra.mxu0 %v4426
          %v6251 = vpop.f32.mrf.mxu0
          %v6252 = vadd.f32 %v5963, %v6251
          %v6253 = vpop.f32.mrf.mxu0
          %v6254 = vpop.f32.mrf.mxu0
          %v6255 = vadd.f32 %v5966, %v6254
          %v6256 = vpop.f32.mrf.mxu0
          %6257 = vmatprep.mubr.bf16.mxu0 %v4837
          %6258 = vmatmul.mubr.bf16.gmra.mxu0 %v4438
          %v6259 = vpop.f32.mrf.mxu0
          %v6260 = vadd.f32 %v5971, %v6259
          %v6261 = vpop.f32.mrf.mxu0
          %v6262 = vpop.f32.mrf.mxu0
          %v6263 = vadd.f32 %v5974, %v6262
          %v6264 = vpop.f32.mrf.mxu0
          %6265 = vmatprep.mubr.bf16.mxu0 %v4840
          %6266 = vmatmul.mubr.bf16.gmra.mxu0 %v4450
          %v6267 = vpop.f32.mrf.mxu0
          %v6268 = vadd.f32 %v5979, %v6267
          %v6269 = vpop.f32.mrf.mxu0
          %v6270 = vpop.f32.mrf.mxu0
          %v6271 = vadd.f32 %v5982, %v6270
          %v6272 = vpop.f32.mrf.mxu0
          %6273 = vmatprep.mubr.bf16.mxu0 %v4843
          %6274 = vmatmul.mubr.bf16.gmra.mxu0 %v4462
          %v6275 = vpop.f32.mrf.mxu0
          %v6276 = vadd.f32 %v5987, %v6275
          %v6277 = vpop.f32.mrf.mxu0
          %v6278 = vpop.f32.mrf.mxu0
          %v6279 = vadd.f32 %v5990, %v6278
          %v6280 = vpop.f32.mrf.mxu0
          %6281 = vmatprep.mubr.bf16.mxu0 %v4846
          %6282 = vmatmul.mubr.bf16.gmra.mxu0 %v4474
          %v6283 = vpop.f32.mrf.mxu0
          %v6284 = vadd.f32 %v5995, %v6283
          %v6285 = vpop.f32.mrf.mxu0
          %v6286 = vpop.f32.mrf.mxu0
          %v6287 = vadd.f32 %v5998, %v6286
          %v6288 = vpop.f32.mrf.mxu0
          %6289 = vmatprep.mubr.bf16.mxu0 %v4849
          %6290 = vmatmul.mubr.bf16.gmra.mxu0 %v4486
          %v6291 = vpop.f32.mrf.mxu0
          %v6292 = vadd.f32 %v6003, %v6291
          %v6293 = vpop.f32.mrf.mxu0
          %v6294 = vpop.f32.mrf.mxu0
          %v6295 = vadd.f32 %v6006, %v6294
          %v6296 = vpop.f32.mrf.mxu0
          %6297 = vmatprep.mubr.bf16.mxu0 %v4852
          %6298 = vmatmul.mubr.bf16.gmra.mxu0 %v4498
          %v6299 = vpop.f32.mrf.mxu0
          %v6300 = vadd.f32 %v6011, %v6299
          %v6301 = vpop.f32.mrf.mxu0
          %v6302 = vpop.f32.mrf.mxu0
          %v6303 = vadd.f32 %v6014, %v6302
          %v6304 = vpop.f32.mrf.mxu0
          %6305 = vmatprep.mubr.bf16.mxu0 %v4855
          %6306 = vmatmul.mubr.bf16.gmra.mxu0 %v4510
          %v6307 = vpop.f32.mrf.mxu0
          %v6308 = vadd.f32 %v6019, %v6307
          %v6309 = vpop.f32.mrf.mxu0
          %v6310 = vpop.f32.mrf.mxu0
          %v6311 = vadd.f32 %v6022, %v6310
          %v6312 = vpop.f32.mrf.mxu0
          %6313 = vmatprep.mubr.bf16.mxu0 %v4858
          %6314 = vmatmul.mubr.bf16.gmra.mxu0 %v4522
          %v6315 = vpop.f32.mrf.mxu0
          %v6316 = vadd.f32 %v6027, %v6315
          %v6317 = vpop.f32.mrf.mxu0
          %v6318 = vpop.f32.mrf.mxu0
          %v6319 = vadd.f32 %v6030, %v6318
          %v6320 = vpop.f32.mrf.mxu0
          %6321 = vmatprep.mubr.bf16.mxu0 %v4971
          %6322 = vmatmul.mubr.bf16.gmra.mxu0 %v4950
          %v6323 = vpop.f32.mrf.mxu0
          %v6324 = vadd.f32 %v6035, %v6323
          %v6325 = vpop.f32.mrf.mxu0
          %v6326 = vpop.f32.mrf.mxu0
          %v6327 = vadd.f32 %v6038, %v6326
          %v6328 = vpop.f32.mrf.mxu0
          %6329 = vmatprep.mubr.bf16.mxu0 %v4864
          %6330 = vmatmul.mubr.bf16.gmra.mxu0 %v4546
          %v6331 = vpop.f32.mrf.mxu0
          %v6332 = vadd.f32 %v6043, %v6331
          %v6333 = vpop.f32.mrf.mxu0
          %v6334 = vpop.f32.mrf.mxu0
          %v6335 = vadd.f32 %v6046, %v6334
          %v6336 = vpop.f32.mrf.mxu0
          %6337 = vmatprep.mubr.bf16.mxu0 %v4867
          %6338 = vmatmul.mubr.bf16.gmra.mxu0 %v4558
          %v6339 = vpop.f32.mrf.mxu0
          %v6340 = vadd.f32 %v6051, %v6339
          %v6341 = vpop.f32.mrf.mxu0
          %v6342 = vpop.f32.mrf.mxu0
          %v6343 = vadd.f32 %v6054, %v6342
          %v6344 = vpop.f32.mrf.mxu0
          %6345 = vmatprep.mubr.bf16.mxu0 %v4870
          %6346 = vmatmul.mubr.bf16.gmra.mxu0 %v4570
          %v6347 = vpop.f32.mrf.mxu0
          %v6348 = vadd.f32 %v6059, %v6347
          %v6349 = vpop.f32.mrf.mxu0
          %v6350 = vpop.f32.mrf.mxu0
          %v6351 = vadd.f32 %v6062, %v6350
          %v6352 = vpop.f32.mrf.mxu0
          %6353 = vmatprep.mubr.bf16.mxu0 %v4873
          %6354 = vmatmul.mubr.bf16.gmra.mxu0 %v4582
          %v6355 = vpop.f32.mrf.mxu0
          %v6356 = vadd.f32 %v6067, %v6355
          %v6357 = vpop.f32.mrf.mxu0
          %v6358 = vpop.f32.mrf.mxu0
          %v6359 = vadd.f32 %v6070, %v6358
          %v6360 = vpop.f32.mrf.mxu0
          %6361 = vmatprep.mubr.bf16.mxu0 %v4876
          %6362 = vmatmul.mubr.bf16.gmra.mxu0 %v4594
          %v6363 = vpop.f32.mrf.mxu0
          %v6364 = vadd.f32 %v6075, %v6363
          %v6365 = vpop.f32.mrf.mxu0
          %v6366 = vpop.f32.mrf.mxu0
          %v6367 = vadd.f32 %v6078, %v6366
          %v6368 = vpop.f32.mrf.mxu0
          %6369 = vmatprep.mubr.bf16.mxu0 %v4879
          %6370 = vmatmul.mubr.bf16.gmra.mxu0 %v4606
          %v6371 = vpop.f32.mrf.mxu0
          %v6372 = vadd.f32 %v6083, %v6371
          %v6373 = vpop.f32.mrf.mxu0
          %v6374 = vpop.f32.mrf.mxu0
          %v6375 = vadd.f32 %v6086, %v6374
          %v6376 = vpop.f32.mrf.mxu0
          %6377 = vmatprep.mubr.bf16.mxu0 %v4882
          %6378 = vmatmul.mubr.bf16.gmra.mxu0 %v4618
          %v6379 = vpop.f32.mrf.mxu0
          %v6380 = vadd.f32 %v6091, %v6379
          %v6381 = vpop.f32.mrf.mxu0
          %v6382 = vpop.f32.mrf.mxu0
          %v6383 = vadd.f32 %v6094, %v6382
          %v6384 = vpop.f32.mrf.mxu0
          %6385 = vmatprep.mubr.bf16.mxu0 %v4885
          %6386 = vmatmul.mubr.bf16.gmra.mxu0 %v4630
          %v6387 = vpop.f32.mrf.mxu0
          %v6388 = vadd.f32 %v6099, %v6387
          %v6389 = vpop.f32.mrf.mxu0
          %v6390 = vpop.f32.mrf.mxu0
          %v6391 = vadd.f32 %v6102, %v6390
          %v6392 = vpop.f32.mrf.mxu0
          %6393 = vmatprep.mubr.bf16.mxu0 %v4888
          %6394 = vmatmul.mubr.bf16.gmra.mxu0 %v4642
          %v6395 = vpop.f32.mrf.mxu0
          %v6396 = vadd.f32 %v6107, %v6395
          %v6397 = vpop.f32.mrf.mxu0
          %v6398 = vpop.f32.mrf.mxu0
          %v6399 = vadd.f32 %v6110, %v6398
          %v6400 = vpop.f32.mrf.mxu0
          %6401 = vmatprep.mubr.bf16.mxu0 %v4891
          %6402 = vmatmul.mubr.bf16.gmra.mxu0 %v4654
          %v6403 = vpop.f32.mrf.mxu0
          %v6404 = vadd.f32 %v6115, %v6403
          %v6405 = vpop.f32.mrf.mxu0
          %v6406 = vpop.f32.mrf.mxu0
          %v6407 = vadd.f32 %v6118, %v6406
          %v6408 = vpop.f32.mrf.mxu0
          %6409 = vmatprep.mubr.bf16.mxu0 %v4894
          %6410 = vmatmul.mubr.bf16.gmra.mxu0 %v4666
          %v6411 = vpop.f32.mrf.mxu0
          %v6412 = vadd.f32 %v6123, %v6411
          %v6413 = vpop.f32.mrf.mxu0
          %v6414 = vpop.f32.mrf.mxu0
          %v6415 = vadd.f32 %v6126, %v6414
          %v6416 = vpop.f32.mrf.mxu0
          %6417 = vmatprep.mubr.bf16.mxu0 %v4897
          %6418 = vmatmul.mubr.bf16.gmra.mxu0 %v4678
          %v6419 = vpop.f32.mrf.mxu0
          %v6420 = vadd.f32 %v6131, %v6419
          %v6421 = vpop.f32.mrf.mxu0
          %v6422 = vpop.f32.mrf.mxu0
          %v6423 = vadd.f32 %v6134, %v6422
          %v6424 = vpop.f32.mrf.mxu0
          %6425 = vmatprep.mubr.bf16.mxu0 %v4900
          %6426 = vmatmul.mubr.bf16.gmra.mxu0 %v4690
          %v6427 = vpop.f32.mrf.mxu0
          %v6428 = vadd.f32 %v6139, %v6427
          %v6429 = vpop.f32.mrf.mxu0
          %v6430 = vpop.f32.mrf.mxu0
          %v6431 = vadd.f32 %v6142, %v6430
          %v6432 = vpop.f32.mrf.mxu0
          %6433 = vmatprep.mubr.bf16.mxu0 %v4903
          %6434 = vmatmul.mubr.bf16.gmra.mxu0 %v4702
          %v6435 = vpop.f32.mrf.mxu0
          %v6436 = vadd.f32 %v6147, %v6435
          %v6437 = vpop.f32.mrf.mxu0
          %v6438 = vpop.f32.mrf.mxu0
          %v6439 = vadd.f32 %v6150, %v6438
          %v6440 = vpop.f32.mrf.mxu0
          %6441 = vmatprep.mubr.bf16.mxu0 %v4906
          %6442 = vmatmul.mubr.bf16.gmra.mxu0 %v4714
          %v6443 = vpop.f32.mrf.mxu0
          %v6444 = vadd.f32 %v6155, %v6443
          %v6445 = vpop.f32.mrf.mxu0
          %v6446 = vpop.f32.mrf.mxu0
          %v6447 = vadd.f32 %v6158, %v6446
          %v6448 = vpop.f32.mrf.mxu0
          %6449 = vmatprep.mubr.bf16.mxu0 %v4974
          %6450 = vmatmul.mubr.bf16.gmra.mxu0 %v4962
          %v6451 = vpop.f32.mrf.mxu0
          %v6452 = vadd.f32 %v6163, %v6451
          %v6453 = vpop.f32.mrf.mxu0
          %v6454 = vpop.f32.mrf.mxu0
          %v6455 = vadd.f32 %v6166, %v6454
          %v6456 = vpop.f32.mrf.mxu0
          %6457 = vdwg.mxu0
          %6458 = vmatprep.subr.bf16.mxu0 0
          %6459 = vmatpush1.bf16.msra.mxu0 %v5502
          %6460 = vmatprep.subr.bf16.mxu0 0
          %6461 = vmatpush1.bf16.msra.mxu0 %v5501
          %6462 = vmatprep.subr.bf16.mxu0 0
          %6463 = vmatpush1.bf16.msra.mxu0 %v5500
          %6464 = vmatprep.subr.bf16.mxu0 0
          %6465 = vmatpush1.bf16.msra.mxu0 %v5499
          %6466 = vmatprep.subr.bf16.mxu0 0
          %6467 = vmatpush1.bf16.msra.mxu0 %v5498
          %6468 = vmatprep.subr.bf16.mxu0 0
          %6469 = vmatpush1.bf16.msra.mxu0 %v5497
          %6470 = vmatprep.subr.bf16.mxu0 0
          %6471 = vmatpush1.bf16.msra.mxu0 %v5496
          %6472 = vmatprep.subr.bf16.mxu0 0
          %6473 = vmatpush1.bf16.msra.mxu0 %v5495
          %6474 = vmatprep.subr.bf16.mxu0 0
          %6475 = vmatpush2.bf16.msra.mxu0 %v5510
          %6476 = vmatprep.subr.bf16.mxu0 0
          %6477 = vmatpush2.bf16.msra.mxu0 %v5509
          %6478 = vmatprep.subr.bf16.mxu0 0
          %6479 = vmatpush2.bf16.msra.mxu0 %v5508
          %6480 = vmatprep.subr.bf16.mxu0 0
          %6481 = vmatpush2.bf16.msra.mxu0 %v5507
          %6482 = vmatprep.subr.bf16.mxu0 0
          %6483 = vmatpush2.bf16.msra.mxu0 %v5506
          %6484 = vmatprep.subr.bf16.mxu0 0
          %6485 = vmatpush2.bf16.msra.mxu0 %v5505
          %6486 = vmatprep.subr.bf16.mxu0 0
          %6487 = vmatpush2.bf16.msra.mxu0 %v5504
          %6488 = vmatprep.subr.bf16.mxu0 0
          %6489 = vmatpush2.bf16.msra.mxu0 %v5503
          %6490 = vmatprep.mubr.bf16.mxu0 %v4366
          %6491 = vmatmul.mubr.bf16.gmra.mxu0 %v4263
          %v6492 = vpop.f32.mrf.mxu0
          %v6493 = vadd.f32 %v6204, %v6492
          %v6494 = vpop.f32.mrf.mxu0
          %v6495 = vpop.f32.mrf.mxu0
          %v6496 = vadd.f32 %v6207, %v6495
          %v6497 = vpop.f32.mrf.mxu0
          %6498 = vmatprep.mubr.bf16.mxu0 %v4378
          %6499 = vmatmul.mubr.bf16.gmra.mxu0 %v4265
          %v6500 = vpop.f32.mrf.mxu0
          %v6501 = vadd.f32 %v6212, %v6500
          %v6502 = vpop.f32.mrf.mxu0
          %v6503 = vpop.f32.mrf.mxu0
          %v6504 = vadd.f32 %v6215, %v6503
          %v6505 = vpop.f32.mrf.mxu0
          %6506 = vmatprep.mubr.bf16.mxu0 %v4390
          %6507 = vmatmul.mubr.bf16.gmra.mxu0 %v4267
          %v6508 = vpop.f32.mrf.mxu0
          %v6509 = vadd.f32 %v6220, %v6508
          %v6510 = vpop.f32.mrf.mxu0
          %v6511 = vpop.f32.mrf.mxu0
          %v6512 = vadd.f32 %v6223, %v6511
          %v6513 = vpop.f32.mrf.mxu0
          %6514 = vmatprep.mubr.bf16.mxu0 %v4402
          %6515 = vmatmul.mubr.bf16.gmra.mxu0 %v4269
          %v6516 = vpop.f32.mrf.mxu0
          %v6517 = vadd.f32 %v6228, %v6516
          %v6518 = vpop.f32.mrf.mxu0
          %v6519 = vpop.f32.mrf.mxu0
          %v6520 = vadd.f32 %v6231, %v6519
          %v6521 = vpop.f32.mrf.mxu0
          %6522 = vmatprep.mubr.bf16.mxu0 %v4414
          %6523 = vmatmul.mubr.bf16.gmra.mxu0 %v4271
          %v6524 = vpop.f32.mrf.mxu0
          %v6525 = vadd.f32 %v6236, %v6524
          %v6526 = vpop.f32.mrf.mxu0
          %v6527 = vpop.f32.mrf.mxu0
          %v6528 = vadd.f32 %v6239, %v6527
          %v6529 = vpop.f32.mrf.mxu0
          %6530 = vmatprep.mubr.bf16.mxu0 %v4426
          %6531 = vmatmul.mubr.bf16.gmra.mxu0 %v4273
          %v6532 = vpop.f32.mrf.mxu0
          %v6533 = vadd.f32 %v6244, %v6532
          %v6534 = vpop.f32.mrf.mxu0
          %v6535 = vpop.f32.mrf.mxu0
          %v6536 = vadd.f32 %v6247, %v6535
          %v6537 = vpop.f32.mrf.mxu0
          %6538 = vmatprep.mubr.bf16.mxu0 %v4438
          %6539 = vmatmul.mubr.bf16.gmra.mxu0 %v4275
          %v6540 = vpop.f32.mrf.mxu0
          %v6541 = vadd.f32 %v6252, %v6540
          %v6542 = vpop.f32.mrf.mxu0
          %v6543 = vpop.f32.mrf.mxu0
          %v6544 = vadd.f32 %v6255, %v6543
          %v6545 = vpop.f32.mrf.mxu0
          %6546 = vmatprep.mubr.bf16.mxu0 %v4450
          %6547 = vmatmul.mubr.bf16.gmra.mxu0 %v4277
          %v6548 = vpop.f32.mrf.mxu0
          %v6549 = vadd.f32 %v6260, %v6548
          %v6550 = vpop.f32.mrf.mxu0
          %v6551 = vpop.f32.mrf.mxu0
          %v6552 = vadd.f32 %v6263, %v6551
          %v6553 = vpop.f32.mrf.mxu0
          %6554 = vmatprep.mubr.bf16.mxu0 %v4462
          %6555 = vmatmul.mubr.bf16.gmra.mxu0 %v4279
          %v6556 = vpop.f32.mrf.mxu0
          %v6557 = vadd.f32 %v6268, %v6556
          %v6558 = vpop.f32.mrf.mxu0
          %v6559 = vpop.f32.mrf.mxu0
          %v6560 = vadd.f32 %v6271, %v6559
          %v6561 = vpop.f32.mrf.mxu0
          %6562 = vmatprep.mubr.bf16.mxu0 %v4474
          %6563 = vmatmul.mubr.bf16.gmra.mxu0 %v4281
          %v6564 = vpop.f32.mrf.mxu0
          %v6565 = vadd.f32 %v6276, %v6564
          %v6566 = vpop.f32.mrf.mxu0
          %v6567 = vpop.f32.mrf.mxu0
          %v6568 = vadd.f32 %v6279, %v6567
          %v6569 = vpop.f32.mrf.mxu0
          %6570 = vmatprep.mubr.bf16.mxu0 %v4486
          %6571 = vmatmul.mubr.bf16.gmra.mxu0 %v4283
          %v6572 = vpop.f32.mrf.mxu0
          %v6573 = vadd.f32 %v6284, %v6572
          %v6574 = vpop.f32.mrf.mxu0
          %v6575 = vpop.f32.mrf.mxu0
          %v6576 = vadd.f32 %v6287, %v6575
          %v6577 = vpop.f32.mrf.mxu0
          %6578 = vmatprep.mubr.bf16.mxu0 %v4498
          %6579 = vmatmul.mubr.bf16.gmra.mxu0 %v4285
          %v6580 = vpop.f32.mrf.mxu0
          %v6581 = vadd.f32 %v6292, %v6580
          %v6582 = vpop.f32.mrf.mxu0
          %v6583 = vpop.f32.mrf.mxu0
          %v6584 = vadd.f32 %v6295, %v6583
          %v6585 = vpop.f32.mrf.mxu0
          %6586 = vmatprep.mubr.bf16.mxu0 %v4510
          %6587 = vmatmul.mubr.bf16.gmra.mxu0 %v4287
          %v6588 = vpop.f32.mrf.mxu0
          %v6589 = vadd.f32 %v6300, %v6588
          %v6590 = vpop.f32.mrf.mxu0
          %v6591 = vpop.f32.mrf.mxu0
          %v6592 = vadd.f32 %v6303, %v6591
          %v6593 = vpop.f32.mrf.mxu0
          %6594 = vmatprep.mubr.bf16.mxu0 %v4522
          %6595 = vmatmul.mubr.bf16.gmra.mxu0 %v4289
          %v6596 = vpop.f32.mrf.mxu0
          %v6597 = vadd.f32 %v6308, %v6596
          %v6598 = vpop.f32.mrf.mxu0
          %v6599 = vpop.f32.mrf.mxu0
          %v6600 = vadd.f32 %v6311, %v6599
          %v6601 = vpop.f32.mrf.mxu0
          %6602 = vmatprep.mubr.bf16.mxu0 %v4950
          %6603 = vmatmul.mubr.bf16.gmra.mxu0 %v4291
          %v6604 = vpop.f32.mrf.mxu0
          %v6605 = vadd.f32 %v6316, %v6604
          %v6606 = vpop.f32.mrf.mxu0
          %v6607 = vpop.f32.mrf.mxu0
          %v6608 = vadd.f32 %v6319, %v6607
          %v6609 = vpop.f32.mrf.mxu0
          %6610 = vmatprep.mubr.bf16.mxu0 %v4988
          %6611 = vmatmul.mubr.bf16.gmra.mxu0 %v4293
          %v6612 = vpop.f32.mrf.mxu0
          %v6613 = vadd.f32 %v6324, %v6612
          %v6614 = vpop.f32.mrf.mxu0
          %v6615 = vpop.f32.mrf.mxu0
          %v6616 = vadd.f32 %v6327, %v6615
          %v6617 = vpop.f32.mrf.mxu0
          %6618 = vmatprep.mubr.bf16.mxu0 %v4558
          %6619 = vmatmul.mubr.bf16.gmra.mxu0 %v4299
          %v6620 = vpop.f32.mrf.mxu0
          %v6621 = vadd.f32 %v6332, %v6620
          %v6622 = vpop.f32.mrf.mxu0
          %v6623 = vpop.f32.mrf.mxu0
          %v6624 = vadd.f32 %v6335, %v6623
          %v6625 = vpop.f32.mrf.mxu0
          %6626 = vmatprep.mubr.bf16.mxu0 %v4570
          %6627 = vmatmul.mubr.bf16.gmra.mxu0 %v4301
          %v6628 = vpop.f32.mrf.mxu0
          %v6629 = vadd.f32 %v6340, %v6628
          %v6630 = vpop.f32.mrf.mxu0
          %v6631 = vpop.f32.mrf.mxu0
          %v6632 = vadd.f32 %v6343, %v6631
          %v6633 = vpop.f32.mrf.mxu0
          %6634 = vmatprep.mubr.bf16.mxu0 %v4582
          %6635 = vmatmul.mubr.bf16.gmra.mxu0 %v4303
          %v6636 = vpop.f32.mrf.mxu0
          %v6637 = vadd.f32 %v6348, %v6636
          %v6638 = vpop.f32.mrf.mxu0
          %v6639 = vpop.f32.mrf.mxu0
          %v6640 = vadd.f32 %v6351, %v6639
          %v6641 = vpop.f32.mrf.mxu0
          %6642 = vmatprep.mubr.bf16.mxu0 %v4594
          %6643 = vmatmul.mubr.bf16.gmra.mxu0 %v4305
          %v6644 = vpop.f32.mrf.mxu0
          %v6645 = vadd.f32 %v6356, %v6644
          %v6646 = vpop.f32.mrf.mxu0
          %v6647 = vpop.f32.mrf.mxu0
          %v6648 = vadd.f32 %v6359, %v6647
          %v6649 = vpop.f32.mrf.mxu0
          %6650 = vmatprep.mubr.bf16.mxu0 %v4606
          %6651 = vmatmul.mubr.bf16.gmra.mxu0 %v4307
          %v6652 = vpop.f32.mrf.mxu0
          %v6653 = vadd.f32 %v6364, %v6652
          %v6654 = vpop.f32.mrf.mxu0
          %v6655 = vpop.f32.mrf.mxu0
          %v6656 = vadd.f32 %v6367, %v6655
          %v6657 = vpop.f32.mrf.mxu0
          %6658 = vmatprep.mubr.bf16.mxu0 %v4618
          %6659 = vmatmul.mubr.bf16.gmra.mxu0 %v4309
          %v6660 = vpop.f32.mrf.mxu0
          %v6661 = vadd.f32 %v6372, %v6660
          %v6662 = vpop.f32.mrf.mxu0
          %v6663 = vpop.f32.mrf.mxu0
          %v6664 = vadd.f32 %v6375, %v6663
          %v6665 = vpop.f32.mrf.mxu0
          %6666 = vmatprep.mubr.bf16.mxu0 %v4630
          %6667 = vmatmul.mubr.bf16.gmra.mxu0 %v4311
          %v6668 = vpop.f32.mrf.mxu0
          %v6669 = vadd.f32 %v6380, %v6668
          %v6670 = vpop.f32.mrf.mxu0
          %v6671 = vpop.f32.mrf.mxu0
          %v6672 = vadd.f32 %v6383, %v6671
          %v6673 = vpop.f32.mrf.mxu0
          %6674 = vmatprep.mubr.bf16.mxu0 %v4642
          %6675 = vmatmul.mubr.bf16.gmra.mxu0 %v4313
          %v6676 = vpop.f32.mrf.mxu0
          %v6677 = vadd.f32 %v6388, %v6676
          %v6678 = vpop.f32.mrf.mxu0
          %v6679 = vpop.f32.mrf.mxu0
          %v6680 = vadd.f32 %v6391, %v6679
          %v6681 = vpop.f32.mrf.mxu0
          %6682 = vmatprep.mubr.bf16.mxu0 %v4654
          %6683 = vmatmul.mubr.bf16.gmra.mxu0 %v4315
          %v6684 = vpop.f32.mrf.mxu0
          %v6685 = vadd.f32 %v6396, %v6684
          %v6686 = vpop.f32.mrf.mxu0
          %v6687 = vpop.f32.mrf.mxu0
          %v6688 = vadd.f32 %v6399, %v6687
          %v6689 = vpop.f32.mrf.mxu0
          %6690 = vmatprep.mubr.bf16.mxu0 %v4666
          %6691 = vmatmul.mubr.bf16.gmra.mxu0 %v4317
          %v6692 = vpop.f32.mrf.mxu0
          %v6693 = vadd.f32 %v6404, %v6692
          %v6694 = vpop.f32.mrf.mxu0
          %v6695 = vpop.f32.mrf.mxu0
          %v6696 = vadd.f32 %v6407, %v6695
          %v6697 = vpop.f32.mrf.mxu0
          %6698 = vmatprep.mubr.bf16.mxu0 %v4678
          %6699 = vmatmul.mubr.bf16.gmra.mxu0 %v4319
          %v6700 = vpop.f32.mrf.mxu0
          %v6701 = vadd.f32 %v6412, %v6700
          %v6702 = vpop.f32.mrf.mxu0
          %v6703 = vpop.f32.mrf.mxu0
          %v6704 = vadd.f32 %v6415, %v6703
          %v6705 = vpop.f32.mrf.mxu0
          %6706 = vmatprep.mubr.bf16.mxu0 %v4690
          %6707 = vmatmul.mubr.bf16.gmra.mxu0 %v4321
          %v6708 = vpop.f32.mrf.mxu0
          %v6709 = vadd.f32 %v6420, %v6708
          %v6710 = vpop.f32.mrf.mxu0
          %v6711 = vpop.f32.mrf.mxu0
          %v6712 = vadd.f32 %v6423, %v6711
          %v6713 = vpop.f32.mrf.mxu0
          %6714 = vmatprep.mubr.bf16.mxu0 %v4702
          %6715 = vmatmul.mubr.bf16.gmra.mxu0 %v4323
          %v6716 = vpop.f32.mrf.mxu0
          %v6717 = vadd.f32 %v6428, %v6716
          %v6718 = vpop.f32.mrf.mxu0
          %v6719 = vpop.f32.mrf.mxu0
          %v6720 = vadd.f32 %v6431, %v6719
          %v6721 = vpop.f32.mrf.mxu0
          %6722 = vmatprep.mubr.bf16.mxu0 %v4714
          %6723 = vmatmul.mubr.bf16.gmra.mxu0 %v4325
          %v6724 = vpop.f32.mrf.mxu0
          %v6725 = vadd.f32 %v6436, %v6724
          %v6726 = vpop.f32.mrf.mxu0
          %v6727 = vpop.f32.mrf.mxu0
          %v6728 = vadd.f32 %v6439, %v6727
          %v6729 = vpop.f32.mrf.mxu0
          %6730 = vmatprep.mubr.bf16.mxu0 %v4962
          %6731 = vmatmul.mubr.bf16.gmra.mxu0 %v4327
          %v6732 = vpop.f32.mrf.mxu0
          %v6733 = vadd.f32 %v6444, %v6732
          %v6734 = vpop.f32.mrf.mxu0
          %v6735 = vpop.f32.mrf.mxu0
          %v6736 = vadd.f32 %v6447, %v6735
          %v6737 = vpop.f32.mrf.mxu0
          %6738 = vmatprep.mubr.bf16.mxu0 %v5000
          %6739 = vmatmul.mubr.bf16.gmra.mxu0 %v4329
          %v6740 = vpop.f32.mrf.mxu0
          %v6741 = vadd.f32 %v6452, %v6740
          %v6742 = vpop.f32.mrf.mxu0
          %v6743 = vpop.f32.mrf.mxu0
          %v6744 = vadd.f32 %v6455, %v6743
          %v6745 = vpop.f32.mrf.mxu0
          %6746 = vdwg.mxu0
          %6747 = vmatprep.subr.bf16.mxu0 0
          %6748 = vmatpush1.bf16.msra.mxu0 %v5518
          %6749 = vmatprep.subr.bf16.mxu0 0
          %6750 = vmatpush1.bf16.msra.mxu0 %v5517
          %6751 = vmatprep.subr.bf16.mxu0 0
          %6752 = vmatpush1.bf16.msra.mxu0 %v5516
          %6753 = vmatprep.subr.bf16.mxu0 0
          %6754 = vmatpush1.bf16.msra.mxu0 %v5515
          %6755 = vmatprep.subr.bf16.mxu0 0
          %6756 = vmatpush1.bf16.msra.mxu0 %v5514
          %6757 = vmatprep.subr.bf16.mxu0 0
          %6758 = vmatpush1.bf16.msra.mxu0 %v5513
          %6759 = vmatprep.subr.bf16.mxu0 0
          %6760 = vmatpush1.bf16.msra.mxu0 %v5512
          %6761 = vmatprep.subr.bf16.mxu0 0
          %6762 = vmatpush1.bf16.msra.mxu0 %v5511
          %6763 = vmatprep.subr.bf16.mxu0 0
          %6764 = vmatpush2.bf16.msra.mxu0 0
          %6765 = vmatprep.subr.bf16.mxu0 0
          %6766 = vmatpush2.bf16.msra.mxu0 0
          %6767 = vmatprep.subr.bf16.mxu0 0
          %6768 = vmatpush2.bf16.msra.mxu0 0
          %6769 = vmatprep.subr.bf16.mxu0 0
          %6770 = vmatpush2.bf16.msra.mxu0 0
          %6771 = vmatprep.subr.bf16.mxu0 0
          %6772 = vmatpush2.bf16.msra.mxu0 0
          %6773 = vmatprep.subr.bf16.mxu0 0
          %6774 = vmatpush2.bf16.msra.mxu0 0
          %6775 = vmatprep.subr.bf16.mxu0 0
          %6776 = vmatpush2.bf16.msra.mxu0 0
          %6777 = vmatprep.subr.bf16.mxu0 0
          %6778 = vmatpush2.bf16.msra.mxu0 0
          %6779 = vmatprep.mubr.bf16.mxu0 0
          %6780 = vmatmul.mubr.bf16.gmra.mxu0 %v4819
          %v6781 = vpop.f32.mrf.mxu0
          %v6782 = vadd.f32 %v6493, %v6781
          %v6783 = vpop.f32.mrf.mxu0
          %v6784 = vpop.f32.mrf.mxu0
          %v6785 = vadd.f32 %v6496, %v6784
          %v6786 = vpop.f32.mrf.mxu0
          %6787 = vmatprep.mubr.bf16.mxu0 0
          %6788 = vmatmul.mubr.bf16.gmra.mxu0 %v4822
          %v6789 = vpop.f32.mrf.mxu0
          %v6790 = vadd.f32 %v6501, %v6789
          %v6791 = vpop.f32.mrf.mxu0
          %v6792 = vpop.f32.mrf.mxu0
          %v6793 = vadd.f32 %v6504, %v6792
          %v6794 = vpop.f32.mrf.mxu0
          %6795 = vmatprep.mubr.bf16.mxu0 0
          %6796 = vmatmul.mubr.bf16.gmra.mxu0 %v4825
          %v6797 = vpop.f32.mrf.mxu0
          %v6798 = vadd.f32 %v6509, %v6797
          %v6799 = vpop.f32.mrf.mxu0
          %v6800 = vpop.f32.mrf.mxu0
          %v6801 = vadd.f32 %v6512, %v6800
          %v6802 = vpop.f32.mrf.mxu0
          %6803 = vmatprep.mubr.bf16.mxu0 0
          %6804 = vmatmul.mubr.bf16.gmra.mxu0 %v4828
          %v6805 = vpop.f32.mrf.mxu0
          %v6806 = vadd.f32 %v6517, %v6805
          %v6807 = vpop.f32.mrf.mxu0
          %v6808 = vpop.f32.mrf.mxu0
          %v6809 = vadd.f32 %v6520, %v6808
          %v6810 = vpop.f32.mrf.mxu0
          %6811 = vmatprep.mubr.bf16.mxu0 0
          %6812 = vmatmul.mubr.bf16.gmra.mxu0 %v4831
          %v6813 = vpop.f32.mrf.mxu0
          %v6814 = vadd.f32 %v6525, %v6813
          %v6815 = vpop.f32.mrf.mxu0
          %v6816 = vpop.f32.mrf.mxu0
          %v6817 = vadd.f32 %v6528, %v6816
          %v6818 = vpop.f32.mrf.mxu0
          %6819 = vmatprep.mubr.bf16.mxu0 0
          %6820 = vmatmul.mubr.bf16.gmra.mxu0 %v4834
          %v6821 = vpop.f32.mrf.mxu0
          %v6822 = vadd.f32 %v6533, %v6821
          %v6823 = vpop.f32.mrf.mxu0
          %v6824 = vpop.f32.mrf.mxu0
          %v6825 = vadd.f32 %v6536, %v6824
          %v6826 = vpop.f32.mrf.mxu0
          %6827 = vmatprep.mubr.bf16.mxu0 0
          %6828 = vmatmul.mubr.bf16.gmra.mxu0 %v4837
          %v6829 = vpop.f32.mrf.mxu0
          %v6830 = vadd.f32 %v6541, %v6829
          %v6831 = vpop.f32.mrf.mxu0
          %v6832 = vpop.f32.mrf.mxu0
          %v6833 = vadd.f32 %v6544, %v6832
          %v6834 = vpop.f32.mrf.mxu0
          %6835 = vmatprep.mubr.bf16.mxu0 0
          %6836 = vmatmul.mubr.bf16.gmra.mxu0 %v4840
          %v6837 = vpop.f32.mrf.mxu0
          %v6838 = vadd.f32 %v6549, %v6837
          %v6839 = vpop.f32.mrf.mxu0
          %v6840 = vpop.f32.mrf.mxu0
          %v6841 = vadd.f32 %v6552, %v6840
          %v6842 = vpop.f32.mrf.mxu0
          %6843 = vmatprep.mubr.bf16.mxu0 0
          %6844 = vmatmul.mubr.bf16.gmra.mxu0 %v4843
          %v6845 = vpop.f32.mrf.mxu0
          %v6846 = vadd.f32 %v6557, %v6845
          %v6847 = vpop.f32.mrf.mxu0
          %v6848 = vpop.f32.mrf.mxu0
          %v6849 = vadd.f32 %v6560, %v6848
          %v6850 = vpop.f32.mrf.mxu0
          %6851 = vmatprep.mubr.bf16.mxu0 0
          %6852 = vmatmul.mubr.bf16.gmra.mxu0 %v4846
          %v6853 = vpop.f32.mrf.mxu0
          %v6854 = vadd.f32 %v6565, %v6853
          %v6855 = vpop.f32.mrf.mxu0
          %v6856 = vpop.f32.mrf.mxu0
          %v6857 = vadd.f32 %v6568, %v6856
          %v6858 = vpop.f32.mrf.mxu0
          %6859 = vmatprep.mubr.bf16.mxu0 0
          %6860 = vmatmul.mubr.bf16.gmra.mxu0 %v4849
          %v6861 = vpop.f32.mrf.mxu0
          %v6862 = vadd.f32 %v6573, %v6861
          %v6863 = vpop.f32.mrf.mxu0
          %v6864 = vpop.f32.mrf.mxu0
          %v6865 = vadd.f32 %v6576, %v6864
          %v6866 = vpop.f32.mrf.mxu0
          %6867 = vmatprep.mubr.bf16.mxu0 0
          %6868 = vmatmul.mubr.bf16.gmra.mxu0 %v4852
          %v6869 = vpop.f32.mrf.mxu0
          %v6870 = vadd.f32 %v6581, %v6869
          %v6871 = vpop.f32.mrf.mxu0
          %v6872 = vpop.f32.mrf.mxu0
          %v6873 = vadd.f32 %v6584, %v6872
          %v6874 = vpop.f32.mrf.mxu0
          %6875 = vmatprep.mubr.bf16.mxu0 0
          %6876 = vmatmul.mubr.bf16.gmra.mxu0 %v4855
          %v6877 = vpop.f32.mrf.mxu0
          %v6878 = vadd.f32 %v6589, %v6877
          %v6879 = vpop.f32.mrf.mxu0
          %v6880 = vpop.f32.mrf.mxu0
          %v6881 = vadd.f32 %v6592, %v6880
          %v6882 = vpop.f32.mrf.mxu0
          %6883 = vmatprep.mubr.bf16.mxu0 0
          %6884 = vmatmul.mubr.bf16.gmra.mxu0 %v4858
          %v6885 = vpop.f32.mrf.mxu0
          %v6886 = vadd.f32 %v6597, %v6885
          %v6887 = vpop.f32.mrf.mxu0
          %v6888 = vpop.f32.mrf.mxu0
          %v6889 = vadd.f32 %v6600, %v6888
          %v6890 = vpop.f32.mrf.mxu0
          %6891 = vmatprep.mubr.bf16.mxu0 0
          %6892 = vmatmul.mubr.bf16.gmra.mxu0 %v4971
          %v6893 = vpop.f32.mrf.mxu0
          %v6894 = vadd.f32 %v6605, %v6893
          %v6895 = vpop.f32.mrf.mxu0
          %v6896 = vpop.f32.mrf.mxu0
          %v6897 = vadd.f32 %v6608, %v6896
          %v6898 = vpop.f32.mrf.mxu0
          %6899 = vmatprep.mubr.bf16.mxu0 0
          %6900 = vmatmul.mubr.bf16.gmra.mxu0 %v5009
          %v6901 = vpop.f32.mrf.mxu0
          %v6902 = vadd.f32 %v6613, %v6901
          %v6903 = vpop.f32.mrf.mxu0
          %v6904 = vpop.f32.mrf.mxu0
          %v6905 = vadd.f32 %v6616, %v6904
          %v6906 = vpop.f32.mrf.mxu0
          %6907 = vmatprep.mubr.bf16.mxu0 0
          %6908 = vmatmul.mubr.bf16.gmra.mxu0 %v4867
          %v6909 = vpop.f32.mrf.mxu0
          %v6910 = vadd.f32 %v6621, %v6909
          %v6911 = vpop.f32.mrf.mxu0
          %v6912 = vpop.f32.mrf.mxu0
          %v6913 = vadd.f32 %v6624, %v6912
          %v6914 = vpop.f32.mrf.mxu0
          %6915 = vmatprep.mubr.bf16.mxu0 0
          %6916 = vmatmul.mubr.bf16.gmra.mxu0 %v4870
          %v6917 = vpop.f32.mrf.mxu0
          %v6918 = vadd.f32 %v6629, %v6917
          %v6919 = vpop.f32.mrf.mxu0
          %v6920 = vpop.f32.mrf.mxu0
          %v6921 = vadd.f32 %v6632, %v6920
          %v6922 = vpop.f32.mrf.mxu0
          %6923 = vmatprep.mubr.bf16.mxu0 0
          %6924 = vmatmul.mubr.bf16.gmra.mxu0 %v4873
          %v6925 = vpop.f32.mrf.mxu0
          %v6926 = vadd.f32 %v6637, %v6925
          %v6927 = vpop.f32.mrf.mxu0
          %v6928 = vpop.f32.mrf.mxu0
          %v6929 = vadd.f32 %v6640, %v6928
          %v6930 = vpop.f32.mrf.mxu0
          %6931 = vmatprep.mubr.bf16.mxu0 0
          %6932 = vmatmul.mubr.bf16.gmra.mxu0 %v4876
          %v6933 = vpop.f32.mrf.mxu0
          %v6934 = vadd.f32 %v6645, %v6933
          %v6935 = vpop.f32.mrf.mxu0
          %v6936 = vpop.f32.mrf.mxu0
          %v6937 = vadd.f32 %v6648, %v6936
          %v6938 = vpop.f32.mrf.mxu0
          %6939 = vmatprep.mubr.bf16.mxu0 0
          %6940 = vmatmul.mubr.bf16.gmra.mxu0 %v4879
          %v6941 = vpop.f32.mrf.mxu0
          %v6942 = vadd.f32 %v6653, %v6941
          %v6943 = vpop.f32.mrf.mxu0
          %v6944 = vpop.f32.mrf.mxu0
          %v6945 = vadd.f32 %v6656, %v6944
          %v6946 = vpop.f32.mrf.mxu0
          %6947 = vmatprep.mubr.bf16.mxu0 0
          %6948 = vmatmul.mubr.bf16.gmra.mxu0 %v4882
          %v6949 = vpop.f32.mrf.mxu0
          %v6950 = vadd.f32 %v6661, %v6949
          %v6951 = vpop.f32.mrf.mxu0
          %v6952 = vpop.f32.mrf.mxu0
          %v6953 = vadd.f32 %v6664, %v6952
          %v6954 = vpop.f32.mrf.mxu0
          %6955 = vmatprep.mubr.bf16.mxu0 0
          %6956 = vmatmul.mubr.bf16.gmra.mxu0 %v4885
          %v6957 = vpop.f32.mrf.mxu0
          %v6958 = vadd.f32 %v6669, %v6957
          %v6959 = vpop.f32.mrf.mxu0
          %v6960 = vpop.f32.mrf.mxu0
          %v6961 = vadd.f32 %v6672, %v6960
          %v6962 = vpop.f32.mrf.mxu0
          %6963 = vmatprep.mubr.bf16.mxu0 0
          %6964 = vmatmul.mubr.bf16.gmra.mxu0 %v4888
          %v6965 = vpop.f32.mrf.mxu0
          %v6966 = vadd.f32 %v6677, %v6965
          %v6967 = vpop.f32.mrf.mxu0
          %v6968 = vpop.f32.mrf.mxu0
          %v6969 = vadd.f32 %v6680, %v6968
          %v6970 = vpop.f32.mrf.mxu0
          %6971 = vmatprep.mubr.bf16.mxu0 0
          %6972 = vmatmul.mubr.bf16.gmra.mxu0 %v4891
          %v6973 = vpop.f32.mrf.mxu0
          %v6974 = vadd.f32 %v6685, %v6973
          %v6975 = vpop.f32.mrf.mxu0
          %v6976 = vpop.f32.mrf.mxu0
          %v6977 = vadd.f32 %v6688, %v6976
          %v6978 = vpop.f32.mrf.mxu0
          %6979 = vmatprep.mubr.bf16.mxu0 0
          %6980 = vmatmul.mubr.bf16.gmra.mxu0 %v4894
          %v6981 = vpop.f32.mrf.mxu0
          %v6982 = vadd.f32 %v6693, %v6981
          %v6983 = vpop.f32.mrf.mxu0
          %v6984 = vpop.f32.mrf.mxu0
          %v6985 = vadd.f32 %v6696, %v6984
          %v6986 = vpop.f32.mrf.mxu0
          %6987 = vmatprep.mubr.bf16.mxu0 0
          %6988 = vmatmul.mubr.bf16.gmra.mxu0 %v4897
          %v6989 = vpop.f32.mrf.mxu0
          %v6990 = vadd.f32 %v6701, %v6989
          %v6991 = vpop.f32.mrf.mxu0
          %v6992 = vpop.f32.mrf.mxu0
          %v6993 = vadd.f32 %v6704, %v6992
          %v6994 = vpop.f32.mrf.mxu0
          %6995 = vmatprep.mubr.bf16.mxu0 0
          %6996 = vmatmul.mubr.bf16.gmra.mxu0 %v4900
          %v6997 = vpop.f32.mrf.mxu0
          %v6998 = vadd.f32 %v6709, %v6997
          %v6999 = vpop.f32.mrf.mxu0
          %v7000 = vpop.f32.mrf.mxu0
          %v7001 = vadd.f32 %v6712, %v7000
          %v7002 = vpop.f32.mrf.mxu0
          %7003 = vmatprep.mubr.bf16.mxu0 0
          %7004 = vmatmul.mubr.bf16.gmra.mxu0 %v4903
          %v7005 = vpop.f32.mrf.mxu0
          %v7006 = vadd.f32 %v6717, %v7005
          %v7007 = vpop.f32.mrf.mxu0
          %v7008 = vpop.f32.mrf.mxu0
          %v7009 = vadd.f32 %v6720, %v7008
          %v7010 = vpop.f32.mrf.mxu0
          %7011 = vmatprep.mubr.bf16.mxu0 0
          %7012 = vmatmul.mubr.bf16.gmra.mxu0 %v4906
          %v7013 = vpop.f32.mrf.mxu0
          %v7014 = vadd.f32 %v6725, %v7013
          %v7015 = vpop.f32.mrf.mxu0
          %v7016 = vpop.f32.mrf.mxu0
          %v7017 = vadd.f32 %v6728, %v7016
          %v7018 = vpop.f32.mrf.mxu0
          %7019 = vmatprep.mubr.bf16.mxu0 0
          %7020 = vmatmul.mubr.bf16.gmra.mxu0 %v4974
          %v7021 = vpop.f32.mrf.mxu0
          %v7022 = vadd.f32 %v6733, %v7021
          %v7023 = vpop.f32.mrf.mxu0
          %v7024 = vpop.f32.mrf.mxu0
          %v7025 = vadd.f32 %v6736, %v7024
          %v7026 = vpop.f32.mrf.mxu0
          %7027 = vmatprep.mubr.bf16.mxu0 0
          %7028 = vmatmul.mubr.bf16.gmra.mxu0 %v5012
          %v7029 = vpop.f32.mrf.mxu0
          %v7030 = vadd.f32 %v6741, %v7029
          %v7031 = vpop.f32.mrf.mxu0
          %v7032 = vpop.f32.mrf.mxu0
          %v7033 = vadd.f32 %v6744, %v7032
          %v7034 = vpop.f32.mrf.mxu0
          %7035 = vdwg.mxu0
          %v7036 = vadd.f32 %v6782, %v6785
          %v7037 = vadd.f32 %v7036, %v6790
          %v7038 = vadd.f32 %v7037, %v6793
          %v7039 = vadd.f32 %v7038, %v6798
          %v7040 = vadd.f32 %v7039, %v6801
          %v7041 = vadd.f32 %v7040, %v6806
          %v7042 = vadd.f32 %v7041, %v6809
          %v7043 = vadd.f32 %v7042, %v6814
          %v7044 = vadd.f32 %v7043, %v6817
          %v7045 = vadd.f32 %v7044, %v6822
          %v7046 = vadd.f32 %v7045, %v6825
          %v7047 = vadd.f32 %v7046, %v6830
          %v7048 = vadd.f32 %v7047, %v6833
          %v7049 = vadd.f32 %v7048, %v6838
          %v7050 = vadd.f32 %v7049, %v6841
          %v7051 = vadd.f32 %v7050, %v6846
          %v7052 = vadd.f32 %v7051, %v6849
          %v7053 = vadd.f32 %v7052, %v6854
          %v7054 = vadd.f32 %v7053, %v6857
          %v7055 = vadd.f32 %v7054, %v6862
          %v7056 = vadd.f32 %v7055, %v6865
          %v7057 = vadd.f32 %v7056, %v6870
          %v7058 = vadd.f32 %v7057, %v6873
          %v7059 = vadd.f32 %v7058, %v6878
          %v7060 = vadd.f32 %v7059, %v6881
          %v7061 = vadd.f32 %v7060, %v6886
          %v7062 = vadd.f32 %v7061, %v6889
          %v7063 = vadd.f32 %v7062, %v6894
          %v7064 = vadd.f32 %v7063, %v6897
          %v7065 = vadd.f32 %v7064, %v6902
          %v7066 = vadd.f32 %v7065, %v6905
          %v7067 = vadd.f32 %v7066, %v6910
          %v7068 = vadd.f32 %v7067, %v6913
          %v7069 = vadd.f32 %v7068, %v6918
          %v7070 = vadd.f32 %v7069, %v6921
          %v7071 = vadd.f32 %v7070, %v6926
          %v7072 = vadd.f32 %v7071, %v6929
          %v7073 = vadd.f32 %v7072, %v6934
          %v7074 = vadd.f32 %v7073, %v6937
          %v7075 = vadd.f32 %v7074, %v6942
          %v7076 = vadd.f32 %v7075, %v6945
          %v7077 = vadd.f32 %v7076, %v6950
          %v7078 = vadd.f32 %v7077, %v6953
          %v7079 = vadd.f32 %v7078, %v6958
          %v7080 = vadd.f32 %v7079, %v6961
          %v7081 = vadd.f32 %v7080, %v6966
          %v7082 = vadd.f32 %v7081, %v6969
          %v7083 = vadd.f32 %v7082, %v6974
          %v7084 = vadd.f32 %v7083, %v6977
          %v7085 = vadd.f32 %v7084, %v6982
          %v7086 = vadd.f32 %v7085, %v6985
          %v7087 = vadd.f32 %v7086, %v6990
          %v7088 = vadd.f32 %v7087, %v6993
          %v7089 = vadd.f32 %v7088, %v6998
          %v7090 = vadd.f32 %v7089, %v7001
          %v7091 = vadd.f32 %v7090, %v7006
          %v7092 = vadd.f32 %v7091, %v7009
          %v7093 = vadd.f32 %v7092, %v7014
          %v7094 = vadd.f32 %v7093, %v7017
          %v7095 = vadd.f32 %v7094, %v7022
          %v7096 = vadd.f32 %v7095, %v7025
          %v7097 = vadd.f32 %v7096, %v7030
          %v7098 = vadd.f32 %v7097, %v7033
          %v7099 = vrot.slane %v7098, 4
          %v7100 = vadd.f32 %v7098, %v7099
          %v7101 = vrot.slane %v7100, 2
          %v7102 = vadd.f32 %v7100, %v7101
          %v7103 = vrot.slane %v7102, 1
          %v7104 = vadd.f32 %v7102, %v7103
          %v7105 = vmul.f32 %v6782, %v6782
          %v7106 = vmul.f32 %v6785, %v6785
          %v7107 = vmul.f32 %v6790, %v6790
          %v7108 = vmul.f32 %v6793, %v6793
          %v7109 = vmul.f32 %v6798, %v6798
          %v7110 = vmul.f32 %v6801, %v6801
          %v7111 = vmul.f32 %v6806, %v6806
          %v7112 = vmul.f32 %v6809, %v6809
          %v7113 = vmul.f32 %v6814, %v6814
          %v7114 = vmul.f32 %v6817, %v6817
          %v7115 = vmul.f32 %v6822, %v6822
          %v7116 = vmul.f32 %v6825, %v6825
          %v7117 = vmul.f32 %v6830, %v6830
          %v7118 = vmul.f32 %v6833, %v6833
          %v7119 = vmul.f32 %v6838, %v6838
          %v7120 = vmul.f32 %v6841, %v6841
          %v7121 = vmul.f32 %v6846, %v6846
          %v7122 = vmul.f32 %v6849, %v6849
          %v7123 = vmul.f32 %v6854, %v6854
          %v7124 = vmul.f32 %v6857, %v6857
          %v7125 = vmul.f32 %v6862, %v6862
          %v7126 = vmul.f32 %v6865, %v6865
          %v7127 = vmul.f32 %v6870, %v6870
          %v7128 = vmul.f32 %v6873, %v6873
          %v7129 = vmul.f32 %v6878, %v6878
          %v7130 = vmul.f32 %v6881, %v6881
          %v7131 = vmul.f32 %v6886, %v6886
          %v7132 = vmul.f32 %v6889, %v6889
          %v7133 = vmul.f32 %v6894, %v6894
          %v7134 = vmul.f32 %v6897, %v6897
          %v7135 = vmul.f32 %v6902, %v6902
          %v7136 = vmul.f32 %v6905, %v6905
          %v7137 = vmul.f32 %v6910, %v6910
          %v7138 = vmul.f32 %v6913, %v6913
          %v7139 = vmul.f32 %v6918, %v6918
          %v7140 = vmul.f32 %v6921, %v6921
          %v7141 = vmul.f32 %v6926, %v6926
          %v7142 = vmul.f32 %v6929, %v6929
          %v7143 = vmul.f32 %v6934, %v6934
          %v7144 = vmul.f32 %v6937, %v6937
          %v7145 = vmul.f32 %v6942, %v6942
          %v7146 = vmul.f32 %v6945, %v6945
          %v7147 = vmul.f32 %v6950, %v6950
          %v7148 = vmul.f32 %v6953, %v6953
          %v7149 = vmul.f32 %v6958, %v6958
          %v7150 = vmul.f32 %v6961, %v6961
          %v7151 = vmul.f32 %v6966, %v6966
          %v7152 = vmul.f32 %v6969, %v6969
          %v7153 = vmul.f32 %v6974, %v6974
          %v7154 = vmul.f32 %v6977, %v6977
          %v7155 = vmul.f32 %v6982, %v6982
          %v7156 = vmul.f32 %v6985, %v6985
          %v7157 = vmul.f32 %v6990, %v6990
          %v7158 = vmul.f32 %v6993, %v6993
          %v7159 = vmul.f32 %v6998, %v6998
          %v7160 = vmul.f32 %v7001, %v7001
          %v7161 = vmul.f32 %v7006, %v7006
          %v7162 = vmul.f32 %v7009, %v7009
          %v7163 = vmul.f32 %v7014, %v7014
          %v7164 = vmul.f32 %v7017, %v7017
          %v7165 = vmul.f32 %v7022, %v7022
          %v7166 = vmul.f32 %v7025, %v7025
          %v7167 = vmul.f32 %v7030, %v7030
          %v7168 = vmul.f32 %v7033, %v7033
          %v7169 = vadd.f32 %v7105, %v7106
          %v7170 = vadd.f32 %v7169, %v7107
          %v7171 = vadd.f32 %v7170, %v7108
          %v7172 = vadd.f32 %v7171, %v7109
          %v7173 = vadd.f32 %v7172, %v7110
          %v7174 = vadd.f32 %v7173, %v7111
          %v7175 = vadd.f32 %v7174, %v7112
          %v7176 = vadd.f32 %v7175, %v7113
          %v7177 = vadd.f32 %v7176, %v7114
          %v7178 = vadd.f32 %v7177, %v7115
          %v7179 = vadd.f32 %v7178, %v7116
          %v7180 = vadd.f32 %v7179, %v7117
          %v7181 = vadd.f32 %v7180, %v7118
          %v7182 = vadd.f32 %v7181, %v7119
          %v7183 = vadd.f32 %v7182, %v7120
          %v7184 = vadd.f32 %v7183, %v7121
          %v7185 = vadd.f32 %v7184, %v7122
          %v7186 = vadd.f32 %v7185, %v7123
          %v7187 = vadd.f32 %v7186, %v7124
          %v7188 = vadd.f32 %v7187, %v7125
          %v7189 = vadd.f32 %v7188, %v7126
          %v7190 = vadd.f32 %v7189, %v7127
          %v7191 = vadd.f32 %v7190, %v7128
          %v7192 = vadd.f32 %v7191, %v7129
          %v7193 = vadd.f32 %v7192, %v7130
          %v7194 = vadd.f32 %v7193, %v7131
          %v7195 = vadd.f32 %v7194, %v7132
          %v7196 = vadd.f32 %v7195, %v7133
          %v7197 = vadd.f32 %v7196, %v7134
          %v7198 = vadd.f32 %v7197, %v7135
          %v7199 = vadd.f32 %v7198, %v7136
          %v7200 = vadd.f32 %v7199, %v7137
          %v7201 = vadd.f32 %v7200, %v7138
          %v7202 = vadd.f32 %v7201, %v7139
          %v7203 = vadd.f32 %v7202, %v7140
          %v7204 = vadd.f32 %v7203, %v7141
          %v7205 = vadd.f32 %v7204, %v7142
          %v7206 = vadd.f32 %v7205, %v7143
          %v7207 = vadd.f32 %v7206, %v7144
          %v7208 = vadd.f32 %v7207, %v7145
          %v7209 = vadd.f32 %v7208, %v7146
          %v7210 = vadd.f32 %v7209, %v7147
          %v7211 = vadd.f32 %v7210, %v7148
          %v7212 = vadd.f32 %v7211, %v7149
          %v7213 = vadd.f32 %v7212, %v7150
          %v7214 = vadd.f32 %v7213, %v7151
          %v7215 = vadd.f32 %v7214, %v7152
          %v7216 = vadd.f32 %v7215, %v7153
          %v7217 = vadd.f32 %v7216, %v7154
          %v7218 = vadd.f32 %v7217, %v7155
          %v7219 = vadd.f32 %v7218, %v7156
          %v7220 = vadd.f32 %v7219, %v7157
          %v7221 = vadd.f32 %v7220, %v7158
          %v7222 = vadd.f32 %v7221, %v7159
          %v7223 = vadd.f32 %v7222, %v7160
          %v7224 = vadd.f32 %v7223, %v7161
          %v7225 = vadd.f32 %v7224, %v7162
          %v7226 = vadd.f32 %v7225, %v7163
          %v7227 = vadd.f32 %v7226, %v7164
          %v7228 = vadd.f32 %v7227, %v7165
          %v7229 = vadd.f32 %v7228, %v7166
          %v7230 = vadd.f32 %v7229, %v7167
          %v7231 = vadd.f32 %v7230, %v7168
          %v7232 = vrot.slane %v7231, 4
          %v7233 = vadd.f32 %v7231, %v7232
          %v7234 = vrot.slane %v7233, 2
          %v7235 = vadd.f32 %v7233, %v7234
          %v7236 = vrot.slane %v7235, 1
          %v7237 = vadd.f32 %v7235, %v7236
          %v7238 = vmul.f32 %v7104, 0.001953125
          %v7239 = vmul.f32 %v7237, 0.001953125
          %v7240 = vmul.f32 %v7238, %v7238
          %v7241 = vsub.f32 %v7239, %v7240
          %v7242 = vld [vmem:[%s5] sm:$0x1]
          %v7243 = vadd.f32 %v7241, 1e-05
          %v7244 = vrsqrt.pop %v7243
          %v7245 = vmul.f32 %v7242, %v7244
          %v7246 = vld [vmem:[%s6] sm:$0x1]
          %v7247 = vmul.f32 %v7238, %v7245
          %v7248 = vsub.f32 %v7246, %v7247
          %v7250 = vlaneseq
          %v7251 = vshrl.u32 %v7250, 7
          %v7252 = vsub.s32 0, %v7251
          %v7253 = vrot.slane %v7245, %v7252
          %v7255 = vmul.f32 %v6782, %v7253
          %v7256 = vmul.f32 %v6785, %v7253
          %v7257 = vmul.f32 %v6790, %v7253
          %v7258 = vmul.f32 %v6793, %v7253
          %v7259 = vmul.f32 %v6798, %v7253
          %v7260 = vmul.f32 %v6801, %v7253
          %v7261 = vmul.f32 %v6806, %v7253
          %v7262 = vmul.f32 %v6809, %v7253
          %v7263 = vmul.f32 %v6814, %v7253
          %v7264 = vmul.f32 %v6817, %v7253
          %v7265 = vmul.f32 %v6822, %v7253
          %v7266 = vmul.f32 %v6825, %v7253
          %v7267 = vmul.f32 %v6830, %v7253
          %v7268 = vmul.f32 %v6833, %v7253
          %v7269 = vmul.f32 %v6838, %v7253
          %v7270 = vmul.f32 %v6841, %v7253
          %v7271 = vmul.f32 %v6846, %v7253
          %v7272 = vmul.f32 %v6849, %v7253
          %v7273 = vmul.f32 %v6854, %v7253
          %v7274 = vmul.f32 %v6857, %v7253
          %v7275 = vmul.f32 %v6862, %v7253
          %v7276 = vmul.f32 %v6865, %v7253
          %v7277 = vmul.f32 %v6870, %v7253
          %v7278 = vmul.f32 %v6873, %v7253
          %v7279 = vmul.f32 %v6878, %v7253
          %v7280 = vmul.f32 %v6881, %v7253
          %v7281 = vmul.f32 %v6886, %v7253
          %v7282 = vmul.f32 %v6889, %v7253
          %v7283 = vmul.f32 %v6894, %v7253
          %v7284 = vmul.f32 %v6897, %v7253
          %v7285 = vmul.f32 %v6902, %v7253
          %v7286 = vmul.f32 %v6905, %v7253
          %v7287 = vmul.f32 %v6910, %v7253
          %v7288 = vmul.f32 %v6913, %v7253
          %v7289 = vmul.f32 %v6918, %v7253
          %v7290 = vmul.f32 %v6921, %v7253
          %v7291 = vmul.f32 %v6926, %v7253
          %v7292 = vmul.f32 %v6929, %v7253
          %v7293 = vmul.f32 %v6934, %v7253
          %v7294 = vmul.f32 %v6937, %v7253
          %v7295 = vmul.f32 %v6942, %v7253
          %v7296 = vmul.f32 %v6945, %v7253
          %v7297 = vmul.f32 %v6950, %v7253
          %v7298 = vmul.f32 %v6953, %v7253
          %v7299 = vmul.f32 %v6958, %v7253
          %v7300 = vmul.f32 %v6961, %v7253
          %v7301 = vmul.f32 %v6966, %v7253
          %v7302 = vmul.f32 %v6969, %v7253
          %v7303 = vmul.f32 %v6974, %v7253
          %v7304 = vmul.f32 %v6977, %v7253
          %v7305 = vmul.f32 %v6982, %v7253
          %v7306 = vmul.f32 %v6985, %v7253
          %v7307 = vmul.f32 %v6990, %v7253
          %v7308 = vmul.f32 %v6993, %v7253
          %v7309 = vmul.f32 %v6998, %v7253
          %v7310 = vmul.f32 %v7001, %v7253
          %v7311 = vmul.f32 %v7006, %v7253
          %v7312 = vmul.f32 %v7009, %v7253
          %v7313 = vmul.f32 %v7014, %v7253
          %v7314 = vmul.f32 %v7017, %v7253
          %v7315 = vmul.f32 %v7022, %v7253
          %v7316 = vmul.f32 %v7025, %v7253
          %v7317 = vmul.f32 %v7030, %v7253
          %v7318 = vmul.f32 %v7033, %v7253
          %v7320 = vlaneseq
          %v7321 = vshrl.u32 %v7320, 7
          %v7322 = vsub.s32 0, %v7321
          %v7323 = vrot.slane %v7248, %v7322
          %v7325 = vadd.f32 %v7255, %v7323
          %v7326 = vadd.f32 %v7256, %v7323
          %v7327 = vadd.f32 %v7257, %v7323
          %v7328 = vadd.f32 %v7258, %v7323
          %v7329 = vadd.f32 %v7259, %v7323
          %v7330 = vadd.f32 %v7260, %v7323
          %v7331 = vadd.f32 %v7261, %v7323
          %v7332 = vadd.f32 %v7262, %v7323
          %v7333 = vadd.f32 %v7263, %v7323
          %v7334 = vadd.f32 %v7264, %v7323
          %v7335 = vadd.f32 %v7265, %v7323
          %v7336 = vadd.f32 %v7266, %v7323
          %v7337 = vadd.f32 %v7267, %v7323
          %v7338 = vadd.f32 %v7268, %v7323
          %v7339 = vadd.f32 %v7269, %v7323
          %v7340 = vadd.f32 %v7270, %v7323
          %v7341 = vadd.f32 %v7271, %v7323
          %v7342 = vadd.f32 %v7272, %v7323
          %v7343 = vadd.f32 %v7273, %v7323
          %v7344 = vadd.f32 %v7274, %v7323
          %v7345 = vadd.f32 %v7275, %v7323
          %v7346 = vadd.f32 %v7276, %v7323
          %v7347 = vadd.f32 %v7277, %v7323
          %v7348 = vadd.f32 %v7278, %v7323
          %v7349 = vadd.f32 %v7279, %v7323
          %v7350 = vadd.f32 %v7280, %v7323
          %v7351 = vadd.f32 %v7281, %v7323
          %v7352 = vadd.f32 %v7282, %v7323
          %v7353 = vadd.f32 %v7283, %v7323
          %v7354 = vadd.f32 %v7284, %v7323
          %v7355 = vadd.f32 %v7285, %v7323
          %v7356 = vadd.f32 %v7286, %v7323
          %v7357 = vadd.f32 %v7287, %v7323
          %v7358 = vadd.f32 %v7288, %v7323
          %v7359 = vadd.f32 %v7289, %v7323
          %v7360 = vadd.f32 %v7290, %v7323
          %v7361 = vadd.f32 %v7291, %v7323
          %v7362 = vadd.f32 %v7292, %v7323
          %v7363 = vadd.f32 %v7293, %v7323
          %v7364 = vadd.f32 %v7294, %v7323
          %v7365 = vadd.f32 %v7295, %v7323
          %v7366 = vadd.f32 %v7296, %v7323
          %v7367 = vadd.f32 %v7297, %v7323
          %v7368 = vadd.f32 %v7298, %v7323
          %v7369 = vadd.f32 %v7299, %v7323
          %v7370 = vadd.f32 %v7300, %v7323
          %v7371 = vadd.f32 %v7301, %v7323
          %v7372 = vadd.f32 %v7302, %v7323
          %v7373 = vadd.f32 %v7303, %v7323
          %v7374 = vadd.f32 %v7304, %v7323
          %v7375 = vadd.f32 %v7305, %v7323
          %v7376 = vadd.f32 %v7306, %v7323
          %v7377 = vadd.f32 %v7307, %v7323
          %v7378 = vadd.f32 %v7308, %v7323
          %v7379 = vadd.f32 %v7309, %v7323
          %v7380 = vadd.f32 %v7310, %v7323
          %v7381 = vadd.f32 %v7311, %v7323
          %v7382 = vadd.f32 %v7312, %v7323
          %v7383 = vadd.f32 %v7313, %v7323
          %v7384 = vadd.f32 %v7314, %v7323
          %v7385 = vadd.f32 %v7315, %v7323
          %v7386 = vadd.f32 %v7316, %v7323
          %v7387 = vadd.f32 %v7317, %v7323
          %v7388 = vadd.f32 %v7318, %v7323
          %v7389 = vmax.f32 %v7325, 0.0
          %v7390 = vmax.f32 %v7326, 0.0
          %v7391 = vmax.f32 %v7327, 0.0
          %v7392 = vmax.f32 %v7328, 0.0
          %v7393 = vmax.f32 %v7329, 0.0
          %v7394 = vmax.f32 %v7330, 0.0
          %v7395 = vmax.f32 %v7331, 0.0
          %v7396 = vmax.f32 %v7332, 0.0
          %v7397 = vmax.f32 %v7333, 0.0
          %v7398 = vmax.f32 %v7334, 0.0
          %v7399 = vmax.f32 %v7335, 0.0
          %v7400 = vmax.f32 %v7336, 0.0
          %v7401 = vmax.f32 %v7337, 0.0
          %v7402 = vmax.f32 %v7338, 0.0
          %v7403 = vmax.f32 %v7339, 0.0
          %v7404 = vmax.f32 %v7340, 0.0
          %v7405 = vmax.f32 %v7341, 0.0
          %v7406 = vmax.f32 %v7342, 0.0
          %v7407 = vmax.f32 %v7343, 0.0
          %v7408 = vmax.f32 %v7344, 0.0
          %v7409 = vmax.f32 %v7345, 0.0
          %v7410 = vmax.f32 %v7346, 0.0
          %v7411 = vmax.f32 %v7347, 0.0
          %v7412 = vmax.f32 %v7348, 0.0
          %v7413 = vmax.f32 %v7349, 0.0
          %v7414 = vmax.f32 %v7350, 0.0
          %v7415 = vmax.f32 %v7351, 0.0
          %v7416 = vmax.f32 %v7352, 0.0
          %v7417 = vmax.f32 %v7353, 0.0
          %v7418 = vmax.f32 %v7354, 0.0
          %v7419 = vmax.f32 %v7355, 0.0
          %v7420 = vmax.f32 %v7356, 0.0
          %v7421 = vmax.f32 %v7357, 0.0
          %v7422 = vmax.f32 %v7358, 0.0
          %v7423 = vmax.f32 %v7359, 0.0
          %v7424 = vmax.f32 %v7360, 0.0
          %v7425 = vmax.f32 %v7361, 0.0
          %v7426 = vmax.f32 %v7362, 0.0
          %v7427 = vmax.f32 %v7363, 0.0
          %v7428 = vmax.f32 %v7364, 0.0
          %v7429 = vmax.f32 %v7365, 0.0
          %v7430 = vmax.f32 %v7366, 0.0
          %v7431 = vmax.f32 %v7367, 0.0
          %v7432 = vmax.f32 %v7368, 0.0
          %v7433 = vmax.f32 %v7369, 0.0
          %v7434 = vmax.f32 %v7370, 0.0
          %v7435 = vmax.f32 %v7371, 0.0
          %v7436 = vmax.f32 %v7372, 0.0
          %v7437 = vmax.f32 %v7373, 0.0
          %v7438 = vmax.f32 %v7374, 0.0
          %v7439 = vmax.f32 %v7375, 0.0
          %v7440 = vmax.f32 %v7376, 0.0
          %v7441 = vmax.f32 %v7377, 0.0
          %v7442 = vmax.f32 %v7378, 0.0
          %v7443 = vmax.f32 %v7379, 0.0
          %v7444 = vmax.f32 %v7380, 0.0
          %v7445 = vmax.f32 %v7381, 0.0
          %v7446 = vmax.f32 %v7382, 0.0
          %v7447 = vmax.f32 %v7383, 0.0
          %v7448 = vmax.f32 %v7384, 0.0
          %v7449 = vmax.f32 %v7385, 0.0
          %v7450 = vmax.f32 %v7386, 0.0
          %v7451 = vmax.f32 %v7387, 0.0
          %v7452 = vmax.f32 %v7388, 0.0
          %7453 = vst [vmem:[#allocation3] sm:$0xff] %v7389
          %7454 = vst [vmem:[#allocation3 + $0x8] sm:$0xff] %v7390
          %7455 = vst [vmem:[#allocation3 + $0x10] sm:$0xff] %v7391
          %7456 = vst [vmem:[#allocation3 + $0x18] sm:$0xff] %v7392
          %7457 = vst [vmem:[#allocation3 + $0x20] sm:$0xff] %v7393
          %7458 = vst [vmem:[#allocation3 + $0x28] sm:$0xff] %v7394
          %7459 = vst [vmem:[#allocation3 + $0x30] sm:$0xff] %v7395
          %7460 = vst [vmem:[#allocation3 + $0x38] sm:$0xff] %v7396
          %7461 = vst [vmem:[#allocation3 + $0x40] sm:$0xff] %v7397
          %7462 = vst [vmem:[#allocation3 + $0x48] sm:$0xff] %v7398
          %7463 = vst [vmem:[#allocation3 + $0x50] sm:$0xff] %v7399
          %7464 = vst [vmem:[#allocation3 + $0x58] sm:$0xff] %v7400
          %7465 = vst [vmem:[#allocation3 + $0x60] sm:$0xff] %v7401
          %7466 = vst [vmem:[#allocation3 + $0x68] sm:$0xff] %v7402
          %7467 = vst [vmem:[#allocation3 + $0x70] sm:$0xff] %v7403
          %7468 = vst [vmem:[#allocation3 + $0x78] sm:$0xff] %v7404
          %7469 = vst [vmem:[#allocation3 + $0x80] sm:$0xff] %v7405
          %7470 = vst [vmem:[#allocation3 + $0x88] sm:$0xff] %v7406
          %7471 = vst [vmem:[#allocation3 + $0x90] sm:$0xff] %v7407
          %7472 = vst [vmem:[#allocation3 + $0x98] sm:$0xff] %v7408
          %7473 = vst [vmem:[#allocation3 + $0xa0] sm:$0xff] %v7409
          %7474 = vst [vmem:[#allocation3 + $0xa8] sm:$0xff] %v7410
          %7475 = vst [vmem:[#allocation3 + $0xb0] sm:$0xff] %v7411
          %7476 = vst [vmem:[#allocation3 + $0xb8] sm:$0xff] %v7412
          %7477 = vst [vmem:[#allocation3 + $0xc0] sm:$0xff] %v7413
          %7478 = vst [vmem:[#allocation3 + $0xc8] sm:$0xff] %v7414
          %7479 = vst [vmem:[#allocation3 + $0xd0] sm:$0xff] %v7415
          %7480 = vst [vmem:[#allocation3 + $0xd8] sm:$0xff] %v7416
          %7481 = vst [vmem:[#allocation3 + $0xe0] sm:$0xff] %v7417
          %7482 = vst [vmem:[#allocation3 + $0xe8] sm:$0xff] %v7418
          %7483 = vst [vmem:[#allocation3 + $0xf0] sm:$0xff] %v7419
          %7484 = vst [vmem:[#allocation3 + $0xf8] sm:$0xff] %v7420
          %7485 = vst [vmem:[#allocation3 + $0x100] sm:$0xff] %v7421
          %7486 = vst [vmem:[#allocation3 + $0x108] sm:$0xff] %v7422
          %7487 = vst [vmem:[#allocation3 + $0x110] sm:$0xff] %v7423
          %7488 = vst [vmem:[#allocation3 + $0x118] sm:$0xff] %v7424
          %7489 = vst [vmem:[#allocation3 + $0x120] sm:$0xff] %v7425
          %7490 = vst [vmem:[#allocation3 + $0x128] sm:$0xff] %v7426
          %7491 = vst [vmem:[#allocation3 + $0x130] sm:$0xff] %v7427
          %7492 = vst [vmem:[#allocation3 + $0x138] sm:$0xff] %v7428
          %7493 = vst [vmem:[#allocation3 + $0x140] sm:$0xff] %v7429
          %7494 = vst [vmem:[#allocation3 + $0x148] sm:$0xff] %v7430
          %7495 = vst [vmem:[#allocation3 + $0x150] sm:$0xff] %v7431
          %7496 = vst [vmem:[#allocation3 + $0x158] sm:$0xff] %v7432
          %7497 = vst [vmem:[#allocation3 + $0x160] sm:$0xff] %v7433
          %7498 = vst [vmem:[#allocation3 + $0x168] sm:$0xff] %v7434
          %7499 = vst [vmem:[#allocation3 + $0x170] sm:$0xff] %v7435
          %7500 = vst [vmem:[#allocation3 + $0x178] sm:$0xff] %v7436
          %7501 = vst [vmem:[#allocation3 + $0x180] sm:$0xff] %v7437
          %7502 = vst [vmem:[#allocation3 + $0x188] sm:$0xff] %v7438
          %7503 = vst [vmem:[#allocation3 + $0x190] sm:$0xff] %v7439
          %7504 = vst [vmem:[#allocation3 + $0x198] sm:$0xff] %v7440
          %7505 = vst [vmem:[#allocation3 + $0x1a0] sm:$0xff] %v7441
          %7506 = vst [vmem:[#allocation3 + $0x1a8] sm:$0xff] %v7442
          %7507 = vst [vmem:[#allocation3 + $0x1b0] sm:$0xff] %v7443
          %7508 = vst [vmem:[#allocation3 + $0x1b8] sm:$0xff] %v7444
          %7509 = vst [vmem:[#allocation3 + $0x1c0] sm:$0xff] %v7445
          %7510 = vst [vmem:[#allocation3 + $0x1c8] sm:$0xff] %v7446
          %7511 = vst [vmem:[#allocation3 + $0x1d0] sm:$0xff] %v7447
          %7512 = vst [vmem:[#allocation3 + $0x1d8] sm:$0xff] %v7448
          %7513 = vst [vmem:[#allocation3 + $0x1e0] sm:$0xff] %v7449
          %7514 = vst [vmem:[#allocation3 + $0x1e8] sm:$0xff] %v7450
          %7515 = vst [vmem:[#allocation3 + $0x1f0] sm:$0xff] %v7451
          %7516 = vst [vmem:[#allocation3 + $0x1f8] sm:$0xff] %v7452
        $region52: #{tpu_custom_call.1} parent=47 // pred_fallthru
          _
        // Predicated region
        $region53: #{tpu_custom_call.1} parent=47 // pred_check
          %p7517 = pneg %p184
        $region54: #{tpu_custom_call.1} parent=47 // pred_check_branch
          %7519 = sbr.rel (%p7517) target = $region56
        $region55: #{tpu_custom_call.1} parent=47 // pred_region
          %s7521 = ssub.s32 8192, 8192
          %7522 = vsyncadd [#allocation4], %s7521
          %s7523 = sshll.u32 [#allocation3], 4
          %s7524 = int_to_ptr.vmem [resolvable:$true] %s7523
          %7529 = dma.vmem_to_hbm [thread:$0]  %s7524, 8192, %s7, [#allocation4], 128, 128, 8
        $region56: #{tpu_custom_call.1} parent=47 // pred_fallthru
          _
        // Predicated region
        $region57: #{tpu_custom_call.1} parent=47 // pred_check
          %p7530 = pneg %p184
        $region58: #{tpu_custom_call.1} parent=47 // pred_check_branch
          %7532 = sbr.rel (%p7530) target = $region60
        $region59: #{tpu_custom_call.1} parent=47 // pred_region
          %7533 = dma.done [#allocation4], 8192
        $region60: #{tpu_custom_call.1} parent=47 // pred_fallthru
          _
      $region48: #{tpu_custom_call.1} parent=5 // pred_fallthru
        _
      %p7534 = scmp.le.s32.totalorder 2, %s14
      // Predicated region
      $region61: #{tpu_custom_call.1} parent=5 // pred_check
        %p7535 = pneg %p7534
      $region62: #{tpu_custom_call.1} parent=5 // pred_check_branch
        %7537 = sbr.rel (%p7535) target = $region64
      $region63: #{tpu_custom_call.1} parent=5 // pred_region
        %s7538 = ssub.s32 %s14, 2
      $region64: #{tpu_custom_call.1} parent=5 // pred_fallthru
        _
    $region6: #{tpu_custom_call.1} parent=1 // loop_footer
      %s18 = sadd.s32 1, %s14
    $region7: #{tpu_custom_call.1} parent=1 // loop_footer_branch
      %13 = sbr.rel target = $region3
    $region8: #{tpu_custom_call.1} parent=1 // loop_exit
      _
    %7539 = vsyncpa [#allocation4], 1
    %s7540 = scalar_lea.sflag [#allocation4], 1
    %7541 = vsyncpa %s7540, 1

</llo_original>
